<compile_context>
chip_gen: v6e
topology: v6e:2x2x1
jax: 0.10.0
libtpu: 0.0.40
codegen_flags: <defaults>
</compile_context>

<pallas_src>
import functools

import jax
import jax.numpy as jnp
from jax.experimental import pallas as pl
from jax.experimental.pallas import tpu as pltpu


# ----------------------------- shared elementwise ----------------------------


def _elu(y):
    # ELU(alpha=1): x if x > 0 else exp(x) - 1 (clamp exp arg so the discarded branch of
    # jnp.where cannot produce inf).
    return jnp.where(y > 0, y, jnp.exp(jnp.minimum(y, 0.0)) - 1.0)


# ------------------ one-time prep: fold convs into dense matrices ------------
# Everything here runs ONCE (eagerly, outside the per-step forward); the jitted forward
# itself is a single pallas_call plus trivial reshapes.


def _im2col(x, k, stride, pad):
    """x: (B, C, H, W) -> (B*Ho*Wo, C*k*k), patch columns ordered (ci, kh, kw)."""
    x = jnp.pad(x, ((0, 0), (0, 0), (pad, pad), (pad, pad)))
    B, C, Hp, Wp = x.shape
    Ho = (Hp - k) // stride + 1
    Wo = (Wp - k) // stride + 1
    cols = []
    for i in range(k):
        for j in range(k):
            cols.append(x[:, :, i:i + stride * Ho:stride, j:j + stride * Wo:stride])
    cols = jnp.stack(cols, axis=2)                                   # (B, C, k*k, Ho, Wo)
    return cols.transpose(0, 3, 4, 1, 2).reshape(B * Ho * Wo, C * k * k), Ho, Wo


def _conv2d_nobias(x, w, stride, pad):
    """torch.nn.Conv2d semantics (no bias).  x: (B,Cin,H,W), w: (Cout,Cin,k,k) -> NCHW."""
    Cout, Cin, k, _ = w.shape
    B = x.shape[0]
    cols, Ho, Wo = _im2col(x, k, stride, pad)
    y = cols @ w.reshape(Cout, Cin * k * k).T
    return y.reshape(B, Ho, Wo, Cout).transpose(0, 3, 1, 2)


def _dilate2d(x, s):
    if s == 1:
        return x
    B, C, H, W = x.shape
    out = jnp.zeros((B, C, (H - 1) * s + 1, (W - 1) * s + 1), x.dtype)
    return out.at[:, :, ::s, ::s].set(x)


def _conv_transpose2d_nobias(x, w, stride, pad):
    """torch.nn.ConvTranspose2d semantics (no bias).  w: (Cin,Cout,k,k)."""
    k = w.shape[2]
    w_eq = jnp.flip(w, axis=(2, 3)).transpose(1, 0, 2, 3)            # (Cout, Cin, k, k)
    return _conv2d_nobias(_dilate2d(x, stride), w_eq, stride=1, pad=k - 1 - pad)


def _linear_map(fn, in_shape):
    """Dense matrix M of the linear map fn:  flatten(fn(x)) == flatten(x) @ M."""
    n = 1
    for d in in_shape:
        n *= d
    basis = jnp.eye(n, dtype=jnp.float32).reshape((n,) + tuple(in_shape))
    return fn(basis).reshape(n, -1)                                  # (n_in, n_out)


_GPAD = 8  # group axis padded to 8 (extra columns/rows are zero -> numerically inert)


def _group_matrices(C, groups, hw):
    """Factorized GroupNorm sum/broadcast matrices for the channel-major flattening.

    Groups occupy contiguous blocks of D = (C//groups)*hw elements, so
      group_sums  = x @ S          (B, GPAD)   with S (N, GPAD) 0/1
      broadcast   = sums @ S.T     (B, N)
    """
    N = C * hw
    D = N // groups
    gid = jnp.arange(N, dtype=jnp.int32) // D
    col = jnp.arange(_GPAD, dtype=jnp.int32)
    S = (gid[:, None] == col[None, :]).astype(jnp.float32)           # (N, GPAD)
    return S, jnp.transpose(S), 1.0 / float(D)


def _rep(v, n):
    return jnp.repeat(v, n).reshape(1, -1)


def prepare_fused_params(params):
    """One-time parameter folding into the GEMM layout used by the fused kernel."""
    channels = params["conv1_w"].shape[1]
    nef = params["conv1_w"].shape[0]
    nef2 = params["conv2_w"].shape[0]
    bf16 = jnp.bfloat16

    w1 = _linear_map(lambda z: _conv2d_nobias(z, params["conv1_w"], 2, 1), (channels, 10, 10))
    w2 = _linear_map(lambda z: _conv2d_nobias(z, params["conv2_w"], 1, 1), (nef, 5, 5))
    w3 = _linear_map(lambda z: _conv_transpose2d_nobias(z, params["convt1_w"], 1, 1), (nef2, 5, 5))
    w4 = _linear_map(lambda z: _conv_transpose2d_nobias(z, params["convt2_w"], 2, 1), (nef, 5, 5))

    s_a, bt_a, _ = _group_matrices(nef, 4, 25)    # shared by GN1 and GN3 (identical content)
    s_b, bt_b, _ = _group_matrices(nef2, 4, 25)

    fused = {
        # folded (transposed-)conv GEMMs, bf16 weights + f32 pre-broadcast biases
        "w1": w1.astype(bf16), "b1": _rep(params["conv1_b"], 25),
        "w2": w2.astype(bf16), "b2": _rep(params["conv2_b"], 25),
        "w3": w3.astype(bf16), "b3": _rep(params["convt1_b"], 25),
        "w4": w4.astype(bf16), "b4": _rep(params["convt2_b"], 100),
        # factorized GroupNorm sum/broadcast matrices (tiny, f32)
        "s_a": s_a, "bt_a": bt_a, "s_b": s_b, "bt_b": bt_b,
        # GroupNorm affines, pre-broadcast to (1, N)
        "g1": _rep(params["gn1_g"], 25), "be1": _rep(params["gn1_b"], 25),
        "g2": _rep(params["gn2_g"], 25), "be2": _rep(params["gn2_b"], 25),
        "g3": _rep(params["gn3_g"], 25), "be3": _rep(params["gn3_b"], 25),
        # fc head (pre-transposed to (in, out)), LayerNorm affine
        "wf1": params["fc1_w"].T.astype(bf16), "bf1": params["fc1_b"].reshape(1, -1),
        "lng": params["ln_g"].reshape(1, -1), "lnb": params["ln_b"].reshape(1, -1),
        "wf2": params["fc2_w"].T.astype(bf16), "bf2": params["fc2_b"].reshape(1, -1),
    }

    # All fused weights live whole in VMEM; keep comfortably inside the scoped limit.
    total_bytes = sum(int(v.size) * v.dtype.itemsize for v in fused.values())
    assert total_bytes < 24 * 1024 * 1024, f"fused params too large for VMEM: {total_bytes}"
    return fused


_PARAM_ORDER = (
    "w1", "b1", "w2", "b2", "w3", "b3", "w4", "b4",
    "s_a", "bt_a", "s_b", "bt_b",
    "g1", "be1", "g2", "be2", "g3", "be3",
    "wf1", "bf1", "lng", "lnb", "wf2", "bf2",
)


# ------------------------------ the fused kernel ------------------------------


def _fused_forward_kernel(
    x_ref,
    w1, b1, w2, b2, w3, b3, w4, b4,
    s_a, bt_a, s_b, bt_b,
    g1, be1, g2, be2, g3, be3,
    wf1, bf1, lng, lnb, wf2, bf2,
    o_ref,
    *, inv_a, inv_b,
):
    f32 = jnp.float32
    bf16 = jnp.bfloat16

    def gemm(h, w_ref, b_ref):
        # bf16 weights, bf16-cast activations, f32 MXU accumulation.
        return jnp.dot(h.astype(bf16), w_ref[...], preferred_element_type=f32) + b_ref[...]

    def group_norm_elu(h, s_ref, bt_ref, inv, g_ref, b_ref):
        # Factorized group statistics: two tiny (N, G) matmuls give per-group mean and
        # E[x^2]; var = E[x^2] - mean^2 (f32 accumulation + 1e-5 eps keeps this safe);
        # mean/scale are broadcast back with the (G, N) 0/1 matrix.
        s = s_ref[...]
        mean_g = jnp.dot(h, s, preferred_element_type=f32) * inv          # (B, G)
        ex2_g = jnp.dot(h * h, s, preferred_element_type=f32) * inv       # (B, G)
        scale_g = jax.lax.rsqrt(ex2_g - mean_g * mean_g + 1e-5)           # (B, G)
        bt = bt_ref[...]
        mean = jnp.dot(mean_g, bt, preferred_element_type=f32)            # (B, N)
        scale = jnp.dot(scale_g, bt, preferred_element_type=f32)          # (B, N)
        return _elu((h - mean) * scale * g_ref[...] + b_ref[...])

    h = x_ref[...]                                                         # (B, C*100) f32
    h = group_norm_elu(gemm(h, w1, b1), s_a, bt_a, inv_a, g1, be1)         # conv1 + GN + ELU
    h = group_norm_elu(gemm(h, w2, b2), s_b, bt_b, inv_b, g2, be2)         # conv2 + GN + ELU
    h = group_norm_elu(gemm(h, w3, b3), s_a, bt_a, inv_a, g3, be3)         # convT1 + GN + ELU
    h = _elu(gemm(h, w4, b4))                                              # convT2 + ELU

    z = gemm(h, wf1, bf1)                                                  # fc1
    mu = jnp.mean(z, axis=-1, keepdims=True)                               # LayerNorm + ELU
    var = jnp.mean(jnp.square(z - mu), axis=-1, keepdims=True)
    z = _elu((z - mu) * jax.lax.rsqrt(var + 1e-5) * lng[...] + lnb[...])

    o_ref[...] = gemm(z, wf2, bf2).astype(o_ref.dtype)                     # fc2


def small_score_forward(fused, x, *, channels, tile_b=256):
    """x: (B, channels, 10, 10) -> (B, channels, 10, 10).  One pallas_call, batch-gridded."""
    B = x.shape[0]
    N = channels * 100
    xf = x.reshape(B, N).astype(jnp.float32)

    if B <= tile_b:
        tb, grid_b, x_pad = B, 1, xf                     # single whole-B block
    else:
        tb = tile_b
        grid_b = pl.cdiv(B, tb)
        pad = grid_b * tb - B
        x_pad = jnp.pad(xf, ((0, pad), (0, 0))) if pad else xf

    inv_a = 1.0 / float(fused["s_a"].shape[0] // 4)
    inv_b = 1.0 / float(fused["s_b"].shape[0] // 4)

    weights = tuple(fused[k] for k in _PARAM_ORDER)
    # Weights: whole-array blocks with constant index_map -> VMEM-resident across grid steps.
    w_specs = [pl.BlockSpec(w.shape, lambda i: (0, 0)) for w in weights]

    out = pl.pallas_call(
        functools.partial(_fused_forward_kernel, inv_a=inv_a, inv_b=inv_b),
        out_shape=jax.ShapeDtypeStruct((grid_b * tb, N), jnp.float32),
        grid_spec=pltpu.PrefetchScalarGridSpec(
            num_scalar_prefetch=0,
            grid=(grid_b,),
            in_specs=[pl.BlockSpec((tb, N), lambda i: (i, 0))] + w_specs,
            out_specs=pl.BlockSpec((tb, N), lambda i: (i, 0)),
        ),
        compiler_params=pltpu.CompilerParams(
            dimension_semantics=("parallel",),           # v7x: both TCs take batch tiles
            vmem_limit_bytes=32 * 1024 * 1024,           # stays valid on v7x's 64 MiB VMEM
        ),
    )(x_pad, *weights)
    return out[:B].reshape(B, channels, 10, 10)


# --------------------------- pure-JAX references (self-checks) ----------------


def _fused_reference(fused, x, *, channels):
    """Plain-JAX mirror of the exact fused-kernel math (same bf16 folded weights)."""
    f32, bf16 = jnp.float32, jnp.bfloat16

    def gemm(h, w, b):
        return jnp.dot(h.astype(bf16), w, preferred_element_type=f32) + b

    def gn_elu(h, s, bt, inv, g, be):
        mg = jnp.dot(h, s, preferred_element_type=f32) * inv
        eg = jnp.dot(h * h, s, preferred_element_type=f32) * inv
        sg = jax.lax.rsqrt(eg - mg * mg + 1e-5)
        return _elu((h - jnp.dot(mg, bt, preferred_element_type=f32))
                    * jnp.dot(sg, bt, preferred_element_type=f32) * g + be)

    inv_a = 1.0 / float(fused["s_a"].shape[0] // 4)
    inv_b = 1.0 / float(fused["s_b"].shape[0] // 4)
    h = x.reshape(x.shape[0], -1).astype(f32)
    h = gn_elu(gemm(h, fused["w1"], fused["b1"]), fused["s_a"], fused["bt_a"], inv_a, fused["g1"], fused["be1"])
    h = gn_elu(gemm(h, fused["w2"], fused["b2"]), fused["s_b"], fused["bt_b"], inv_b, fused["g2"], fused["be2"])
    h = gn_elu(gemm(h, fused["w3"], fused["b3"]), fused["s_a"], fused["bt_a"], inv_a, fused["g3"], fused["be3"])
    h = _elu(gemm(h, fused["w4"], fused["b4"]))
    z = gemm(h, fused["wf1"], fused["bf1"])
    m = z.mean(-1, keepdims=True)
    v = jnp.square(z - m).mean(-1, keepdims=True)
    z = _elu((z - m) * jax.lax.rsqrt(v + 1e-5) * fused["lng"] + fused["lnb"])
    z = gemm(z, fused["wf2"], fused["bf2"])
    return z.reshape(x.shape[0], channels, 10, 10)


def _reference_forward(params, x, *, channels):
    """Layer-by-layer f32 reference with original (unfolded) torch-layout weights."""
    def gn_elu(h, g, b, groups):
        B, C, H, W = h.shape
        hg = h.reshape(B, groups, -1)
        m = hg.mean(-1, keepdims=True)
        v = jnp.square(hg - m).mean(-1, keepdims=True)
        hn = ((hg - m) * jax.lax.rsqrt(v + 1e-5)).reshape(B, C, H, W)
        return _elu(hn * g.reshape(1, -1, 1, 1) + b.reshape(1, -1, 1, 1))

    h = _conv2d_nobias(x, params["conv1_w"], 2, 1) + params["conv1_b"].reshape(1, -1, 1, 1)
    h = gn_elu(h, params["gn1_g"], params["gn1_b"], 4)
    h = _conv2d_nobias(h, params["conv2_w"], 1, 1) + params["conv2_b"].reshape(1, -1, 1, 1)
    h = gn_elu(h, params["gn2_g"], params["gn2_b"], 4)
    h = _conv_transpose2d_nobias(h, params["convt1_w"], 1, 1) + params["convt1_b"].reshape(1, -1, 1, 1)
    h = gn_elu(h, params["gn3_g"], params["gn3_b"], 4)
    h = _elu(_conv_transpose2d_nobias(h, params["convt2_w"], 2, 1)
             + params["convt2_b"].reshape(1, -1, 1, 1))
    z = h.reshape(x.shape[0], -1) @ params["fc1_w"].T + params["fc1_b"]
    m = z.mean(-1, keepdims=True)
    v = jnp.square(z - m).mean(-1, keepdims=True)
    z = _elu((z - m) * jax.lax.rsqrt(v + 1e-5) * params["ln_g"] + params["ln_b"])
    z = z @ params["fc2_w"].T + params["fc2_b"]
    return z.reshape(x.shape[0], channels, 10, 10)


# --------------------------------- params -------------------------------------


def init_params(key, channels, nef):
    ks = jax.random.split(key, 7)

    def w_init(k, shape, fan_in):
        return jax.random.normal(k, shape, jnp.float32) / jnp.float32(fan_in) ** 0.5

    def b_init(n):
        return 0.01 * jnp.arange(n, dtype=jnp.float32)

    def affine(n):  # non-trivial gamma/beta so the self-check exercises their layout
        return (1.0 + 0.01 * jnp.arange(n, dtype=jnp.float32),
                0.02 * jnp.arange(n, dtype=jnp.float32))

    nef2 = nef * 2
    nfc = channels * 100
    gn1_g, gn1_b = affine(nef)
    gn2_g, gn2_b = affine(nef2)
    gn3_g, gn3_b = affine(nef)
    ln_g, ln_b = affine(256)
    return {
        # u_net
        "conv1_w": w_init(ks[0], (nef, channels, 4, 4), channels * 16),
        "conv1_b": b_init(nef),
        "gn1_g": gn1_g, "gn1_b": gn1_b,
        "conv2_w": w_init(ks[1], (nef2, nef, 3, 3), nef * 9),
        "conv2_b": b_init(nef2),
        "gn2_g": gn2_g, "gn2_b": gn2_b,
        "convt1_w": w_init(ks[2], (nef2, nef, 3, 3), nef2 * 9),      # (Cin, Cout, k, k)
        "convt1_b": b_init(nef),
        "gn3_g": gn3_g, "gn3_b": gn3_b,
        "convt2_w": w_init(ks[3], (nef, channels, 4, 4), nef * 16),  # (Cin, Cout, k, k)
        "convt2_b": b_init(channels),
        # fc head (torch Linear stores (out, in))
        "fc1_w": w_init(ks[4], (256, nfc), nfc),
        "fc1_b": b_init(256),
        "ln_g": ln_g, "ln_b": ln_b,
        "fc2_w": w_init(ks[5], (nfc, 256), 256),
        "fc2_b": b_init(nfc),
    }


if __name__ == "__main__":
    key = jax.random.PRNGKey(0)
    B = 2
    channels = 3          # config.data.channels
    nef = 4 * 4           # config.model.nef = 4  ->  nef = config.model.nef * 4 = 16

    pkey, xkey = jax.random.split(key)
    params = init_params(pkey, channels, nef)
    x = jax.random.normal(xkey, (B, channels, 10, 10), jnp.float32)

    # One-time parameter folding (eager; outside the per-step forward).
    fused = prepare_fused_params(params)
    jax.block_until_ready(fused)

    fwd = jax.jit(functools.partial(small_score_forward, channels=channels))
    out = fwd(fused, x)
    jax.block_until_ready(out)

    assert out.shape == (B, channels, 10, 10), out.shape
    assert bool(jnp.all(jnp.isfinite(out)))

    # Tight check: identical fused math (same bf16 folded weights) in plain JAX -> verifies
    # kernel structure without being masked by the bf16 weight cast.
    ref_fused = _fused_reference(fused, x, channels=channels)
    assert bool(jnp.allclose(out, ref_fused, rtol=5e-3, atol=5e-3))

    # Loose check: original layer-by-layer f32 reference (torch semantics) -> verifies the
    # conv/GN folding end to end; tolerance absorbs the bf16 weight quantization.
    ref = _reference_forward(params, x, channels=channels)
    assert bool(jnp.allclose(out, ref, rtol=1e-1, atol=1e-1))

    print("KERNEL_OK")
</pallas_src>

<mosaic_0001>
module attributes {stable_mosaic.version = 11 : i64} {
  func.func @_fused_forward_kernel(%arg0: i32, %arg1: memref<2x300xf32, #tpu.memory_space<vmem>>, %arg2: memref<300x400xbf16, #tpu.memory_space<vmem>>, %arg3: memref<1x400xf32, #tpu.memory_space<vmem>>, %arg4: memref<400x800xbf16, #tpu.memory_space<vmem>>, %arg5: memref<1x800xf32, #tpu.memory_space<vmem>>, %arg6: memref<800x400xbf16, #tpu.memory_space<vmem>>, %arg7: memref<1x400xf32, #tpu.memory_space<vmem>>, %arg8: memref<400x300xbf16, #tpu.memory_space<vmem>>, %arg9: memref<1x300xf32, #tpu.memory_space<vmem>>, %arg10: memref<400x8xf32, #tpu.memory_space<vmem>>, %arg11: memref<8x400xf32, #tpu.memory_space<vmem>>, %arg12: memref<800x8xf32, #tpu.memory_space<vmem>>, %arg13: memref<8x800xf32, #tpu.memory_space<vmem>>, %arg14: memref<1x400xf32, #tpu.memory_space<vmem>>, %arg15: memref<1x400xf32, #tpu.memory_space<vmem>>, %arg16: memref<1x800xf32, #tpu.memory_space<vmem>>, %arg17: memref<1x800xf32, #tpu.memory_space<vmem>>, %arg18: memref<1x400xf32, #tpu.memory_space<vmem>>, %arg19: memref<1x400xf32, #tpu.memory_space<vmem>>, %arg20: memref<300x256xbf16, #tpu.memory_space<vmem>>, %arg21: memref<1x256xf32, #tpu.memory_space<vmem>>, %arg22: memref<1x256xf32, #tpu.memory_space<vmem>>, %arg23: memref<1x256xf32, #tpu.memory_space<vmem>>, %arg24: memref<256x300xbf16, #tpu.memory_space<vmem>>, %arg25: memref<1x300xf32, #tpu.memory_space<vmem>>, %arg26: memref<2x300xf32, #tpu.memory_space<vmem>>) attributes {dimension_semantics = [#tpu.dimension_semantics<parallel>], iteration_bounds = array<i64: 1>, scalar_prefetch = 0 : i64, scratch_operands = 0 : i64, tpu.core_type = #tpu.core_type<tc>, window_params = [{transform_indices = @transform_0, window_bounds = array<i64: 2, 300>}, {pipeline_mode = #tpu.pipeline_mode<synchronous>, transform_indices = @transform_1, window_bounds = array<i64: 300, 400>}, {pipeline_mode = #tpu.pipeline_mode<synchronous>, transform_indices = @transform_2, window_bounds = array<i64: 1, 400>}, {pipeline_mode = #tpu.pipeline_mode<synchronous>, transform_indices = @transform_3, window_bounds = array<i64: 400, 800>}, {pipeline_mode = #tpu.pipeline_mode<synchronous>, transform_indices = @transform_4, window_bounds = array<i64: 1, 800>}, {pipeline_mode = #tpu.pipeline_mode<synchronous>, transform_indices = @transform_5, window_bounds = array<i64: 800, 400>}, {pipeline_mode = #tpu.pipeline_mode<synchronous>, transform_indices = @transform_6, window_bounds = array<i64: 1, 400>}, {pipeline_mode = #tpu.pipeline_mode<synchronous>, transform_indices = @transform_7, window_bounds = array<i64: 400, 300>}, {pipeline_mode = #tpu.pipeline_mode<synchronous>, transform_indices = @transform_8, window_bounds = array<i64: 1, 300>}, {pipeline_mode = #tpu.pipeline_mode<synchronous>, transform_indices = @transform_9, window_bounds = array<i64: 400, 8>}, {pipeline_mode = #tpu.pipeline_mode<synchronous>, transform_indices = @transform_10, window_bounds = array<i64: 8, 400>}, {pipeline_mode = #tpu.pipeline_mode<synchronous>, transform_indices = @transform_11, window_bounds = array<i64: 800, 8>}, {pipeline_mode = #tpu.pipeline_mode<synchronous>, transform_indices = @transform_12, window_bounds = array<i64: 8, 800>}, {pipeline_mode = #tpu.pipeline_mode<synchronous>, transform_indices = @transform_13, window_bounds = array<i64: 1, 400>}, {pipeline_mode = #tpu.pipeline_mode<synchronous>, transform_indices = @transform_14, window_bounds = array<i64: 1, 400>}, {pipeline_mode = #tpu.pipeline_mode<synchronous>, transform_indices = @transform_15, window_bounds = array<i64: 1, 800>}, {pipeline_mode = #tpu.pipeline_mode<synchronous>, transform_indices = @transform_16, window_bounds = array<i64: 1, 800>}, {pipeline_mode = #tpu.pipeline_mode<synchronous>, transform_indices = @transform_17, window_bounds = array<i64: 1, 400>}, {pipeline_mode = #tpu.pipeline_mode<synchronous>, transform_indices = @transform_18, window_bounds = array<i64: 1, 400>}, {pipeline_mode = #tpu.pipeline_mode<synchronous>, transform_indices = @transform_19, window_bounds = array<i64: 300, 256>}, {pipeline_mode = #tpu.pipeline_mode<synchronous>, transform_indices = @transform_20, window_bounds = array<i64: 1, 256>}, {pipeline_mode = #tpu.pipeline_mode<synchronous>, transform_indices = @transform_21, window_bounds = array<i64: 1, 256>}, {pipeline_mode = #tpu.pipeline_mode<synchronous>, transform_indices = @transform_22, window_bounds = array<i64: 1, 256>}, {pipeline_mode = #tpu.pipeline_mode<synchronous>, transform_indices = @transform_23, window_bounds = array<i64: 256, 300>}, {pipeline_mode = #tpu.pipeline_mode<synchronous>, transform_indices = @transform_24, window_bounds = array<i64: 1, 300>}, {transform_indices = @transform_25, window_bounds = array<i64: 2, 300>}]} {
    %c0 = arith.constant 0 : index
    %c0_0 = arith.constant 0 : index
    %0 = vector.load %arg1[%c0, %c0_0] : memref<2x300xf32, #tpu.memory_space<vmem>>, vector<2x300xf32>
    %1 = arith.truncf %0 : vector<2x300xf32> to vector<2x300xbf16>
    %c0_1 = arith.constant 0 : index
    %c0_2 = arith.constant 0 : index
    %2 = vector.load %arg2[%c0_1, %c0_2] : memref<300x400xbf16, #tpu.memory_space<vmem>>, vector<300x400xbf16>
    %cst = arith.constant dense<0.000000e+00> : vector<2x400xf32>
    %3 = tpu.matmul %1, %2, %cst {dimension_numbers = #tpu.dot_dimension_numbers<[1], [0], [0], [1], [0, 0, 1, 1], [], []>} : vector<2x300xbf16>, vector<300x400xbf16>, vector<2x400xf32> -> vector<2x400xf32>
    %c0_3 = arith.constant 0 : index
    %c0_4 = arith.constant 0 : index
    %4 = vector.load %arg3[%c0_3, %c0_4] : memref<1x400xf32, #tpu.memory_space<vmem>>, vector<1x400xf32>
    %5 = vector.broadcast %4 : vector<1x400xf32> to vector<2x400xf32>
    %6 = arith.addf %3, %5 : vector<2x400xf32>
    %c0_5 = arith.constant 0 : index
    %c0_6 = arith.constant 0 : index
    %7 = vector.load %arg10[%c0_5, %c0_6] : memref<400x8xf32, #tpu.memory_space<vmem>>, vector<400x8xf32>
    %cst_7 = arith.constant dense<0.000000e+00> : vector<2x8xf32>
    %8 = tpu.matmul %6, %7, %cst_7 {dimension_numbers = #tpu.dot_dimension_numbers<[1], [0], [0], [1], [0, 0, 1, 1], [], []>} : vector<2x400xf32>, vector<400x8xf32>, vector<2x8xf32> -> vector<2x8xf32>
    %cst_8 = arith.constant 0.00999999977 : f32
    %9 = vector.broadcast %cst_8 : f32 to vector<2x8xf32>
    %10 = arith.mulf %8, %9 : vector<2x8xf32>
    %11 = arith.mulf %6, %6 : vector<2x400xf32>
    %cst_9 = arith.constant dense<0.000000e+00> : vector<2x8xf32>
    %12 = tpu.matmul %11, %7, %cst_9 {dimension_numbers = #tpu.dot_dimension_numbers<[1], [0], [0], [1], [0, 0, 1, 1], [], []>} : vector<2x400xf32>, vector<400x8xf32>, vector<2x8xf32> -> vector<2x8xf32>
    %cst_10 = arith.constant 0.00999999977 : f32
    %13 = vector.broadcast %cst_10 : f32 to vector<2x8xf32>
    %14 = arith.mulf %12, %13 : vector<2x8xf32>
    %15 = arith.mulf %10, %10 : vector<2x8xf32>
    %16 = arith.subf %14, %15 : vector<2x8xf32>
    %cst_11 = arith.constant 9.99999974E-6 : f32
    %17 = vector.broadcast %cst_11 : f32 to vector<2x8xf32>
    %18 = arith.addf %16, %17 : vector<2x8xf32>
    %19 = math.rsqrt %18 : vector<2x8xf32>
    %c0_12 = arith.constant 0 : index
    %c0_13 = arith.constant 0 : index
    %20 = vector.load %arg11[%c0_12, %c0_13] : memref<8x400xf32, #tpu.memory_space<vmem>>, vector<8x400xf32>
    %cst_14 = arith.constant dense<0.000000e+00> : vector<2x400xf32>
    %21 = tpu.matmul %10, %20, %cst_14 {dimension_numbers = #tpu.dot_dimension_numbers<[1], [0], [0], [1], [0, 0, 1, 1], [], []>} : vector<2x8xf32>, vector<8x400xf32>, vector<2x400xf32> -> vector<2x400xf32>
    %cst_15 = arith.constant dense<0.000000e+00> : vector<2x400xf32>
    %22 = tpu.matmul %19, %20, %cst_15 {dimension_numbers = #tpu.dot_dimension_numbers<[1], [0], [0], [1], [0, 0, 1, 1], [], []>} : vector<2x8xf32>, vector<8x400xf32>, vector<2x400xf32> -> vector<2x400xf32>
    %23 = arith.subf %6, %21 : vector<2x400xf32>
    %24 = arith.mulf %23, %22 : vector<2x400xf32>
    %c0_16 = arith.constant 0 : index
    %c0_17 = arith.constant 0 : index
    %25 = vector.load %arg14[%c0_16, %c0_17] : memref<1x400xf32, #tpu.memory_space<vmem>>, vector<1x400xf32>
    %26 = vector.broadcast %25 : vector<1x400xf32> to vector<2x400xf32>
    %27 = arith.mulf %24, %26 : vector<2x400xf32>
    %c0_18 = arith.constant 0 : index
    %c0_19 = arith.constant 0 : index
    %28 = vector.load %arg15[%c0_18, %c0_19] : memref<1x400xf32, #tpu.memory_space<vmem>>, vector<1x400xf32>
    %29 = vector.broadcast %28 : vector<1x400xf32> to vector<2x400xf32>
    %30 = arith.addf %27, %29 : vector<2x400xf32>
    %cst_20 = arith.constant 0.000000e+00 : f32
    %31 = vector.broadcast %cst_20 : f32 to vector<2x400xf32>
    %32 = arith.cmpf ogt, %30, %31 : vector<2x400xf32>
    %cst_21 = arith.constant 0.000000e+00 : f32
    %33 = vector.broadcast %cst_21 : f32 to vector<2x400xf32>
    %34 = arith.minimumf %30, %33 : vector<2x400xf32>
    %35 = math.exp %34 : vector<2x400xf32>
    %cst_22 = arith.constant 1.000000e+00 : f32
    %36 = vector.broadcast %cst_22 : f32 to vector<2x400xf32>
    %37 = arith.subf %35, %36 : vector<2x400xf32>
    %38 = arith.select %32, %30, %37 : vector<2x400xi1>, vector<2x400xf32>
    %39 = arith.truncf %38 : vector<2x400xf32> to vector<2x400xbf16>
    %c0_23 = arith.constant 0 : index
    %c0_24 = arith.constant 0 : index
    %40 = vector.load %arg4[%c0_23, %c0_24] : memref<400x800xbf16, #tpu.memory_space<vmem>>, vector<400x800xbf16>
    %cst_25 = arith.constant dense<0.000000e+00> : vector<2x800xf32>
    %41 = tpu.matmul %39, %40, %cst_25 {dimension_numbers = #tpu.dot_dimension_numbers<[1], [0], [0], [1], [0, 0, 1, 1], [], []>} : vector<2x400xbf16>, vector<400x800xbf16>, vector<2x800xf32> -> vector<2x800xf32>
    %c0_26 = arith.constant 0 : index
    %c0_27 = arith.constant 0 : index
    %42 = vector.load %arg5[%c0_26, %c0_27] : memref<1x800xf32, #tpu.memory_space<vmem>>, vector<1x800xf32>
    %43 = vector.broadcast %42 : vector<1x800xf32> to vector<2x800xf32>
    %44 = arith.addf %41, %43 : vector<2x800xf32>
    %c0_28 = arith.constant 0 : index
    %c0_29 = arith.constant 0 : index
    %45 = vector.load %arg12[%c0_28, %c0_29] : memref<800x8xf32, #tpu.memory_space<vmem>>, vector<800x8xf32>
    %cst_30 = arith.constant dense<0.000000e+00> : vector<2x8xf32>
    %46 = tpu.matmul %44, %45, %cst_30 {dimension_numbers = #tpu.dot_dimension_numbers<[1], [0], [0], [1], [0, 0, 1, 1], [], []>} : vector<2x800xf32>, vector<800x8xf32>, vector<2x8xf32> -> vector<2x8xf32>
    %cst_31 = arith.constant 5.000000e-03 : f32
    %47 = vector.broadcast %cst_31 : f32 to vector<2x8xf32>
    %48 = arith.mulf %46, %47 : vector<2x8xf32>
    %49 = arith.mulf %44, %44 : vector<2x800xf32>
    %cst_32 = arith.constant dense<0.000000e+00> : vector<2x8xf32>
    %50 = tpu.matmul %49, %45, %cst_32 {dimension_numbers = #tpu.dot_dimension_numbers<[1], [0], [0], [1], [0, 0, 1, 1], [], []>} : vector<2x800xf32>, vector<800x8xf32>, vector<2x8xf32> -> vector<2x8xf32>
    %cst_33 = arith.constant 5.000000e-03 : f32
    %51 = vector.broadcast %cst_33 : f32 to vector<2x8xf32>
    %52 = arith.mulf %50, %51 : vector<2x8xf32>
    %53 = arith.mulf %48, %48 : vector<2x8xf32>
    %54 = arith.subf %52, %53 : vector<2x8xf32>
    %cst_34 = arith.constant 9.99999974E-6 : f32
    %55 = vector.broadcast %cst_34 : f32 to vector<2x8xf32>
    %56 = arith.addf %54, %55 : vector<2x8xf32>
    %57 = math.rsqrt %56 : vector<2x8xf32>
    %c0_35 = arith.constant 0 : index
    %c0_36 = arith.constant 0 : index
    %58 = vector.load %arg13[%c0_35, %c0_36] : memref<8x800xf32, #tpu.memory_space<vmem>>, vector<8x800xf32>
    %cst_37 = arith.constant dense<0.000000e+00> : vector<2x800xf32>
    %59 = tpu.matmul %48, %58, %cst_37 {dimension_numbers = #tpu.dot_dimension_numbers<[1], [0], [0], [1], [0, 0, 1, 1], [], []>} : vector<2x8xf32>, vector<8x800xf32>, vector<2x800xf32> -> vector<2x800xf32>
    %cst_38 = arith.constant dense<0.000000e+00> : vector<2x800xf32>
    %60 = tpu.matmul %57, %58, %cst_38 {dimension_numbers = #tpu.dot_dimension_numbers<[1], [0], [0], [1], [0, 0, 1, 1], [], []>} : vector<2x8xf32>, vector<8x800xf32>, vector<2x800xf32> -> vector<2x800xf32>
    %61 = arith.subf %44, %59 : vector<2x800xf32>
    %62 = arith.mulf %61, %60 : vector<2x800xf32>
    %c0_39 = arith.constant 0 : index
    %c0_40 = arith.constant 0 : index
    %63 = vector.load %arg16[%c0_39, %c0_40] : memref<1x800xf32, #tpu.memory_space<vmem>>, vector<1x800xf32>
    %64 = vector.broadcast %63 : vector<1x800xf32> to vector<2x800xf32>
    %65 = arith.mulf %62, %64 : vector<2x800xf32>
    %c0_41 = arith.constant 0 : index
    %c0_42 = arith.constant 0 : index
    %66 = vector.load %arg17[%c0_41, %c0_42] : memref<1x800xf32, #tpu.memory_space<vmem>>, vector<1x800xf32>
    %67 = vector.broadcast %66 : vector<1x800xf32> to vector<2x800xf32>
    %68 = arith.addf %65, %67 : vector<2x800xf32>
    %cst_43 = arith.constant 0.000000e+00 : f32
    %69 = vector.broadcast %cst_43 : f32 to vector<2x800xf32>
    %70 = arith.cmpf ogt, %68, %69 : vector<2x800xf32>
    %cst_44 = arith.constant 0.000000e+00 : f32
    %71 = vector.broadcast %cst_44 : f32 to vector<2x800xf32>
    %72 = arith.minimumf %68, %71 : vector<2x800xf32>
    %73 = math.exp %72 : vector<2x800xf32>
    %cst_45 = arith.constant 1.000000e+00 : f32
    %74 = vector.broadcast %cst_45 : f32 to vector<2x800xf32>
    %75 = arith.subf %73, %74 : vector<2x800xf32>
    %76 = arith.select %70, %68, %75 : vector<2x800xi1>, vector<2x800xf32>
    %77 = arith.truncf %76 : vector<2x800xf32> to vector<2x800xbf16>
    %c0_46 = arith.constant 0 : index
    %c0_47 = arith.constant 0 : index
    %78 = vector.load %arg6[%c0_46, %c0_47] : memref<800x400xbf16, #tpu.memory_space<vmem>>, vector<800x400xbf16>
    %cst_48 = arith.constant dense<0.000000e+00> : vector<2x400xf32>
    %79 = tpu.matmul %77, %78, %cst_48 {dimension_numbers = #tpu.dot_dimension_numbers<[1], [0], [0], [1], [0, 0, 1, 1], [], []>} : vector<2x800xbf16>, vector<800x400xbf16>, vector<2x400xf32> -> vector<2x400xf32>
    %c0_49 = arith.constant 0 : index
    %c0_50 = arith.constant 0 : index
    %80 = vector.load %arg7[%c0_49, %c0_50] : memref<1x400xf32, #tpu.memory_space<vmem>>, vector<1x400xf32>
    %81 = vector.broadcast %80 : vector<1x400xf32> to vector<2x400xf32>
    %82 = arith.addf %79, %81 : vector<2x400xf32>
    %c0_51 = arith.constant 0 : index
    %c0_52 = arith.constant 0 : index
    %83 = vector.load %arg10[%c0_51, %c0_52] : memref<400x8xf32, #tpu.memory_space<vmem>>, vector<400x8xf32>
    %cst_53 = arith.constant dense<0.000000e+00> : vector<2x8xf32>
    %84 = tpu.matmul %82, %83, %cst_53 {dimension_numbers = #tpu.dot_dimension_numbers<[1], [0], [0], [1], [0, 0, 1, 1], [], []>} : vector<2x400xf32>, vector<400x8xf32>, vector<2x8xf32> -> vector<2x8xf32>
    %cst_54 = arith.constant 0.00999999977 : f32
    %85 = vector.broadcast %cst_54 : f32 to vector<2x8xf32>
    %86 = arith.mulf %84, %85 : vector<2x8xf32>
    %87 = arith.mulf %82, %82 : vector<2x400xf32>
    %cst_55 = arith.constant dense<0.000000e+00> : vector<2x8xf32>
    %88 = tpu.matmul %87, %83, %cst_55 {dimension_numbers = #tpu.dot_dimension_numbers<[1], [0], [0], [1], [0, 0, 1, 1], [], []>} : vector<2x400xf32>, vector<400x8xf32>, vector<2x8xf32> -> vector<2x8xf32>
    %cst_56 = arith.constant 0.00999999977 : f32
    %89 = vector.broadcast %cst_56 : f32 to vector<2x8xf32>
    %90 = arith.mulf %88, %89 : vector<2x8xf32>
    %91 = arith.mulf %86, %86 : vector<2x8xf32>
    %92 = arith.subf %90, %91 : vector<2x8xf32>
    %cst_57 = arith.constant 9.99999974E-6 : f32
    %93 = vector.broadcast %cst_57 : f32 to vector<2x8xf32>
    %94 = arith.addf %92, %93 : vector<2x8xf32>
    %95 = math.rsqrt %94 : vector<2x8xf32>
    %c0_58 = arith.constant 0 : index
    %c0_59 = arith.constant 0 : index
    %96 = vector.load %arg11[%c0_58, %c0_59] : memref<8x400xf32, #tpu.memory_space<vmem>>, vector<8x400xf32>
    %cst_60 = arith.constant dense<0.000000e+00> : vector<2x400xf32>
    %97 = tpu.matmul %86, %96, %cst_60 {dimension_numbers = #tpu.dot_dimension_numbers<[1], [0], [0], [1], [0, 0, 1, 1], [], []>} : vector<2x8xf32>, vector<8x400xf32>, vector<2x400xf32> -> vector<2x400xf32>
    %cst_61 = arith.constant dense<0.000000e+00> : vector<2x400xf32>
    %98 = tpu.matmul %95, %96, %cst_61 {dimension_numbers = #tpu.dot_dimension_numbers<[1], [0], [0], [1], [0, 0, 1, 1], [], []>} : vector<2x8xf32>, vector<8x400xf32>, vector<2x400xf32> -> vector<2x400xf32>
    %99 = arith.subf %82, %97 : vector<2x400xf32>
    %100 = arith.mulf %99, %98 : vector<2x400xf32>
    %c0_62 = arith.constant 0 : index
    %c0_63 = arith.constant 0 : index
    %101 = vector.load %arg18[%c0_62, %c0_63] : memref<1x400xf32, #tpu.memory_space<vmem>>, vector<1x400xf32>
    %102 = vector.broadcast %101 : vector<1x400xf32> to vector<2x400xf32>
    %103 = arith.mulf %100, %102 : vector<2x400xf32>
    %c0_64 = arith.constant 0 : index
    %c0_65 = arith.constant 0 : index
    %104 = vector.load %arg19[%c0_64, %c0_65] : memref<1x400xf32, #tpu.memory_space<vmem>>, vector<1x400xf32>
    %105 = vector.broadcast %104 : vector<1x400xf32> to vector<2x400xf32>
    %106 = arith.addf %103, %105 : vector<2x400xf32>
    %cst_66 = arith.constant 0.000000e+00 : f32
    %107 = vector.broadcast %cst_66 : f32 to vector<2x400xf32>
    %108 = arith.cmpf ogt, %106, %107 : vector<2x400xf32>
    %cst_67 = arith.constant 0.000000e+00 : f32
    %109 = vector.broadcast %cst_67 : f32 to vector<2x400xf32>
    %110 = arith.minimumf %106, %109 : vector<2x400xf32>
    %111 = math.exp %110 : vector<2x400xf32>
    %cst_68 = arith.constant 1.000000e+00 : f32
    %112 = vector.broadcast %cst_68 : f32 to vector<2x400xf32>
    %113 = arith.subf %111, %112 : vector<2x400xf32>
    %114 = arith.select %108, %106, %113 : vector<2x400xi1>, vector<2x400xf32>
    %115 = arith.truncf %114 : vector<2x400xf32> to vector<2x400xbf16>
    %c0_69 = arith.constant 0 : index
    %c0_70 = arith.constant 0 : index
    %116 = vector.load %arg8[%c0_69, %c0_70] : memref<400x300xbf16, #tpu.memory_space<vmem>>, vector<400x300xbf16>
    %cst_71 = arith.constant dense<0.000000e+00> : vector<2x300xf32>
    %117 = tpu.matmul %115, %116, %cst_71 {dimension_numbers = #tpu.dot_dimension_numbers<[1], [0], [0], [1], [0, 0, 1, 1], [], []>} : vector<2x400xbf16>, vector<400x300xbf16>, vector<2x300xf32> -> vector<2x300xf32>
    %c0_72 = arith.constant 0 : index
    %c0_73 = arith.constant 0 : index
    %118 = vector.load %arg9[%c0_72, %c0_73] : memref<1x300xf32, #tpu.memory_space<vmem>>, vector<1x300xf32>
    %119 = vector.broadcast %118 : vector<1x300xf32> to vector<2x300xf32>
    %120 = arith.addf %117, %119 : vector<2x300xf32>
    %cst_74 = arith.constant 0.000000e+00 : f32
    %121 = vector.broadcast %cst_74 : f32 to vector<2x300xf32>
    %122 = arith.cmpf ogt, %120, %121 : vector<2x300xf32>
    %cst_75 = arith.constant 0.000000e+00 : f32
    %123 = vector.broadcast %cst_75 : f32 to vector<2x300xf32>
    %124 = arith.minimumf %120, %123 : vector<2x300xf32>
    %125 = math.exp %124 : vector<2x300xf32>
    %cst_76 = arith.constant 1.000000e+00 : f32
    %126 = vector.broadcast %cst_76 : f32 to vector<2x300xf32>
    %127 = arith.subf %125, %126 : vector<2x300xf32>
    %128 = arith.select %122, %120, %127 : vector<2x300xi1>, vector<2x300xf32>
    %129 = arith.truncf %128 : vector<2x300xf32> to vector<2x300xbf16>
    %c0_77 = arith.constant 0 : index
    %c0_78 = arith.constant 0 : index
    %130 = vector.load %arg20[%c0_77, %c0_78] : memref<300x256xbf16, #tpu.memory_space<vmem>>, vector<300x256xbf16>
    %cst_79 = arith.constant dense<0.000000e+00> : vector<2x256xf32>
    %131 = tpu.matmul %129, %130, %cst_79 {dimension_numbers = #tpu.dot_dimension_numbers<[1], [0], [0], [1], [0, 0, 1, 1], [], []>} : vector<2x300xbf16>, vector<300x256xbf16>, vector<2x256xf32> -> vector<2x256xf32>
    %c0_80 = arith.constant 0 : index
    %c0_81 = arith.constant 0 : index
    %132 = vector.load %arg21[%c0_80, %c0_81] : memref<1x256xf32, #tpu.memory_space<vmem>>, vector<1x256xf32>
    %133 = vector.broadcast %132 : vector<1x256xf32> to vector<2x256xf32>
    %134 = arith.addf %131, %133 : vector<2x256xf32>
    %cst_82 = arith.constant dense<0.000000e+00> : vector<2xf32>
    %135 = vector.multi_reduction <add>, %134, %cst_82 [1] : vector<2x256xf32> to vector<2xf32>
    %136 = vector.shape_cast %135 : vector<2xf32> to vector<2x1xf32>
    %cst_83 = arith.constant 2.560000e+02 : f32
    %137 = vector.broadcast %cst_83 : f32 to vector<2x1xf32>
    %138 = arith.divf %136, %137 : vector<2x1xf32>
    %139 = vector.broadcast %138 : vector<2x1xf32> to vector<2x256xf32>
    %140 = arith.subf %134, %139 : vector<2x256xf32>
    %141 = arith.mulf %140, %140 : vector<2x256xf32>
    %cst_84 = arith.constant dense<0.000000e+00> : vector<2xf32>
    %142 = vector.multi_reduction <add>, %141, %cst_84 [1] : vector<2x256xf32> to vector<2xf32>
    %143 = vector.shape_cast %142 : vector<2xf32> to vector<2x1xf32>
    %cst_85 = arith.constant 2.560000e+02 : f32
    %144 = vector.broadcast %cst_85 : f32 to vector<2x1xf32>
    %145 = arith.divf %143, %144 : vector<2x1xf32>
    %146 = vector.broadcast %138 : vector<2x1xf32> to vector<2x256xf32>
    %147 = arith.subf %134, %146 : vector<2x256xf32>
    %cst_86 = arith.constant 9.99999974E-6 : f32
    %148 = vector.broadcast %cst_86 : f32 to vector<2x1xf32>
    %149 = arith.addf %145, %148 : vector<2x1xf32>
    %150 = math.rsqrt %149 : vector<2x1xf32>
    %151 = vector.broadcast %150 : vector<2x1xf32> to vector<2x256xf32>
    %152 = arith.mulf %147, %151 : vector<2x256xf32>
    %c0_87 = arith.constant 0 : index
    %c0_88 = arith.constant 0 : index
    %153 = vector.load %arg22[%c0_87, %c0_88] : memref<1x256xf32, #tpu.memory_space<vmem>>, vector<1x256xf32>
    %154 = vector.broadcast %153 : vector<1x256xf32> to vector<2x256xf32>
    %155 = arith.mulf %152, %154 : vector<2x256xf32>
    %c0_89 = arith.constant 0 : index
    %c0_90 = arith.constant 0 : index
    %156 = vector.load %arg23[%c0_89, %c0_90] : memref<1x256xf32, #tpu.memory_space<vmem>>, vector<1x256xf32>
    %157 = vector.broadcast %156 : vector<1x256xf32> to vector<2x256xf32>
    %158 = arith.addf %155, %157 : vector<2x256xf32>
    %cst_91 = arith.constant 0.000000e+00 : f32
    %159 = vector.broadcast %cst_91 : f32 to vector<2x256xf32>
    %160 = arith.cmpf ogt, %158, %159 : vector<2x256xf32>
    %cst_92 = arith.constant 0.000000e+00 : f32
    %161 = vector.broadcast %cst_92 : f32 to vector<2x256xf32>
    %162 = arith.minimumf %158, %161 : vector<2x256xf32>
    %163 = math.exp %162 : vector<2x256xf32>
    %cst_93 = arith.constant 1.000000e+00 : f32
    %164 = vector.broadcast %cst_93 : f32 to vector<2x256xf32>
    %165 = arith.subf %163, %164 : vector<2x256xf32>
    %166 = arith.select %160, %158, %165 : vector<2x256xi1>, vector<2x256xf32>
    %167 = arith.truncf %166 : vector<2x256xf32> to vector<2x256xbf16>
    %c0_94 = arith.constant 0 : index
    %c0_95 = arith.constant 0 : index
    %168 = vector.load %arg24[%c0_94, %c0_95] : memref<256x300xbf16, #tpu.memory_space<vmem>>, vector<256x300xbf16>
    %cst_96 = arith.constant dense<0.000000e+00> : vector<2x300xf32>
    %169 = tpu.matmul %167, %168, %cst_96 {dimension_numbers = #tpu.dot_dimension_numbers<[1], [0], [0], [1], [0, 0, 1, 1], [], []>} : vector<2x256xbf16>, vector<256x300xbf16>, vector<2x300xf32> -> vector<2x300xf32>
    %c0_97 = arith.constant 0 : index
    %c0_98 = arith.constant 0 : index
    %170 = vector.load %arg25[%c0_97, %c0_98] : memref<1x300xf32, #tpu.memory_space<vmem>>, vector<1x300xf32>
    %171 = vector.broadcast %170 : vector<1x300xf32> to vector<2x300xf32>
    %172 = arith.addf %169, %171 : vector<2x300xf32>
    %c0_99 = arith.constant 0 : index
    %c0_100 = arith.constant 0 : index
    %173 = vector.load %arg26[%c0_99, %c0_100] : memref<2x300xf32, #tpu.memory_space<vmem>>, vector<2x300xf32>
    tpu.vector_store %arg26[%c0_99, %c0_100], %172 {strides = array<i32>} : memref<2x300xf32, #tpu.memory_space<vmem>>, vector<2x300xf32>,
    return
  }
  func.func @transform_0(%arg0: i32) -> (i32, i32) {
    %c0_i32 = arith.constant 0 : i32
    %c0_i32_0 = arith.constant 0 : i32
    return %arg0, %c0_i32 : i32, i32
  }
  func.func @transform_1(%arg0: i32) -> (i32, i32) {
    %c0_i32 = arith.constant 0 : i32
    %c0_i32_0 = arith.constant 0 : i32
    %c0_i32_1 = arith.constant 0 : i32
    return %c0_i32, %c0_i32_0 : i32, i32
  }
  func.func @transform_2(%arg0: i32) -> (i32, i32) {
    %c0_i32 = arith.constant 0 : i32
    %c0_i32_0 = arith.constant 0 : i32
    %c0_i32_1 = arith.constant 0 : i32
    return %c0_i32, %c0_i32_0 : i32, i32
  }
  func.func @transform_3(%arg0: i32) -> (i32, i32) {
    %c0_i32 = arith.constant 0 : i32
    %c0_i32_0 = arith.constant 0 : i32
    %c0_i32_1 = arith.constant 0 : i32
    return %c0_i32, %c0_i32_0 : i32, i32
  }
  func.func @transform_4(%arg0: i32) -> (i32, i32) {
    %c0_i32 = arith.constant 0 : i32
    %c0_i32_0 = arith.constant 0 : i32
    %c0_i32_1 = arith.constant 0 : i32
    return %c0_i32, %c0_i32_0 : i32, i32
  }
  func.func @transform_5(%arg0: i32) -> (i32, i32) {
    %c0_i32 = arith.constant 0 : i32
    %c0_i32_0 = arith.constant 0 : i32
    %c0_i32_1 = arith.constant 0 : i32
    return %c0_i32, %c0_i32_0 : i32, i32
  }
  func.func @transform_6(%arg0: i32) -> (i32, i32) {
    %c0_i32 = arith.constant 0 : i32
    %c0_i32_0 = arith.constant 0 : i32
    %c0_i32_1 = arith.constant 0 : i32
    return %c0_i32, %c0_i32_0 : i32, i32
  }
  func.func @transform_7(%arg0: i32) -> (i32, i32) {
    %c0_i32 = arith.constant 0 : i32
    %c0_i32_0 = arith.constant 0 : i32
    %c0_i32_1 = arith.constant 0 : i32
    return %c0_i32, %c0_i32_0 : i32, i32
  }
  func.func @transform_8(%arg0: i32) -> (i32, i32) {
    %c0_i32 = arith.constant 0 : i32
    %c0_i32_0 = arith.constant 0 : i32
    %c0_i32_1 = arith.constant 0 : i32
    return %c0_i32, %c0_i32_0 : i32, i32
  }
  func.func @transform_9(%arg0: i32) -> (i32, i32) {
    %c0_i32 = arith.constant 0 : i32
    %c0_i32_0 = arith.constant 0 : i32
    %c0_i32_1 = arith.constant 0 : i32
    return %c0_i32, %c0_i32_0 : i32, i32
  }
  func.func @transform_10(%arg0: i32) -> (i32, i32) {
    %c0_i32 = arith.constant 0 : i32
    %c0_i32_0 = arith.constant 0 : i32
    %c0_i32_1 = arith.constant 0 : i32
    return %c0_i32, %c0_i32_0 : i32, i32
  }
  func.func @transform_11(%arg0: i32) -> (i32, i32) {
    %c0_i32 = arith.constant 0 : i32
    %c0_i32_0 = arith.constant 0 : i32
    %c0_i32_1 = arith.constant 0 : i32
    return %c0_i32, %c0_i32_0 : i32, i32
  }
  func.func @transform_12(%arg0: i32) -> (i32, i32) {
    %c0_i32 = arith.constant 0 : i32
    %c0_i32_0 = arith.constant 0 : i32
    %c0_i32_1 = arith.constant 0 : i32
    return %c0_i32, %c0_i32_0 : i32, i32
  }
  func.func @transform_13(%arg0: i32) -> (i32, i32) {
    %c0_i32 = arith.constant 0 : i32
    %c0_i32_0 = arith.constant 0 : i32
    %c0_i32_1 = arith.constant 0 : i32
    return %c0_i32, %c0_i32_0 : i32, i32
  }
  func.func @transform_14(%arg0: i32) -> (i32, i32) {
    %c0_i32 = arith.constant 0 : i32
    %c0_i32_0 = arith.constant 0 : i32
    %c0_i32_1 = arith.constant 0 : i32
    return %c0_i32, %c0_i32_0 : i32, i32
  }
  func.func @transform_15(%arg0: i32) -> (i32, i32) {
    %c0_i32 = arith.constant 0 : i32
    %c0_i32_0 = arith.constant 0 : i32
    %c0_i32_1 = arith.constant 0 : i32
    return %c0_i32, %c0_i32_0 : i32, i32
  }
  func.func @transform_16(%arg0: i32) -> (i32, i32) {
    %c0_i32 = arith.constant 0 : i32
    %c0_i32_0 = arith.constant 0 : i32
    %c0_i32_1 = arith.constant 0 : i32
    return %c0_i32, %c0_i32_0 : i32, i32
  }
  func.func @transform_17(%arg0: i32) -> (i32, i32) {
    %c0_i32 = arith.constant 0 : i32
    %c0_i32_0 = arith.constant 0 : i32
    %c0_i32_1 = arith.constant 0 : i32
    return %c0_i32, %c0_i32_0 : i32, i32
  }
  func.func @transform_18(%arg0: i32) -> (i32, i32) {
    %c0_i32 = arith.constant 0 : i32
    %c0_i32_0 = arith.constant 0 : i32
    %c0_i32_1 = arith.constant 0 : i32
    return %c0_i32, %c0_i32_0 : i32, i32
  }
  func.func @transform_19(%arg0: i32) -> (i32, i32) {
    %c0_i32 = arith.constant 0 : i32
    %c0_i32_0 = arith.constant 0 : i32
    %c0_i32_1 = arith.constant 0 : i32
    return %c0_i32, %c0_i32_0 : i32, i32
  }
  func.func @transform_20(%arg0: i32) -> (i32, i32) {
    %c0_i32 = arith.constant 0 : i32
    %c0_i32_0 = arith.constant 0 : i32
    %c0_i32_1 = arith.constant 0 : i32
    return %c0_i32, %c0_i32_0 : i32, i32
  }
  func.func @transform_21(%arg0: i32) -> (i32, i32) {
    %c0_i32 = arith.constant 0 : i32
    %c0_i32_0 = arith.constant 0 : i32
    %c0_i32_1 = arith.constant 0 : i32
    return %c0_i32, %c0_i32_0 : i32, i32
  }
  func.func @transform_22(%arg0: i32) -> (i32, i32) {
    %c0_i32 = arith.constant 0 : i32
    %c0_i32_0 = arith.constant 0 : i32
    %c0_i32_1 = arith.constant 0 : i32
    return %c0_i32, %c0_i32_0 : i32, i32
  }
  func.func @transform_23(%arg0: i32) -> (i32, i32) {
    %c0_i32 = arith.constant 0 : i32
    %c0_i32_0 = arith.constant 0 : i32
    %c0_i32_1 = arith.constant 0 : i32
    return %c0_i32, %c0_i32_0 : i32, i32
  }
  func.func @transform_24(%arg0: i32) -> (i32, i32) {
    %c0_i32 = arith.constant 0 : i32
    %c0_i32_0 = arith.constant 0 : i32
    %c0_i32_1 = arith.constant 0 : i32
    return %c0_i32, %c0_i32_0 : i32, i32
  }
  func.func @transform_25(%arg0: i32) -> (i32, i32) {
    %c0_i32 = arith.constant 0 : i32
    %c0_i32_0 = arith.constant 0 : i32
    return %arg0, %c0_i32 : i32, i32
  }
}

</mosaic_0001>

<llo_original>
// kernel: small_score_forward.1
$region0: #{small_score_forward.1}
  #allocation0 [shape = 'u32[]', space=smem, size = 0x4, offset = 0x4, fixed_abs, tag = 'smem constant byte address 0x4 - core index']
  #allocation1 [shape = 'u32[144,128]{1,0:T(1,128)}', space=vmem, size = 0x12000, scoped, tag = 'internal scratch']
  %s0 = inlined_call_operand.vmem [shape: f32[2,300], index: 0, kind: input, shape index: {}]
  %s1 = inlined_call_operand.vmem [shape: bf16[300,400], index: 1, kind: input, shape index: {}]
  %s2 = inlined_call_operand.vmem [shape: f32[1,400], index: 2, kind: input, shape index: {}]
  %s3 = inlined_call_operand.vmem [shape: bf16[400,800], index: 3, kind: input, shape index: {}]
  %s4 = inlined_call_operand.vmem [shape: f32[1,800], index: 4, kind: input, shape index: {}]
  %s5 = inlined_call_operand.vmem [shape: bf16[800,400], index: 5, kind: input, shape index: {}]
  %s6 = inlined_call_operand.vmem [shape: f32[1,400], index: 6, kind: input, shape index: {}]
  %s7 = inlined_call_operand.vmem [shape: bf16[400,300], index: 7, kind: input, shape index: {}]
  %s8 = inlined_call_operand.vmem [shape: f32[1,300], index: 8, kind: input, shape index: {}]
  %s9 = inlined_call_operand.vmem [shape: f32[400,8], index: 9, kind: input, shape index: {}]
  %s10 = inlined_call_operand.vmem [shape: f32[8,400], index: 10, kind: input, shape index: {}]
  %s11 = inlined_call_operand.vmem [shape: f32[800,8], index: 11, kind: input, shape index: {}]
  %s12 = inlined_call_operand.vmem [shape: f32[8,800], index: 12, kind: input, shape index: {}]
  %s13 = inlined_call_operand.vmem [shape: f32[1,400], index: 13, kind: input, shape index: {}]
  %s14 = inlined_call_operand.vmem [shape: f32[1,400], index: 14, kind: input, shape index: {}]
  %s15 = inlined_call_operand.vmem [shape: f32[1,800], index: 15, kind: input, shape index: {}]
  %s16 = inlined_call_operand.vmem [shape: f32[1,800], index: 16, kind: input, shape index: {}]
  %s17 = inlined_call_operand.vmem [shape: f32[1,400], index: 17, kind: input, shape index: {}]
  %s18 = inlined_call_operand.vmem [shape: f32[1,400], index: 18, kind: input, shape index: {}]
  %s19 = inlined_call_operand.vmem [shape: bf16[300,256], index: 19, kind: input, shape index: {}]
  %s20 = inlined_call_operand.vmem [shape: f32[1,256], index: 20, kind: input, shape index: {}]
  %s21 = inlined_call_operand.vmem [shape: f32[1,256], index: 21, kind: input, shape index: {}]
  %s22 = inlined_call_operand.vmem [shape: f32[1,256], index: 22, kind: input, shape index: {}]
  %s23 = inlined_call_operand.vmem [shape: bf16[256,300], index: 23, kind: input, shape index: {}]
  %s24 = inlined_call_operand.vmem [shape: f32[1,300], index: 24, kind: input, shape index: {}]
  %s25 = inlined_call_operand.vmem [shape: f32[2,300], index: 25, kind: output, shape index: {}]
  %s26 = sld [smem:[#allocation0]]
  $region110: #{small_score_forward.1} parent=0
    _
  %s28 = ssub.s32 1, %s26
  %s29 = scalar_select 0, %s28, %s26
  // Predicated region
  $region2: #{small_score_forward.1} parent=0 // pred_check
    _
  $region3: #{small_score_forward.1} parent=0 // pred_check_branch
    %31 = sbr.rel (0) target = $region5
  $region4: #{small_score_forward.1} parent=0 // pred_region
    _
  $region5: #{small_score_forward.1} parent=0 // pred_fallthru
    _
  // Predicated region
  $region6: #{small_score_forward.1} parent=0 // pred_check
    _
  $region7: #{small_score_forward.1} parent=0 // pred_check_branch
    %33 = sbr.rel (0) target = $region9
  $region8: #{small_score_forward.1} parent=0 // pred_region
    _
  $region9: #{small_score_forward.1} parent=0 // pred_fallthru
    _
  // Predicated region
  $region10: #{small_score_forward.1} parent=0 // pred_check
    _
  $region11: #{small_score_forward.1} parent=0 // pred_check_branch
    %35 = sbr.rel (0) target = $region13
  $region12: #{small_score_forward.1} parent=0 // pred_region
    _
  $region13: #{small_score_forward.1} parent=0 // pred_fallthru
    _
  // Predicated region
  $region14: #{small_score_forward.1} parent=0 // pred_check
    _
  $region15: #{small_score_forward.1} parent=0 // pred_check_branch
    %37 = sbr.rel (0) target = $region17
  $region16: #{small_score_forward.1} parent=0 // pred_region
    _
  $region17: #{small_score_forward.1} parent=0 // pred_fallthru
    _
  // Predicated region
  $region18: #{small_score_forward.1} parent=0 // pred_check
    _
  $region19: #{small_score_forward.1} parent=0 // pred_check_branch
    %39 = sbr.rel (0) target = $region21
  $region20: #{small_score_forward.1} parent=0 // pred_region
    _
  $region21: #{small_score_forward.1} parent=0 // pred_fallthru
    _
  // Predicated region
  $region22: #{small_score_forward.1} parent=0 // pred_check
    _
  $region23: #{small_score_forward.1} parent=0 // pred_check_branch
    %41 = sbr.rel (0) target = $region25
  $region24: #{small_score_forward.1} parent=0 // pred_region
    _
  $region25: #{small_score_forward.1} parent=0 // pred_fallthru
    _
  // Predicated region
  $region26: #{small_score_forward.1} parent=0 // pred_check
    _
  $region27: #{small_score_forward.1} parent=0 // pred_check_branch
    %43 = sbr.rel (0) target = $region29
  $region28: #{small_score_forward.1} parent=0 // pred_region
    _
  $region29: #{small_score_forward.1} parent=0 // pred_fallthru
    _
  // Predicated region
  $region30: #{small_score_forward.1} parent=0 // pred_check
    _
  $region31: #{small_score_forward.1} parent=0 // pred_check_branch
    %45 = sbr.rel (0) target = $region33
  $region32: #{small_score_forward.1} parent=0 // pred_region
    _
  $region33: #{small_score_forward.1} parent=0 // pred_fallthru
    _
  // Predicated region
  $region34: #{small_score_forward.1} parent=0 // pred_check
    _
  $region35: #{small_score_forward.1} parent=0 // pred_check_branch
    %47 = sbr.rel (0) target = $region37
  $region36: #{small_score_forward.1} parent=0 // pred_region
    _
  $region37: #{small_score_forward.1} parent=0 // pred_fallthru
    _
  // Predicated region
  $region38: #{small_score_forward.1} parent=0 // pred_check
    _
  $region39: #{small_score_forward.1} parent=0 // pred_check_branch
    %49 = sbr.rel (0) target = $region41
  $region40: #{small_score_forward.1} parent=0 // pred_region
    _
  $region41: #{small_score_forward.1} parent=0 // pred_fallthru
    _
  // Predicated region
  $region42: #{small_score_forward.1} parent=0 // pred_check
    _
  $region43: #{small_score_forward.1} parent=0 // pred_check_branch
    %51 = sbr.rel (0) target = $region45
  $region44: #{small_score_forward.1} parent=0 // pred_region
    _
  $region45: #{small_score_forward.1} parent=0 // pred_fallthru
    _
  // Predicated region
  $region46: #{small_score_forward.1} parent=0 // pred_check
    _
  $region47: #{small_score_forward.1} parent=0 // pred_check_branch
    %53 = sbr.rel (0) target = $region49
  $region48: #{small_score_forward.1} parent=0 // pred_region
    _
  $region49: #{small_score_forward.1} parent=0 // pred_fallthru
    _
  // Predicated region
  $region50: #{small_score_forward.1} parent=0 // pred_check
    _
  $region51: #{small_score_forward.1} parent=0 // pred_check_branch
    %55 = sbr.rel (0) target = $region53
  $region52: #{small_score_forward.1} parent=0 // pred_region
    _
  $region53: #{small_score_forward.1} parent=0 // pred_fallthru
    _
  // Predicated region
  $region54: #{small_score_forward.1} parent=0 // pred_check
    _
  $region55: #{small_score_forward.1} parent=0 // pred_check_branch
    %57 = sbr.rel (0) target = $region57
  $region56: #{small_score_forward.1} parent=0 // pred_region
    _
  $region57: #{small_score_forward.1} parent=0 // pred_fallthru
    _
  // Predicated region
  $region58: #{small_score_forward.1} parent=0 // pred_check
    _
  $region59: #{small_score_forward.1} parent=0 // pred_check_branch
    %59 = sbr.rel (0) target = $region61
  $region60: #{small_score_forward.1} parent=0 // pred_region
    _
  $region61: #{small_score_forward.1} parent=0 // pred_fallthru
    _
  // Predicated region
  $region62: #{small_score_forward.1} parent=0 // pred_check
    _
  $region63: #{small_score_forward.1} parent=0 // pred_check_branch
    %61 = sbr.rel (0) target = $region65
  $region64: #{small_score_forward.1} parent=0 // pred_region
    _
  $region65: #{small_score_forward.1} parent=0 // pred_fallthru
    _
  // Predicated region
  $region66: #{small_score_forward.1} parent=0 // pred_check
    _
  $region67: #{small_score_forward.1} parent=0 // pred_check_branch
    %63 = sbr.rel (0) target = $region69
  $region68: #{small_score_forward.1} parent=0 // pred_region
    _
  $region69: #{small_score_forward.1} parent=0 // pred_fallthru
    _
  // Predicated region
  $region70: #{small_score_forward.1} parent=0 // pred_check
    _
  $region71: #{small_score_forward.1} parent=0 // pred_check_branch
    %65 = sbr.rel (0) target = $region73
  $region72: #{small_score_forward.1} parent=0 // pred_region
    _
  $region73: #{small_score_forward.1} parent=0 // pred_fallthru
    _
  // Predicated region
  $region74: #{small_score_forward.1} parent=0 // pred_check
    _
  $region75: #{small_score_forward.1} parent=0 // pred_check_branch
    %67 = sbr.rel (0) target = $region77
  $region76: #{small_score_forward.1} parent=0 // pred_region
    _
  $region77: #{small_score_forward.1} parent=0 // pred_fallthru
    _
  // Predicated region
  $region78: #{small_score_forward.1} parent=0 // pred_check
    _
  $region79: #{small_score_forward.1} parent=0 // pred_check_branch
    %69 = sbr.rel (0) target = $region81
  $region80: #{small_score_forward.1} parent=0 // pred_region
    _
  $region81: #{small_score_forward.1} parent=0 // pred_fallthru
    _
  // Predicated region
  $region82: #{small_score_forward.1} parent=0 // pred_check
    _
  $region83: #{small_score_forward.1} parent=0 // pred_check_branch
    %71 = sbr.rel (0) target = $region85
  $region84: #{small_score_forward.1} parent=0 // pred_region
    _
  $region85: #{small_score_forward.1} parent=0 // pred_fallthru
    _
  // Predicated region
  $region86: #{small_score_forward.1} parent=0 // pred_check
    _
  $region87: #{small_score_forward.1} parent=0 // pred_check_branch
    %73 = sbr.rel (0) target = $region89
  $region88: #{small_score_forward.1} parent=0 // pred_region
    _
  $region89: #{small_score_forward.1} parent=0 // pred_fallthru
    _
  // Predicated region
  $region90: #{small_score_forward.1} parent=0 // pred_check
    _
  $region91: #{small_score_forward.1} parent=0 // pred_check_branch
    %75 = sbr.rel (0) target = $region93
  $region92: #{small_score_forward.1} parent=0 // pred_region
    _
  $region93: #{small_score_forward.1} parent=0 // pred_fallthru
    _
  // Predicated region
  $region94: #{small_score_forward.1} parent=0 // pred_check
    _
  $region95: #{small_score_forward.1} parent=0 // pred_check_branch
    %77 = sbr.rel (0) target = $region97
  $region96: #{small_score_forward.1} parent=0 // pred_region
    _
  $region97: #{small_score_forward.1} parent=0 // pred_fallthru
    _
  // Predicated region
  $region98: #{small_score_forward.1} parent=0 // pred_check
    _
  $region99: #{small_score_forward.1} parent=0 // pred_check_branch
    %79 = sbr.rel (0) target = $region101
  $region100: #{small_score_forward.1} parent=0 // pred_region
    _
  $region101: #{small_score_forward.1} parent=0 // pred_fallthru
    _
  %v81 = vld [vmem:[%s0] sm:$0x3f]
  %v83 = vcombine.high %v81, %v81
  %v85 = vunpack.c.l.s4 1983009808
  %v86 = vunpack.c.0.s8 %v85
  %v87 = vlaneseq
  %v88 = vshrl.u32 %v87, 7
  %v89 = vsub.s32 %v86, %v88
  %v90 = vrot.slane %v81, %v89
  %v92 = vunpack.c.l.s4 1983009808
  %v93 = vunpack.c.0.s8 %v92
  %v94 = vlaneseq
  %v95 = vshrl.u32 %v94, 7
  %v96 = vsub.s32 %v93, %v95
  %v97 = vrot.slane %v83, %v96
  %v98 = vcombine.high %v90, %v90
  %v102 = vpack.c.bf16 %v90, %v90
  %v103 = vpack.c.bf16 %v98, %v98
  %v104 = vpack.c.bf16 %v97, %v97
  %v105 = vld [vmem:[%s1] sm:$0xff]
  %v106 = vld [vmem:[%s1 + $0x8] sm:$0xff]
  %v107 = vld [vmem:[%s1 + $0x10] sm:$0xff]
  %v108 = vld [vmem:[%s1 + $0x18] sm:$0xff]
  %v109 = vld [vmem:[%s1 + $0x20] sm:$0xff]
  %v110 = vld [vmem:[%s1 + $0x28] sm:$0xff]
  %v111 = vld [vmem:[%s1 + $0x30] sm:$0xff]
  %v112 = vld [vmem:[%s1 + $0x38] sm:$0xff]
  %v113 = vld [vmem:[%s1 + $0x40] sm:$0xff]
  %v114 = vld [vmem:[%s1 + $0x48] sm:$0xff]
  %v115 = vld [vmem:[%s1 + $0x50] sm:$0xff]
  %v116 = vld [vmem:[%s1 + $0x58] sm:$0xff]
  %v117 = vld [vmem:[%s1 + $0x60] sm:$0xff]
  %v118 = vld [vmem:[%s1 + $0x68] sm:$0xff]
  %v119 = vld [vmem:[%s1 + $0x70] sm:$0xff]
  %v120 = vld [vmem:[%s1 + $0x78] sm:$0xff]
  %v121 = vld [vmem:[%s1 + $0x80] sm:$0xff]
  %v122 = vld [vmem:[%s1 + $0x88] sm:$0xff]
  %v123 = vld [vmem:[%s1 + $0x90] sm:$0xff]
  %v124 = vld [vmem:[%s1 + $0x98] sm:$0xff]
  %v125 = vld [vmem:[%s1 + $0xa0] sm:$0xff]
  %v126 = vld [vmem:[%s1 + $0xa8] sm:$0xff]
  %v127 = vld [vmem:[%s1 + $0xb0] sm:$0xff]
  %v128 = vld [vmem:[%s1 + $0xb8] sm:$0xff]
  %v129 = vld [vmem:[%s1 + $0xc0] sm:$0xff]
  %v130 = vld [vmem:[%s1 + $0xc8] sm:$0xff]
  %v131 = vld [vmem:[%s1 + $0xd0] sm:$0xff]
  %v132 = vld [vmem:[%s1 + $0xd8] sm:$0xff]
  %v133 = vld [vmem:[%s1 + $0xe0] sm:$0xff]
  %v134 = vld [vmem:[%s1 + $0xe8] sm:$0xff]
  %v135 = vld [vmem:[%s1 + $0xf0] sm:$0xff]
  %v136 = vld [vmem:[%s1 + $0xf8] sm:$0xff]
  %v137 = vld [vmem:[%s1 + $0x100] sm:$0xff]
  %v138 = vld [vmem:[%s1 + $0x108] sm:$0xff]
  %v139 = vld [vmem:[%s1 + $0x110] sm:$0xff]
  %v140 = vld [vmem:[%s1 + $0x118] sm:$0xff]
  %v141 = vld [vmem:[%s1 + $0x120] sm:$0xff]
  %v142 = vld [vmem:[%s1 + $0x128] sm:$0xff]
  %v143 = vld [vmem:[%s1 + $0x130] sm:$0xff]
  %v144 = vld [vmem:[%s1 + $0x138] sm:$0xff]
  %v145 = vld [vmem:[%s1 + $0x140] sm:$0xff]
  %v146 = vld [vmem:[%s1 + $0x148] sm:$0xff]
  %v147 = vld [vmem:[%s1 + $0x150] sm:$0xff]
  %v148 = vld [vmem:[%s1 + $0x158] sm:$0xff]
  %v149 = vld [vmem:[%s1 + $0x160] sm:$0xff]
  %v150 = vld [vmem:[%s1 + $0x168] sm:$0xff]
  %v151 = vld [vmem:[%s1 + $0x170] sm:$0xff]
  %v152 = vld [vmem:[%s1 + $0x178] sm:$0xff]
  %v153 = vld [vmem:[%s1 + $0x180] sm:$0xff]
  %v154 = vld [vmem:[%s1 + $0x188] sm:$0xff]
  %v155 = vld [vmem:[%s1 + $0x190] sm:$0xff]
  %v156 = vld [vmem:[%s1 + $0x198] sm:$0xff]
  %v157 = vld [vmem:[%s1 + $0x1a0] sm:$0xff]
  %v158 = vld [vmem:[%s1 + $0x1a8] sm:$0xff]
  %v159 = vld [vmem:[%s1 + $0x1b0] sm:$0xff]
  %v160 = vld [vmem:[%s1 + $0x1b8] sm:$0xff]
  %v161 = vld [vmem:[%s1 + $0x1c0] sm:$0xff]
  %v162 = vld [vmem:[%s1 + $0x1c8] sm:$0xff]
  %v163 = vld [vmem:[%s1 + $0x1d0] sm:$0xff]
  %v164 = vld [vmem:[%s1 + $0x1d8] sm:$0xff]
  %v165 = vld [vmem:[%s1 + $0x1e0] sm:$0xff]
  %v166 = vld [vmem:[%s1 + $0x1e8] sm:$0xff]
  %v167 = vld [vmem:[%s1 + $0x1f0] sm:$0xff]
  %v168 = vld [vmem:[%s1 + $0x1f8] sm:$0xff]
  %v169 = vld [vmem:[%s1 + $0x200] sm:$0xff]
  %v170 = vld [vmem:[%s1 + $0x208] sm:$0xff]
  %v171 = vld [vmem:[%s1 + $0x210] sm:$0xff]
  %v172 = vld [vmem:[%s1 + $0x218] sm:$0xff]
  %v173 = vld [vmem:[%s1 + $0x220] sm:$0xff]
  %v174 = vld [vmem:[%s1 + $0x228] sm:$0xff]
  %v175 = vld [vmem:[%s1 + $0x230] sm:$0xff]
  %v176 = vld [vmem:[%s1 + $0x238] sm:$0xff]
  %v177 = vld [vmem:[%s1 + $0x240] sm:$0xff]
  %v178 = vld [vmem:[%s1 + $0x248] sm:$0xff]
  %v179 = vld [vmem:[%s1 + $0x250] sm:$0x33]
  %v180 = vld [vmem:[%s1 + $0x258] sm:$0x33]
  %v181 = vld [vmem:[%s2] sm:$0xf]
  %v183 = vlaneseq
  %v184 = vshrl.u32 %v183, 7
  %v185 = vsub.s32 0, %v184
  %v186 = vrot.slane %v181, %v185
  %v187 = vlaneseq
  %v188 = vshrl.u32 %v187, 7
  %v189 = vsub.s32 1, %v188
  %v190 = vrot.slane %v181, %v189
  %v191 = vlaneseq
  %v192 = vshrl.u32 %v191, 7
  %v193 = vsub.s32 2, %v192
  %v194 = vrot.slane %v181, %v193
  %v195 = vlaneseq
  %v196 = vshrl.u32 %v195, 7
  %v197 = vsub.s32 3, %v196
  %v198 = vrot.slane %v181, %v197
  %v279 = vunpack.c.l.b16 %v105
  %v280 = vunpack.c.h.b16 %v105
  %v281 = vunpack.c.l.b16 %v106
  %v282 = vunpack.c.h.b16 %v106
  %v283 = vunpack.c.l.b16 %v107
  %v284 = vunpack.c.h.b16 %v107
  %v285 = vunpack.c.l.b16 %v108
  %v286 = vunpack.c.h.b16 %v108
  %v287 = vunpack.c.l.b16 %v109
  %v288 = vunpack.c.h.b16 %v109
  %v289 = vunpack.c.l.b16 %v110
  %v290 = vunpack.c.h.b16 %v110
  %v291 = vunpack.c.l.b16 %v111
  %v292 = vunpack.c.h.b16 %v111
  %v293 = vunpack.c.l.b16 %v112
  %v294 = vunpack.c.h.b16 %v112
  %v295 = vunpack.c.l.b16 %v113
  %v296 = vunpack.c.h.b16 %v113
  %v297 = vunpack.c.l.b16 %v114
  %v298 = vunpack.c.h.b16 %v114
  %v299 = vunpack.c.l.b16 %v115
  %v300 = vunpack.c.h.b16 %v115
  %v301 = vunpack.c.l.b16 %v116
  %v302 = vunpack.c.h.b16 %v116
  %v303 = vunpack.c.l.b16 %v117
  %v304 = vunpack.c.h.b16 %v117
  %v305 = vunpack.c.l.b16 %v118
  %v306 = vunpack.c.h.b16 %v118
  %v307 = vunpack.c.l.b16 %v119
  %v308 = vunpack.c.h.b16 %v119
  %v309 = vunpack.c.l.b16 %v120
  %v310 = vunpack.c.h.b16 %v120
  %v311 = vunpack.c.l.b16 %v121
  %v312 = vunpack.c.h.b16 %v121
  %v313 = vunpack.c.l.b16 %v122
  %v314 = vunpack.c.h.b16 %v122
  %v315 = vunpack.c.l.b16 %v123
  %v316 = vunpack.c.h.b16 %v123
  %v317 = vunpack.c.l.b16 %v124
  %v318 = vunpack.c.h.b16 %v124
  %v319 = vunpack.c.l.b16 %v125
  %v320 = vunpack.c.h.b16 %v125
  %v321 = vunpack.c.l.b16 %v126
  %v322 = vunpack.c.h.b16 %v126
  %v323 = vunpack.c.l.b16 %v127
  %v324 = vunpack.c.h.b16 %v127
  %v325 = vunpack.c.l.b16 %v128
  %v326 = vunpack.c.h.b16 %v128
  %v327 = vunpack.c.l.b16 %v129
  %v328 = vunpack.c.h.b16 %v129
  %v329 = vunpack.c.l.b16 %v130
  %v330 = vunpack.c.h.b16 %v130
  %v331 = vunpack.c.l.b16 %v131
  %v332 = vunpack.c.h.b16 %v131
  %v333 = vunpack.c.l.b16 %v132
  %v334 = vunpack.c.h.b16 %v132
  %v335 = vunpack.c.l.b16 %v133
  %v336 = vunpack.c.h.b16 %v133
  %v337 = vunpack.c.l.b16 %v134
  %v338 = vunpack.c.h.b16 %v134
  %v339 = vunpack.c.l.b16 %v135
  %v340 = vunpack.c.h.b16 %v135
  %v341 = vunpack.c.l.b16 %v136
  %v342 = vunpack.c.h.b16 %v136
  %v343 = vunpack.c.l.b16 %v137
  %v344 = vunpack.c.h.b16 %v137
  %v345 = vunpack.c.l.b16 %v138
  %v346 = vunpack.c.h.b16 %v138
  %v347 = vunpack.c.l.b16 %v139
  %v348 = vunpack.c.h.b16 %v139
  %v349 = vunpack.c.l.b16 %v140
  %v350 = vunpack.c.h.b16 %v140
  %v351 = vunpack.c.l.b16 %v141
  %v352 = vunpack.c.h.b16 %v141
  %v353 = vunpack.c.l.b16 %v142
  %v354 = vunpack.c.h.b16 %v142
  %v355 = vunpack.c.l.b16 %v143
  %v356 = vunpack.c.h.b16 %v143
  %v357 = vunpack.c.l.b16 %v144
  %v358 = vunpack.c.h.b16 %v144
  %v359 = vunpack.c.l.b16 %v145
  %v360 = vunpack.c.h.b16 %v145
  %v361 = vunpack.c.l.b16 %v146
  %v362 = vunpack.c.h.b16 %v146
  %v363 = vunpack.c.l.b16 %v147
  %v364 = vunpack.c.h.b16 %v147
  %v365 = vunpack.c.l.b16 %v148
  %v366 = vunpack.c.h.b16 %v148
  %v367 = vunpack.c.l.b16 %v149
  %v368 = vunpack.c.h.b16 %v149
  %v369 = vunpack.c.l.b16 %v150
  %v370 = vunpack.c.h.b16 %v150
  %v371 = vunpack.c.l.b16 %v151
  %v372 = vunpack.c.h.b16 %v151
  %v373 = vunpack.c.l.b16 %v152
  %v374 = vunpack.c.h.b16 %v152
  %v375 = vunpack.c.l.b16 %v153
  %v376 = vunpack.c.h.b16 %v153
  %v377 = vunpack.c.l.b16 %v154
  %v378 = vunpack.c.h.b16 %v154
  %v379 = vunpack.c.l.b16 %v155
  %v380 = vunpack.c.h.b16 %v155
  %v381 = vunpack.c.l.b16 %v156
  %v382 = vunpack.c.h.b16 %v156
  %v383 = vunpack.c.l.b16 %v157
  %v384 = vunpack.c.h.b16 %v157
  %v385 = vunpack.c.l.b16 %v158
  %v386 = vunpack.c.h.b16 %v158
  %v387 = vunpack.c.l.b16 %v159
  %v388 = vunpack.c.h.b16 %v159
  %v389 = vunpack.c.l.b16 %v160
  %v390 = vunpack.c.h.b16 %v160
  %v391 = vunpack.c.l.b16 %v161
  %v392 = vunpack.c.h.b16 %v161
  %v393 = vunpack.c.l.b16 %v162
  %v394 = vunpack.c.h.b16 %v162
  %v395 = vunpack.c.l.b16 %v163
  %v396 = vunpack.c.h.b16 %v163
  %v397 = vunpack.c.l.b16 %v164
  %v398 = vunpack.c.h.b16 %v164
  %v399 = vunpack.c.l.b16 %v165
  %v400 = vunpack.c.h.b16 %v165
  %v401 = vunpack.c.l.b16 %v166
  %v402 = vunpack.c.h.b16 %v166
  %v403 = vunpack.c.l.b16 %v167
  %v404 = vunpack.c.h.b16 %v167
  %v405 = vunpack.c.l.b16 %v168
  %v406 = vunpack.c.h.b16 %v168
  %v407 = vunpack.c.l.b16 %v169
  %v408 = vunpack.c.h.b16 %v169
  %v409 = vunpack.c.l.b16 %v170
  %v410 = vunpack.c.h.b16 %v170
  %v411 = vunpack.c.l.b16 %v171
  %v412 = vunpack.c.h.b16 %v171
  %v413 = vunpack.c.l.b16 %v172
  %v414 = vunpack.c.h.b16 %v172
  %v415 = vunpack.c.l.b16 %v173
  %v416 = vunpack.c.h.b16 %v173
  %v417 = vunpack.c.l.b16 %v174
  %v418 = vunpack.c.h.b16 %v174
  %v419 = vunpack.c.l.b16 %v175
  %v420 = vunpack.c.h.b16 %v175
  %v421 = vunpack.c.l.b16 %v176
  %v422 = vunpack.c.h.b16 %v176
  %v423 = vunpack.c.l.b16 %v177
  %v424 = vunpack.c.h.b16 %v177
  %v425 = vunpack.c.l.b16 %v178
  %v426 = vunpack.c.h.b16 %v178
  %v427 = vunpack.c.l.b16 %v179
  %v428 = vunpack.c.h.b16 %v179
  %v429 = vunpack.c.l.b16 %v180
  %v430 = vunpack.c.h.b16 %v180
  %v431 = vpack.c.b16 %v283, %v279
  %v432 = vpack.c.b16 %v284, %v280
  %v433 = vpack.c.b16 %v285, %v281
  %v434 = vpack.c.b16 %v286, %v282
  %v435 = vpack.c.b16 %v291, %v287
  %v436 = vpack.c.b16 %v292, %v288
  %v437 = vpack.c.b16 %v293, %v289
  %v438 = vpack.c.b16 %v294, %v290
  %v439 = vpack.c.b16 %v299, %v295
  %v440 = vpack.c.b16 %v300, %v296
  %v441 = vpack.c.b16 %v301, %v297
  %v442 = vpack.c.b16 %v302, %v298
  %v443 = vpack.c.b16 %v307, %v303
  %v444 = vpack.c.b16 %v308, %v304
  %v445 = vpack.c.b16 %v309, %v305
  %v446 = vpack.c.b16 %v310, %v306
  %v447 = vpack.c.b16 %v315, %v311
  %v448 = vpack.c.b16 %v316, %v312
  %v449 = vpack.c.b16 %v317, %v313
  %v450 = vpack.c.b16 %v318, %v314
  %v451 = vpack.c.b16 %v323, %v319
  %v452 = vpack.c.b16 %v324, %v320
  %v453 = vpack.c.b16 %v325, %v321
  %v454 = vpack.c.b16 %v326, %v322
  %v455 = vpack.c.b16 %v331, %v327
  %v456 = vpack.c.b16 %v332, %v328
  %v457 = vpack.c.b16 %v333, %v329
  %v458 = vpack.c.b16 %v334, %v330
  %v459 = vpack.c.b16 %v339, %v335
  %v460 = vpack.c.b16 %v340, %v336
  %v461 = vpack.c.b16 %v341, %v337
  %v462 = vpack.c.b16 %v342, %v338
  %v463 = vpack.c.b16 %v347, %v343
  %v464 = vpack.c.b16 %v348, %v344
  %v465 = vpack.c.b16 %v349, %v345
  %v466 = vpack.c.b16 %v350, %v346
  %v467 = vpack.c.b16 %v355, %v351
  %v468 = vpack.c.b16 %v356, %v352
  %v469 = vpack.c.b16 %v357, %v353
  %v470 = vpack.c.b16 %v358, %v354
  %v471 = vpack.c.b16 %v363, %v359
  %v472 = vpack.c.b16 %v364, %v360
  %v473 = vpack.c.b16 %v365, %v361
  %v474 = vpack.c.b16 %v366, %v362
  %v475 = vpack.c.b16 %v371, %v367
  %v476 = vpack.c.b16 %v372, %v368
  %v477 = vpack.c.b16 %v373, %v369
  %v478 = vpack.c.b16 %v374, %v370
  %v479 = vpack.c.b16 %v379, %v375
  %v480 = vpack.c.b16 %v380, %v376
  %v481 = vpack.c.b16 %v381, %v377
  %v482 = vpack.c.b16 %v382, %v378
  %v483 = vpack.c.b16 %v387, %v383
  %v484 = vpack.c.b16 %v388, %v384
  %v485 = vpack.c.b16 %v389, %v385
  %v486 = vpack.c.b16 %v390, %v386
  %v487 = vpack.c.b16 %v395, %v391
  %v488 = vpack.c.b16 %v396, %v392
  %v489 = vpack.c.b16 %v397, %v393
  %v490 = vpack.c.b16 %v398, %v394
  %v491 = vpack.c.b16 %v403, %v399
  %v492 = vpack.c.b16 %v404, %v400
  %v493 = vpack.c.b16 %v405, %v401
  %v494 = vpack.c.b16 %v406, %v402
  %v495 = vpack.c.b16 %v411, %v407
  %v496 = vpack.c.b16 %v412, %v408
  %v497 = vpack.c.b16 %v413, %v409
  %v498 = vpack.c.b16 %v414, %v410
  %v499 = vpack.c.b16 %v419, %v415
  %v500 = vpack.c.b16 %v420, %v416
  %v501 = vpack.c.b16 %v421, %v417
  %v502 = vpack.c.b16 %v422, %v418
  %v503 = vpack.c.b16 %v427, %v423
  %v504 = vpack.c.b16 %v428, %v424
  %v505 = vpack.c.b16 %v429, %v425
  %v506 = vpack.c.b16 %v430, %v426
  %vm579 = vcmask 359424
  %v581 = vsel %vm579, %v104, 0
  %vm583 = vcmask 1045504
  %v585 = vsel %vm583, %v503, 0
  %v588 = vsel %vm583, %v504, 0
  %v591 = vsel %vm583, %v505, 0
  %v594 = vsel %vm583, %v506, 0
  %596 = vmatprep.subr.bf16.mxu0 %v460
  %597 = vmatpush1.bf16.msra.mxu0 %v459
  %598 = vmatprep.subr.bf16.mxu0 %v456
  %599 = vmatpush1.bf16.msra.mxu0 %v455
  %600 = vmatprep.subr.bf16.mxu0 %v452
  %601 = vmatpush1.bf16.msra.mxu0 %v451
  %602 = vmatprep.subr.bf16.mxu0 %v448
  %603 = vmatpush1.bf16.msra.mxu0 %v447
  %604 = vmatprep.subr.bf16.mxu0 %v444
  %605 = vmatpush1.bf16.msra.mxu0 %v443
  %606 = vmatprep.subr.bf16.mxu0 %v440
  %607 = vmatpush1.bf16.msra.mxu0 %v439
  %608 = vmatprep.subr.bf16.mxu0 %v436
  %609 = vmatpush1.bf16.msra.mxu0 %v435
  %610 = vmatprep.subr.bf16.mxu0 %v432
  %611 = vmatpush1.bf16.msra.mxu0 %v431
  %612 = vmatprep.subr.bf16.mxu0 %v492
  %613 = vmatpush2.bf16.msra.mxu0 %v491
  %614 = vmatprep.subr.bf16.mxu0 %v488
  %615 = vmatpush2.bf16.msra.mxu0 %v487
  %616 = vmatprep.subr.bf16.mxu0 %v484
  %617 = vmatpush2.bf16.msra.mxu0 %v483
  %618 = vmatprep.subr.bf16.mxu0 %v480
  %619 = vmatpush2.bf16.msra.mxu0 %v479
  %620 = vmatprep.subr.bf16.mxu0 %v476
  %621 = vmatpush2.bf16.msra.mxu0 %v475
  %622 = vmatprep.subr.bf16.mxu0 %v472
  %623 = vmatpush2.bf16.msra.mxu0 %v471
  %624 = vmatprep.subr.bf16.mxu0 %v468
  %625 = vmatpush2.bf16.msra.mxu0 %v467
  %626 = vmatprep.subr.bf16.mxu0 %v464
  %627 = vmatpush2.bf16.msra.mxu0 %v463
  %628 = vmatprep.mubr.bf16.mxu0 %v103
  %629 = vmatmul.mubr.bf16.gmra.mxu0 %v102
  %v630 = vpop.f32.mrf.mxu0
  %v631 = vadd.f32 %v186, %v630
  %v632 = vpop.f32.mrf.mxu0
  %v633 = vadd.f32 %v190, %v632
  %v634 = vpop.f32.mrf.mxu0
  %v635 = vpop.f32.mrf.mxu0
  %636 = vdwg.mxu0
  %637 = vmatprep.subr.bf16.mxu0 0
  %638 = vmatpush1.bf16.msra.mxu0 0
  %639 = vmatprep.subr.bf16.mxu0 0
  %640 = vmatpush1.bf16.msra.mxu0 0
  %641 = vmatprep.subr.bf16.mxu0 0
  %642 = vmatpush1.bf16.msra.mxu0 0
  %643 = vmatprep.subr.bf16.mxu0 0
  %644 = vmatpush1.bf16.msra.mxu0 0
  %645 = vmatprep.subr.bf16.mxu0 0
  %646 = vmatpush1.bf16.msra.mxu0 0
  %647 = vmatprep.subr.bf16.mxu0 %v588
  %648 = vmatpush1.bf16.msra.mxu0 %v585
  %649 = vmatprep.subr.bf16.mxu0 %v500
  %650 = vmatpush1.bf16.msra.mxu0 %v499
  %651 = vmatprep.subr.bf16.mxu0 %v496
  %652 = vmatpush1.bf16.msra.mxu0 %v495
  %653 = vmatprep.subr.bf16.mxu0 0
  %654 = vmatpush2.bf16.msra.mxu0 0
  %655 = vmatprep.subr.bf16.mxu0 0
  %656 = vmatpush2.bf16.msra.mxu0 0
  %657 = vmatprep.subr.bf16.mxu0 0
  %658 = vmatpush2.bf16.msra.mxu0 0
  %659 = vmatprep.subr.bf16.mxu0 0
  %660 = vmatpush2.bf16.msra.mxu0 0
  %661 = vmatprep.subr.bf16.mxu0 0
  %662 = vmatpush2.bf16.msra.mxu0 0
  %663 = vmatprep.subr.bf16.mxu0 0
  %664 = vmatpush2.bf16.msra.mxu0 0
  %665 = vmatprep.subr.bf16.mxu0 0
  %666 = vmatpush2.bf16.msra.mxu0 0
  %667 = vmatprep.subr.bf16.mxu0 0
  %668 = vmatpush2.bf16.msra.mxu0 0
  %669 = vmatprep.mubr.bf16.mxu0 0
  %670 = vmatmul.mubr.bf16.gmra.mxu0 %v581
  %v671 = vpop.f32.mrf.mxu0
  %v672 = vadd.f32 %v631, %v671
  %v673 = vpop.f32.mrf.mxu0
  %v674 = vadd.f32 %v633, %v673
  %v675 = vpop.f32.mrf.mxu0
  %v676 = vpop.f32.mrf.mxu0
  %677 = vdwg.mxu0
  %678 = vmatprep.subr.bf16.mxu0 %v462
  %679 = vmatpush1.bf16.msra.mxu0 %v461
  %680 = vmatprep.subr.bf16.mxu0 %v458
  %681 = vmatpush1.bf16.msra.mxu0 %v457
  %682 = vmatprep.subr.bf16.mxu0 %v454
  %683 = vmatpush1.bf16.msra.mxu0 %v453
  %684 = vmatprep.subr.bf16.mxu0 %v450
  %685 = vmatpush1.bf16.msra.mxu0 %v449
  %686 = vmatprep.subr.bf16.mxu0 %v446
  %687 = vmatpush1.bf16.msra.mxu0 %v445
  %688 = vmatprep.subr.bf16.mxu0 %v442
  %689 = vmatpush1.bf16.msra.mxu0 %v441
  %690 = vmatprep.subr.bf16.mxu0 %v438
  %691 = vmatpush1.bf16.msra.mxu0 %v437
  %692 = vmatprep.subr.bf16.mxu0 %v434
  %693 = vmatpush1.bf16.msra.mxu0 %v433
  %694 = vmatprep.subr.bf16.mxu0 %v494
  %695 = vmatpush2.bf16.msra.mxu0 %v493
  %696 = vmatprep.subr.bf16.mxu0 %v490
  %697 = vmatpush2.bf16.msra.mxu0 %v489
  %698 = vmatprep.subr.bf16.mxu0 %v486
  %699 = vmatpush2.bf16.msra.mxu0 %v485
  %700 = vmatprep.subr.bf16.mxu0 %v482
  %701 = vmatpush2.bf16.msra.mxu0 %v481
  %702 = vmatprep.subr.bf16.mxu0 %v478
  %703 = vmatpush2.bf16.msra.mxu0 %v477
  %704 = vmatprep.subr.bf16.mxu0 %v474
  %705 = vmatpush2.bf16.msra.mxu0 %v473
  %706 = vmatprep.subr.bf16.mxu0 %v470
  %707 = vmatpush2.bf16.msra.mxu0 %v469
  %708 = vmatprep.subr.bf16.mxu0 %v466
  %709 = vmatpush2.bf16.msra.mxu0 %v465
  %710 = vmatprep.mubr.bf16.mxu0 %v103
  %711 = vmatmul.mubr.bf16.gmra.mxu0 %v102
  %v712 = vpop.f32.mrf.mxu0
  %v713 = vadd.f32 %v194, %v712
  %v714 = vpop.f32.mrf.mxu0
  %v715 = vadd.f32 %v198, %v714
  %v716 = vpop.f32.mrf.mxu0
  %v717 = vpop.f32.mrf.mxu0
  %718 = vdwg.mxu0
  %719 = vmatprep.subr.bf16.mxu0 0
  %720 = vmatpush1.bf16.msra.mxu0 0
  %721 = vmatprep.subr.bf16.mxu0 0
  %722 = vmatpush1.bf16.msra.mxu0 0
  %723 = vmatprep.subr.bf16.mxu0 0
  %724 = vmatpush1.bf16.msra.mxu0 0
  %725 = vmatprep.subr.bf16.mxu0 0
  %726 = vmatpush1.bf16.msra.mxu0 0
  %727 = vmatprep.subr.bf16.mxu0 0
  %728 = vmatpush1.bf16.msra.mxu0 0
  %729 = vmatprep.subr.bf16.mxu0 %v594
  %730 = vmatpush1.bf16.msra.mxu0 %v591
  %731 = vmatprep.subr.bf16.mxu0 %v502
  %732 = vmatpush1.bf16.msra.mxu0 %v501
  %733 = vmatprep.subr.bf16.mxu0 %v498
  %734 = vmatpush1.bf16.msra.mxu0 %v497
  %735 = vmatprep.subr.bf16.mxu0 0
  %736 = vmatpush2.bf16.msra.mxu0 0
  %737 = vmatprep.subr.bf16.mxu0 0
  %738 = vmatpush2.bf16.msra.mxu0 0
  %739 = vmatprep.subr.bf16.mxu0 0
  %740 = vmatpush2.bf16.msra.mxu0 0
  %741 = vmatprep.subr.bf16.mxu0 0
  %742 = vmatpush2.bf16.msra.mxu0 0
  %743 = vmatprep.subr.bf16.mxu0 0
  %744 = vmatpush2.bf16.msra.mxu0 0
  %745 = vmatprep.subr.bf16.mxu0 0
  %746 = vmatpush2.bf16.msra.mxu0 0
  %747 = vmatprep.subr.bf16.mxu0 0
  %748 = vmatpush2.bf16.msra.mxu0 0
  %749 = vmatprep.subr.bf16.mxu0 0
  %750 = vmatpush2.bf16.msra.mxu0 0
  %751 = vmatprep.mubr.bf16.mxu0 0
  %752 = vmatmul.mubr.bf16.gmra.mxu0 %v581
  %v753 = vpop.f32.mrf.mxu0
  %v754 = vadd.f32 %v713, %v753
  %v755 = vpop.f32.mrf.mxu0
  %v756 = vadd.f32 %v715, %v755
  %v757 = vpop.f32.mrf.mxu0
  %v758 = vpop.f32.mrf.mxu0
  %759 = vdwg.mxu0
  %v760 = vld [vmem:[%s9] sm:$0xff]
  %v761 = vld [vmem:[%s9 + $0x8] sm:$0xff]
  %v762 = vld [vmem:[%s9 + $0x10] sm:$0xff]
  %v763 = vld [vmem:[%s9 + $0x18] sm:$0xff]
  %v764 = vld [vmem:[%s9 + $0x20] sm:$0xff]
  %v765 = vld [vmem:[%s9 + $0x28] sm:$0xff]
  %v766 = vld [vmem:[%s9 + $0x30] sm:$0xff]
  %v767 = vld [vmem:[%s9 + $0x38] sm:$0xff]
  %v768 = vld [vmem:[%s9 + $0x40] sm:$0xff]
  %v769 = vld [vmem:[%s9 + $0x48] sm:$0xff]
  %v770 = vld [vmem:[%s9 + $0x50] sm:$0xff]
  %v771 = vld [vmem:[%s9 + $0x58] sm:$0xff]
  %v772 = vld [vmem:[%s9 + $0x60] sm:$0xff]
  %v773 = vld [vmem:[%s9 + $0x68] sm:$0xff]
  %v774 = vld [vmem:[%s9 + $0x70] sm:$0xff]
  %v775 = vld [vmem:[%s9 + $0x78] sm:$0xff]
  %v776 = vld [vmem:[%s9 + $0x80] sm:$0xff]
  %v777 = vld [vmem:[%s9 + $0x88] sm:$0xff]
  %v778 = vld [vmem:[%s9 + $0x90] sm:$0xff]
  %v779 = vld [vmem:[%s9 + $0x98] sm:$0xff]
  %v780 = vld [vmem:[%s9 + $0xa0] sm:$0xff]
  %v781 = vld [vmem:[%s9 + $0xa8] sm:$0xff]
  %v782 = vld [vmem:[%s9 + $0xb0] sm:$0xff]
  %v783 = vld [vmem:[%s9 + $0xb8] sm:$0xff]
  %v784 = vld [vmem:[%s9 + $0xc0] sm:$0xff]
  %v785 = vld [vmem:[%s9 + $0xc8] sm:$0xff]
  %v786 = vld [vmem:[%s9 + $0xd0] sm:$0xff]
  %v787 = vld [vmem:[%s9 + $0xd8] sm:$0xff]
  %v788 = vld [vmem:[%s9 + $0xe0] sm:$0xff]
  %v789 = vld [vmem:[%s9 + $0xe8] sm:$0xff]
  %v790 = vld [vmem:[%s9 + $0xf0] sm:$0xff]
  %v791 = vld [vmem:[%s9 + $0xf8] sm:$0xff]
  %v792 = vld [vmem:[%s9 + $0x100] sm:$0xff]
  %v793 = vld [vmem:[%s9 + $0x108] sm:$0xff]
  %v794 = vld [vmem:[%s9 + $0x110] sm:$0xff]
  %v795 = vld [vmem:[%s9 + $0x118] sm:$0xff]
  %v796 = vld [vmem:[%s9 + $0x120] sm:$0xff]
  %v797 = vld [vmem:[%s9 + $0x128] sm:$0xff]
  %v798 = vld [vmem:[%s9 + $0x130] sm:$0xff]
  %v799 = vld [vmem:[%s9 + $0x138] sm:$0xff]
  %v800 = vld [vmem:[%s9 + $0x140] sm:$0xff]
  %v801 = vld [vmem:[%s9 + $0x148] sm:$0xff]
  %v802 = vld [vmem:[%s9 + $0x150] sm:$0xff]
  %v803 = vld [vmem:[%s9 + $0x158] sm:$0xff]
  %v804 = vld [vmem:[%s9 + $0x160] sm:$0xff]
  %v805 = vld [vmem:[%s9 + $0x168] sm:$0xff]
  %v806 = vld [vmem:[%s9 + $0x170] sm:$0xff]
  %v807 = vld [vmem:[%s9 + $0x178] sm:$0xff]
  %v808 = vld [vmem:[%s9 + $0x180] sm:$0xff]
  %v809 = vld [vmem:[%s9 + $0x188] sm:$0xff]
  %vm810 = vcmask 130048
  %v812 = vsel %vm810, %v756, 0
  %814 = vmatprep.subr.mxu0 0.0
  %815 = vmatpush1.msra.mxu0 %v775
  %816 = vmatprep.subr.mxu0 0.0
  %817 = vmatpush1.msra.mxu0 %v774
  %818 = vmatprep.subr.mxu0 0.0
  %819 = vmatpush1.msra.mxu0 %v773
  %820 = vmatprep.subr.mxu0 0.0
  %821 = vmatpush1.msra.mxu0 %v772
  %822 = vmatprep.subr.mxu0 0.0
  %823 = vmatpush1.msra.mxu0 %v771
  %824 = vmatprep.subr.mxu0 0.0
  %825 = vmatpush1.msra.mxu0 %v770
  %826 = vmatprep.subr.mxu0 0.0
  %827 = vmatpush1.msra.mxu0 %v769
  %828 = vmatprep.subr.mxu0 0.0
  %829 = vmatpush1.msra.mxu0 %v768
  %830 = vmatprep.subr.mxu0 0.0
  %831 = vmatpush1.msra.mxu0 %v767
  %832 = vmatprep.subr.mxu0 0.0
  %833 = vmatpush1.msra.mxu0 %v766
  %834 = vmatprep.subr.mxu0 0.0
  %835 = vmatpush1.msra.mxu0 %v765
  %836 = vmatprep.subr.mxu0 0.0
  %837 = vmatpush1.msra.mxu0 %v764
  %838 = vmatprep.subr.mxu0 0.0
  %839 = vmatpush1.msra.mxu0 %v763
  %840 = vmatprep.subr.mxu0 0.0
  %841 = vmatpush1.msra.mxu0 %v762
  %842 = vmatprep.subr.mxu0 0.0
  %843 = vmatpush1.msra.mxu0 %v761
  %844 = vmatprep.subr.mxu0 0.0
  %845 = vmatpush1.msra.mxu0 %v760
  %846 = vmatprep.subr.mxu0 0.0
  %847 = vmatpush2.msra.mxu0 %v791
  %848 = vmatprep.subr.mxu0 0.0
  %849 = vmatpush2.msra.mxu0 %v790
  %850 = vmatprep.subr.mxu0 0.0
  %851 = vmatpush2.msra.mxu0 %v789
  %852 = vmatprep.subr.mxu0 0.0
  %853 = vmatpush2.msra.mxu0 %v788
  %854 = vmatprep.subr.mxu0 0.0
  %855 = vmatpush2.msra.mxu0 %v787
  %856 = vmatprep.subr.mxu0 0.0
  %857 = vmatpush2.msra.mxu0 %v786
  %858 = vmatprep.subr.mxu0 0.0
  %859 = vmatpush2.msra.mxu0 %v785
  %860 = vmatprep.subr.mxu0 0.0
  %861 = vmatpush2.msra.mxu0 %v784
  %862 = vmatprep.subr.mxu0 0.0
  %863 = vmatpush2.msra.mxu0 %v783
  %864 = vmatprep.subr.mxu0 0.0
  %865 = vmatpush2.msra.mxu0 %v782
  %866 = vmatprep.subr.mxu0 0.0
  %867 = vmatpush2.msra.mxu0 %v781
  %868 = vmatprep.subr.mxu0 0.0
  %869 = vmatpush2.msra.mxu0 %v780
  %870 = vmatprep.subr.mxu0 0.0
  %871 = vmatpush2.msra.mxu0 %v779
  %872 = vmatprep.subr.mxu0 0.0
  %873 = vmatpush2.msra.mxu0 %v778
  %874 = vmatprep.subr.mxu0 0.0
  %875 = vmatpush2.msra.mxu0 %v777
  %876 = vmatprep.subr.mxu0 0.0
  %877 = vmatpush2.msra.mxu0 %v776
  %878 = vmatprep.mubr.f32.mxu0 %v674
  %879 = vmatmul.mubr.f32.gmra.mxu0 %v672
  %v880 = vpop.f32.mrf.mxu0
  %v881 = vadd.f32 0.0, %v880
  %v882 = vpop.f32.mrf.mxu0
  %883 = vdwg.mxu0
  %884 = vmatprep.subr.mxu0 0.0
  %885 = vmatpush1.msra.mxu0 %v807
  %886 = vmatprep.subr.mxu0 0.0
  %887 = vmatpush1.msra.mxu0 %v806
  %888 = vmatprep.subr.mxu0 0.0
  %889 = vmatpush1.msra.mxu0 %v805
  %890 = vmatprep.subr.mxu0 0.0
  %891 = vmatpush1.msra.mxu0 %v804
  %892 = vmatprep.subr.mxu0 0.0
  %893 = vmatpush1.msra.mxu0 %v803
  %894 = vmatprep.subr.mxu0 0.0
  %895 = vmatpush1.msra.mxu0 %v802
  %896 = vmatprep.subr.mxu0 0.0
  %897 = vmatpush1.msra.mxu0 %v801
  %898 = vmatprep.subr.mxu0 0.0
  %899 = vmatpush1.msra.mxu0 %v800
  %900 = vmatprep.subr.mxu0 0.0
  %901 = vmatpush1.msra.mxu0 %v799
  %902 = vmatprep.subr.mxu0 0.0
  %903 = vmatpush1.msra.mxu0 %v798
  %904 = vmatprep.subr.mxu0 0.0
  %905 = vmatpush1.msra.mxu0 %v797
  %906 = vmatprep.subr.mxu0 0.0
  %907 = vmatpush1.msra.mxu0 %v796
  %908 = vmatprep.subr.mxu0 0.0
  %909 = vmatpush1.msra.mxu0 %v795
  %910 = vmatprep.subr.mxu0 0.0
  %911 = vmatpush1.msra.mxu0 %v794
  %912 = vmatprep.subr.mxu0 0.0
  %913 = vmatpush1.msra.mxu0 %v793
  %914 = vmatprep.subr.mxu0 0.0
  %915 = vmatpush1.msra.mxu0 %v792
  %916 = vmatprep.subr.mxu0 0.0
  %917 = vmatpush2.msra.mxu0 0.0
  %918 = vmatprep.subr.mxu0 0.0
  %919 = vmatpush2.msra.mxu0 0.0
  %920 = vmatprep.subr.mxu0 0.0
  %921 = vmatpush2.msra.mxu0 0.0
  %922 = vmatprep.subr.mxu0 0.0
  %923 = vmatpush2.msra.mxu0 0.0
  %924 = vmatprep.subr.mxu0 0.0
  %925 = vmatpush2.msra.mxu0 0.0
  %926 = vmatprep.subr.mxu0 0.0
  %927 = vmatpush2.msra.mxu0 0.0
  %928 = vmatprep.subr.mxu0 0.0
  %929 = vmatpush2.msra.mxu0 0.0
  %930 = vmatprep.subr.mxu0 0.0
  %931 = vmatpush2.msra.mxu0 0.0
  %932 = vmatprep.subr.mxu0 0.0
  %933 = vmatpush2.msra.mxu0 0.0
  %934 = vmatprep.subr.mxu0 0.0
  %935 = vmatpush2.msra.mxu0 0.0
  %936 = vmatprep.subr.mxu0 0.0
  %937 = vmatpush2.msra.mxu0 0.0
  %938 = vmatprep.subr.mxu0 0.0
  %939 = vmatpush2.msra.mxu0 0.0
  %940 = vmatprep.subr.mxu0 0.0
  %941 = vmatpush2.msra.mxu0 0.0
  %942 = vmatprep.subr.mxu0 0.0
  %943 = vmatpush2.msra.mxu0 0.0
  %944 = vmatprep.subr.mxu0 0.0
  %945 = vmatpush2.msra.mxu0 %v809
  %946 = vmatprep.subr.mxu0 0.0
  %947 = vmatpush2.msra.mxu0 %v808
  %948 = vmatprep.mubr.f32.mxu0 %v812
  %949 = vmatmul.mubr.f32.gmra.mxu0 %v754
  %v950 = vpop.f32.mrf.mxu0
  %v951 = vadd.f32 %v881, %v950
  %v952 = vpop.f32.mrf.mxu0
  %953 = vdwg.mxu0
  %v954 = vmul.f32 %v951, 0.01
  %v955 = vmul.f32 %v672, %v672
  %v956 = vmul.f32 %v674, %v674
  %v957 = vmul.f32 %v754, %v754
  %v958 = vmul.f32 %v756, %v756
  %v960 = vsel %vm810, %v958, 0
  %962 = vmatprep.subr.mxu0 0.0
  %963 = vmatpush1.msra.mxu0 %v775
  %964 = vmatprep.subr.mxu0 0.0
  %965 = vmatpush1.msra.mxu0 %v774
  %966 = vmatprep.subr.mxu0 0.0
  %967 = vmatpush1.msra.mxu0 %v773
  %968 = vmatprep.subr.mxu0 0.0
  %969 = vmatpush1.msra.mxu0 %v772
  %970 = vmatprep.subr.mxu0 0.0
  %971 = vmatpush1.msra.mxu0 %v771
  %972 = vmatprep.subr.mxu0 0.0
  %973 = vmatpush1.msra.mxu0 %v770
  %974 = vmatprep.subr.mxu0 0.0
  %975 = vmatpush1.msra.mxu0 %v769
  %976 = vmatprep.subr.mxu0 0.0
  %977 = vmatpush1.msra.mxu0 %v768
  %978 = vmatprep.subr.mxu0 0.0
  %979 = vmatpush1.msra.mxu0 %v767
  %980 = vmatprep.subr.mxu0 0.0
  %981 = vmatpush1.msra.mxu0 %v766
  %982 = vmatprep.subr.mxu0 0.0
  %983 = vmatpush1.msra.mxu0 %v765
  %984 = vmatprep.subr.mxu0 0.0
  %985 = vmatpush1.msra.mxu0 %v764
  %986 = vmatprep.subr.mxu0 0.0
  %987 = vmatpush1.msra.mxu0 %v763
  %988 = vmatprep.subr.mxu0 0.0
  %989 = vmatpush1.msra.mxu0 %v762
  %990 = vmatprep.subr.mxu0 0.0
  %991 = vmatpush1.msra.mxu0 %v761
  %992 = vmatprep.subr.mxu0 0.0
  %993 = vmatpush1.msra.mxu0 %v760
  %994 = vmatprep.subr.mxu0 0.0
  %995 = vmatpush2.msra.mxu0 %v791
  %996 = vmatprep.subr.mxu0 0.0
  %997 = vmatpush2.msra.mxu0 %v790
  %998 = vmatprep.subr.mxu0 0.0
  %999 = vmatpush2.msra.mxu0 %v789
  %1000 = vmatprep.subr.mxu0 0.0
  %1001 = vmatpush2.msra.mxu0 %v788
  %1002 = vmatprep.subr.mxu0 0.0
  %1003 = vmatpush2.msra.mxu0 %v787
  %1004 = vmatprep.subr.mxu0 0.0
  %1005 = vmatpush2.msra.mxu0 %v786
  %1006 = vmatprep.subr.mxu0 0.0
  %1007 = vmatpush2.msra.mxu0 %v785
  %1008 = vmatprep.subr.mxu0 0.0
  %1009 = vmatpush2.msra.mxu0 %v784
  %1010 = vmatprep.subr.mxu0 0.0
  %1011 = vmatpush2.msra.mxu0 %v783
  %1012 = vmatprep.subr.mxu0 0.0
  %1013 = vmatpush2.msra.mxu0 %v782
  %1014 = vmatprep.subr.mxu0 0.0
  %1015 = vmatpush2.msra.mxu0 %v781
  %1016 = vmatprep.subr.mxu0 0.0
  %1017 = vmatpush2.msra.mxu0 %v780
  %1018 = vmatprep.subr.mxu0 0.0
  %1019 = vmatpush2.msra.mxu0 %v779
  %1020 = vmatprep.subr.mxu0 0.0
  %1021 = vmatpush2.msra.mxu0 %v778
  %1022 = vmatprep.subr.mxu0 0.0
  %1023 = vmatpush2.msra.mxu0 %v777
  %1024 = vmatprep.subr.mxu0 0.0
  %1025 = vmatpush2.msra.mxu0 %v776
  %1026 = vmatprep.mubr.f32.mxu0 %v956
  %1027 = vmatmul.mubr.f32.gmra.mxu0 %v955
  %v1028 = vpop.f32.mrf.mxu0
  %v1029 = vadd.f32 0.0, %v1028
  %v1030 = vpop.f32.mrf.mxu0
  %1031 = vdwg.mxu0
  %1032 = vmatprep.subr.mxu0 0.0
  %1033 = vmatpush1.msra.mxu0 %v807
  %1034 = vmatprep.subr.mxu0 0.0
  %1035 = vmatpush1.msra.mxu0 %v806
  %1036 = vmatprep.subr.mxu0 0.0
  %1037 = vmatpush1.msra.mxu0 %v805
  %1038 = vmatprep.subr.mxu0 0.0
  %1039 = vmatpush1.msra.mxu0 %v804
  %1040 = vmatprep.subr.mxu0 0.0
  %1041 = vmatpush1.msra.mxu0 %v803
  %1042 = vmatprep.subr.mxu0 0.0
  %1043 = vmatpush1.msra.mxu0 %v802
  %1044 = vmatprep.subr.mxu0 0.0
  %1045 = vmatpush1.msra.mxu0 %v801
  %1046 = vmatprep.subr.mxu0 0.0
  %1047 = vmatpush1.msra.mxu0 %v800
  %1048 = vmatprep.subr.mxu0 0.0
  %1049 = vmatpush1.msra.mxu0 %v799
  %1050 = vmatprep.subr.mxu0 0.0
  %1051 = vmatpush1.msra.mxu0 %v798
  %1052 = vmatprep.subr.mxu0 0.0
  %1053 = vmatpush1.msra.mxu0 %v797
  %1054 = vmatprep.subr.mxu0 0.0
  %1055 = vmatpush1.msra.mxu0 %v796
  %1056 = vmatprep.subr.mxu0 0.0
  %1057 = vmatpush1.msra.mxu0 %v795
  %1058 = vmatprep.subr.mxu0 0.0
  %1059 = vmatpush1.msra.mxu0 %v794
  %1060 = vmatprep.subr.mxu0 0.0
  %1061 = vmatpush1.msra.mxu0 %v793
  %1062 = vmatprep.subr.mxu0 0.0
  %1063 = vmatpush1.msra.mxu0 %v792
  %1064 = vmatprep.subr.mxu0 0.0
  %1065 = vmatpush2.msra.mxu0 0.0
  %1066 = vmatprep.subr.mxu0 0.0
  %1067 = vmatpush2.msra.mxu0 0.0
  %1068 = vmatprep.subr.mxu0 0.0
  %1069 = vmatpush2.msra.mxu0 0.0
  %1070 = vmatprep.subr.mxu0 0.0
  %1071 = vmatpush2.msra.mxu0 0.0
  %1072 = vmatprep.subr.mxu0 0.0
  %1073 = vmatpush2.msra.mxu0 0.0
  %1074 = vmatprep.subr.mxu0 0.0
  %1075 = vmatpush2.msra.mxu0 0.0
  %1076 = vmatprep.subr.mxu0 0.0
  %1077 = vmatpush2.msra.mxu0 0.0
  %1078 = vmatprep.subr.mxu0 0.0
  %1079 = vmatpush2.msra.mxu0 0.0
  %1080 = vmatprep.subr.mxu0 0.0
  %1081 = vmatpush2.msra.mxu0 0.0
  %1082 = vmatprep.subr.mxu0 0.0
  %1083 = vmatpush2.msra.mxu0 0.0
  %1084 = vmatprep.subr.mxu0 0.0
  %1085 = vmatpush2.msra.mxu0 0.0
  %1086 = vmatprep.subr.mxu0 0.0
  %1087 = vmatpush2.msra.mxu0 0.0
  %1088 = vmatprep.subr.mxu0 0.0
  %1089 = vmatpush2.msra.mxu0 0.0
  %1090 = vmatprep.subr.mxu0 0.0
  %1091 = vmatpush2.msra.mxu0 0.0
  %1092 = vmatprep.subr.mxu0 0.0
  %1093 = vmatpush2.msra.mxu0 %v809
  %1094 = vmatprep.subr.mxu0 0.0
  %1095 = vmatpush2.msra.mxu0 %v808
  %1096 = vmatprep.mubr.f32.mxu0 %v960
  %1097 = vmatmul.mubr.f32.gmra.mxu0 %v957
  %v1098 = vpop.f32.mrf.mxu0
  %v1099 = vadd.f32 %v1029, %v1098
  %v1100 = vpop.f32.mrf.mxu0
  %1101 = vdwg.mxu0
  %v1102 = vmul.f32 %v1099, 0.01
  %v1103 = vmul.f32 %v954, %v954
  %v1104 = vsub.f32 %v1102, %v1103
  %v1105 = vadd.f32 %v1104, 1e-05
  %v1106 = vrsqrt.pop %v1105
  %v1107 = vld [vmem:[%s10] sm:$0xff]
  %v1108 = vld [vmem:[%s10 + $0x8] sm:$0xff]
  %v1109 = vld [vmem:[%s10 + $0x10] sm:$0xff]
  %v1110 = vld [vmem:[%s10 + $0x18] sm:$0xff]
  %vm1111 = vcmask 64512
  %v1113 = vsel %vm1111, %v954, 0
  %1115 = vmatprep.subr.mxu0 0.0
  %1116 = vmatpush1.msra.mxu0 0.0
  %1117 = vmatprep.subr.mxu0 0.0
  %1118 = vmatpush1.msra.mxu0 0.0
  %1119 = vmatprep.subr.mxu0 0.0
  %1120 = vmatpush1.msra.mxu0 0.0
  %1121 = vmatprep.subr.mxu0 0.0
  %1122 = vmatpush1.msra.mxu0 0.0
  %1123 = vmatprep.subr.mxu0 0.0
  %1124 = vmatpush1.msra.mxu0 0.0
  %1125 = vmatprep.subr.mxu0 0.0
  %1126 = vmatpush1.msra.mxu0 0.0
  %1127 = vmatprep.subr.mxu0 0.0
  %1128 = vmatpush1.msra.mxu0 0.0
  %1129 = vmatprep.subr.mxu0 0.0
  %1130 = vmatpush1.msra.mxu0 0.0
  %1131 = vmatprep.subr.mxu0 0.0
  %1132 = vmatpush1.msra.mxu0 0.0
  %1133 = vmatprep.subr.mxu0 0.0
  %1134 = vmatpush1.msra.mxu0 0.0
  %1135 = vmatprep.subr.mxu0 0.0
  %1136 = vmatpush1.msra.mxu0 0.0
  %1137 = vmatprep.subr.mxu0 0.0
  %1138 = vmatpush1.msra.mxu0 0.0
  %1139 = vmatprep.subr.mxu0 0.0
  %1140 = vmatpush1.msra.mxu0 0.0
  %1141 = vmatprep.subr.mxu0 0.0
  %1142 = vmatpush1.msra.mxu0 0.0
  %1143 = vmatprep.subr.mxu0 0.0
  %1144 = vmatpush1.msra.mxu0 0.0
  %1145 = vmatprep.subr.mxu0 %v1108
  %1146 = vmatpush1.msra.mxu0 %v1107
  %1147 = vmatprep.subr.mxu0 0.0
  %1148 = vmatpush2.msra.mxu0 0.0
  %1149 = vmatprep.subr.mxu0 0.0
  %1150 = vmatpush2.msra.mxu0 0.0
  %1151 = vmatprep.subr.mxu0 0.0
  %1152 = vmatpush2.msra.mxu0 0.0
  %1153 = vmatprep.subr.mxu0 0.0
  %1154 = vmatpush2.msra.mxu0 0.0
  %1155 = vmatprep.subr.mxu0 0.0
  %1156 = vmatpush2.msra.mxu0 0.0
  %1157 = vmatprep.subr.mxu0 0.0
  %1158 = vmatpush2.msra.mxu0 0.0
  %1159 = vmatprep.subr.mxu0 0.0
  %1160 = vmatpush2.msra.mxu0 0.0
  %1161 = vmatprep.subr.mxu0 0.0
  %1162 = vmatpush2.msra.mxu0 0.0
  %1163 = vmatprep.subr.mxu0 0.0
  %1164 = vmatpush2.msra.mxu0 0.0
  %1165 = vmatprep.subr.mxu0 0.0
  %1166 = vmatpush2.msra.mxu0 0.0
  %1167 = vmatprep.subr.mxu0 0.0
  %1168 = vmatpush2.msra.mxu0 0.0
  %1169 = vmatprep.subr.mxu0 0.0
  %1170 = vmatpush2.msra.mxu0 0.0
  %1171 = vmatprep.subr.mxu0 0.0
  %1172 = vmatpush2.msra.mxu0 0.0
  %1173 = vmatprep.subr.mxu0 0.0
  %1174 = vmatpush2.msra.mxu0 0.0
  %1175 = vmatprep.subr.mxu0 0.0
  %1176 = vmatpush2.msra.mxu0 0.0
  %1177 = vmatprep.subr.mxu0 0.0
  %1178 = vmatpush2.msra.mxu0 0.0
  %1179 = vmatprep.mubr.f32.mxu0 0.0
  %1180 = vmatmul.mubr.f32.gmra.mxu0 %v1113
  %v1181 = vpop.f32.mrf.mxu0
  %v1182 = vadd.f32 0.0, %v1181
  %v1183 = vpop.f32.mrf.mxu0
  %v1184 = vadd.f32 0.0, %v1183
  %1185 = vdwg.mxu0
  %1186 = vmatprep.subr.mxu0 0.0
  %1187 = vmatpush1.msra.mxu0 0.0
  %1188 = vmatprep.subr.mxu0 0.0
  %1189 = vmatpush1.msra.mxu0 0.0
  %1190 = vmatprep.subr.mxu0 0.0
  %1191 = vmatpush1.msra.mxu0 0.0
  %1192 = vmatprep.subr.mxu0 0.0
  %1193 = vmatpush1.msra.mxu0 0.0
  %1194 = vmatprep.subr.mxu0 0.0
  %1195 = vmatpush1.msra.mxu0 0.0
  %1196 = vmatprep.subr.mxu0 0.0
  %1197 = vmatpush1.msra.mxu0 0.0
  %1198 = vmatprep.subr.mxu0 0.0
  %1199 = vmatpush1.msra.mxu0 0.0
  %1200 = vmatprep.subr.mxu0 0.0
  %1201 = vmatpush1.msra.mxu0 0.0
  %1202 = vmatprep.subr.mxu0 0.0
  %1203 = vmatpush1.msra.mxu0 0.0
  %1204 = vmatprep.subr.mxu0 0.0
  %1205 = vmatpush1.msra.mxu0 0.0
  %1206 = vmatprep.subr.mxu0 0.0
  %1207 = vmatpush1.msra.mxu0 0.0
  %1208 = vmatprep.subr.mxu0 0.0
  %1209 = vmatpush1.msra.mxu0 0.0
  %1210 = vmatprep.subr.mxu0 0.0
  %1211 = vmatpush1.msra.mxu0 0.0
  %1212 = vmatprep.subr.mxu0 0.0
  %1213 = vmatpush1.msra.mxu0 0.0
  %1214 = vmatprep.subr.mxu0 0.0
  %1215 = vmatpush1.msra.mxu0 0.0
  %1216 = vmatprep.subr.mxu0 %v1110
  %1217 = vmatpush1.msra.mxu0 %v1109
  %1218 = vmatprep.subr.mxu0 0.0
  %1219 = vmatpush2.msra.mxu0 0.0
  %1220 = vmatprep.subr.mxu0 0.0
  %1221 = vmatpush2.msra.mxu0 0.0
  %1222 = vmatprep.subr.mxu0 0.0
  %1223 = vmatpush2.msra.mxu0 0.0
  %1224 = vmatprep.subr.mxu0 0.0
  %1225 = vmatpush2.msra.mxu0 0.0
  %1226 = vmatprep.subr.mxu0 0.0
  %1227 = vmatpush2.msra.mxu0 0.0
  %1228 = vmatprep.subr.mxu0 0.0
  %1229 = vmatpush2.msra.mxu0 0.0
  %1230 = vmatprep.subr.mxu0 0.0
  %1231 = vmatpush2.msra.mxu0 0.0
  %1232 = vmatprep.subr.mxu0 0.0
  %1233 = vmatpush2.msra.mxu0 0.0
  %1234 = vmatprep.subr.mxu0 0.0
  %1235 = vmatpush2.msra.mxu0 0.0
  %1236 = vmatprep.subr.mxu0 0.0
  %1237 = vmatpush2.msra.mxu0 0.0
  %1238 = vmatprep.subr.mxu0 0.0
  %1239 = vmatpush2.msra.mxu0 0.0
  %1240 = vmatprep.subr.mxu0 0.0
  %1241 = vmatpush2.msra.mxu0 0.0
  %1242 = vmatprep.subr.mxu0 0.0
  %1243 = vmatpush2.msra.mxu0 0.0
  %1244 = vmatprep.subr.mxu0 0.0
  %1245 = vmatpush2.msra.mxu0 0.0
  %1246 = vmatprep.subr.mxu0 0.0
  %1247 = vmatpush2.msra.mxu0 0.0
  %1248 = vmatprep.subr.mxu0 0.0
  %1249 = vmatpush2.msra.mxu0 0.0
  %1250 = vmatprep.mubr.f32.mxu0 0.0
  %1251 = vmatmul.mubr.f32.gmra.mxu0 %v1113
  %v1252 = vpop.f32.mrf.mxu0
  %v1253 = vadd.f32 0.0, %v1252
  %v1254 = vpop.f32.mrf.mxu0
  %v1255 = vadd.f32 0.0, %v1254
  %1256 = vdwg.mxu0
  %v1258 = vsel %vm1111, %v1106, 0
  %1260 = vmatprep.subr.mxu0 0.0
  %1261 = vmatpush1.msra.mxu0 0.0
  %1262 = vmatprep.subr.mxu0 0.0
  %1263 = vmatpush1.msra.mxu0 0.0
  %1264 = vmatprep.subr.mxu0 0.0
  %1265 = vmatpush1.msra.mxu0 0.0
  %1266 = vmatprep.subr.mxu0 0.0
  %1267 = vmatpush1.msra.mxu0 0.0
  %1268 = vmatprep.subr.mxu0 0.0
  %1269 = vmatpush1.msra.mxu0 0.0
  %1270 = vmatprep.subr.mxu0 0.0
  %1271 = vmatpush1.msra.mxu0 0.0
  %1272 = vmatprep.subr.mxu0 0.0
  %1273 = vmatpush1.msra.mxu0 0.0
  %1274 = vmatprep.subr.mxu0 0.0
  %1275 = vmatpush1.msra.mxu0 0.0
  %1276 = vmatprep.subr.mxu0 0.0
  %1277 = vmatpush1.msra.mxu0 0.0
  %1278 = vmatprep.subr.mxu0 0.0
  %1279 = vmatpush1.msra.mxu0 0.0
  %1280 = vmatprep.subr.mxu0 0.0
  %1281 = vmatpush1.msra.mxu0 0.0
  %1282 = vmatprep.subr.mxu0 0.0
  %1283 = vmatpush1.msra.mxu0 0.0
  %1284 = vmatprep.subr.mxu0 0.0
  %1285 = vmatpush1.msra.mxu0 0.0
  %1286 = vmatprep.subr.mxu0 0.0
  %1287 = vmatpush1.msra.mxu0 0.0
  %1288 = vmatprep.subr.mxu0 0.0
  %1289 = vmatpush1.msra.mxu0 0.0
  %1290 = vmatprep.subr.mxu0 %v1108
  %1291 = vmatpush1.msra.mxu0 %v1107
  %1292 = vmatprep.subr.mxu0 0.0
  %1293 = vmatpush2.msra.mxu0 0.0
  %1294 = vmatprep.subr.mxu0 0.0
  %1295 = vmatpush2.msra.mxu0 0.0
  %1296 = vmatprep.subr.mxu0 0.0
  %1297 = vmatpush2.msra.mxu0 0.0
  %1298 = vmatprep.subr.mxu0 0.0
  %1299 = vmatpush2.msra.mxu0 0.0
  %1300 = vmatprep.subr.mxu0 0.0
  %1301 = vmatpush2.msra.mxu0 0.0
  %1302 = vmatprep.subr.mxu0 0.0
  %1303 = vmatpush2.msra.mxu0 0.0
  %1304 = vmatprep.subr.mxu0 0.0
  %1305 = vmatpush2.msra.mxu0 0.0
  %1306 = vmatprep.subr.mxu0 0.0
  %1307 = vmatpush2.msra.mxu0 0.0
  %1308 = vmatprep.subr.mxu0 0.0
  %1309 = vmatpush2.msra.mxu0 0.0
  %1310 = vmatprep.subr.mxu0 0.0
  %1311 = vmatpush2.msra.mxu0 0.0
  %1312 = vmatprep.subr.mxu0 0.0
  %1313 = vmatpush2.msra.mxu0 0.0
  %1314 = vmatprep.subr.mxu0 0.0
  %1315 = vmatpush2.msra.mxu0 0.0
  %1316 = vmatprep.subr.mxu0 0.0
  %1317 = vmatpush2.msra.mxu0 0.0
  %1318 = vmatprep.subr.mxu0 0.0
  %1319 = vmatpush2.msra.mxu0 0.0
  %1320 = vmatprep.subr.mxu0 0.0
  %1321 = vmatpush2.msra.mxu0 0.0
  %1322 = vmatprep.subr.mxu0 0.0
  %1323 = vmatpush2.msra.mxu0 0.0
  %1324 = vmatprep.mubr.f32.mxu0 0.0
  %1325 = vmatmul.mubr.f32.gmra.mxu0 %v1258
  %v1326 = vpop.f32.mrf.mxu0
  %v1327 = vadd.f32 0.0, %v1326
  %v1328 = vpop.f32.mrf.mxu0
  %v1329 = vadd.f32 0.0, %v1328
  %1330 = vdwg.mxu0
  %1331 = vmatprep.subr.mxu0 0.0
  %1332 = vmatpush1.msra.mxu0 0.0
  %1333 = vmatprep.subr.mxu0 0.0
  %1334 = vmatpush1.msra.mxu0 0.0
  %1335 = vmatprep.subr.mxu0 0.0
  %1336 = vmatpush1.msra.mxu0 0.0
  %1337 = vmatprep.subr.mxu0 0.0
  %1338 = vmatpush1.msra.mxu0 0.0
  %1339 = vmatprep.subr.mxu0 0.0
  %1340 = vmatpush1.msra.mxu0 0.0
  %1341 = vmatprep.subr.mxu0 0.0
  %1342 = vmatpush1.msra.mxu0 0.0
  %1343 = vmatprep.subr.mxu0 0.0
  %1344 = vmatpush1.msra.mxu0 0.0
  %1345 = vmatprep.subr.mxu0 0.0
  %1346 = vmatpush1.msra.mxu0 0.0
  %1347 = vmatprep.subr.mxu0 0.0
  %1348 = vmatpush1.msra.mxu0 0.0
  %1349 = vmatprep.subr.mxu0 0.0
  %1350 = vmatpush1.msra.mxu0 0.0
  %1351 = vmatprep.subr.mxu0 0.0
  %1352 = vmatpush1.msra.mxu0 0.0
  %1353 = vmatprep.subr.mxu0 0.0
  %1354 = vmatpush1.msra.mxu0 0.0
  %1355 = vmatprep.subr.mxu0 0.0
  %1356 = vmatpush1.msra.mxu0 0.0
  %1357 = vmatprep.subr.mxu0 0.0
  %1358 = vmatpush1.msra.mxu0 0.0
  %1359 = vmatprep.subr.mxu0 0.0
  %1360 = vmatpush1.msra.mxu0 0.0
  %1361 = vmatprep.subr.mxu0 %v1110
  %1362 = vmatpush1.msra.mxu0 %v1109
  %1363 = vmatprep.subr.mxu0 0.0
  %1364 = vmatpush2.msra.mxu0 0.0
  %1365 = vmatprep.subr.mxu0 0.0
  %1366 = vmatpush2.msra.mxu0 0.0
  %1367 = vmatprep.subr.mxu0 0.0
  %1368 = vmatpush2.msra.mxu0 0.0
  %1369 = vmatprep.subr.mxu0 0.0
  %1370 = vmatpush2.msra.mxu0 0.0
  %1371 = vmatprep.subr.mxu0 0.0
  %1372 = vmatpush2.msra.mxu0 0.0
  %1373 = vmatprep.subr.mxu0 0.0
  %1374 = vmatpush2.msra.mxu0 0.0
  %1375 = vmatprep.subr.mxu0 0.0
  %1376 = vmatpush2.msra.mxu0 0.0
  %1377 = vmatprep.subr.mxu0 0.0
  %1378 = vmatpush2.msra.mxu0 0.0
  %1379 = vmatprep.subr.mxu0 0.0
  %1380 = vmatpush2.msra.mxu0 0.0
  %1381 = vmatprep.subr.mxu0 0.0
  %1382 = vmatpush2.msra.mxu0 0.0
  %1383 = vmatprep.subr.mxu0 0.0
  %1384 = vmatpush2.msra.mxu0 0.0
  %1385 = vmatprep.subr.mxu0 0.0
  %1386 = vmatpush2.msra.mxu0 0.0
  %1387 = vmatprep.subr.mxu0 0.0
  %1388 = vmatpush2.msra.mxu0 0.0
  %1389 = vmatprep.subr.mxu0 0.0
  %1390 = vmatpush2.msra.mxu0 0.0
  %1391 = vmatprep.subr.mxu0 0.0
  %1392 = vmatpush2.msra.mxu0 0.0
  %1393 = vmatprep.subr.mxu0 0.0
  %1394 = vmatpush2.msra.mxu0 0.0
  %1395 = vmatprep.mubr.f32.mxu0 0.0
  %1396 = vmatmul.mubr.f32.gmra.mxu0 %v1258
  %v1397 = vpop.f32.mrf.mxu0
  %v1398 = vadd.f32 0.0, %v1397
  %v1399 = vpop.f32.mrf.mxu0
  %v1400 = vadd.f32 0.0, %v1399
  %1401 = vdwg.mxu0
  %v1402 = vsub.f32 %v672, %v1182
  %v1403 = vsub.f32 %v674, %v1184
  %v1404 = vsub.f32 %v754, %v1253
  %v1405 = vsub.f32 %v756, %v1255
  %v1406 = vmul.f32 %v1402, %v1327
  %v1407 = vmul.f32 %v1403, %v1329
  %v1408 = vmul.f32 %v1404, %v1398
  %v1409 = vmul.f32 %v1405, %v1400
  %v1410 = vld [vmem:[%s13] sm:$0xf]
  %v1412 = vlaneseq
  %v1413 = vshrl.u32 %v1412, 7
  %v1414 = vsub.s32 0, %v1413
  %v1415 = vrot.slane %v1410, %v1414
  %v1416 = vlaneseq
  %v1417 = vshrl.u32 %v1416, 7
  %v1418 = vsub.s32 1, %v1417
  %v1419 = vrot.slane %v1410, %v1418
  %v1420 = vlaneseq
  %v1421 = vshrl.u32 %v1420, 7
  %v1422 = vsub.s32 2, %v1421
  %v1423 = vrot.slane %v1410, %v1422
  %v1424 = vlaneseq
  %v1425 = vshrl.u32 %v1424, 7
  %v1426 = vsub.s32 3, %v1425
  %v1427 = vrot.slane %v1410, %v1426
  %v1432 = vmul.f32 %v1406, %v1415
  %v1433 = vmul.f32 %v1407, %v1419
  %v1434 = vmul.f32 %v1408, %v1423
  %v1435 = vmul.f32 %v1409, %v1427
  %v1436 = vld [vmem:[%s14] sm:$0xf]
  %v1438 = vlaneseq
  %v1439 = vshrl.u32 %v1438, 7
  %v1440 = vsub.s32 0, %v1439
  %v1441 = vrot.slane %v1436, %v1440
  %v1442 = vlaneseq
  %v1443 = vshrl.u32 %v1442, 7
  %v1444 = vsub.s32 1, %v1443
  %v1445 = vrot.slane %v1436, %v1444
  %v1446 = vlaneseq
  %v1447 = vshrl.u32 %v1446, 7
  %v1448 = vsub.s32 2, %v1447
  %v1449 = vrot.slane %v1436, %v1448
  %v1450 = vlaneseq
  %v1451 = vshrl.u32 %v1450, 7
  %v1452 = vsub.s32 3, %v1451
  %v1453 = vrot.slane %v1436, %v1452
  %v1458 = vadd.f32 %v1432, %v1441
  %v1459 = vadd.f32 %v1433, %v1445
  %v1460 = vadd.f32 %v1434, %v1449
  %v1461 = vadd.f32 %v1435, %v1453
  %vm1462 = vcmp.gt.f32.partialorder %v1458, 0.0
  %vm1463 = vcmp.gt.f32.partialorder %v1459, 0.0
  %vm1464 = vcmp.gt.f32.partialorder %v1460, 0.0
  %vm1465 = vcmp.gt.f32.partialorder %v1461, 0.0
  %v1466 = vmin.f32 %v1458, 0.0
  %v1467 = vmin.f32 %v1459, 0.0
  %v1468 = vmin.f32 %v1460, 0.0
  %v1469 = vmin.f32 %v1461, 0.0
  %v1470 = vmul.f32 %v1466, 1.442695
  %v1471 = vpow.pop %v1470
  %v1472 = vmul.f32 %v1467, 1.442695
  %v1473 = vpow.pop %v1472
  %v1474 = vmul.f32 %v1468, 1.442695
  %v1475 = vpow.pop %v1474
  %v1476 = vmul.f32 %v1469, 1.442695
  %v1477 = vpow.pop %v1476
  %v1478 = vsub.f32 %v1471, 1.0
  %v1479 = vsub.f32 %v1473, 1.0
  %v1480 = vsub.f32 %v1475, 1.0
  %v1481 = vsub.f32 %v1477, 1.0
  %v1482 = vsel %vm1462, %v1458, %v1478
  %v1483 = vsel %vm1463, %v1459, %v1479
  %v1484 = vsel %vm1464, %v1460, %v1480
  %v1485 = vsel %vm1465, %v1461, %v1481
  %v1486 = vpack.c.bf16 %v1482, %v1482
  %v1487 = vpack.c.bf16 %v1483, %v1483
  %v1488 = vpack.c.bf16 %v1484, %v1484
  %v1489 = vpack.c.bf16 %v1485, %v1485
  %v1490 = vld [vmem:[%s3] sm:$0xff]
  %v1491 = vld [vmem:[%s3 + $0x8] sm:$0xff]
  %v1492 = vld [vmem:[%s3 + $0x10] sm:$0xff]
  %v1493 = vld [vmem:[%s3 + $0x18] sm:$0xf]
  %v1494 = vld [vmem:[%s3 + $0x1c] sm:$0xff]
  %v1495 = vld [vmem:[%s3 + $0x24] sm:$0xff]
  %v1496 = vld [vmem:[%s3 + $0x2c] sm:$0xff]
  %v1497 = vld [vmem:[%s3 + $0x34] sm:$0xf]
  %v1498 = vld [vmem:[%s3 + $0x38] sm:$0xff]
  %v1499 = vld [vmem:[%s3 + $0x40] sm:$0xff]
  %v1500 = vld [vmem:[%s3 + $0x48] sm:$0xff]
  %v1501 = vld [vmem:[%s3 + $0x50] sm:$0xf]
  %v1502 = vld [vmem:[%s3 + $0x54] sm:$0xff]
  %v1503 = vld [vmem:[%s3 + $0x5c] sm:$0xff]
  %v1504 = vld [vmem:[%s3 + $0x64] sm:$0xff]
  %v1505 = vld [vmem:[%s3 + $0x6c] sm:$0xf]
  %v1506 = vld [vmem:[%s3 + $0x70] sm:$0xff]
  %v1507 = vld [vmem:[%s3 + $0x78] sm:$0xff]
  %v1508 = vld [vmem:[%s3 + $0x80] sm:$0xff]
  %v1509 = vld [vmem:[%s3 + $0x88] sm:$0xf]
  %v1510 = vld [vmem:[%s3 + $0x8c] sm:$0xff]
  %v1511 = vld [vmem:[%s3 + $0x94] sm:$0xff]
  %v1512 = vld [vmem:[%s3 + $0x9c] sm:$0xff]
  %v1513 = vld [vmem:[%s3 + $0xa4] sm:$0xf]
  %v1514 = vld [vmem:[%s3 + $0xa8] sm:$0xff]
  %v1515 = vld [vmem:[%s3 + $0xb0] sm:$0xff]
  %v1516 = vld [vmem:[%s3 + $0xb8] sm:$0xff]
  %v1517 = vld [vmem:[%s3 + $0xc0] sm:$0xf]
  %v1518 = vld [vmem:[%s3 + $0xc4] sm:$0xff]
  %v1519 = vld [vmem:[%s3 + $0xcc] sm:$0xff]
  %v1520 = vld [vmem:[%s3 + $0xd4] sm:$0xff]
  %v1521 = vld [vmem:[%s3 + $0xdc] sm:$0xf]
  %v1522 = vld [vmem:[%s3 + $0xe0] sm:$0xff]
  %v1523 = vld [vmem:[%s3 + $0xe8] sm:$0xff]
  %v1524 = vld [vmem:[%s3 + $0xf0] sm:$0xff]
  %v1525 = vld [vmem:[%s3 + $0xf8] sm:$0xf]
  %v1526 = vld [vmem:[%s3 + $0xfc] sm:$0xff]
  %v1527 = vld [vmem:[%s3 + $0x104] sm:$0xff]
  %v1528 = vld [vmem:[%s3 + $0x10c] sm:$0xff]
  %v1529 = vld [vmem:[%s3 + $0x114] sm:$0xf]
  %v1530 = vld [vmem:[%s3 + $0x118] sm:$0xff]
  %v1531 = vld [vmem:[%s3 + $0x120] sm:$0xff]
  %v1532 = vld [vmem:[%s3 + $0x128] sm:$0xff]
  %v1533 = vld [vmem:[%s3 + $0x130] sm:$0xf]
  %v1534 = vld [vmem:[%s3 + $0x134] sm:$0xff]
  %v1535 = vld [vmem:[%s3 + $0x13c] sm:$0xff]
  %v1536 = vld [vmem:[%s3 + $0x144] sm:$0xff]
  %v1537 = vld [vmem:[%s3 + $0x14c] sm:$0xf]
  %v1538 = vld [vmem:[%s3 + $0x150] sm:$0xff]
  %v1539 = vld [vmem:[%s3 + $0x158] sm:$0xff]
  %v1540 = vld [vmem:[%s3 + $0x160] sm:$0xff]
  %v1541 = vld [vmem:[%s3 + $0x168] sm:$0xf]
  %v1542 = vld [vmem:[%s3 + $0x16c] sm:$0xff]
  %v1543 = vld [vmem:[%s3 + $0x174] sm:$0xff]
  %v1544 = vld [vmem:[%s3 + $0x17c] sm:$0xff]
  %v1545 = vld [vmem:[%s3 + $0x184] sm:$0xf]
  %v1546 = vld [vmem:[%s3 + $0x188] sm:$0xff]
  %v1547 = vld [vmem:[%s3 + $0x190] sm:$0xff]
  %v1548 = vld [vmem:[%s3 + $0x198] sm:$0xff]
  %v1549 = vld [vmem:[%s3 + $0x1a0] sm:$0xf]
  %v1550 = vld [vmem:[%s3 + $0x1a4] sm:$0xff]
  %v1551 = vld [vmem:[%s3 + $0x1ac] sm:$0xff]
  %v1552 = vld [vmem:[%s3 + $0x1b4] sm:$0xff]
  %v1553 = vld [vmem:[%s3 + $0x1bc] sm:$0xf]
  %v1554 = vld [vmem:[%s3 + $0x1c0] sm:$0xff]
  %v1555 = vld [vmem:[%s3 + $0x1c8] sm:$0xff]
  %v1556 = vld [vmem:[%s3 + $0x1d0] sm:$0xff]
  %v1557 = vld [vmem:[%s3 + $0x1d8] sm:$0xf]
  %v1558 = vld [vmem:[%s3 + $0x1dc] sm:$0xff]
  %v1559 = vld [vmem:[%s3 + $0x1e4] sm:$0xff]
  %v1560 = vld [vmem:[%s3 + $0x1ec] sm:$0xff]
  %v1561 = vld [vmem:[%s3 + $0x1f4] sm:$0xf]
  %v1562 = vld [vmem:[%s3 + $0x1f8] sm:$0xff]
  %v1563 = vld [vmem:[%s3 + $0x200] sm:$0xff]
  %v1564 = vld [vmem:[%s3 + $0x208] sm:$0xff]
  %v1565 = vld [vmem:[%s3 + $0x210] sm:$0xf]
  %v1566 = vld [vmem:[%s3 + $0x214] sm:$0xff]
  %v1567 = vld [vmem:[%s3 + $0x21c] sm:$0xff]
  %v1568 = vld [vmem:[%s3 + $0x224] sm:$0xff]
  %v1569 = vld [vmem:[%s3 + $0x22c] sm:$0xf]
  %v1570 = vld [vmem:[%s3 + $0x230] sm:$0xff]
  %v1571 = vld [vmem:[%s3 + $0x238] sm:$0xff]
  %v1572 = vld [vmem:[%s3 + $0x240] sm:$0xff]
  %v1573 = vld [vmem:[%s3 + $0x248] sm:$0xf]
  %v1574 = vld [vmem:[%s3 + $0x24c] sm:$0xff]
  %v1575 = vld [vmem:[%s3 + $0x254] sm:$0xff]
  %v1576 = vld [vmem:[%s3 + $0x25c] sm:$0xff]
  %v1577 = vld [vmem:[%s3 + $0x264] sm:$0xf]
  %v1578 = vld [vmem:[%s3 + $0x268] sm:$0xff]
  %v1579 = vld [vmem:[%s3 + $0x270] sm:$0xff]
  %v1580 = vld [vmem:[%s3 + $0x278] sm:$0xff]
  %v1581 = vld [vmem:[%s3 + $0x280] sm:$0xf]
  %v1582 = vld [vmem:[%s3 + $0x284] sm:$0xff]
  %v1583 = vld [vmem:[%s3 + $0x28c] sm:$0xff]
  %v1584 = vld [vmem:[%s3 + $0x294] sm:$0xff]
  %v1585 = vld [vmem:[%s3 + $0x29c] sm:$0xf]
  %v1586 = vld [vmem:[%s3 + $0x2a0] sm:$0xff]
  %v1587 = vld [vmem:[%s3 + $0x2a8] sm:$0xff]
  %v1588 = vld [vmem:[%s3 + $0x2b0] sm:$0xff]
  %v1589 = vld [vmem:[%s3 + $0x2b8] sm:$0xf]
  %v1590 = vld [vmem:[%s3 + $0x2bc] sm:$0xff]
  %v1591 = vld [vmem:[%s3 + $0x2c4] sm:$0xff]
  %v1592 = vld [vmem:[%s3 + $0x2cc] sm:$0xff]
  %v1593 = vld [vmem:[%s3 + $0x2d4] sm:$0xf]
  %v1594 = vld [vmem:[%s3 + $0x2d8] sm:$0xff]
  %v1595 = vld [vmem:[%s3 + $0x2e0] sm:$0xff]
  %v1596 = vld [vmem:[%s3 + $0x2e8] sm:$0xff]
  %v1597 = vld [vmem:[%s3 + $0x2f0] sm:$0xf]
  %v1598 = vld [vmem:[%s3 + $0x2f4] sm:$0xff]
  %v1599 = vld [vmem:[%s3 + $0x2fc] sm:$0xff]
  %v1600 = vld [vmem:[%s3 + $0x304] sm:$0xff]
  %v1601 = vld [vmem:[%s3 + $0x30c] sm:$0xf]
  %v1602 = vld [vmem:[%s3 + $0x310] sm:$0xff]
  %v1603 = vld [vmem:[%s3 + $0x318] sm:$0xff]
  %v1604 = vld [vmem:[%s3 + $0x320] sm:$0xff]
  %v1605 = vld [vmem:[%s3 + $0x328] sm:$0xf]
  %v1606 = vld [vmem:[%s3 + $0x32c] sm:$0xff]
  %v1607 = vld [vmem:[%s3 + $0x334] sm:$0xff]
  %v1608 = vld [vmem:[%s3 + $0x33c] sm:$0xff]
  %v1609 = vld [vmem:[%s3 + $0x344] sm:$0xf]
  %v1610 = vld [vmem:[%s3 + $0x348] sm:$0xff]
  %v1611 = vld [vmem:[%s3 + $0x350] sm:$0xff]
  %v1612 = vld [vmem:[%s3 + $0x358] sm:$0xff]
  %v1613 = vld [vmem:[%s3 + $0x360] sm:$0xf]
  %v1614 = vld [vmem:[%s3 + $0x364] sm:$0xff]
  %v1615 = vld [vmem:[%s3 + $0x36c] sm:$0xff]
  %v1616 = vld [vmem:[%s3 + $0x374] sm:$0xff]
  %v1617 = vld [vmem:[%s3 + $0x37c] sm:$0xf]
  %v1618 = vld [vmem:[%s3 + $0x380] sm:$0xff]
  %v1619 = vld [vmem:[%s3 + $0x388] sm:$0xff]
  %v1620 = vld [vmem:[%s3 + $0x390] sm:$0xff]
  %v1621 = vld [vmem:[%s3 + $0x398] sm:$0xf]
  %v1622 = vld [vmem:[%s3 + $0x39c] sm:$0xff]
  %v1623 = vld [vmem:[%s3 + $0x3a4] sm:$0xff]
  %v1624 = vld [vmem:[%s3 + $0x3ac] sm:$0xff]
  %v1625 = vld [vmem:[%s3 + $0x3b4] sm:$0xf]
  %v1626 = vld [vmem:[%s3 + $0x3b8] sm:$0xff]
  %v1627 = vld [vmem:[%s3 + $0x3c0] sm:$0xff]
  %v1628 = vld [vmem:[%s3 + $0x3c8] sm:$0xff]
  %v1629 = vld [vmem:[%s3 + $0x3d0] sm:$0xf]
  %v1630 = vld [vmem:[%s3 + $0x3d4] sm:$0xff]
  %v1631 = vld [vmem:[%s3 + $0x3dc] sm:$0xff]
  %v1632 = vld [vmem:[%s3 + $0x3e4] sm:$0xff]
  %v1633 = vld [vmem:[%s3 + $0x3ec] sm:$0xf]
  %v1634 = vld [vmem:[%s3 + $0x3f0] sm:$0xff]
  %v1635 = vld [vmem:[%s3 + $0x3f8] sm:$0xff]
  %v1636 = vld [vmem:[%s3 + $0x400] sm:$0xff]
  %v1637 = vld [vmem:[%s3 + $0x408] sm:$0xf]
  %v1638 = vld [vmem:[%s3 + $0x40c] sm:$0xff]
  %v1639 = vld [vmem:[%s3 + $0x414] sm:$0xff]
  %v1640 = vld [vmem:[%s3 + $0x41c] sm:$0xff]
  %v1641 = vld [vmem:[%s3 + $0x424] sm:$0xf]
  %v1642 = vld [vmem:[%s3 + $0x428] sm:$0xff]
  %v1643 = vld [vmem:[%s3 + $0x430] sm:$0xff]
  %v1644 = vld [vmem:[%s3 + $0x438] sm:$0xff]
  %v1645 = vld [vmem:[%s3 + $0x440] sm:$0xf]
  %v1646 = vld [vmem:[%s3 + $0x444] sm:$0xff]
  %v1647 = vld [vmem:[%s3 + $0x44c] sm:$0xff]
  %v1648 = vld [vmem:[%s3 + $0x454] sm:$0xff]
  %v1649 = vld [vmem:[%s3 + $0x45c] sm:$0xf]
  %v1650 = vld [vmem:[%s3 + $0x460] sm:$0xff]
  %v1651 = vld [vmem:[%s3 + $0x468] sm:$0xff]
  %v1652 = vld [vmem:[%s3 + $0x470] sm:$0xff]
  %v1653 = vld [vmem:[%s3 + $0x478] sm:$0xf]
  %v1654 = vld [vmem:[%s3 + $0x47c] sm:$0xff]
  %v1655 = vld [vmem:[%s3 + $0x484] sm:$0xff]
  %v1656 = vld [vmem:[%s3 + $0x48c] sm:$0xff]
  %v1657 = vld [vmem:[%s3 + $0x494] sm:$0xf]
  %v1658 = vld [vmem:[%s3 + $0x498] sm:$0xff]
  %v1659 = vld [vmem:[%s3 + $0x4a0] sm:$0xff]
  %v1660 = vld [vmem:[%s3 + $0x4a8] sm:$0xff]
  %v1661 = vld [vmem:[%s3 + $0x4b0] sm:$0xf]
  %v1662 = vld [vmem:[%s3 + $0x4b4] sm:$0xff]
  %v1663 = vld [vmem:[%s3 + $0x4bc] sm:$0xff]
  %v1664 = vld [vmem:[%s3 + $0x4c4] sm:$0xff]
  %v1665 = vld [vmem:[%s3 + $0x4cc] sm:$0xf]
  %v1666 = vld [vmem:[%s3 + $0x4d0] sm:$0xff]
  %v1667 = vld [vmem:[%s3 + $0x4d8] sm:$0xff]
  %v1668 = vld [vmem:[%s3 + $0x4e0] sm:$0xff]
  %v1669 = vld [vmem:[%s3 + $0x4e8] sm:$0xf]
  %v1670 = vld [vmem:[%s3 + $0x4ec] sm:$0xff]
  %v1671 = vld [vmem:[%s3 + $0x4f4] sm:$0xff]
  %v1672 = vld [vmem:[%s3 + $0x4fc] sm:$0xff]
  %v1673 = vld [vmem:[%s3 + $0x504] sm:$0xf]
  %v1674 = vld [vmem:[%s3 + $0x508] sm:$0xff]
  %v1675 = vld [vmem:[%s3 + $0x510] sm:$0xff]
  %v1676 = vld [vmem:[%s3 + $0x518] sm:$0xff]
  %v1677 = vld [vmem:[%s3 + $0x520] sm:$0xf]
  %v1678 = vld [vmem:[%s3 + $0x524] sm:$0xff]
  %v1679 = vld [vmem:[%s3 + $0x52c] sm:$0xff]
  %v1680 = vld [vmem:[%s3 + $0x534] sm:$0xff]
  %v1681 = vld [vmem:[%s3 + $0x53c] sm:$0xf]
  %v1682 = vld [vmem:[%s3 + $0x540] sm:$0xff]
  %v1683 = vld [vmem:[%s3 + $0x548] sm:$0xff]
  %v1684 = vld [vmem:[%s3 + $0x550] sm:$0xff]
  %v1685 = vld [vmem:[%s3 + $0x558] sm:$0xf]
  %v1686 = vld [vmem:[%s3 + $0x55c] sm:$0xff]
  %v1687 = vld [vmem:[%s3 + $0x564] sm:$0xff]
  %v1688 = vld [vmem:[%s3 + $0x56c] sm:$0xff]
  %v1689 = vld [vmem:[%s3 + $0x574] sm:$0xf]
  %v1690 = vld [vmem:[%s4] sm:$0x7f]
  %v1692 = vlaneseq
  %v1693 = vshrl.u32 %v1692, 7
  %v1694 = vsub.s32 0, %v1693
  %v1695 = vrot.slane %v1690, %v1694
  %v1696 = vlaneseq
  %v1697 = vshrl.u32 %v1696, 7
  %v1698 = vsub.s32 1, %v1697
  %v1699 = vrot.slane %v1690, %v1698
  %v1700 = vlaneseq
  %v1701 = vshrl.u32 %v1700, 7
  %v1702 = vsub.s32 2, %v1701
  %v1703 = vrot.slane %v1690, %v1702
  %v1704 = vlaneseq
  %v1705 = vshrl.u32 %v1704, 7
  %v1706 = vsub.s32 3, %v1705
  %v1707 = vrot.slane %v1690, %v1706
  %v1708 = vlaneseq
  %v1709 = vshrl.u32 %v1708, 7
  %v1710 = vsub.s32 4, %v1709
  %v1711 = vrot.slane %v1690, %v1710
  %v1712 = vlaneseq
  %v1713 = vshrl.u32 %v1712, 7
  %v1714 = vsub.s32 5, %v1713
  %v1715 = vrot.slane %v1690, %v1714
  %v1716 = vlaneseq
  %v1717 = vshrl.u32 %v1716, 7
  %v1718 = vsub.s32 6, %v1717
  %v1719 = vrot.slane %v1690, %v1718
  %v1927 = vunpack.c.l.b16 %v1490
  %v1928 = vunpack.c.h.b16 %v1490
  %v1929 = vunpack.c.l.b16 %v1491
  %v1930 = vunpack.c.h.b16 %v1491
  %v1931 = vunpack.c.l.b16 %v1492
  %v1932 = vunpack.c.h.b16 %v1492
  %v1933 = vunpack.c.l.b16 %v1493
  %v1934 = vunpack.c.l.b16 %v1494
  %v1935 = vunpack.c.h.b16 %v1494
  %v1936 = vunpack.c.l.b16 %v1495
  %v1937 = vunpack.c.h.b16 %v1495
  %v1938 = vunpack.c.l.b16 %v1496
  %v1939 = vunpack.c.h.b16 %v1496
  %v1940 = vunpack.c.l.b16 %v1497
  %v1941 = vunpack.c.l.b16 %v1498
  %v1942 = vunpack.c.h.b16 %v1498
  %v1943 = vunpack.c.l.b16 %v1499
  %v1944 = vunpack.c.h.b16 %v1499
  %v1945 = vunpack.c.l.b16 %v1500
  %v1946 = vunpack.c.h.b16 %v1500
  %v1947 = vunpack.c.l.b16 %v1501
  %v1948 = vunpack.c.l.b16 %v1502
  %v1949 = vunpack.c.h.b16 %v1502
  %v1950 = vunpack.c.l.b16 %v1503
  %v1951 = vunpack.c.h.b16 %v1503
  %v1952 = vunpack.c.l.b16 %v1504
  %v1953 = vunpack.c.h.b16 %v1504
  %v1954 = vunpack.c.l.b16 %v1505
  %v1955 = vunpack.c.l.b16 %v1506
  %v1956 = vunpack.c.h.b16 %v1506
  %v1957 = vunpack.c.l.b16 %v1507
  %v1958 = vunpack.c.h.b16 %v1507
  %v1959 = vunpack.c.l.b16 %v1508
  %v1960 = vunpack.c.h.b16 %v1508
  %v1961 = vunpack.c.l.b16 %v1509
  %v1962 = vunpack.c.l.b16 %v1510
  %v1963 = vunpack.c.h.b16 %v1510
  %v1964 = vunpack.c.l.b16 %v1511
  %v1965 = vunpack.c.h.b16 %v1511
  %v1966 = vunpack.c.l.b16 %v1512
  %v1967 = vunpack.c.h.b16 %v1512
  %v1968 = vunpack.c.l.b16 %v1513
  %v1969 = vunpack.c.l.b16 %v1514
  %v1970 = vunpack.c.h.b16 %v1514
  %v1971 = vunpack.c.l.b16 %v1515
  %v1972 = vunpack.c.h.b16 %v1515
  %v1973 = vunpack.c.l.b16 %v1516
  %v1974 = vunpack.c.h.b16 %v1516
  %v1975 = vunpack.c.l.b16 %v1517
  %v1976 = vunpack.c.l.b16 %v1518
  %v1977 = vunpack.c.h.b16 %v1518
  %v1978 = vunpack.c.l.b16 %v1519
  %v1979 = vunpack.c.h.b16 %v1519
  %v1980 = vunpack.c.l.b16 %v1520
  %v1981 = vunpack.c.h.b16 %v1520
  %v1982 = vunpack.c.l.b16 %v1521
  %v1983 = vunpack.c.l.b16 %v1522
  %v1984 = vunpack.c.h.b16 %v1522
  %v1985 = vunpack.c.l.b16 %v1523
  %v1986 = vunpack.c.h.b16 %v1523
  %v1987 = vunpack.c.l.b16 %v1524
  %v1988 = vunpack.c.h.b16 %v1524
  %v1989 = vunpack.c.l.b16 %v1525
  %v1990 = vunpack.c.l.b16 %v1526
  %v1991 = vunpack.c.h.b16 %v1526
  %v1992 = vunpack.c.l.b16 %v1527
  %v1993 = vunpack.c.h.b16 %v1527
  %v1994 = vunpack.c.l.b16 %v1528
  %v1995 = vunpack.c.h.b16 %v1528
  %v1996 = vunpack.c.l.b16 %v1529
  %v1997 = vunpack.c.l.b16 %v1530
  %v1998 = vunpack.c.h.b16 %v1530
  %v1999 = vunpack.c.l.b16 %v1531
  %v2000 = vunpack.c.h.b16 %v1531
  %v2001 = vunpack.c.l.b16 %v1532
  %v2002 = vunpack.c.h.b16 %v1532
  %v2003 = vunpack.c.l.b16 %v1533
  %v2004 = vunpack.c.l.b16 %v1534
  %v2005 = vunpack.c.h.b16 %v1534
  %v2006 = vunpack.c.l.b16 %v1535
  %v2007 = vunpack.c.h.b16 %v1535
  %v2008 = vunpack.c.l.b16 %v1536
  %v2009 = vunpack.c.h.b16 %v1536
  %v2010 = vunpack.c.l.b16 %v1537
  %v2011 = vunpack.c.l.b16 %v1538
  %v2012 = vunpack.c.h.b16 %v1538
  %v2013 = vunpack.c.l.b16 %v1539
  %v2014 = vunpack.c.h.b16 %v1539
  %v2015 = vunpack.c.l.b16 %v1540
  %v2016 = vunpack.c.h.b16 %v1540
  %v2017 = vunpack.c.l.b16 %v1541
  %v2018 = vunpack.c.l.b16 %v1542
  %v2019 = vunpack.c.h.b16 %v1542
  %v2020 = vunpack.c.l.b16 %v1543
  %v2021 = vunpack.c.h.b16 %v1543
  %v2022 = vunpack.c.l.b16 %v1544
  %v2023 = vunpack.c.h.b16 %v1544
  %v2024 = vunpack.c.l.b16 %v1545
  %v2025 = vunpack.c.l.b16 %v1546
  %v2026 = vunpack.c.h.b16 %v1546
  %v2027 = vunpack.c.l.b16 %v1547
  %v2028 = vunpack.c.h.b16 %v1547
  %v2029 = vunpack.c.l.b16 %v1548
  %v2030 = vunpack.c.h.b16 %v1548
  %v2031 = vunpack.c.l.b16 %v1549
  %v2032 = vunpack.c.l.b16 %v1550
  %v2033 = vunpack.c.h.b16 %v1550
  %v2034 = vunpack.c.l.b16 %v1551
  %v2035 = vunpack.c.h.b16 %v1551
  %v2036 = vunpack.c.l.b16 %v1552
  %v2037 = vunpack.c.h.b16 %v1552
  %v2038 = vunpack.c.l.b16 %v1553
  %v2039 = vunpack.c.l.b16 %v1554
  %v2040 = vunpack.c.h.b16 %v1554
  %v2041 = vunpack.c.l.b16 %v1555
  %v2042 = vunpack.c.h.b16 %v1555
  %v2043 = vunpack.c.l.b16 %v1556
  %v2044 = vunpack.c.h.b16 %v1556
  %v2045 = vunpack.c.l.b16 %v1557
  %v2046 = vunpack.c.l.b16 %v1558
  %v2047 = vunpack.c.h.b16 %v1558
  %v2048 = vunpack.c.l.b16 %v1559
  %v2049 = vunpack.c.h.b16 %v1559
  %v2050 = vunpack.c.l.b16 %v1560
  %v2051 = vunpack.c.h.b16 %v1560
  %v2052 = vunpack.c.l.b16 %v1561
  %v2053 = vunpack.c.l.b16 %v1562
  %v2054 = vunpack.c.h.b16 %v1562
  %v2055 = vunpack.c.l.b16 %v1563
  %v2056 = vunpack.c.h.b16 %v1563
  %v2057 = vunpack.c.l.b16 %v1564
  %v2058 = vunpack.c.h.b16 %v1564
  %v2059 = vunpack.c.l.b16 %v1565
  %v2060 = vunpack.c.l.b16 %v1566
  %v2061 = vunpack.c.h.b16 %v1566
  %v2062 = vunpack.c.l.b16 %v1567
  %v2063 = vunpack.c.h.b16 %v1567
  %v2064 = vunpack.c.l.b16 %v1568
  %v2065 = vunpack.c.h.b16 %v1568
  %v2066 = vunpack.c.l.b16 %v1569
  %v2067 = vunpack.c.l.b16 %v1570
  %v2068 = vunpack.c.h.b16 %v1570
  %v2069 = vunpack.c.l.b16 %v1571
  %v2070 = vunpack.c.h.b16 %v1571
  %v2071 = vunpack.c.l.b16 %v1572
  %v2072 = vunpack.c.h.b16 %v1572
  %v2073 = vunpack.c.l.b16 %v1573
  %v2074 = vunpack.c.l.b16 %v1574
  %v2075 = vunpack.c.h.b16 %v1574
  %v2076 = vunpack.c.l.b16 %v1575
  %v2077 = vunpack.c.h.b16 %v1575
  %v2078 = vunpack.c.l.b16 %v1576
  %v2079 = vunpack.c.h.b16 %v1576
  %v2080 = vunpack.c.l.b16 %v1577
  %v2081 = vunpack.c.l.b16 %v1578
  %v2082 = vunpack.c.h.b16 %v1578
  %v2083 = vunpack.c.l.b16 %v1579
  %v2084 = vunpack.c.h.b16 %v1579
  %v2085 = vunpack.c.l.b16 %v1580
  %v2086 = vunpack.c.h.b16 %v1580
  %v2087 = vunpack.c.l.b16 %v1581
  %v2088 = vunpack.c.l.b16 %v1582
  %v2089 = vunpack.c.h.b16 %v1582
  %v2090 = vunpack.c.l.b16 %v1583
  %v2091 = vunpack.c.h.b16 %v1583
  %v2092 = vunpack.c.l.b16 %v1584
  %v2093 = vunpack.c.h.b16 %v1584
  %v2094 = vunpack.c.l.b16 %v1585
  %v2095 = vunpack.c.l.b16 %v1586
  %v2096 = vunpack.c.h.b16 %v1586
  %v2097 = vunpack.c.l.b16 %v1587
  %v2098 = vunpack.c.h.b16 %v1587
  %v2099 = vunpack.c.l.b16 %v1588
  %v2100 = vunpack.c.h.b16 %v1588
  %v2101 = vunpack.c.l.b16 %v1589
  %v2102 = vunpack.c.l.b16 %v1590
  %v2103 = vunpack.c.h.b16 %v1590
  %v2104 = vunpack.c.l.b16 %v1591
  %v2105 = vunpack.c.h.b16 %v1591
  %v2106 = vunpack.c.l.b16 %v1592
  %v2107 = vunpack.c.h.b16 %v1592
  %v2108 = vunpack.c.l.b16 %v1593
  %v2109 = vunpack.c.l.b16 %v1594
  %v2110 = vunpack.c.h.b16 %v1594
  %v2111 = vunpack.c.l.b16 %v1595
  %v2112 = vunpack.c.h.b16 %v1595
  %v2113 = vunpack.c.l.b16 %v1596
  %v2114 = vunpack.c.h.b16 %v1596
  %v2115 = vunpack.c.l.b16 %v1597
  %v2116 = vunpack.c.l.b16 %v1598
  %v2117 = vunpack.c.h.b16 %v1598
  %v2118 = vunpack.c.l.b16 %v1599
  %v2119 = vunpack.c.h.b16 %v1599
  %v2120 = vunpack.c.l.b16 %v1600
  %v2121 = vunpack.c.h.b16 %v1600
  %v2122 = vunpack.c.l.b16 %v1601
  %v2123 = vunpack.c.l.b16 %v1602
  %v2124 = vunpack.c.h.b16 %v1602
  %v2125 = vunpack.c.l.b16 %v1603
  %v2126 = vunpack.c.h.b16 %v1603
  %v2127 = vunpack.c.l.b16 %v1604
  %v2128 = vunpack.c.h.b16 %v1604
  %v2129 = vunpack.c.l.b16 %v1605
  %v2130 = vunpack.c.l.b16 %v1606
  %v2131 = vunpack.c.h.b16 %v1606
  %v2132 = vunpack.c.l.b16 %v1607
  %v2133 = vunpack.c.h.b16 %v1607
  %v2134 = vunpack.c.l.b16 %v1608
  %v2135 = vunpack.c.h.b16 %v1608
  %v2136 = vunpack.c.l.b16 %v1609
  %v2137 = vunpack.c.l.b16 %v1610
  %v2138 = vunpack.c.h.b16 %v1610
  %v2139 = vunpack.c.l.b16 %v1611
  %v2140 = vunpack.c.h.b16 %v1611
  %v2141 = vunpack.c.l.b16 %v1612
  %v2142 = vunpack.c.h.b16 %v1612
  %v2143 = vunpack.c.l.b16 %v1613
  %v2144 = vunpack.c.l.b16 %v1614
  %v2145 = vunpack.c.h.b16 %v1614
  %v2146 = vunpack.c.l.b16 %v1615
  %v2147 = vunpack.c.h.b16 %v1615
  %v2148 = vunpack.c.l.b16 %v1616
  %v2149 = vunpack.c.h.b16 %v1616
  %v2150 = vunpack.c.l.b16 %v1617
  %v2151 = vunpack.c.l.b16 %v1618
  %v2152 = vunpack.c.h.b16 %v1618
  %v2153 = vunpack.c.l.b16 %v1619
  %v2154 = vunpack.c.h.b16 %v1619
  %v2155 = vunpack.c.l.b16 %v1620
  %v2156 = vunpack.c.h.b16 %v1620
  %v2157 = vunpack.c.l.b16 %v1621
  %v2158 = vunpack.c.l.b16 %v1622
  %v2159 = vunpack.c.h.b16 %v1622
  %v2160 = vunpack.c.l.b16 %v1623
  %v2161 = vunpack.c.h.b16 %v1623
  %v2162 = vunpack.c.l.b16 %v1624
  %v2163 = vunpack.c.h.b16 %v1624
  %v2164 = vunpack.c.l.b16 %v1625
  %v2165 = vunpack.c.l.b16 %v1626
  %v2166 = vunpack.c.h.b16 %v1626
  %v2167 = vunpack.c.l.b16 %v1627
  %v2168 = vunpack.c.h.b16 %v1627
  %v2169 = vunpack.c.l.b16 %v1628
  %v2170 = vunpack.c.h.b16 %v1628
  %v2171 = vunpack.c.l.b16 %v1629
  %v2172 = vunpack.c.l.b16 %v1630
  %v2173 = vunpack.c.h.b16 %v1630
  %v2174 = vunpack.c.l.b16 %v1631
  %v2175 = vunpack.c.h.b16 %v1631
  %v2176 = vunpack.c.l.b16 %v1632
  %v2177 = vunpack.c.h.b16 %v1632
  %v2178 = vunpack.c.l.b16 %v1633
  %v2179 = vunpack.c.l.b16 %v1634
  %v2180 = vunpack.c.h.b16 %v1634
  %v2181 = vunpack.c.l.b16 %v1635
  %v2182 = vunpack.c.h.b16 %v1635
  %v2183 = vunpack.c.l.b16 %v1636
  %v2184 = vunpack.c.h.b16 %v1636
  %v2185 = vunpack.c.l.b16 %v1637
  %v2186 = vunpack.c.l.b16 %v1638
  %v2187 = vunpack.c.h.b16 %v1638
  %v2188 = vunpack.c.l.b16 %v1639
  %v2189 = vunpack.c.h.b16 %v1639
  %v2190 = vunpack.c.l.b16 %v1640
  %v2191 = vunpack.c.h.b16 %v1640
  %v2192 = vunpack.c.l.b16 %v1641
  %v2193 = vunpack.c.l.b16 %v1642
  %v2194 = vunpack.c.h.b16 %v1642
  %v2195 = vunpack.c.l.b16 %v1643
  %v2196 = vunpack.c.h.b16 %v1643
  %v2197 = vunpack.c.l.b16 %v1644
  %v2198 = vunpack.c.h.b16 %v1644
  %v2199 = vunpack.c.l.b16 %v1645
  %v2200 = vunpack.c.l.b16 %v1646
  %v2201 = vunpack.c.h.b16 %v1646
  %v2202 = vunpack.c.l.b16 %v1647
  %v2203 = vunpack.c.h.b16 %v1647
  %v2204 = vunpack.c.l.b16 %v1648
  %v2205 = vunpack.c.h.b16 %v1648
  %v2206 = vunpack.c.l.b16 %v1649
  %v2207 = vunpack.c.l.b16 %v1650
  %v2208 = vunpack.c.h.b16 %v1650
  %v2209 = vunpack.c.l.b16 %v1651
  %v2210 = vunpack.c.h.b16 %v1651
  %v2211 = vunpack.c.l.b16 %v1652
  %v2212 = vunpack.c.h.b16 %v1652
  %v2213 = vunpack.c.l.b16 %v1653
  %v2214 = vunpack.c.l.b16 %v1654
  %v2215 = vunpack.c.h.b16 %v1654
  %v2216 = vunpack.c.l.b16 %v1655
  %v2217 = vunpack.c.h.b16 %v1655
  %v2218 = vunpack.c.l.b16 %v1656
  %v2219 = vunpack.c.h.b16 %v1656
  %v2220 = vunpack.c.l.b16 %v1657
  %v2221 = vunpack.c.l.b16 %v1658
  %v2222 = vunpack.c.h.b16 %v1658
  %v2223 = vunpack.c.l.b16 %v1659
  %v2224 = vunpack.c.h.b16 %v1659
  %v2225 = vunpack.c.l.b16 %v1660
  %v2226 = vunpack.c.h.b16 %v1660
  %v2227 = vunpack.c.l.b16 %v1661
  %v2228 = vunpack.c.l.b16 %v1662
  %v2229 = vunpack.c.h.b16 %v1662
  %v2230 = vunpack.c.l.b16 %v1663
  %v2231 = vunpack.c.h.b16 %v1663
  %v2232 = vunpack.c.l.b16 %v1664
  %v2233 = vunpack.c.h.b16 %v1664
  %v2234 = vunpack.c.l.b16 %v1665
  %v2235 = vunpack.c.l.b16 %v1666
  %v2236 = vunpack.c.h.b16 %v1666
  %v2237 = vunpack.c.l.b16 %v1667
  %v2238 = vunpack.c.h.b16 %v1667
  %v2239 = vunpack.c.l.b16 %v1668
  %v2240 = vunpack.c.h.b16 %v1668
  %v2241 = vunpack.c.l.b16 %v1669
  %v2242 = vunpack.c.l.b16 %v1670
  %v2243 = vunpack.c.h.b16 %v1670
  %v2244 = vunpack.c.l.b16 %v1671
  %v2245 = vunpack.c.h.b16 %v1671
  %v2246 = vunpack.c.l.b16 %v1672
  %v2247 = vunpack.c.h.b16 %v1672
  %v2248 = vunpack.c.l.b16 %v1673
  %v2249 = vunpack.c.l.b16 %v1674
  %v2250 = vunpack.c.h.b16 %v1674
  %v2251 = vunpack.c.l.b16 %v1675
  %v2252 = vunpack.c.h.b16 %v1675
  %v2253 = vunpack.c.l.b16 %v1676
  %v2254 = vunpack.c.h.b16 %v1676
  %v2255 = vunpack.c.l.b16 %v1677
  %v2256 = vunpack.c.l.b16 %v1678
  %v2257 = vunpack.c.h.b16 %v1678
  %v2258 = vunpack.c.l.b16 %v1679
  %v2259 = vunpack.c.h.b16 %v1679
  %v2260 = vunpack.c.l.b16 %v1680
  %v2261 = vunpack.c.h.b16 %v1680
  %v2262 = vunpack.c.l.b16 %v1681
  %v2263 = vunpack.c.l.b16 %v1682
  %v2264 = vunpack.c.h.b16 %v1682
  %v2265 = vunpack.c.l.b16 %v1683
  %v2266 = vunpack.c.h.b16 %v1683
  %v2267 = vunpack.c.l.b16 %v1684
  %v2268 = vunpack.c.h.b16 %v1684
  %v2269 = vunpack.c.l.b16 %v1685
  %v2270 = vunpack.c.l.b16 %v1686
  %v2271 = vunpack.c.h.b16 %v1686
  %v2272 = vunpack.c.l.b16 %v1687
  %v2273 = vunpack.c.h.b16 %v1687
  %v2274 = vunpack.c.l.b16 %v1688
  %v2275 = vunpack.c.h.b16 %v1688
  %v2276 = vunpack.c.l.b16 %v1689
  %v2277 = vpack.c.b16 %v1934, %v1927
  %v2278 = vpack.c.b16 %v1935, %v1928
  %v2279 = vpack.c.b16 %v1936, %v1929
  %v2280 = vpack.c.b16 %v1937, %v1930
  %v2281 = vpack.c.b16 %v1938, %v1931
  %v2282 = vpack.c.b16 %v1939, %v1932
  %v2283 = vpack.c.b16 %v1940, %v1933
  %v2284 = vpack.c.b16 %v1948, %v1941
  %v2285 = vpack.c.b16 %v1949, %v1942
  %v2286 = vpack.c.b16 %v1950, %v1943
  %v2287 = vpack.c.b16 %v1951, %v1944
  %v2288 = vpack.c.b16 %v1952, %v1945
  %v2289 = vpack.c.b16 %v1953, %v1946
  %v2290 = vpack.c.b16 %v1954, %v1947
  %v2291 = vpack.c.b16 %v1962, %v1955
  %v2292 = vpack.c.b16 %v1963, %v1956
  %v2293 = vpack.c.b16 %v1964, %v1957
  %v2294 = vpack.c.b16 %v1965, %v1958
  %v2295 = vpack.c.b16 %v1966, %v1959
  %v2296 = vpack.c.b16 %v1967, %v1960
  %v2297 = vpack.c.b16 %v1968, %v1961
  %v2298 = vpack.c.b16 %v1976, %v1969
  %v2299 = vpack.c.b16 %v1977, %v1970
  %v2300 = vpack.c.b16 %v1978, %v1971
  %v2301 = vpack.c.b16 %v1979, %v1972
  %v2302 = vpack.c.b16 %v1980, %v1973
  %v2303 = vpack.c.b16 %v1981, %v1974
  %v2304 = vpack.c.b16 %v1982, %v1975
  %v2305 = vpack.c.b16 %v1990, %v1983
  %v2306 = vpack.c.b16 %v1991, %v1984
  %v2307 = vpack.c.b16 %v1992, %v1985
  %v2308 = vpack.c.b16 %v1993, %v1986
  %v2309 = vpack.c.b16 %v1994, %v1987
  %v2310 = vpack.c.b16 %v1995, %v1988
  %v2311 = vpack.c.b16 %v1996, %v1989
  %v2312 = vpack.c.b16 %v2004, %v1997
  %v2313 = vpack.c.b16 %v2005, %v1998
  %v2314 = vpack.c.b16 %v2006, %v1999
  %v2315 = vpack.c.b16 %v2007, %v2000
  %v2316 = vpack.c.b16 %v2008, %v2001
  %v2317 = vpack.c.b16 %v2009, %v2002
  %v2318 = vpack.c.b16 %v2010, %v2003
  %v2319 = vpack.c.b16 %v2018, %v2011
  %v2320 = vpack.c.b16 %v2019, %v2012
  %v2321 = vpack.c.b16 %v2020, %v2013
  %v2322 = vpack.c.b16 %v2021, %v2014
  %v2323 = vpack.c.b16 %v2022, %v2015
  %v2324 = vpack.c.b16 %v2023, %v2016
  %v2325 = vpack.c.b16 %v2024, %v2017
  %v2326 = vpack.c.b16 %v2032, %v2025
  %v2327 = vpack.c.b16 %v2033, %v2026
  %v2328 = vpack.c.b16 %v2034, %v2027
  %v2329 = vpack.c.b16 %v2035, %v2028
  %v2330 = vpack.c.b16 %v2036, %v2029
  %v2331 = vpack.c.b16 %v2037, %v2030
  %v2332 = vpack.c.b16 %v2038, %v2031
  %v2333 = vpack.c.b16 %v2046, %v2039
  %v2334 = vpack.c.b16 %v2047, %v2040
  %v2335 = vpack.c.b16 %v2048, %v2041
  %v2336 = vpack.c.b16 %v2049, %v2042
  %v2337 = vpack.c.b16 %v2050, %v2043
  %v2338 = vpack.c.b16 %v2051, %v2044
  %v2339 = vpack.c.b16 %v2052, %v2045
  %v2340 = vpack.c.b16 %v2060, %v2053
  %v2341 = vpack.c.b16 %v2061, %v2054
  %v2342 = vpack.c.b16 %v2062, %v2055
  %v2343 = vpack.c.b16 %v2063, %v2056
  %v2344 = vpack.c.b16 %v2064, %v2057
  %v2345 = vpack.c.b16 %v2065, %v2058
  %v2346 = vpack.c.b16 %v2066, %v2059
  %v2347 = vpack.c.b16 %v2074, %v2067
  %v2348 = vpack.c.b16 %v2075, %v2068
  %v2349 = vpack.c.b16 %v2076, %v2069
  %v2350 = vpack.c.b16 %v2077, %v2070
  %v2351 = vpack.c.b16 %v2078, %v2071
  %v2352 = vpack.c.b16 %v2079, %v2072
  %v2353 = vpack.c.b16 %v2080, %v2073
  %v2354 = vpack.c.b16 %v2088, %v2081
  %v2355 = vpack.c.b16 %v2089, %v2082
  %v2356 = vpack.c.b16 %v2090, %v2083
  %v2357 = vpack.c.b16 %v2091, %v2084
  %v2358 = vpack.c.b16 %v2092, %v2085
  %v2359 = vpack.c.b16 %v2093, %v2086
  %v2360 = vpack.c.b16 %v2094, %v2087
  %v2361 = vpack.c.b16 %v2102, %v2095
  %v2362 = vpack.c.b16 %v2103, %v2096
  %v2363 = vpack.c.b16 %v2104, %v2097
  %v2364 = vpack.c.b16 %v2105, %v2098
  %v2365 = vpack.c.b16 %v2106, %v2099
  %v2366 = vpack.c.b16 %v2107, %v2100
  %v2367 = vpack.c.b16 %v2108, %v2101
  %v2368 = vpack.c.b16 %v2116, %v2109
  %v2369 = vpack.c.b16 %v2117, %v2110
  %v2370 = vpack.c.b16 %v2118, %v2111
  %v2371 = vpack.c.b16 %v2119, %v2112
  %v2372 = vpack.c.b16 %v2120, %v2113
  %v2373 = vpack.c.b16 %v2121, %v2114
  %v2374 = vpack.c.b16 %v2122, %v2115
  %v2375 = vpack.c.b16 %v2130, %v2123
  %v2376 = vpack.c.b16 %v2131, %v2124
  %v2377 = vpack.c.b16 %v2132, %v2125
  %v2378 = vpack.c.b16 %v2133, %v2126
  %v2379 = vpack.c.b16 %v2134, %v2127
  %v2380 = vpack.c.b16 %v2135, %v2128
  %v2381 = vpack.c.b16 %v2136, %v2129
  %v2382 = vpack.c.b16 %v2144, %v2137
  %v2383 = vpack.c.b16 %v2145, %v2138
  %v2384 = vpack.c.b16 %v2146, %v2139
  %v2385 = vpack.c.b16 %v2147, %v2140
  %v2386 = vpack.c.b16 %v2148, %v2141
  %v2387 = vpack.c.b16 %v2149, %v2142
  %v2388 = vpack.c.b16 %v2150, %v2143
  %v2389 = vpack.c.b16 %v2158, %v2151
  %v2390 = vpack.c.b16 %v2159, %v2152
  %v2391 = vpack.c.b16 %v2160, %v2153
  %v2392 = vpack.c.b16 %v2161, %v2154
  %v2393 = vpack.c.b16 %v2162, %v2155
  %v2394 = vpack.c.b16 %v2163, %v2156
  %v2395 = vpack.c.b16 %v2164, %v2157
  %v2396 = vpack.c.b16 %v2172, %v2165
  %v2397 = vpack.c.b16 %v2173, %v2166
  %v2398 = vpack.c.b16 %v2174, %v2167
  %v2399 = vpack.c.b16 %v2175, %v2168
  %v2400 = vpack.c.b16 %v2176, %v2169
  %v2401 = vpack.c.b16 %v2177, %v2170
  %v2402 = vpack.c.b16 %v2178, %v2171
  %v2403 = vpack.c.b16 %v2186, %v2179
  %v2404 = vpack.c.b16 %v2187, %v2180
  %v2405 = vpack.c.b16 %v2188, %v2181
  %v2406 = vpack.c.b16 %v2189, %v2182
  %v2407 = vpack.c.b16 %v2190, %v2183
  %v2408 = vpack.c.b16 %v2191, %v2184
  %v2409 = vpack.c.b16 %v2192, %v2185
  %v2410 = vpack.c.b16 %v2200, %v2193
  %v2411 = vpack.c.b16 %v2201, %v2194
  %v2412 = vpack.c.b16 %v2202, %v2195
  %v2413 = vpack.c.b16 %v2203, %v2196
  %v2414 = vpack.c.b16 %v2204, %v2197
  %v2415 = vpack.c.b16 %v2205, %v2198
  %v2416 = vpack.c.b16 %v2206, %v2199
  %v2417 = vpack.c.b16 %v2214, %v2207
  %v2418 = vpack.c.b16 %v2215, %v2208
  %v2419 = vpack.c.b16 %v2216, %v2209
  %v2420 = vpack.c.b16 %v2217, %v2210
  %v2421 = vpack.c.b16 %v2218, %v2211
  %v2422 = vpack.c.b16 %v2219, %v2212
  %v2423 = vpack.c.b16 %v2220, %v2213
  %v2424 = vpack.c.b16 %v2228, %v2221
  %v2425 = vpack.c.b16 %v2229, %v2222
  %v2426 = vpack.c.b16 %v2230, %v2223
  %v2427 = vpack.c.b16 %v2231, %v2224
  %v2428 = vpack.c.b16 %v2232, %v2225
  %v2429 = vpack.c.b16 %v2233, %v2226
  %v2430 = vpack.c.b16 %v2234, %v2227
  %v2431 = vpack.c.b16 %v2242, %v2235
  %v2432 = vpack.c.b16 %v2243, %v2236
  %v2433 = vpack.c.b16 %v2244, %v2237
  %v2434 = vpack.c.b16 %v2245, %v2238
  %v2435 = vpack.c.b16 %v2246, %v2239
  %v2436 = vpack.c.b16 %v2247, %v2240
  %v2437 = vpack.c.b16 %v2248, %v2241
  %v2438 = vpack.c.b16 %v2256, %v2249
  %v2439 = vpack.c.b16 %v2257, %v2250
  %v2440 = vpack.c.b16 %v2258, %v2251
  %v2441 = vpack.c.b16 %v2259, %v2252
  %v2442 = vpack.c.b16 %v2260, %v2253
  %v2443 = vpack.c.b16 %v2261, %v2254
  %v2444 = vpack.c.b16 %v2262, %v2255
  %v2445 = vpack.c.b16 %v2270, %v2263
  %v2446 = vpack.c.b16 %v2271, %v2264
  %v2447 = vpack.c.b16 %v2272, %v2265
  %v2448 = vpack.c.b16 %v2273, %v2266
  %v2449 = vpack.c.b16 %v2274, %v2267
  %v2450 = vpack.c.b16 %v2275, %v2268
  %v2451 = vpack.c.b16 %v2276, %v2269
  %v2628 = vsel %vm810, %v1489, 0
  %2630 = vmatprep.subr.bf16.mxu0 %v2327
  %2631 = vmatpush1.bf16.msra.mxu0 %v2326
  %2632 = vmatprep.subr.bf16.mxu0 %v2320
  %2633 = vmatpush1.bf16.msra.mxu0 %v2319
  %2634 = vmatprep.subr.bf16.mxu0 %v2313
  %2635 = vmatpush1.bf16.msra.mxu0 %v2312
  %2636 = vmatprep.subr.bf16.mxu0 %v2306
  %2637 = vmatpush1.bf16.msra.mxu0 %v2305
  %2638 = vmatprep.subr.bf16.mxu0 %v2299
  %2639 = vmatpush1.bf16.msra.mxu0 %v2298
  %2640 = vmatprep.subr.bf16.mxu0 %v2292
  %2641 = vmatpush1.bf16.msra.mxu0 %v2291
  %2642 = vmatprep.subr.bf16.mxu0 %v2285
  %2643 = vmatpush1.bf16.msra.mxu0 %v2284
  %2644 = vmatprep.subr.bf16.mxu0 %v2278
  %2645 = vmatpush1.bf16.msra.mxu0 %v2277
  %2646 = vmatprep.subr.bf16.mxu0 %v2383
  %2647 = vmatpush2.bf16.msra.mxu0 %v2382
  %2648 = vmatprep.subr.bf16.mxu0 %v2376
  %2649 = vmatpush2.bf16.msra.mxu0 %v2375
  %2650 = vmatprep.subr.bf16.mxu0 %v2369
  %2651 = vmatpush2.bf16.msra.mxu0 %v2368
  %2652 = vmatprep.subr.bf16.mxu0 %v2362
  %2653 = vmatpush2.bf16.msra.mxu0 %v2361
  %2654 = vmatprep.subr.bf16.mxu0 %v2355
  %2655 = vmatpush2.bf16.msra.mxu0 %v2354
  %2656 = vmatprep.subr.bf16.mxu0 %v2348
  %2657 = vmatpush2.bf16.msra.mxu0 %v2347
  %2658 = vmatprep.subr.bf16.mxu0 %v2341
  %2659 = vmatpush2.bf16.msra.mxu0 %v2340
  %2660 = vmatprep.subr.bf16.mxu0 %v2334
  %2661 = vmatpush2.bf16.msra.mxu0 %v2333
  %2662 = vmatprep.mubr.bf16.mxu0 %v1487
  %2663 = vmatmul.mubr.bf16.gmra.mxu0 %v1486
  %v2664 = vpop.f32.mrf.mxu0
  %v2665 = vadd.f32 %v1695, %v2664
  %v2666 = vpop.f32.mrf.mxu0
  %v2667 = vadd.f32 %v1699, %v2666
  %v2668 = vpop.f32.mrf.mxu0
  %v2669 = vpop.f32.mrf.mxu0
  %2670 = vdwg.mxu0
  %2671 = vmatprep.subr.bf16.mxu0 %v2439
  %2672 = vmatpush1.bf16.msra.mxu0 %v2438
  %2673 = vmatprep.subr.bf16.mxu0 %v2432
  %2674 = vmatpush1.bf16.msra.mxu0 %v2431
  %2675 = vmatprep.subr.bf16.mxu0 %v2425
  %2676 = vmatpush1.bf16.msra.mxu0 %v2424
  %2677 = vmatprep.subr.bf16.mxu0 %v2418
  %2678 = vmatpush1.bf16.msra.mxu0 %v2417
  %2679 = vmatprep.subr.bf16.mxu0 %v2411
  %2680 = vmatpush1.bf16.msra.mxu0 %v2410
  %2681 = vmatprep.subr.bf16.mxu0 %v2404
  %2682 = vmatpush1.bf16.msra.mxu0 %v2403
  %2683 = vmatprep.subr.bf16.mxu0 %v2397
  %2684 = vmatpush1.bf16.msra.mxu0 %v2396
  %2685 = vmatprep.subr.bf16.mxu0 %v2390
  %2686 = vmatpush1.bf16.msra.mxu0 %v2389
  %2687 = vmatprep.subr.bf16.mxu0 0
  %2688 = vmatpush2.bf16.msra.mxu0 0
  %2689 = vmatprep.subr.bf16.mxu0 0
  %2690 = vmatpush2.bf16.msra.mxu0 0
  %2691 = vmatprep.subr.bf16.mxu0 0
  %2692 = vmatpush2.bf16.msra.mxu0 0
  %2693 = vmatprep.subr.bf16.mxu0 0
  %2694 = vmatpush2.bf16.msra.mxu0 0
  %2695 = vmatprep.subr.bf16.mxu0 0
  %2696 = vmatpush2.bf16.msra.mxu0 0
  %2697 = vmatprep.subr.bf16.mxu0 0
  %2698 = vmatpush2.bf16.msra.mxu0 0
  %2699 = vmatprep.subr.bf16.mxu0 0
  %2700 = vmatpush2.bf16.msra.mxu0 0
  %2701 = vmatprep.subr.bf16.mxu0 %v2446
  %2702 = vmatpush2.bf16.msra.mxu0 %v2445
  %2703 = vmatprep.mubr.bf16.mxu0 %v2628
  %2704 = vmatmul.mubr.bf16.gmra.mxu0 %v1488
  %v2705 = vpop.f32.mrf.mxu0
  %v2706 = vadd.f32 %v2665, %v2705
  %v2707 = vpop.f32.mrf.mxu0
  %v2708 = vadd.f32 %v2667, %v2707
  %v2709 = vpop.f32.mrf.mxu0
  %v2710 = vpop.f32.mrf.mxu0
  %2711 = vdwg.mxu0
  %2712 = vmatprep.subr.bf16.mxu0 %v2329
  %2713 = vmatpush1.bf16.msra.mxu0 %v2328
  %2714 = vmatprep.subr.bf16.mxu0 %v2322
  %2715 = vmatpush1.bf16.msra.mxu0 %v2321
  %2716 = vmatprep.subr.bf16.mxu0 %v2315
  %2717 = vmatpush1.bf16.msra.mxu0 %v2314
  %2718 = vmatprep.subr.bf16.mxu0 %v2308
  %2719 = vmatpush1.bf16.msra.mxu0 %v2307
  %2720 = vmatprep.subr.bf16.mxu0 %v2301
  %2721 = vmatpush1.bf16.msra.mxu0 %v2300
  %2722 = vmatprep.subr.bf16.mxu0 %v2294
  %2723 = vmatpush1.bf16.msra.mxu0 %v2293
  %2724 = vmatprep.subr.bf16.mxu0 %v2287
  %2725 = vmatpush1.bf16.msra.mxu0 %v2286
  %2726 = vmatprep.subr.bf16.mxu0 %v2280
  %2727 = vmatpush1.bf16.msra.mxu0 %v2279
  %2728 = vmatprep.subr.bf16.mxu0 %v2385
  %2729 = vmatpush2.bf16.msra.mxu0 %v2384
  %2730 = vmatprep.subr.bf16.mxu0 %v2378
  %2731 = vmatpush2.bf16.msra.mxu0 %v2377
  %2732 = vmatprep.subr.bf16.mxu0 %v2371
  %2733 = vmatpush2.bf16.msra.mxu0 %v2370
  %2734 = vmatprep.subr.bf16.mxu0 %v2364
  %2735 = vmatpush2.bf16.msra.mxu0 %v2363
  %2736 = vmatprep.subr.bf16.mxu0 %v2357
  %2737 = vmatpush2.bf16.msra.mxu0 %v2356
  %2738 = vmatprep.subr.bf16.mxu0 %v2350
  %2739 = vmatpush2.bf16.msra.mxu0 %v2349
  %2740 = vmatprep.subr.bf16.mxu0 %v2343
  %2741 = vmatpush2.bf16.msra.mxu0 %v2342
  %2742 = vmatprep.subr.bf16.mxu0 %v2336
  %2743 = vmatpush2.bf16.msra.mxu0 %v2335
  %2744 = vmatprep.mubr.bf16.mxu0 %v1487
  %2745 = vmatmul.mubr.bf16.gmra.mxu0 %v1486
  %v2746 = vpop.f32.mrf.mxu0
  %v2747 = vadd.f32 %v1703, %v2746
  %v2748 = vpop.f32.mrf.mxu0
  %v2749 = vadd.f32 %v1707, %v2748
  %v2750 = vpop.f32.mrf.mxu0
  %v2751 = vpop.f32.mrf.mxu0
  %2752 = vdwg.mxu0
  %2753 = vmatprep.subr.bf16.mxu0 %v2441
  %2754 = vmatpush1.bf16.msra.mxu0 %v2440
  %2755 = vmatprep.subr.bf16.mxu0 %v2434
  %2756 = vmatpush1.bf16.msra.mxu0 %v2433
  %2757 = vmatprep.subr.bf16.mxu0 %v2427
  %2758 = vmatpush1.bf16.msra.mxu0 %v2426
  %2759 = vmatprep.subr.bf16.mxu0 %v2420
  %2760 = vmatpush1.bf16.msra.mxu0 %v2419
  %2761 = vmatprep.subr.bf16.mxu0 %v2413
  %2762 = vmatpush1.bf16.msra.mxu0 %v2412
  %2763 = vmatprep.subr.bf16.mxu0 %v2406
  %2764 = vmatpush1.bf16.msra.mxu0 %v2405
  %2765 = vmatprep.subr.bf16.mxu0 %v2399
  %2766 = vmatpush1.bf16.msra.mxu0 %v2398
  %2767 = vmatprep.subr.bf16.mxu0 %v2392
  %2768 = vmatpush1.bf16.msra.mxu0 %v2391
  %2769 = vmatprep.subr.bf16.mxu0 0
  %2770 = vmatpush2.bf16.msra.mxu0 0
  %2771 = vmatprep.subr.bf16.mxu0 0
  %2772 = vmatpush2.bf16.msra.mxu0 0
  %2773 = vmatprep.subr.bf16.mxu0 0
  %2774 = vmatpush2.bf16.msra.mxu0 0
  %2775 = vmatprep.subr.bf16.mxu0 0
  %2776 = vmatpush2.bf16.msra.mxu0 0
  %2777 = vmatprep.subr.bf16.mxu0 0
  %2778 = vmatpush2.bf16.msra.mxu0 0
  %2779 = vmatprep.subr.bf16.mxu0 0
  %2780 = vmatpush2.bf16.msra.mxu0 0
  %2781 = vmatprep.subr.bf16.mxu0 0
  %2782 = vmatpush2.bf16.msra.mxu0 0
  %2783 = vmatprep.subr.bf16.mxu0 %v2448
  %2784 = vmatpush2.bf16.msra.mxu0 %v2447
  %2785 = vmatprep.mubr.bf16.mxu0 %v2628
  %2786 = vmatmul.mubr.bf16.gmra.mxu0 %v1488
  %v2787 = vpop.f32.mrf.mxu0
  %v2788 = vadd.f32 %v2747, %v2787
  %v2789 = vpop.f32.mrf.mxu0
  %v2790 = vadd.f32 %v2749, %v2789
  %v2791 = vpop.f32.mrf.mxu0
  %v2792 = vpop.f32.mrf.mxu0
  %2793 = vdwg.mxu0
  %2794 = vmatprep.subr.bf16.mxu0 %v2331
  %2795 = vmatpush1.bf16.msra.mxu0 %v2330
  %2796 = vmatprep.subr.bf16.mxu0 %v2324
  %2797 = vmatpush1.bf16.msra.mxu0 %v2323
  %2798 = vmatprep.subr.bf16.mxu0 %v2317
  %2799 = vmatpush1.bf16.msra.mxu0 %v2316
  %2800 = vmatprep.subr.bf16.mxu0 %v2310
  %2801 = vmatpush1.bf16.msra.mxu0 %v2309
  %2802 = vmatprep.subr.bf16.mxu0 %v2303
  %2803 = vmatpush1.bf16.msra.mxu0 %v2302
  %2804 = vmatprep.subr.bf16.mxu0 %v2296
  %2805 = vmatpush1.bf16.msra.mxu0 %v2295
  %2806 = vmatprep.subr.bf16.mxu0 %v2289
  %2807 = vmatpush1.bf16.msra.mxu0 %v2288
  %2808 = vmatprep.subr.bf16.mxu0 %v2282
  %2809 = vmatpush1.bf16.msra.mxu0 %v2281
  %2810 = vmatprep.subr.bf16.mxu0 %v2387
  %2811 = vmatpush2.bf16.msra.mxu0 %v2386
  %2812 = vmatprep.subr.bf16.mxu0 %v2380
  %2813 = vmatpush2.bf16.msra.mxu0 %v2379
  %2814 = vmatprep.subr.bf16.mxu0 %v2373
  %2815 = vmatpush2.bf16.msra.mxu0 %v2372
  %2816 = vmatprep.subr.bf16.mxu0 %v2366
  %2817 = vmatpush2.bf16.msra.mxu0 %v2365
  %2818 = vmatprep.subr.bf16.mxu0 %v2359
  %2819 = vmatpush2.bf16.msra.mxu0 %v2358
  %2820 = vmatprep.subr.bf16.mxu0 %v2352
  %2821 = vmatpush2.bf16.msra.mxu0 %v2351
  %2822 = vmatprep.subr.bf16.mxu0 %v2345
  %2823 = vmatpush2.bf16.msra.mxu0 %v2344
  %2824 = vmatprep.subr.bf16.mxu0 %v2338
  %2825 = vmatpush2.bf16.msra.mxu0 %v2337
  %2826 = vmatprep.mubr.bf16.mxu0 %v1487
  %2827 = vmatmul.mubr.bf16.gmra.mxu0 %v1486
  %v2828 = vpop.f32.mrf.mxu0
  %v2829 = vadd.f32 %v1711, %v2828
  %v2830 = vpop.f32.mrf.mxu0
  %v2831 = vadd.f32 %v1715, %v2830
  %v2832 = vpop.f32.mrf.mxu0
  %v2833 = vpop.f32.mrf.mxu0
  %2834 = vdwg.mxu0
  %2835 = vmatprep.subr.bf16.mxu0 %v2443
  %2836 = vmatpush1.bf16.msra.mxu0 %v2442
  %2837 = vmatprep.subr.bf16.mxu0 %v2436
  %2838 = vmatpush1.bf16.msra.mxu0 %v2435
  %2839 = vmatprep.subr.bf16.mxu0 %v2429
  %2840 = vmatpush1.bf16.msra.mxu0 %v2428
  %2841 = vmatprep.subr.bf16.mxu0 %v2422
  %2842 = vmatpush1.bf16.msra.mxu0 %v2421
  %2843 = vmatprep.subr.bf16.mxu0 %v2415
  %2844 = vmatpush1.bf16.msra.mxu0 %v2414
  %2845 = vmatprep.subr.bf16.mxu0 %v2408
  %2846 = vmatpush1.bf16.msra.mxu0 %v2407
  %2847 = vmatprep.subr.bf16.mxu0 %v2401
  %2848 = vmatpush1.bf16.msra.mxu0 %v2400
  %2849 = vmatprep.subr.bf16.mxu0 %v2394
  %2850 = vmatpush1.bf16.msra.mxu0 %v2393
  %2851 = vmatprep.subr.bf16.mxu0 0
  %2852 = vmatpush2.bf16.msra.mxu0 0
  %2853 = vmatprep.subr.bf16.mxu0 0
  %2854 = vmatpush2.bf16.msra.mxu0 0
  %2855 = vmatprep.subr.bf16.mxu0 0
  %2856 = vmatpush2.bf16.msra.mxu0 0
  %2857 = vmatprep.subr.bf16.mxu0 0
  %2858 = vmatpush2.bf16.msra.mxu0 0
  %2859 = vmatprep.subr.bf16.mxu0 0
  %2860 = vmatpush2.bf16.msra.mxu0 0
  %2861 = vmatprep.subr.bf16.mxu0 0
  %2862 = vmatpush2.bf16.msra.mxu0 0
  %2863 = vmatprep.subr.bf16.mxu0 0
  %2864 = vmatpush2.bf16.msra.mxu0 0
  %2865 = vmatprep.subr.bf16.mxu0 %v2450
  %2866 = vmatpush2.bf16.msra.mxu0 %v2449
  %2867 = vmatprep.mubr.bf16.mxu0 %v2628
  %2868 = vmatmul.mubr.bf16.gmra.mxu0 %v1488
  %v2869 = vpop.f32.mrf.mxu0
  %v2870 = vadd.f32 %v2829, %v2869
  %v2871 = vpop.f32.mrf.mxu0
  %v2872 = vadd.f32 %v2831, %v2871
  %v2873 = vpop.f32.mrf.mxu0
  %v2874 = vpop.f32.mrf.mxu0
  %2875 = vdwg.mxu0
  %2876 = vmatprep.subr.bf16.mxu0 0
  %2877 = vmatpush1.bf16.msra.mxu0 %v2332
  %2878 = vmatprep.subr.bf16.mxu0 0
  %2879 = vmatpush1.bf16.msra.mxu0 %v2325
  %2880 = vmatprep.subr.bf16.mxu0 0
  %2881 = vmatpush1.bf16.msra.mxu0 %v2318
  %2882 = vmatprep.subr.bf16.mxu0 0
  %2883 = vmatpush1.bf16.msra.mxu0 %v2311
  %2884 = vmatprep.subr.bf16.mxu0 0
  %2885 = vmatpush1.bf16.msra.mxu0 %v2304
  %2886 = vmatprep.subr.bf16.mxu0 0
  %2887 = vmatpush1.bf16.msra.mxu0 %v2297
  %2888 = vmatprep.subr.bf16.mxu0 0
  %2889 = vmatpush1.bf16.msra.mxu0 %v2290
  %2890 = vmatprep.subr.bf16.mxu0 0
  %2891 = vmatpush1.bf16.msra.mxu0 %v2283
  %2892 = vmatprep.subr.bf16.mxu0 0
  %2893 = vmatpush2.bf16.msra.mxu0 %v2388
  %2894 = vmatprep.subr.bf16.mxu0 0
  %2895 = vmatpush2.bf16.msra.mxu0 %v2381
  %2896 = vmatprep.subr.bf16.mxu0 0
  %2897 = vmatpush2.bf16.msra.mxu0 %v2374
  %2898 = vmatprep.subr.bf16.mxu0 0
  %2899 = vmatpush2.bf16.msra.mxu0 %v2367
  %2900 = vmatprep.subr.bf16.mxu0 0
  %2901 = vmatpush2.bf16.msra.mxu0 %v2360
  %2902 = vmatprep.subr.bf16.mxu0 0
  %2903 = vmatpush2.bf16.msra.mxu0 %v2353
  %2904 = vmatprep.subr.bf16.mxu0 0
  %2905 = vmatpush2.bf16.msra.mxu0 %v2346
  %2906 = vmatprep.subr.bf16.mxu0 0
  %2907 = vmatpush2.bf16.msra.mxu0 %v2339
  %2908 = vmatprep.mubr.bf16.mxu0 %v1487
  %2909 = vmatmul.mubr.bf16.gmra.mxu0 %v1486
  %v2910 = vpop.f32.mrf.mxu0
  %v2911 = vadd.f32 %v1719, %v2910
  %v2912 = vpop.f32.mrf.mxu0
  %v2913 = vpop.f32.mrf.mxu0
  %v2914 = vpop.f32.mrf.mxu0
  %2915 = vdwg.mxu0
  %2916 = vmatprep.subr.bf16.mxu0 0
  %2917 = vmatpush1.bf16.msra.mxu0 %v2444
  %2918 = vmatprep.subr.bf16.mxu0 0
  %2919 = vmatpush1.bf16.msra.mxu0 %v2437
  %2920 = vmatprep.subr.bf16.mxu0 0
  %2921 = vmatpush1.bf16.msra.mxu0 %v2430
  %2922 = vmatprep.subr.bf16.mxu0 0
  %2923 = vmatpush1.bf16.msra.mxu0 %v2423
  %2924 = vmatprep.subr.bf16.mxu0 0
  %2925 = vmatpush1.bf16.msra.mxu0 %v2416
  %2926 = vmatprep.subr.bf16.mxu0 0
  %2927 = vmatpush1.bf16.msra.mxu0 %v2409
  %2928 = vmatprep.subr.bf16.mxu0 0
  %2929 = vmatpush1.bf16.msra.mxu0 %v2402
  %2930 = vmatprep.subr.bf16.mxu0 0
  %2931 = vmatpush1.bf16.msra.mxu0 %v2395
  %2932 = vmatprep.subr.bf16.mxu0 0
  %2933 = vmatpush2.bf16.msra.mxu0 0
  %2934 = vmatprep.subr.bf16.mxu0 0
  %2935 = vmatpush2.bf16.msra.mxu0 0
  %2936 = vmatprep.subr.bf16.mxu0 0
  %2937 = vmatpush2.bf16.msra.mxu0 0
  %2938 = vmatprep.subr.bf16.mxu0 0
  %2939 = vmatpush2.bf16.msra.mxu0 0
  %2940 = vmatprep.subr.bf16.mxu0 0
  %2941 = vmatpush2.bf16.msra.mxu0 0
  %2942 = vmatprep.subr.bf16.mxu0 0
  %2943 = vmatpush2.bf16.msra.mxu0 0
  %2944 = vmatprep.subr.bf16.mxu0 0
  %2945 = vmatpush2.bf16.msra.mxu0 0
  %2946 = vmatprep.subr.bf16.mxu0 0
  %2947 = vmatpush2.bf16.msra.mxu0 %v2451
  %2948 = vmatprep.mubr.bf16.mxu0 %v2628
  %2949 = vmatmul.mubr.bf16.gmra.mxu0 %v1488
  %v2950 = vpop.f32.mrf.mxu0
  %v2951 = vadd.f32 %v2911, %v2950
  %v2952 = vpop.f32.mrf.mxu0
  %v2953 = vpop.f32.mrf.mxu0
  %v2954 = vpop.f32.mrf.mxu0
  %2955 = vdwg.mxu0
  %v2956 = vld [vmem:[%s11] sm:$0xff]
  %v2957 = vld [vmem:[%s11 + $0x8] sm:$0xff]
  %v2958 = vld [vmem:[%s11 + $0x10] sm:$0xff]
  %v2959 = vld [vmem:[%s11 + $0x18] sm:$0xff]
  %v2960 = vld [vmem:[%s11 + $0x20] sm:$0xff]
  %v2961 = vld [vmem:[%s11 + $0x28] sm:$0xff]
  %v2962 = vld [vmem:[%s11 + $0x30] sm:$0xff]
  %v2963 = vld [vmem:[%s11 + $0x38] sm:$0xff]
  %v2964 = vld [vmem:[%s11 + $0x40] sm:$0xff]
  %v2965 = vld [vmem:[%s11 + $0x48] sm:$0xff]
  %v2966 = vld [vmem:[%s11 + $0x50] sm:$0xff]
  %v2967 = vld [vmem:[%s11 + $0x58] sm:$0xff]
  %v2968 = vld [vmem:[%s11 + $0x60] sm:$0xff]
  %v2969 = vld [vmem:[%s11 + $0x68] sm:$0xff]
  %v2970 = vld [vmem:[%s11 + $0x70] sm:$0xff]
  %v2971 = vld [vmem:[%s11 + $0x78] sm:$0xff]
  %v2972 = vld [vmem:[%s11 + $0x80] sm:$0xff]
  %v2973 = vld [vmem:[%s11 + $0x88] sm:$0xff]
  %v2974 = vld [vmem:[%s11 + $0x90] sm:$0xff]
  %v2975 = vld [vmem:[%s11 + $0x98] sm:$0xff]
  %v2976 = vld [vmem:[%s11 + $0xa0] sm:$0xff]
  %v2977 = vld [vmem:[%s11 + $0xa8] sm:$0xff]
  %v2978 = vld [vmem:[%s11 + $0xb0] sm:$0xff]
  %v2979 = vld [vmem:[%s11 + $0xb8] sm:$0xff]
  %v2980 = vld [vmem:[%s11 + $0xc0] sm:$0xff]
  %v2981 = vld [vmem:[%s11 + $0xc8] sm:$0xff]
  %v2982 = vld [vmem:[%s11 + $0xd0] sm:$0xff]
  %v2983 = vld [vmem:[%s11 + $0xd8] sm:$0xff]
  %v2984 = vld [vmem:[%s11 + $0xe0] sm:$0xff]
  %v2985 = vld [vmem:[%s11 + $0xe8] sm:$0xff]
  %v2986 = vld [vmem:[%s11 + $0xf0] sm:$0xff]
  %v2987 = vld [vmem:[%s11 + $0xf8] sm:$0xff]
  %v2988 = vld [vmem:[%s11 + $0x100] sm:$0xff]
  %v2989 = vld [vmem:[%s11 + $0x108] sm:$0xff]
  %v2990 = vld [vmem:[%s11 + $0x110] sm:$0xff]
  %v2991 = vld [vmem:[%s11 + $0x118] sm:$0xff]
  %v2992 = vld [vmem:[%s11 + $0x120] sm:$0xff]
  %v2993 = vld [vmem:[%s11 + $0x128] sm:$0xff]
  %v2994 = vld [vmem:[%s11 + $0x130] sm:$0xff]
  %v2995 = vld [vmem:[%s11 + $0x138] sm:$0xff]
  %v2996 = vld [vmem:[%s11 + $0x140] sm:$0xff]
  %v2997 = vld [vmem:[%s11 + $0x148] sm:$0xff]
  %v2998 = vld [vmem:[%s11 + $0x150] sm:$0xff]
  %v2999 = vld [vmem:[%s11 + $0x158] sm:$0xff]
  %v3000 = vld [vmem:[%s11 + $0x160] sm:$0xff]
  %v3001 = vld [vmem:[%s11 + $0x168] sm:$0xff]
  %v3002 = vld [vmem:[%s11 + $0x170] sm:$0xff]
  %v3003 = vld [vmem:[%s11 + $0x178] sm:$0xff]
  %v3004 = vld [vmem:[%s11 + $0x180] sm:$0xff]
  %v3005 = vld [vmem:[%s11 + $0x188] sm:$0xff]
  %v3006 = vld [vmem:[%s11 + $0x190] sm:$0xff]
  %v3007 = vld [vmem:[%s11 + $0x198] sm:$0xff]
  %v3008 = vld [vmem:[%s11 + $0x1a0] sm:$0xff]
  %v3009 = vld [vmem:[%s11 + $0x1a8] sm:$0xff]
  %v3010 = vld [vmem:[%s11 + $0x1b0] sm:$0xff]
  %v3011 = vld [vmem:[%s11 + $0x1b8] sm:$0xff]
  %v3012 = vld [vmem:[%s11 + $0x1c0] sm:$0xff]
  %v3013 = vld [vmem:[%s11 + $0x1c8] sm:$0xff]
  %v3014 = vld [vmem:[%s11 + $0x1d0] sm:$0xff]
  %v3015 = vld [vmem:[%s11 + $0x1d8] sm:$0xff]
  %v3016 = vld [vmem:[%s11 + $0x1e0] sm:$0xff]
  %v3017 = vld [vmem:[%s11 + $0x1e8] sm:$0xff]
  %v3018 = vld [vmem:[%s11 + $0x1f0] sm:$0xff]
  %v3019 = vld [vmem:[%s11 + $0x1f8] sm:$0xff]
  %v3020 = vld [vmem:[%s11 + $0x200] sm:$0xff]
  %v3021 = vld [vmem:[%s11 + $0x208] sm:$0xff]
  %v3022 = vld [vmem:[%s11 + $0x210] sm:$0xff]
  %v3023 = vld [vmem:[%s11 + $0x218] sm:$0xff]
  %v3024 = vld [vmem:[%s11 + $0x220] sm:$0xff]
  %v3025 = vld [vmem:[%s11 + $0x228] sm:$0xff]
  %v3026 = vld [vmem:[%s11 + $0x230] sm:$0xff]
  %v3027 = vld [vmem:[%s11 + $0x238] sm:$0xff]
  %v3028 = vld [vmem:[%s11 + $0x240] sm:$0xff]
  %v3029 = vld [vmem:[%s11 + $0x248] sm:$0xff]
  %v3030 = vld [vmem:[%s11 + $0x250] sm:$0xff]
  %v3031 = vld [vmem:[%s11 + $0x258] sm:$0xff]
  %v3032 = vld [vmem:[%s11 + $0x260] sm:$0xff]
  %v3033 = vld [vmem:[%s11 + $0x268] sm:$0xff]
  %v3034 = vld [vmem:[%s11 + $0x270] sm:$0xff]
  %v3035 = vld [vmem:[%s11 + $0x278] sm:$0xff]
  %v3036 = vld [vmem:[%s11 + $0x280] sm:$0xff]
  %v3037 = vld [vmem:[%s11 + $0x288] sm:$0xff]
  %v3038 = vld [vmem:[%s11 + $0x290] sm:$0xff]
  %v3039 = vld [vmem:[%s11 + $0x298] sm:$0xff]
  %v3040 = vld [vmem:[%s11 + $0x2a0] sm:$0xff]
  %v3041 = vld [vmem:[%s11 + $0x2a8] sm:$0xff]
  %v3042 = vld [vmem:[%s11 + $0x2b0] sm:$0xff]
  %v3043 = vld [vmem:[%s11 + $0x2b8] sm:$0xff]
  %v3044 = vld [vmem:[%s11 + $0x2c0] sm:$0xff]
  %v3045 = vld [vmem:[%s11 + $0x2c8] sm:$0xff]
  %v3046 = vld [vmem:[%s11 + $0x2d0] sm:$0xff]
  %v3047 = vld [vmem:[%s11 + $0x2d8] sm:$0xff]
  %v3048 = vld [vmem:[%s11 + $0x2e0] sm:$0xff]
  %v3049 = vld [vmem:[%s11 + $0x2e8] sm:$0xff]
  %v3050 = vld [vmem:[%s11 + $0x2f0] sm:$0xff]
  %v3051 = vld [vmem:[%s11 + $0x2f8] sm:$0xff]
  %v3052 = vld [vmem:[%s11 + $0x300] sm:$0xff]
  %v3053 = vld [vmem:[%s11 + $0x308] sm:$0xff]
  %v3054 = vld [vmem:[%s11 + $0x310] sm:$0xff]
  %v3055 = vld [vmem:[%s11 + $0x318] sm:$0xff]
  %vm3056 = vcmask 261120
  %v3058 = vsel %vm3056, %v2951, 0
  %3060 = vmatprep.subr.mxu0 0.0
  %3061 = vmatpush1.msra.mxu0 %v2971
  %3062 = vmatprep.subr.mxu0 0.0
  %3063 = vmatpush1.msra.mxu0 %v2970
  %3064 = vmatprep.subr.mxu0 0.0
  %3065 = vmatpush1.msra.mxu0 %v2969
  %3066 = vmatprep.subr.mxu0 0.0
  %3067 = vmatpush1.msra.mxu0 %v2968
  %3068 = vmatprep.subr.mxu0 0.0
  %3069 = vmatpush1.msra.mxu0 %v2967
  %3070 = vmatprep.subr.mxu0 0.0
  %3071 = vmatpush1.msra.mxu0 %v2966
  %3072 = vmatprep.subr.mxu0 0.0
  %3073 = vmatpush1.msra.mxu0 %v2965
  %3074 = vmatprep.subr.mxu0 0.0
  %3075 = vmatpush1.msra.mxu0 %v2964
  %3076 = vmatprep.subr.mxu0 0.0
  %3077 = vmatpush1.msra.mxu0 %v2963
  %3078 = vmatprep.subr.mxu0 0.0
  %3079 = vmatpush1.msra.mxu0 %v2962
  %3080 = vmatprep.subr.mxu0 0.0
  %3081 = vmatpush1.msra.mxu0 %v2961
  %3082 = vmatprep.subr.mxu0 0.0
  %3083 = vmatpush1.msra.mxu0 %v2960
  %3084 = vmatprep.subr.mxu0 0.0
  %3085 = vmatpush1.msra.mxu0 %v2959
  %3086 = vmatprep.subr.mxu0 0.0
  %3087 = vmatpush1.msra.mxu0 %v2958
  %3088 = vmatprep.subr.mxu0 0.0
  %3089 = vmatpush1.msra.mxu0 %v2957
  %3090 = vmatprep.subr.mxu0 0.0
  %3091 = vmatpush1.msra.mxu0 %v2956
  %3092 = vmatprep.subr.mxu0 0.0
  %3093 = vmatpush2.msra.mxu0 %v2987
  %3094 = vmatprep.subr.mxu0 0.0
  %3095 = vmatpush2.msra.mxu0 %v2986
  %3096 = vmatprep.subr.mxu0 0.0
  %3097 = vmatpush2.msra.mxu0 %v2985
  %3098 = vmatprep.subr.mxu0 0.0
  %3099 = vmatpush2.msra.mxu0 %v2984
  %3100 = vmatprep.subr.mxu0 0.0
  %3101 = vmatpush2.msra.mxu0 %v2983
  %3102 = vmatprep.subr.mxu0 0.0
  %3103 = vmatpush2.msra.mxu0 %v2982
  %3104 = vmatprep.subr.mxu0 0.0
  %3105 = vmatpush2.msra.mxu0 %v2981
  %3106 = vmatprep.subr.mxu0 0.0
  %3107 = vmatpush2.msra.mxu0 %v2980
  %3108 = vmatprep.subr.mxu0 0.0
  %3109 = vmatpush2.msra.mxu0 %v2979
  %3110 = vmatprep.subr.mxu0 0.0
  %3111 = vmatpush2.msra.mxu0 %v2978
  %3112 = vmatprep.subr.mxu0 0.0
  %3113 = vmatpush2.msra.mxu0 %v2977
  %3114 = vmatprep.subr.mxu0 0.0
  %3115 = vmatpush2.msra.mxu0 %v2976
  %3116 = vmatprep.subr.mxu0 0.0
  %3117 = vmatpush2.msra.mxu0 %v2975
  %3118 = vmatprep.subr.mxu0 0.0
  %3119 = vmatpush2.msra.mxu0 %v2974
  %3120 = vmatprep.subr.mxu0 0.0
  %3121 = vmatpush2.msra.mxu0 %v2973
  %3122 = vmatprep.subr.mxu0 0.0
  %3123 = vmatpush2.msra.mxu0 %v2972
  %3124 = vmatprep.mubr.f32.mxu0 %v2708
  %3125 = vmatmul.mubr.f32.gmra.mxu0 %v2706
  %v3126 = vpop.f32.mrf.mxu0
  %v3127 = vadd.f32 0.0, %v3126
  %v3128 = vpop.f32.mrf.mxu0
  %3129 = vdwg.mxu0
  %3130 = vmatprep.subr.mxu0 0.0
  %3131 = vmatpush1.msra.mxu0 %v3003
  %3132 = vmatprep.subr.mxu0 0.0
  %3133 = vmatpush1.msra.mxu0 %v3002
  %3134 = vmatprep.subr.mxu0 0.0
  %3135 = vmatpush1.msra.mxu0 %v3001
  %3136 = vmatprep.subr.mxu0 0.0
  %3137 = vmatpush1.msra.mxu0 %v3000
  %3138 = vmatprep.subr.mxu0 0.0
  %3139 = vmatpush1.msra.mxu0 %v2999
  %3140 = vmatprep.subr.mxu0 0.0
  %3141 = vmatpush1.msra.mxu0 %v2998
  %3142 = vmatprep.subr.mxu0 0.0
  %3143 = vmatpush1.msra.mxu0 %v2997
  %3144 = vmatprep.subr.mxu0 0.0
  %3145 = vmatpush1.msra.mxu0 %v2996
  %3146 = vmatprep.subr.mxu0 0.0
  %3147 = vmatpush1.msra.mxu0 %v2995
  %3148 = vmatprep.subr.mxu0 0.0
  %3149 = vmatpush1.msra.mxu0 %v2994
  %3150 = vmatprep.subr.mxu0 0.0
  %3151 = vmatpush1.msra.mxu0 %v2993
  %3152 = vmatprep.subr.mxu0 0.0
  %3153 = vmatpush1.msra.mxu0 %v2992
  %3154 = vmatprep.subr.mxu0 0.0
  %3155 = vmatpush1.msra.mxu0 %v2991
  %3156 = vmatprep.subr.mxu0 0.0
  %3157 = vmatpush1.msra.mxu0 %v2990
  %3158 = vmatprep.subr.mxu0 0.0
  %3159 = vmatpush1.msra.mxu0 %v2989
  %3160 = vmatprep.subr.mxu0 0.0
  %3161 = vmatpush1.msra.mxu0 %v2988
  %3162 = vmatprep.subr.mxu0 0.0
  %3163 = vmatpush2.msra.mxu0 %v3019
  %3164 = vmatprep.subr.mxu0 0.0
  %3165 = vmatpush2.msra.mxu0 %v3018
  %3166 = vmatprep.subr.mxu0 0.0
  %3167 = vmatpush2.msra.mxu0 %v3017
  %3168 = vmatprep.subr.mxu0 0.0
  %3169 = vmatpush2.msra.mxu0 %v3016
  %3170 = vmatprep.subr.mxu0 0.0
  %3171 = vmatpush2.msra.mxu0 %v3015
  %3172 = vmatprep.subr.mxu0 0.0
  %3173 = vmatpush2.msra.mxu0 %v3014
  %3174 = vmatprep.subr.mxu0 0.0
  %3175 = vmatpush2.msra.mxu0 %v3013
  %3176 = vmatprep.subr.mxu0 0.0
  %3177 = vmatpush2.msra.mxu0 %v3012
  %3178 = vmatprep.subr.mxu0 0.0
  %3179 = vmatpush2.msra.mxu0 %v3011
  %3180 = vmatprep.subr.mxu0 0.0
  %3181 = vmatpush2.msra.mxu0 %v3010
  %3182 = vmatprep.subr.mxu0 0.0
  %3183 = vmatpush2.msra.mxu0 %v3009
  %3184 = vmatprep.subr.mxu0 0.0
  %3185 = vmatpush2.msra.mxu0 %v3008
  %3186 = vmatprep.subr.mxu0 0.0
  %3187 = vmatpush2.msra.mxu0 %v3007
  %3188 = vmatprep.subr.mxu0 0.0
  %3189 = vmatpush2.msra.mxu0 %v3006
  %3190 = vmatprep.subr.mxu0 0.0
  %3191 = vmatpush2.msra.mxu0 %v3005
  %3192 = vmatprep.subr.mxu0 0.0
  %3193 = vmatpush2.msra.mxu0 %v3004
  %3194 = vmatprep.mubr.f32.mxu0 %v2790
  %3195 = vmatmul.mubr.f32.gmra.mxu0 %v2788
  %v3196 = vpop.f32.mrf.mxu0
  %v3197 = vadd.f32 %v3127, %v3196
  %v3198 = vpop.f32.mrf.mxu0
  %3199 = vdwg.mxu0
  %3200 = vmatprep.subr.mxu0 0.0
  %3201 = vmatpush1.msra.mxu0 %v3035
  %3202 = vmatprep.subr.mxu0 0.0
  %3203 = vmatpush1.msra.mxu0 %v3034
  %3204 = vmatprep.subr.mxu0 0.0
  %3205 = vmatpush1.msra.mxu0 %v3033
  %3206 = vmatprep.subr.mxu0 0.0
  %3207 = vmatpush1.msra.mxu0 %v3032
  %3208 = vmatprep.subr.mxu0 0.0
  %3209 = vmatpush1.msra.mxu0 %v3031
  %3210 = vmatprep.subr.mxu0 0.0
  %3211 = vmatpush1.msra.mxu0 %v3030
  %3212 = vmatprep.subr.mxu0 0.0
  %3213 = vmatpush1.msra.mxu0 %v3029
  %3214 = vmatprep.subr.mxu0 0.0
  %3215 = vmatpush1.msra.mxu0 %v3028
  %3216 = vmatprep.subr.mxu0 0.0
  %3217 = vmatpush1.msra.mxu0 %v3027
  %3218 = vmatprep.subr.mxu0 0.0
  %3219 = vmatpush1.msra.mxu0 %v3026
  %3220 = vmatprep.subr.mxu0 0.0
  %3221 = vmatpush1.msra.mxu0 %v3025
  %3222 = vmatprep.subr.mxu0 0.0
  %3223 = vmatpush1.msra.mxu0 %v3024
  %3224 = vmatprep.subr.mxu0 0.0
  %3225 = vmatpush1.msra.mxu0 %v3023
  %3226 = vmatprep.subr.mxu0 0.0
  %3227 = vmatpush1.msra.mxu0 %v3022
  %3228 = vmatprep.subr.mxu0 0.0
  %3229 = vmatpush1.msra.mxu0 %v3021
  %3230 = vmatprep.subr.mxu0 0.0
  %3231 = vmatpush1.msra.mxu0 %v3020
  %3232 = vmatprep.subr.mxu0 0.0
  %3233 = vmatpush2.msra.mxu0 %v3051
  %3234 = vmatprep.subr.mxu0 0.0
  %3235 = vmatpush2.msra.mxu0 %v3050
  %3236 = vmatprep.subr.mxu0 0.0
  %3237 = vmatpush2.msra.mxu0 %v3049
  %3238 = vmatprep.subr.mxu0 0.0
  %3239 = vmatpush2.msra.mxu0 %v3048
  %3240 = vmatprep.subr.mxu0 0.0
  %3241 = vmatpush2.msra.mxu0 %v3047
  %3242 = vmatprep.subr.mxu0 0.0
  %3243 = vmatpush2.msra.mxu0 %v3046
  %3244 = vmatprep.subr.mxu0 0.0
  %3245 = vmatpush2.msra.mxu0 %v3045
  %3246 = vmatprep.subr.mxu0 0.0
  %3247 = vmatpush2.msra.mxu0 %v3044
  %3248 = vmatprep.subr.mxu0 0.0
  %3249 = vmatpush2.msra.mxu0 %v3043
  %3250 = vmatprep.subr.mxu0 0.0
  %3251 = vmatpush2.msra.mxu0 %v3042
  %3252 = vmatprep.subr.mxu0 0.0
  %3253 = vmatpush2.msra.mxu0 %v3041
  %3254 = vmatprep.subr.mxu0 0.0
  %3255 = vmatpush2.msra.mxu0 %v3040
  %3256 = vmatprep.subr.mxu0 0.0
  %3257 = vmatpush2.msra.mxu0 %v3039
  %3258 = vmatprep.subr.mxu0 0.0
  %3259 = vmatpush2.msra.mxu0 %v3038
  %3260 = vmatprep.subr.mxu0 0.0
  %3261 = vmatpush2.msra.mxu0 %v3037
  %3262 = vmatprep.subr.mxu0 0.0
  %3263 = vmatpush2.msra.mxu0 %v3036
  %3264 = vmatprep.mubr.f32.mxu0 %v2872
  %3265 = vmatmul.mubr.f32.gmra.mxu0 %v2870
  %v3266 = vpop.f32.mrf.mxu0
  %v3267 = vadd.f32 %v3197, %v3266
  %v3268 = vpop.f32.mrf.mxu0
  %3269 = vdwg.mxu0
  %3270 = vmatprep.subr.mxu0 0.0
  %3271 = vmatpush1.msra.mxu0 0.0
  %3272 = vmatprep.subr.mxu0 0.0
  %3273 = vmatpush1.msra.mxu0 0.0
  %3274 = vmatprep.subr.mxu0 0.0
  %3275 = vmatpush1.msra.mxu0 0.0
  %3276 = vmatprep.subr.mxu0 0.0
  %3277 = vmatpush1.msra.mxu0 0.0
  %3278 = vmatprep.subr.mxu0 0.0
  %3279 = vmatpush1.msra.mxu0 0.0
  %3280 = vmatprep.subr.mxu0 0.0
  %3281 = vmatpush1.msra.mxu0 0.0
  %3282 = vmatprep.subr.mxu0 0.0
  %3283 = vmatpush1.msra.mxu0 0.0
  %3284 = vmatprep.subr.mxu0 0.0
  %3285 = vmatpush1.msra.mxu0 0.0
  %3286 = vmatprep.subr.mxu0 0.0
  %3287 = vmatpush1.msra.mxu0 0.0
  %3288 = vmatprep.subr.mxu0 0.0
  %3289 = vmatpush1.msra.mxu0 0.0
  %3290 = vmatprep.subr.mxu0 0.0
  %3291 = vmatpush1.msra.mxu0 0.0
  %3292 = vmatprep.subr.mxu0 0.0
  %3293 = vmatpush1.msra.mxu0 0.0
  %3294 = vmatprep.subr.mxu0 0.0
  %3295 = vmatpush1.msra.mxu0 %v3055
  %3296 = vmatprep.subr.mxu0 0.0
  %3297 = vmatpush1.msra.mxu0 %v3054
  %3298 = vmatprep.subr.mxu0 0.0
  %3299 = vmatpush1.msra.mxu0 %v3053
  %3300 = vmatprep.subr.mxu0 0.0
  %3301 = vmatpush1.msra.mxu0 %v3052
  %3302 = vmatprep.subr.mxu0 0.0
  %3303 = vmatpush2.msra.mxu0 0.0
  %3304 = vmatprep.subr.mxu0 0.0
  %3305 = vmatpush2.msra.mxu0 0.0
  %3306 = vmatprep.subr.mxu0 0.0
  %3307 = vmatpush2.msra.mxu0 0.0
  %3308 = vmatprep.subr.mxu0 0.0
  %3309 = vmatpush2.msra.mxu0 0.0
  %3310 = vmatprep.subr.mxu0 0.0
  %3311 = vmatpush2.msra.mxu0 0.0
  %3312 = vmatprep.subr.mxu0 0.0
  %3313 = vmatpush2.msra.mxu0 0.0
  %3314 = vmatprep.subr.mxu0 0.0
  %3315 = vmatpush2.msra.mxu0 0.0
  %3316 = vmatprep.subr.mxu0 0.0
  %3317 = vmatpush2.msra.mxu0 0.0
  %3318 = vmatprep.subr.mxu0 0.0
  %3319 = vmatpush2.msra.mxu0 0.0
  %3320 = vmatprep.subr.mxu0 0.0
  %3321 = vmatpush2.msra.mxu0 0.0
  %3322 = vmatprep.subr.mxu0 0.0
  %3323 = vmatpush2.msra.mxu0 0.0
  %3324 = vmatprep.subr.mxu0 0.0
  %3325 = vmatpush2.msra.mxu0 0.0
  %3326 = vmatprep.subr.mxu0 0.0
  %3327 = vmatpush2.msra.mxu0 0.0
  %3328 = vmatprep.subr.mxu0 0.0
  %3329 = vmatpush2.msra.mxu0 0.0
  %3330 = vmatprep.subr.mxu0 0.0
  %3331 = vmatpush2.msra.mxu0 0.0
  %3332 = vmatprep.subr.mxu0 0.0
  %3333 = vmatpush2.msra.mxu0 0.0
  %3334 = vmatprep.mubr.f32.mxu0 0.0
  %3335 = vmatmul.mubr.f32.gmra.mxu0 %v3058
  %v3336 = vpop.f32.mrf.mxu0
  %v3337 = vadd.f32 %v3267, %v3336
  %v3338 = vpop.f32.mrf.mxu0
  %3339 = vdwg.mxu0
  %v3340 = vmul.f32 %v3337, 0.005
  %v3341 = vmul.f32 %v2706, %v2706
  %v3342 = vmul.f32 %v2708, %v2708
  %v3343 = vmul.f32 %v2788, %v2788
  %v3344 = vmul.f32 %v2790, %v2790
  %v3345 = vmul.f32 %v2870, %v2870
  %v3346 = vmul.f32 %v2872, %v2872
  %v3347 = vmul.f32 %v2951, %v2951
  %v3349 = vsel %vm3056, %v3347, 0
  %3351 = vmatprep.subr.mxu0 0.0
  %3352 = vmatpush1.msra.mxu0 %v2971
  %3353 = vmatprep.subr.mxu0 0.0
  %3354 = vmatpush1.msra.mxu0 %v2970
  %3355 = vmatprep.subr.mxu0 0.0
  %3356 = vmatpush1.msra.mxu0 %v2969
  %3357 = vmatprep.subr.mxu0 0.0
  %3358 = vmatpush1.msra.mxu0 %v2968
  %3359 = vmatprep.subr.mxu0 0.0
  %3360 = vmatpush1.msra.mxu0 %v2967
  %3361 = vmatprep.subr.mxu0 0.0
  %3362 = vmatpush1.msra.mxu0 %v2966
  %3363 = vmatprep.subr.mxu0 0.0
  %3364 = vmatpush1.msra.mxu0 %v2965
  %3365 = vmatprep.subr.mxu0 0.0
  %3366 = vmatpush1.msra.mxu0 %v2964
  %3367 = vmatprep.subr.mxu0 0.0
  %3368 = vmatpush1.msra.mxu0 %v2963
  %3369 = vmatprep.subr.mxu0 0.0
  %3370 = vmatpush1.msra.mxu0 %v2962
  %3371 = vmatprep.subr.mxu0 0.0
  %3372 = vmatpush1.msra.mxu0 %v2961
  %3373 = vmatprep.subr.mxu0 0.0
  %3374 = vmatpush1.msra.mxu0 %v2960
  %3375 = vmatprep.subr.mxu0 0.0
  %3376 = vmatpush1.msra.mxu0 %v2959
  %3377 = vmatprep.subr.mxu0 0.0
  %3378 = vmatpush1.msra.mxu0 %v2958
  %3379 = vmatprep.subr.mxu0 0.0
  %3380 = vmatpush1.msra.mxu0 %v2957
  %3381 = vmatprep.subr.mxu0 0.0
  %3382 = vmatpush1.msra.mxu0 %v2956
  %3383 = vmatprep.subr.mxu0 0.0
  %3384 = vmatpush2.msra.mxu0 %v2987
  %3385 = vmatprep.subr.mxu0 0.0
  %3386 = vmatpush2.msra.mxu0 %v2986
  %3387 = vmatprep.subr.mxu0 0.0
  %3388 = vmatpush2.msra.mxu0 %v2985
  %3389 = vmatprep.subr.mxu0 0.0
  %3390 = vmatpush2.msra.mxu0 %v2984
  %3391 = vmatprep.subr.mxu0 0.0
  %3392 = vmatpush2.msra.mxu0 %v2983
  %3393 = vmatprep.subr.mxu0 0.0
  %3394 = vmatpush2.msra.mxu0 %v2982
  %3395 = vmatprep.subr.mxu0 0.0
  %3396 = vmatpush2.msra.mxu0 %v2981
  %3397 = vmatprep.subr.mxu0 0.0
  %3398 = vmatpush2.msra.mxu0 %v2980
  %3399 = vmatprep.subr.mxu0 0.0
  %3400 = vmatpush2.msra.mxu0 %v2979
  %3401 = vmatprep.subr.mxu0 0.0
  %3402 = vmatpush2.msra.mxu0 %v2978
  %3403 = vmatprep.subr.mxu0 0.0
  %3404 = vmatpush2.msra.mxu0 %v2977
  %3405 = vmatprep.subr.mxu0 0.0
  %3406 = vmatpush2.msra.mxu0 %v2976
  %3407 = vmatprep.subr.mxu0 0.0
  %3408 = vmatpush2.msra.mxu0 %v2975
  %3409 = vmatprep.subr.mxu0 0.0
  %3410 = vmatpush2.msra.mxu0 %v2974
  %3411 = vmatprep.subr.mxu0 0.0
  %3412 = vmatpush2.msra.mxu0 %v2973
  %3413 = vmatprep.subr.mxu0 0.0
  %3414 = vmatpush2.msra.mxu0 %v2972
  %3415 = vmatprep.mubr.f32.mxu0 %v3342
  %3416 = vmatmul.mubr.f32.gmra.mxu0 %v3341
  %v3417 = vpop.f32.mrf.mxu0
  %v3418 = vadd.f32 0.0, %v3417
  %v3419 = vpop.f32.mrf.mxu0
  %3420 = vdwg.mxu0
  %3421 = vmatprep.subr.mxu0 0.0
  %3422 = vmatpush1.msra.mxu0 %v3003
  %3423 = vmatprep.subr.mxu0 0.0
  %3424 = vmatpush1.msra.mxu0 %v3002
  %3425 = vmatprep.subr.mxu0 0.0
  %3426 = vmatpush1.msra.mxu0 %v3001
  %3427 = vmatprep.subr.mxu0 0.0
  %3428 = vmatpush1.msra.mxu0 %v3000
  %3429 = vmatprep.subr.mxu0 0.0
  %3430 = vmatpush1.msra.mxu0 %v2999
  %3431 = vmatprep.subr.mxu0 0.0
  %3432 = vmatpush1.msra.mxu0 %v2998
  %3433 = vmatprep.subr.mxu0 0.0
  %3434 = vmatpush1.msra.mxu0 %v2997
  %3435 = vmatprep.subr.mxu0 0.0
  %3436 = vmatpush1.msra.mxu0 %v2996
  %3437 = vmatprep.subr.mxu0 0.0
  %3438 = vmatpush1.msra.mxu0 %v2995
  %3439 = vmatprep.subr.mxu0 0.0
  %3440 = vmatpush1.msra.mxu0 %v2994
  %3441 = vmatprep.subr.mxu0 0.0
  %3442 = vmatpush1.msra.mxu0 %v2993
  %3443 = vmatprep.subr.mxu0 0.0
  %3444 = vmatpush1.msra.mxu0 %v2992
  %3445 = vmatprep.subr.mxu0 0.0
  %3446 = vmatpush1.msra.mxu0 %v2991
  %3447 = vmatprep.subr.mxu0 0.0
  %3448 = vmatpush1.msra.mxu0 %v2990
  %3449 = vmatprep.subr.mxu0 0.0
  %3450 = vmatpush1.msra.mxu0 %v2989
  %3451 = vmatprep.subr.mxu0 0.0
  %3452 = vmatpush1.msra.mxu0 %v2988
  %3453 = vmatprep.subr.mxu0 0.0
  %3454 = vmatpush2.msra.mxu0 %v3019
  %3455 = vmatprep.subr.mxu0 0.0
  %3456 = vmatpush2.msra.mxu0 %v3018
  %3457 = vmatprep.subr.mxu0 0.0
  %3458 = vmatpush2.msra.mxu0 %v3017
  %3459 = vmatprep.subr.mxu0 0.0
  %3460 = vmatpush2.msra.mxu0 %v3016
  %3461 = vmatprep.subr.mxu0 0.0
  %3462 = vmatpush2.msra.mxu0 %v3015
  %3463 = vmatprep.subr.mxu0 0.0
  %3464 = vmatpush2.msra.mxu0 %v3014
  %3465 = vmatprep.subr.mxu0 0.0
  %3466 = vmatpush2.msra.mxu0 %v3013
  %3467 = vmatprep.subr.mxu0 0.0
  %3468 = vmatpush2.msra.mxu0 %v3012
  %3469 = vmatprep.subr.mxu0 0.0
  %3470 = vmatpush2.msra.mxu0 %v3011
  %3471 = vmatprep.subr.mxu0 0.0
  %3472 = vmatpush2.msra.mxu0 %v3010
  %3473 = vmatprep.subr.mxu0 0.0
  %3474 = vmatpush2.msra.mxu0 %v3009
  %3475 = vmatprep.subr.mxu0 0.0
  %3476 = vmatpush2.msra.mxu0 %v3008
  %3477 = vmatprep.subr.mxu0 0.0
  %3478 = vmatpush2.msra.mxu0 %v3007
  %3479 = vmatprep.subr.mxu0 0.0
  %3480 = vmatpush2.msra.mxu0 %v3006
  %3481 = vmatprep.subr.mxu0 0.0
  %3482 = vmatpush2.msra.mxu0 %v3005
  %3483 = vmatprep.subr.mxu0 0.0
  %3484 = vmatpush2.msra.mxu0 %v3004
  %3485 = vmatprep.mubr.f32.mxu0 %v3344
  %3486 = vmatmul.mubr.f32.gmra.mxu0 %v3343
  %v3487 = vpop.f32.mrf.mxu0
  %v3488 = vadd.f32 %v3418, %v3487
  %v3489 = vpop.f32.mrf.mxu0
  %3490 = vdwg.mxu0
  %3491 = vmatprep.subr.mxu0 0.0
  %3492 = vmatpush1.msra.mxu0 %v3035
  %3493 = vmatprep.subr.mxu0 0.0
  %3494 = vmatpush1.msra.mxu0 %v3034
  %3495 = vmatprep.subr.mxu0 0.0
  %3496 = vmatpush1.msra.mxu0 %v3033
  %3497 = vmatprep.subr.mxu0 0.0
  %3498 = vmatpush1.msra.mxu0 %v3032
  %3499 = vmatprep.subr.mxu0 0.0
  %3500 = vmatpush1.msra.mxu0 %v3031
  %3501 = vmatprep.subr.mxu0 0.0
  %3502 = vmatpush1.msra.mxu0 %v3030
  %3503 = vmatprep.subr.mxu0 0.0
  %3504 = vmatpush1.msra.mxu0 %v3029
  %3505 = vmatprep.subr.mxu0 0.0
  %3506 = vmatpush1.msra.mxu0 %v3028
  %3507 = vmatprep.subr.mxu0 0.0
  %3508 = vmatpush1.msra.mxu0 %v3027
  %3509 = vmatprep.subr.mxu0 0.0
  %3510 = vmatpush1.msra.mxu0 %v3026
  %3511 = vmatprep.subr.mxu0 0.0
  %3512 = vmatpush1.msra.mxu0 %v3025
  %3513 = vmatprep.subr.mxu0 0.0
  %3514 = vmatpush1.msra.mxu0 %v3024
  %3515 = vmatprep.subr.mxu0 0.0
  %3516 = vmatpush1.msra.mxu0 %v3023
  %3517 = vmatprep.subr.mxu0 0.0
  %3518 = vmatpush1.msra.mxu0 %v3022
  %3519 = vmatprep.subr.mxu0 0.0
  %3520 = vmatpush1.msra.mxu0 %v3021
  %3521 = vmatprep.subr.mxu0 0.0
  %3522 = vmatpush1.msra.mxu0 %v3020
  %3523 = vmatprep.subr.mxu0 0.0
  %3524 = vmatpush2.msra.mxu0 %v3051
  %3525 = vmatprep.subr.mxu0 0.0
  %3526 = vmatpush2.msra.mxu0 %v3050
  %3527 = vmatprep.subr.mxu0 0.0
  %3528 = vmatpush2.msra.mxu0 %v3049
  %3529 = vmatprep.subr.mxu0 0.0
  %3530 = vmatpush2.msra.mxu0 %v3048
  %3531 = vmatprep.subr.mxu0 0.0
  %3532 = vmatpush2.msra.mxu0 %v3047
  %3533 = vmatprep.subr.mxu0 0.0
  %3534 = vmatpush2.msra.mxu0 %v3046
  %3535 = vmatprep.subr.mxu0 0.0
  %3536 = vmatpush2.msra.mxu0 %v3045
  %3537 = vmatprep.subr.mxu0 0.0
  %3538 = vmatpush2.msra.mxu0 %v3044
  %3539 = vmatprep.subr.mxu0 0.0
  %3540 = vmatpush2.msra.mxu0 %v3043
  %3541 = vmatprep.subr.mxu0 0.0
  %3542 = vmatpush2.msra.mxu0 %v3042
  %3543 = vmatprep.subr.mxu0 0.0
  %3544 = vmatpush2.msra.mxu0 %v3041
  %3545 = vmatprep.subr.mxu0 0.0
  %3546 = vmatpush2.msra.mxu0 %v3040
  %3547 = vmatprep.subr.mxu0 0.0
  %3548 = vmatpush2.msra.mxu0 %v3039
  %3549 = vmatprep.subr.mxu0 0.0
  %3550 = vmatpush2.msra.mxu0 %v3038
  %3551 = vmatprep.subr.mxu0 0.0
  %3552 = vmatpush2.msra.mxu0 %v3037
  %3553 = vmatprep.subr.mxu0 0.0
  %3554 = vmatpush2.msra.mxu0 %v3036
  %3555 = vmatprep.mubr.f32.mxu0 %v3346
  %3556 = vmatmul.mubr.f32.gmra.mxu0 %v3345
  %v3557 = vpop.f32.mrf.mxu0
  %v3558 = vadd.f32 %v3488, %v3557
  %v3559 = vpop.f32.mrf.mxu0
  %3560 = vdwg.mxu0
  %3561 = vmatprep.subr.mxu0 0.0
  %3562 = vmatpush1.msra.mxu0 0.0
  %3563 = vmatprep.subr.mxu0 0.0
  %3564 = vmatpush1.msra.mxu0 0.0
  %3565 = vmatprep.subr.mxu0 0.0
  %3566 = vmatpush1.msra.mxu0 0.0
  %3567 = vmatprep.subr.mxu0 0.0
  %3568 = vmatpush1.msra.mxu0 0.0
  %3569 = vmatprep.subr.mxu0 0.0
  %3570 = vmatpush1.msra.mxu0 0.0
  %3571 = vmatprep.subr.mxu0 0.0
  %3572 = vmatpush1.msra.mxu0 0.0
  %3573 = vmatprep.subr.mxu0 0.0
  %3574 = vmatpush1.msra.mxu0 0.0
  %3575 = vmatprep.subr.mxu0 0.0
  %3576 = vmatpush1.msra.mxu0 0.0
  %3577 = vmatprep.subr.mxu0 0.0
  %3578 = vmatpush1.msra.mxu0 0.0
  %3579 = vmatprep.subr.mxu0 0.0
  %3580 = vmatpush1.msra.mxu0 0.0
  %3581 = vmatprep.subr.mxu0 0.0
  %3582 = vmatpush1.msra.mxu0 0.0
  %3583 = vmatprep.subr.mxu0 0.0
  %3584 = vmatpush1.msra.mxu0 0.0
  %3585 = vmatprep.subr.mxu0 0.0
  %3586 = vmatpush1.msra.mxu0 %v3055
  %3587 = vmatprep.subr.mxu0 0.0
  %3588 = vmatpush1.msra.mxu0 %v3054
  %3589 = vmatprep.subr.mxu0 0.0
  %3590 = vmatpush1.msra.mxu0 %v3053
  %3591 = vmatprep.subr.mxu0 0.0
  %3592 = vmatpush1.msra.mxu0 %v3052
  %3593 = vmatprep.subr.mxu0 0.0
  %3594 = vmatpush2.msra.mxu0 0.0
  %3595 = vmatprep.subr.mxu0 0.0
  %3596 = vmatpush2.msra.mxu0 0.0
  %3597 = vmatprep.subr.mxu0 0.0
  %3598 = vmatpush2.msra.mxu0 0.0
  %3599 = vmatprep.subr.mxu0 0.0
  %3600 = vmatpush2.msra.mxu0 0.0
  %3601 = vmatprep.subr.mxu0 0.0
  %3602 = vmatpush2.msra.mxu0 0.0
  %3603 = vmatprep.subr.mxu0 0.0
  %3604 = vmatpush2.msra.mxu0 0.0
  %3605 = vmatprep.subr.mxu0 0.0
  %3606 = vmatpush2.msra.mxu0 0.0
  %3607 = vmatprep.subr.mxu0 0.0
  %3608 = vmatpush2.msra.mxu0 0.0
  %3609 = vmatprep.subr.mxu0 0.0
  %3610 = vmatpush2.msra.mxu0 0.0
  %3611 = vmatprep.subr.mxu0 0.0
  %3612 = vmatpush2.msra.mxu0 0.0
  %3613 = vmatprep.subr.mxu0 0.0
  %3614 = vmatpush2.msra.mxu0 0.0
  %3615 = vmatprep.subr.mxu0 0.0
  %3616 = vmatpush2.msra.mxu0 0.0
  %3617 = vmatprep.subr.mxu0 0.0
  %3618 = vmatpush2.msra.mxu0 0.0
  %3619 = vmatprep.subr.mxu0 0.0
  %3620 = vmatpush2.msra.mxu0 0.0
  %3621 = vmatprep.subr.mxu0 0.0
  %3622 = vmatpush2.msra.mxu0 0.0
  %3623 = vmatprep.subr.mxu0 0.0
  %3624 = vmatpush2.msra.mxu0 0.0
  %3625 = vmatprep.mubr.f32.mxu0 0.0
  %3626 = vmatmul.mubr.f32.gmra.mxu0 %v3349
  %v3627 = vpop.f32.mrf.mxu0
  %v3628 = vadd.f32 %v3558, %v3627
  %v3629 = vpop.f32.mrf.mxu0
  %3630 = vdwg.mxu0
  %v3631 = vmul.f32 %v3628, 0.005
  %v3632 = vmul.f32 %v3340, %v3340
  %v3633 = vsub.f32 %v3631, %v3632
  %v3634 = vadd.f32 %v3633, 1e-05
  %v3635 = vrsqrt.pop %v3634
  %v3636 = vld [vmem:[%s12] sm:$0xff]
  %v3637 = vld [vmem:[%s12 + $0x8] sm:$0xff]
  %v3638 = vld [vmem:[%s12 + $0x10] sm:$0xff]
  %v3639 = vld [vmem:[%s12 + $0x18] sm:$0xff]
  %v3640 = vld [vmem:[%s12 + $0x20] sm:$0xff]
  %v3641 = vld [vmem:[%s12 + $0x28] sm:$0xff]
  %v3642 = vld [vmem:[%s12 + $0x30] sm:$0xff]
  %v3644 = vsel %vm1111, %v3340, 0
  %3646 = vmatprep.subr.mxu0 0.0
  %3647 = vmatpush1.msra.mxu0 0.0
  %3648 = vmatprep.subr.mxu0 0.0
  %3649 = vmatpush1.msra.mxu0 0.0
  %3650 = vmatprep.subr.mxu0 0.0
  %3651 = vmatpush1.msra.mxu0 0.0
  %3652 = vmatprep.subr.mxu0 0.0
  %3653 = vmatpush1.msra.mxu0 0.0
  %3654 = vmatprep.subr.mxu0 0.0
  %3655 = vmatpush1.msra.mxu0 0.0
  %3656 = vmatprep.subr.mxu0 0.0
  %3657 = vmatpush1.msra.mxu0 0.0
  %3658 = vmatprep.subr.mxu0 0.0
  %3659 = vmatpush1.msra.mxu0 0.0
  %3660 = vmatprep.subr.mxu0 0.0
  %3661 = vmatpush1.msra.mxu0 0.0
  %3662 = vmatprep.subr.mxu0 0.0
  %3663 = vmatpush1.msra.mxu0 0.0
  %3664 = vmatprep.subr.mxu0 0.0
  %3665 = vmatpush1.msra.mxu0 0.0
  %3666 = vmatprep.subr.mxu0 0.0
  %3667 = vmatpush1.msra.mxu0 0.0
  %3668 = vmatprep.subr.mxu0 0.0
  %3669 = vmatpush1.msra.mxu0 0.0
  %3670 = vmatprep.subr.mxu0 0.0
  %3671 = vmatpush1.msra.mxu0 0.0
  %3672 = vmatprep.subr.mxu0 0.0
  %3673 = vmatpush1.msra.mxu0 0.0
  %3674 = vmatprep.subr.mxu0 0.0
  %3675 = vmatpush1.msra.mxu0 0.0
  %3676 = vmatprep.subr.mxu0 %v3637
  %3677 = vmatpush1.msra.mxu0 %v3636
  %3678 = vmatprep.subr.mxu0 0.0
  %3679 = vmatpush2.msra.mxu0 0.0
  %3680 = vmatprep.subr.mxu0 0.0
  %3681 = vmatpush2.msra.mxu0 0.0
  %3682 = vmatprep.subr.mxu0 0.0
  %3683 = vmatpush2.msra.mxu0 0.0
  %3684 = vmatprep.subr.mxu0 0.0
  %3685 = vmatpush2.msra.mxu0 0.0
  %3686 = vmatprep.subr.mxu0 0.0
  %3687 = vmatpush2.msra.mxu0 0.0
  %3688 = vmatprep.subr.mxu0 0.0
  %3689 = vmatpush2.msra.mxu0 0.0
  %3690 = vmatprep.subr.mxu0 0.0
  %3691 = vmatpush2.msra.mxu0 0.0
  %3692 = vmatprep.subr.mxu0 0.0
  %3693 = vmatpush2.msra.mxu0 0.0
  %3694 = vmatprep.subr.mxu0 0.0
  %3695 = vmatpush2.msra.mxu0 0.0
  %3696 = vmatprep.subr.mxu0 0.0
  %3697 = vmatpush2.msra.mxu0 0.0
  %3698 = vmatprep.subr.mxu0 0.0
  %3699 = vmatpush2.msra.mxu0 0.0
  %3700 = vmatprep.subr.mxu0 0.0
  %3701 = vmatpush2.msra.mxu0 0.0
  %3702 = vmatprep.subr.mxu0 0.0
  %3703 = vmatpush2.msra.mxu0 0.0
  %3704 = vmatprep.subr.mxu0 0.0
  %3705 = vmatpush2.msra.mxu0 0.0
  %3706 = vmatprep.subr.mxu0 0.0
  %3707 = vmatpush2.msra.mxu0 0.0
  %3708 = vmatprep.subr.mxu0 0.0
  %3709 = vmatpush2.msra.mxu0 0.0
  %3710 = vmatprep.mubr.f32.mxu0 0.0
  %3711 = vmatmul.mubr.f32.gmra.mxu0 %v3644
  %v3712 = vpop.f32.mrf.mxu0
  %v3713 = vadd.f32 0.0, %v3712
  %v3714 = vpop.f32.mrf.mxu0
  %v3715 = vadd.f32 0.0, %v3714
  %3716 = vdwg.mxu0
  %3717 = vmatprep.subr.mxu0 0.0
  %3718 = vmatpush1.msra.mxu0 0.0
  %3719 = vmatprep.subr.mxu0 0.0
  %3720 = vmatpush1.msra.mxu0 0.0
  %3721 = vmatprep.subr.mxu0 0.0
  %3722 = vmatpush1.msra.mxu0 0.0
  %3723 = vmatprep.subr.mxu0 0.0
  %3724 = vmatpush1.msra.mxu0 0.0
  %3725 = vmatprep.subr.mxu0 0.0
  %3726 = vmatpush1.msra.mxu0 0.0
  %3727 = vmatprep.subr.mxu0 0.0
  %3728 = vmatpush1.msra.mxu0 0.0
  %3729 = vmatprep.subr.mxu0 0.0
  %3730 = vmatpush1.msra.mxu0 0.0
  %3731 = vmatprep.subr.mxu0 0.0
  %3732 = vmatpush1.msra.mxu0 0.0
  %3733 = vmatprep.subr.mxu0 0.0
  %3734 = vmatpush1.msra.mxu0 0.0
  %3735 = vmatprep.subr.mxu0 0.0
  %3736 = vmatpush1.msra.mxu0 0.0
  %3737 = vmatprep.subr.mxu0 0.0
  %3738 = vmatpush1.msra.mxu0 0.0
  %3739 = vmatprep.subr.mxu0 0.0
  %3740 = vmatpush1.msra.mxu0 0.0
  %3741 = vmatprep.subr.mxu0 0.0
  %3742 = vmatpush1.msra.mxu0 0.0
  %3743 = vmatprep.subr.mxu0 0.0
  %3744 = vmatpush1.msra.mxu0 0.0
  %3745 = vmatprep.subr.mxu0 0.0
  %3746 = vmatpush1.msra.mxu0 0.0
  %3747 = vmatprep.subr.mxu0 %v3639
  %3748 = vmatpush1.msra.mxu0 %v3638
  %3749 = vmatprep.subr.mxu0 0.0
  %3750 = vmatpush2.msra.mxu0 0.0
  %3751 = vmatprep.subr.mxu0 0.0
  %3752 = vmatpush2.msra.mxu0 0.0
  %3753 = vmatprep.subr.mxu0 0.0
  %3754 = vmatpush2.msra.mxu0 0.0
  %3755 = vmatprep.subr.mxu0 0.0
  %3756 = vmatpush2.msra.mxu0 0.0
  %3757 = vmatprep.subr.mxu0 0.0
  %3758 = vmatpush2.msra.mxu0 0.0
  %3759 = vmatprep.subr.mxu0 0.0
  %3760 = vmatpush2.msra.mxu0 0.0
  %3761 = vmatprep.subr.mxu0 0.0
  %3762 = vmatpush2.msra.mxu0 0.0
  %3763 = vmatprep.subr.mxu0 0.0
  %3764 = vmatpush2.msra.mxu0 0.0
  %3765 = vmatprep.subr.mxu0 0.0
  %3766 = vmatpush2.msra.mxu0 0.0
  %3767 = vmatprep.subr.mxu0 0.0
  %3768 = vmatpush2.msra.mxu0 0.0
  %3769 = vmatprep.subr.mxu0 0.0
  %3770 = vmatpush2.msra.mxu0 0.0
  %3771 = vmatprep.subr.mxu0 0.0
  %3772 = vmatpush2.msra.mxu0 0.0
  %3773 = vmatprep.subr.mxu0 0.0
  %3774 = vmatpush2.msra.mxu0 0.0
  %3775 = vmatprep.subr.mxu0 0.0
  %3776 = vmatpush2.msra.mxu0 0.0
  %3777 = vmatprep.subr.mxu0 0.0
  %3778 = vmatpush2.msra.mxu0 0.0
  %3779 = vmatprep.subr.mxu0 0.0
  %3780 = vmatpush2.msra.mxu0 0.0
  %3781 = vmatprep.mubr.f32.mxu0 0.0
  %3782 = vmatmul.mubr.f32.gmra.mxu0 %v3644
  %v3783 = vpop.f32.mrf.mxu0
  %v3784 = vadd.f32 0.0, %v3783
  %v3785 = vpop.f32.mrf.mxu0
  %v3786 = vadd.f32 0.0, %v3785
  %3787 = vdwg.mxu0
  %3788 = vmatprep.subr.mxu0 0.0
  %3789 = vmatpush1.msra.mxu0 0.0
  %3790 = vmatprep.subr.mxu0 0.0
  %3791 = vmatpush1.msra.mxu0 0.0
  %3792 = vmatprep.subr.mxu0 0.0
  %3793 = vmatpush1.msra.mxu0 0.0
  %3794 = vmatprep.subr.mxu0 0.0
  %3795 = vmatpush1.msra.mxu0 0.0
  %3796 = vmatprep.subr.mxu0 0.0
  %3797 = vmatpush1.msra.mxu0 0.0
  %3798 = vmatprep.subr.mxu0 0.0
  %3799 = vmatpush1.msra.mxu0 0.0
  %3800 = vmatprep.subr.mxu0 0.0
  %3801 = vmatpush1.msra.mxu0 0.0
  %3802 = vmatprep.subr.mxu0 0.0
  %3803 = vmatpush1.msra.mxu0 0.0
  %3804 = vmatprep.subr.mxu0 0.0
  %3805 = vmatpush1.msra.mxu0 0.0
  %3806 = vmatprep.subr.mxu0 0.0
  %3807 = vmatpush1.msra.mxu0 0.0
  %3808 = vmatprep.subr.mxu0 0.0
  %3809 = vmatpush1.msra.mxu0 0.0
  %3810 = vmatprep.subr.mxu0 0.0
  %3811 = vmatpush1.msra.mxu0 0.0
  %3812 = vmatprep.subr.mxu0 0.0
  %3813 = vmatpush1.msra.mxu0 0.0
  %3814 = vmatprep.subr.mxu0 0.0
  %3815 = vmatpush1.msra.mxu0 0.0
  %3816 = vmatprep.subr.mxu0 0.0
  %3817 = vmatpush1.msra.mxu0 0.0
  %3818 = vmatprep.subr.mxu0 %v3641
  %3819 = vmatpush1.msra.mxu0 %v3640
  %3820 = vmatprep.subr.mxu0 0.0
  %3821 = vmatpush2.msra.mxu0 0.0
  %3822 = vmatprep.subr.mxu0 0.0
  %3823 = vmatpush2.msra.mxu0 0.0
  %3824 = vmatprep.subr.mxu0 0.0
  %3825 = vmatpush2.msra.mxu0 0.0
  %3826 = vmatprep.subr.mxu0 0.0
  %3827 = vmatpush2.msra.mxu0 0.0
  %3828 = vmatprep.subr.mxu0 0.0
  %3829 = vmatpush2.msra.mxu0 0.0
  %3830 = vmatprep.subr.mxu0 0.0
  %3831 = vmatpush2.msra.mxu0 0.0
  %3832 = vmatprep.subr.mxu0 0.0
  %3833 = vmatpush2.msra.mxu0 0.0
  %3834 = vmatprep.subr.mxu0 0.0
  %3835 = vmatpush2.msra.mxu0 0.0
  %3836 = vmatprep.subr.mxu0 0.0
  %3837 = vmatpush2.msra.mxu0 0.0
  %3838 = vmatprep.subr.mxu0 0.0
  %3839 = vmatpush2.msra.mxu0 0.0
  %3840 = vmatprep.subr.mxu0 0.0
  %3841 = vmatpush2.msra.mxu0 0.0
  %3842 = vmatprep.subr.mxu0 0.0
  %3843 = vmatpush2.msra.mxu0 0.0
  %3844 = vmatprep.subr.mxu0 0.0
  %3845 = vmatpush2.msra.mxu0 0.0
  %3846 = vmatprep.subr.mxu0 0.0
  %3847 = vmatpush2.msra.mxu0 0.0
  %3848 = vmatprep.subr.mxu0 0.0
  %3849 = vmatpush2.msra.mxu0 0.0
  %3850 = vmatprep.subr.mxu0 0.0
  %3851 = vmatpush2.msra.mxu0 0.0
  %3852 = vmatprep.mubr.f32.mxu0 0.0
  %3853 = vmatmul.mubr.f32.gmra.mxu0 %v3644
  %v3854 = vpop.f32.mrf.mxu0
  %v3855 = vadd.f32 0.0, %v3854
  %v3856 = vpop.f32.mrf.mxu0
  %v3857 = vadd.f32 0.0, %v3856
  %3858 = vdwg.mxu0
  %3859 = vmatprep.subr.mxu0 0.0
  %3860 = vmatpush1.msra.mxu0 0.0
  %3861 = vmatprep.subr.mxu0 0.0
  %3862 = vmatpush1.msra.mxu0 0.0
  %3863 = vmatprep.subr.mxu0 0.0
  %3864 = vmatpush1.msra.mxu0 0.0
  %3865 = vmatprep.subr.mxu0 0.0
  %3866 = vmatpush1.msra.mxu0 0.0
  %3867 = vmatprep.subr.mxu0 0.0
  %3868 = vmatpush1.msra.mxu0 0.0
  %3869 = vmatprep.subr.mxu0 0.0
  %3870 = vmatpush1.msra.mxu0 0.0
  %3871 = vmatprep.subr.mxu0 0.0
  %3872 = vmatpush1.msra.mxu0 0.0
  %3873 = vmatprep.subr.mxu0 0.0
  %3874 = vmatpush1.msra.mxu0 0.0
  %3875 = vmatprep.subr.mxu0 0.0
  %3876 = vmatpush1.msra.mxu0 0.0
  %3877 = vmatprep.subr.mxu0 0.0
  %3878 = vmatpush1.msra.mxu0 0.0
  %3879 = vmatprep.subr.mxu0 0.0
  %3880 = vmatpush1.msra.mxu0 0.0
  %3881 = vmatprep.subr.mxu0 0.0
  %3882 = vmatpush1.msra.mxu0 0.0
  %3883 = vmatprep.subr.mxu0 0.0
  %3884 = vmatpush1.msra.mxu0 0.0
  %3885 = vmatprep.subr.mxu0 0.0
  %3886 = vmatpush1.msra.mxu0 0.0
  %3887 = vmatprep.subr.mxu0 0.0
  %3888 = vmatpush1.msra.mxu0 0.0
  %3889 = vmatprep.subr.mxu0 0.0
  %3890 = vmatpush1.msra.mxu0 %v3642
  %3891 = vmatprep.subr.mxu0 0.0
  %3892 = vmatpush2.msra.mxu0 0.0
  %3893 = vmatprep.subr.mxu0 0.0
  %3894 = vmatpush2.msra.mxu0 0.0
  %3895 = vmatprep.subr.mxu0 0.0
  %3896 = vmatpush2.msra.mxu0 0.0
  %3897 = vmatprep.subr.mxu0 0.0
  %3898 = vmatpush2.msra.mxu0 0.0
  %3899 = vmatprep.subr.mxu0 0.0
  %3900 = vmatpush2.msra.mxu0 0.0
  %3901 = vmatprep.subr.mxu0 0.0
  %3902 = vmatpush2.msra.mxu0 0.0
  %3903 = vmatprep.subr.mxu0 0.0
  %3904 = vmatpush2.msra.mxu0 0.0
  %3905 = vmatprep.subr.mxu0 0.0
  %3906 = vmatpush2.msra.mxu0 0.0
  %3907 = vmatprep.subr.mxu0 0.0
  %3908 = vmatpush2.msra.mxu0 0.0
  %3909 = vmatprep.subr.mxu0 0.0
  %3910 = vmatpush2.msra.mxu0 0.0
  %3911 = vmatprep.subr.mxu0 0.0
  %3912 = vmatpush2.msra.mxu0 0.0
  %3913 = vmatprep.subr.mxu0 0.0
  %3914 = vmatpush2.msra.mxu0 0.0
  %3915 = vmatprep.subr.mxu0 0.0
  %3916 = vmatpush2.msra.mxu0 0.0
  %3917 = vmatprep.subr.mxu0 0.0
  %3918 = vmatpush2.msra.mxu0 0.0
  %3919 = vmatprep.subr.mxu0 0.0
  %3920 = vmatpush2.msra.mxu0 0.0
  %3921 = vmatprep.subr.mxu0 0.0
  %3922 = vmatpush2.msra.mxu0 0.0
  %3923 = vmatprep.mubr.f32.mxu0 0.0
  %3924 = vmatmul.mubr.f32.gmra.mxu0 %v3644
  %v3925 = vpop.f32.mrf.mxu0
  %v3926 = vadd.f32 0.0, %v3925
  %v3927 = vpop.f32.mrf.mxu0
  %3928 = vdwg.mxu0
  %v3930 = vsel %vm1111, %v3635, 0
  %3932 = vmatprep.subr.mxu0 0.0
  %3933 = vmatpush1.msra.mxu0 0.0
  %3934 = vmatprep.subr.mxu0 0.0
  %3935 = vmatpush1.msra.mxu0 0.0
  %3936 = vmatprep.subr.mxu0 0.0
  %3937 = vmatpush1.msra.mxu0 0.0
  %3938 = vmatprep.subr.mxu0 0.0
  %3939 = vmatpush1.msra.mxu0 0.0
  %3940 = vmatprep.subr.mxu0 0.0
  %3941 = vmatpush1.msra.mxu0 0.0
  %3942 = vmatprep.subr.mxu0 0.0
  %3943 = vmatpush1.msra.mxu0 0.0
  %3944 = vmatprep.subr.mxu0 0.0
  %3945 = vmatpush1.msra.mxu0 0.0
  %3946 = vmatprep.subr.mxu0 0.0
  %3947 = vmatpush1.msra.mxu0 0.0
  %3948 = vmatprep.subr.mxu0 0.0
  %3949 = vmatpush1.msra.mxu0 0.0
  %3950 = vmatprep.subr.mxu0 0.0
  %3951 = vmatpush1.msra.mxu0 0.0
  %3952 = vmatprep.subr.mxu0 0.0
  %3953 = vmatpush1.msra.mxu0 0.0
  %3954 = vmatprep.subr.mxu0 0.0
  %3955 = vmatpush1.msra.mxu0 0.0
  %3956 = vmatprep.subr.mxu0 0.0
  %3957 = vmatpush1.msra.mxu0 0.0
  %3958 = vmatprep.subr.mxu0 0.0
  %3959 = vmatpush1.msra.mxu0 0.0
  %3960 = vmatprep.subr.mxu0 0.0
  %3961 = vmatpush1.msra.mxu0 0.0
  %3962 = vmatprep.subr.mxu0 %v3637
  %3963 = vmatpush1.msra.mxu0 %v3636
  %3964 = vmatprep.subr.mxu0 0.0
  %3965 = vmatpush2.msra.mxu0 0.0
  %3966 = vmatprep.subr.mxu0 0.0
  %3967 = vmatpush2.msra.mxu0 0.0
  %3968 = vmatprep.subr.mxu0 0.0
  %3969 = vmatpush2.msra.mxu0 0.0
  %3970 = vmatprep.subr.mxu0 0.0
  %3971 = vmatpush2.msra.mxu0 0.0
  %3972 = vmatprep.subr.mxu0 0.0
  %3973 = vmatpush2.msra.mxu0 0.0
  %3974 = vmatprep.subr.mxu0 0.0
  %3975 = vmatpush2.msra.mxu0 0.0
  %3976 = vmatprep.subr.mxu0 0.0
  %3977 = vmatpush2.msra.mxu0 0.0
  %3978 = vmatprep.subr.mxu0 0.0
  %3979 = vmatpush2.msra.mxu0 0.0
  %3980 = vmatprep.subr.mxu0 0.0
  %3981 = vmatpush2.msra.mxu0 0.0
  %3982 = vmatprep.subr.mxu0 0.0
  %3983 = vmatpush2.msra.mxu0 0.0
  %3984 = vmatprep.subr.mxu0 0.0
  %3985 = vmatpush2.msra.mxu0 0.0
  %3986 = vmatprep.subr.mxu0 0.0
  %3987 = vmatpush2.msra.mxu0 0.0
  %3988 = vmatprep.subr.mxu0 0.0
  %3989 = vmatpush2.msra.mxu0 0.0
  %3990 = vmatprep.subr.mxu0 0.0
  %3991 = vmatpush2.msra.mxu0 0.0
  %3992 = vmatprep.subr.mxu0 0.0
  %3993 = vmatpush2.msra.mxu0 0.0
  %3994 = vmatprep.subr.mxu0 0.0
  %3995 = vmatpush2.msra.mxu0 0.0
  %3996 = vmatprep.mubr.f32.mxu0 0.0
  %3997 = vmatmul.mubr.f32.gmra.mxu0 %v3930
  %v3998 = vpop.f32.mrf.mxu0
  %v3999 = vadd.f32 0.0, %v3998
  %v4000 = vpop.f32.mrf.mxu0
  %v4001 = vadd.f32 0.0, %v4000
  %4002 = vdwg.mxu0
  %4003 = vmatprep.subr.mxu0 0.0
  %4004 = vmatpush1.msra.mxu0 0.0
  %4005 = vmatprep.subr.mxu0 0.0
  %4006 = vmatpush1.msra.mxu0 0.0
  %4007 = vmatprep.subr.mxu0 0.0
  %4008 = vmatpush1.msra.mxu0 0.0
  %4009 = vmatprep.subr.mxu0 0.0
  %4010 = vmatpush1.msra.mxu0 0.0
  %4011 = vmatprep.subr.mxu0 0.0
  %4012 = vmatpush1.msra.mxu0 0.0
  %4013 = vmatprep.subr.mxu0 0.0
  %4014 = vmatpush1.msra.mxu0 0.0
  %4015 = vmatprep.subr.mxu0 0.0
  %4016 = vmatpush1.msra.mxu0 0.0
  %4017 = vmatprep.subr.mxu0 0.0
  %4018 = vmatpush1.msra.mxu0 0.0
  %4019 = vmatprep.subr.mxu0 0.0
  %4020 = vmatpush1.msra.mxu0 0.0
  %4021 = vmatprep.subr.mxu0 0.0
  %4022 = vmatpush1.msra.mxu0 0.0
  %4023 = vmatprep.subr.mxu0 0.0
  %4024 = vmatpush1.msra.mxu0 0.0
  %4025 = vmatprep.subr.mxu0 0.0
  %4026 = vmatpush1.msra.mxu0 0.0
  %4027 = vmatprep.subr.mxu0 0.0
  %4028 = vmatpush1.msra.mxu0 0.0
  %4029 = vmatprep.subr.mxu0 0.0
  %4030 = vmatpush1.msra.mxu0 0.0
  %4031 = vmatprep.subr.mxu0 0.0
  %4032 = vmatpush1.msra.mxu0 0.0
  %4033 = vmatprep.subr.mxu0 %v3639
  %4034 = vmatpush1.msra.mxu0 %v3638
  %4035 = vmatprep.subr.mxu0 0.0
  %4036 = vmatpush2.msra.mxu0 0.0
  %4037 = vmatprep.subr.mxu0 0.0
  %4038 = vmatpush2.msra.mxu0 0.0
  %4039 = vmatprep.subr.mxu0 0.0
  %4040 = vmatpush2.msra.mxu0 0.0
  %4041 = vmatprep.subr.mxu0 0.0
  %4042 = vmatpush2.msra.mxu0 0.0
  %4043 = vmatprep.subr.mxu0 0.0
  %4044 = vmatpush2.msra.mxu0 0.0
  %4045 = vmatprep.subr.mxu0 0.0
  %4046 = vmatpush2.msra.mxu0 0.0
  %4047 = vmatprep.subr.mxu0 0.0
  %4048 = vmatpush2.msra.mxu0 0.0
  %4049 = vmatprep.subr.mxu0 0.0
  %4050 = vmatpush2.msra.mxu0 0.0
  %4051 = vmatprep.subr.mxu0 0.0
  %4052 = vmatpush2.msra.mxu0 0.0
  %4053 = vmatprep.subr.mxu0 0.0
  %4054 = vmatpush2.msra.mxu0 0.0
  %4055 = vmatprep.subr.mxu0 0.0
  %4056 = vmatpush2.msra.mxu0 0.0
  %4057 = vmatprep.subr.mxu0 0.0
  %4058 = vmatpush2.msra.mxu0 0.0
  %4059 = vmatprep.subr.mxu0 0.0
  %4060 = vmatpush2.msra.mxu0 0.0
  %4061 = vmatprep.subr.mxu0 0.0
  %4062 = vmatpush2.msra.mxu0 0.0
  %4063 = vmatprep.subr.mxu0 0.0
  %4064 = vmatpush2.msra.mxu0 0.0
  %4065 = vmatprep.subr.mxu0 0.0
  %4066 = vmatpush2.msra.mxu0 0.0
  %4067 = vmatprep.mubr.f32.mxu0 0.0
  %4068 = vmatmul.mubr.f32.gmra.mxu0 %v3930
  %v4069 = vpop.f32.mrf.mxu0
  %v4070 = vadd.f32 0.0, %v4069
  %v4071 = vpop.f32.mrf.mxu0
  %v4072 = vadd.f32 0.0, %v4071
  %4073 = vdwg.mxu0
  %4074 = vmatprep.subr.mxu0 0.0
  %4075 = vmatpush1.msra.mxu0 0.0
  %4076 = vmatprep.subr.mxu0 0.0
  %4077 = vmatpush1.msra.mxu0 0.0
  %4078 = vmatprep.subr.mxu0 0.0
  %4079 = vmatpush1.msra.mxu0 0.0
  %4080 = vmatprep.subr.mxu0 0.0
  %4081 = vmatpush1.msra.mxu0 0.0
  %4082 = vmatprep.subr.mxu0 0.0
  %4083 = vmatpush1.msra.mxu0 0.0
  %4084 = vmatprep.subr.mxu0 0.0
  %4085 = vmatpush1.msra.mxu0 0.0
  %4086 = vmatprep.subr.mxu0 0.0
  %4087 = vmatpush1.msra.mxu0 0.0
  %4088 = vmatprep.subr.mxu0 0.0
  %4089 = vmatpush1.msra.mxu0 0.0
  %4090 = vmatprep.subr.mxu0 0.0
  %4091 = vmatpush1.msra.mxu0 0.0
  %4092 = vmatprep.subr.mxu0 0.0
  %4093 = vmatpush1.msra.mxu0 0.0
  %4094 = vmatprep.subr.mxu0 0.0
  %4095 = vmatpush1.msra.mxu0 0.0
  %4096 = vmatprep.subr.mxu0 0.0
  %4097 = vmatpush1.msra.mxu0 0.0
  %4098 = vmatprep.subr.mxu0 0.0
  %4099 = vmatpush1.msra.mxu0 0.0
  %4100 = vmatprep.subr.mxu0 0.0
  %4101 = vmatpush1.msra.mxu0 0.0
  %4102 = vmatprep.subr.mxu0 0.0
  %4103 = vmatpush1.msra.mxu0 0.0
  %4104 = vmatprep.subr.mxu0 %v3641
  %4105 = vmatpush1.msra.mxu0 %v3640
  %4106 = vmatprep.subr.mxu0 0.0
  %4107 = vmatpush2.msra.mxu0 0.0
  %4108 = vmatprep.subr.mxu0 0.0
  %4109 = vmatpush2.msra.mxu0 0.0
  %4110 = vmatprep.subr.mxu0 0.0
  %4111 = vmatpush2.msra.mxu0 0.0
  %4112 = vmatprep.subr.mxu0 0.0
  %4113 = vmatpush2.msra.mxu0 0.0
  %4114 = vmatprep.subr.mxu0 0.0
  %4115 = vmatpush2.msra.mxu0 0.0
  %4116 = vmatprep.subr.mxu0 0.0
  %4117 = vmatpush2.msra.mxu0 0.0
  %4118 = vmatprep.subr.mxu0 0.0
  %4119 = vmatpush2.msra.mxu0 0.0
  %4120 = vmatprep.subr.mxu0 0.0
  %4121 = vmatpush2.msra.mxu0 0.0
  %4122 = vmatprep.subr.mxu0 0.0
  %4123 = vmatpush2.msra.mxu0 0.0
  %4124 = vmatprep.subr.mxu0 0.0
  %4125 = vmatpush2.msra.mxu0 0.0
  %4126 = vmatprep.subr.mxu0 0.0
  %4127 = vmatpush2.msra.mxu0 0.0
  %4128 = vmatprep.subr.mxu0 0.0
  %4129 = vmatpush2.msra.mxu0 0.0
  %4130 = vmatprep.subr.mxu0 0.0
  %4131 = vmatpush2.msra.mxu0 0.0
  %4132 = vmatprep.subr.mxu0 0.0
  %4133 = vmatpush2.msra.mxu0 0.0
  %4134 = vmatprep.subr.mxu0 0.0
  %4135 = vmatpush2.msra.mxu0 0.0
  %4136 = vmatprep.subr.mxu0 0.0
  %4137 = vmatpush2.msra.mxu0 0.0
  %4138 = vmatprep.mubr.f32.mxu0 0.0
  %4139 = vmatmul.mubr.f32.gmra.mxu0 %v3930
  %v4140 = vpop.f32.mrf.mxu0
  %v4141 = vadd.f32 0.0, %v4140
  %v4142 = vpop.f32.mrf.mxu0
  %v4143 = vadd.f32 0.0, %v4142
  %4144 = vdwg.mxu0
  %4145 = vmatprep.subr.mxu0 0.0
  %4146 = vmatpush1.msra.mxu0 0.0
  %4147 = vmatprep.subr.mxu0 0.0
  %4148 = vmatpush1.msra.mxu0 0.0
  %4149 = vmatprep.subr.mxu0 0.0
  %4150 = vmatpush1.msra.mxu0 0.0
  %4151 = vmatprep.subr.mxu0 0.0
  %4152 = vmatpush1.msra.mxu0 0.0
  %4153 = vmatprep.subr.mxu0 0.0
  %4154 = vmatpush1.msra.mxu0 0.0
  %4155 = vmatprep.subr.mxu0 0.0
  %4156 = vmatpush1.msra.mxu0 0.0
  %4157 = vmatprep.subr.mxu0 0.0
  %4158 = vmatpush1.msra.mxu0 0.0
  %4159 = vmatprep.subr.mxu0 0.0
  %4160 = vmatpush1.msra.mxu0 0.0
  %4161 = vmatprep.subr.mxu0 0.0
  %4162 = vmatpush1.msra.mxu0 0.0
  %4163 = vmatprep.subr.mxu0 0.0
  %4164 = vmatpush1.msra.mxu0 0.0
  %4165 = vmatprep.subr.mxu0 0.0
  %4166 = vmatpush1.msra.mxu0 0.0
  %4167 = vmatprep.subr.mxu0 0.0
  %4168 = vmatpush1.msra.mxu0 0.0
  %4169 = vmatprep.subr.mxu0 0.0
  %4170 = vmatpush1.msra.mxu0 0.0
  %4171 = vmatprep.subr.mxu0 0.0
  %4172 = vmatpush1.msra.mxu0 0.0
  %4173 = vmatprep.subr.mxu0 0.0
  %4174 = vmatpush1.msra.mxu0 0.0
  %4175 = vmatprep.subr.mxu0 0.0
  %4176 = vmatpush1.msra.mxu0 %v3642
  %4177 = vmatprep.subr.mxu0 0.0
  %4178 = vmatpush2.msra.mxu0 0.0
  %4179 = vmatprep.subr.mxu0 0.0
  %4180 = vmatpush2.msra.mxu0 0.0
  %4181 = vmatprep.subr.mxu0 0.0
  %4182 = vmatpush2.msra.mxu0 0.0
  %4183 = vmatprep.subr.mxu0 0.0
  %4184 = vmatpush2.msra.mxu0 0.0
  %4185 = vmatprep.subr.mxu0 0.0
  %4186 = vmatpush2.msra.mxu0 0.0
  %4187 = vmatprep.subr.mxu0 0.0
  %4188 = vmatpush2.msra.mxu0 0.0
  %4189 = vmatprep.subr.mxu0 0.0
  %4190 = vmatpush2.msra.mxu0 0.0
  %4191 = vmatprep.subr.mxu0 0.0
  %4192 = vmatpush2.msra.mxu0 0.0
  %4193 = vmatprep.subr.mxu0 0.0
  %4194 = vmatpush2.msra.mxu0 0.0
  %4195 = vmatprep.subr.mxu0 0.0
  %4196 = vmatpush2.msra.mxu0 0.0
  %4197 = vmatprep.subr.mxu0 0.0
  %4198 = vmatpush2.msra.mxu0 0.0
  %4199 = vmatprep.subr.mxu0 0.0
  %4200 = vmatpush2.msra.mxu0 0.0
  %4201 = vmatprep.subr.mxu0 0.0
  %4202 = vmatpush2.msra.mxu0 0.0
  %4203 = vmatprep.subr.mxu0 0.0
  %4204 = vmatpush2.msra.mxu0 0.0
  %4205 = vmatprep.subr.mxu0 0.0
  %4206 = vmatpush2.msra.mxu0 0.0
  %4207 = vmatprep.subr.mxu0 0.0
  %4208 = vmatpush2.msra.mxu0 0.0
  %4209 = vmatprep.mubr.f32.mxu0 0.0
  %4210 = vmatmul.mubr.f32.gmra.mxu0 %v3930
  %v4211 = vpop.f32.mrf.mxu0
  %v4212 = vadd.f32 0.0, %v4211
  %v4213 = vpop.f32.mrf.mxu0
  %4214 = vdwg.mxu0
  %v4215 = vsub.f32 %v2706, %v3713
  %v4216 = vsub.f32 %v2708, %v3715
  %v4217 = vsub.f32 %v2788, %v3784
  %v4218 = vsub.f32 %v2790, %v3786
  %v4219 = vsub.f32 %v2870, %v3855
  %v4220 = vsub.f32 %v2872, %v3857
  %v4221 = vsub.f32 %v2951, %v3926
  %v4222 = vmul.f32 %v4215, %v3999
  %v4223 = vmul.f32 %v4216, %v4001
  %v4224 = vmul.f32 %v4217, %v4070
  %v4225 = vmul.f32 %v4218, %v4072
  %v4226 = vmul.f32 %v4219, %v4141
  %v4227 = vmul.f32 %v4220, %v4143
  %v4228 = vmul.f32 %v4221, %v4212
  %v4229 = vld [vmem:[%s15] sm:$0x7f]
  %v4231 = vlaneseq
  %v4232 = vshrl.u32 %v4231, 7
  %v4233 = vsub.s32 0, %v4232
  %v4234 = vrot.slane %v4229, %v4233
  %v4235 = vlaneseq
  %v4236 = vshrl.u32 %v4235, 7
  %v4237 = vsub.s32 1, %v4236
  %v4238 = vrot.slane %v4229, %v4237
  %v4239 = vlaneseq
  %v4240 = vshrl.u32 %v4239, 7
  %v4241 = vsub.s32 2, %v4240
  %v4242 = vrot.slane %v4229, %v4241
  %v4243 = vlaneseq
  %v4244 = vshrl.u32 %v4243, 7
  %v4245 = vsub.s32 3, %v4244
  %v4246 = vrot.slane %v4229, %v4245
  %v4247 = vlaneseq
  %v4248 = vshrl.u32 %v4247, 7
  %v4249 = vsub.s32 4, %v4248
  %v4250 = vrot.slane %v4229, %v4249
  %v4251 = vlaneseq
  %v4252 = vshrl.u32 %v4251, 7
  %v4253 = vsub.s32 5, %v4252
  %v4254 = vrot.slane %v4229, %v4253
  %v4255 = vlaneseq
  %v4256 = vshrl.u32 %v4255, 7
  %v4257 = vsub.s32 6, %v4256
  %v4258 = vrot.slane %v4229, %v4257
  %v4266 = vmul.f32 %v4222, %v4234
  %v4267 = vmul.f32 %v4223, %v4238
  %v4268 = vmul.f32 %v4224, %v4242
  %v4269 = vmul.f32 %v4225, %v4246
  %v4270 = vmul.f32 %v4226, %v4250
  %v4271 = vmul.f32 %v4227, %v4254
  %v4272 = vmul.f32 %v4228, %v4258
  %v4273 = vld [vmem:[%s16] sm:$0x7f]
  %v4275 = vlaneseq
  %v4276 = vshrl.u32 %v4275, 7
  %v4277 = vsub.s32 0, %v4276
  %v4278 = vrot.slane %v4273, %v4277
  %v4279 = vlaneseq
  %v4280 = vshrl.u32 %v4279, 7
  %v4281 = vsub.s32 1, %v4280
  %v4282 = vrot.slane %v4273, %v4281
  %v4283 = vlaneseq
  %v4284 = vshrl.u32 %v4283, 7
  %v4285 = vsub.s32 2, %v4284
  %v4286 = vrot.slane %v4273, %v4285
  %v4287 = vlaneseq
  %v4288 = vshrl.u32 %v4287, 7
  %v4289 = vsub.s32 3, %v4288
  %v4290 = vrot.slane %v4273, %v4289
  %v4291 = vlaneseq
  %v4292 = vshrl.u32 %v4291, 7
  %v4293 = vsub.s32 4, %v4292
  %v4294 = vrot.slane %v4273, %v4293
  %v4295 = vlaneseq
  %v4296 = vshrl.u32 %v4295, 7
  %v4297 = vsub.s32 5, %v4296
  %v4298 = vrot.slane %v4273, %v4297
  %v4299 = vlaneseq
  %v4300 = vshrl.u32 %v4299, 7
  %v4301 = vsub.s32 6, %v4300
  %v4302 = vrot.slane %v4273, %v4301
  %v4310 = vadd.f32 %v4266, %v4278
  %v4311 = vadd.f32 %v4267, %v4282
  %v4312 = vadd.f32 %v4268, %v4286
  %v4313 = vadd.f32 %v4269, %v4290
  %v4314 = vadd.f32 %v4270, %v4294
  %v4315 = vadd.f32 %v4271, %v4298
  %v4316 = vadd.f32 %v4272, %v4302
  %vm4317 = vcmp.gt.f32.partialorder %v4310, 0.0
  %vm4318 = vcmp.gt.f32.partialorder %v4311, 0.0
  %vm4319 = vcmp.gt.f32.partialorder %v4312, 0.0
  %vm4320 = vcmp.gt.f32.partialorder %v4313, 0.0
  %vm4321 = vcmp.gt.f32.partialorder %v4314, 0.0
  %vm4322 = vcmp.gt.f32.partialorder %v4315, 0.0
  %vm4323 = vcmp.gt.f32.partialorder %v4316, 0.0
  %v4324 = vmin.f32 %v4310, 0.0
  %v4325 = vmin.f32 %v4311, 0.0
  %v4326 = vmin.f32 %v4312, 0.0
  %v4327 = vmin.f32 %v4313, 0.0
  %v4328 = vmin.f32 %v4314, 0.0
  %v4329 = vmin.f32 %v4315, 0.0
  %v4330 = vmin.f32 %v4316, 0.0
  %v4331 = vmul.f32 %v4324, 1.442695
  %v4332 = vpow.pop %v4331
  %v4333 = vmul.f32 %v4325, 1.442695
  %v4334 = vpow.pop %v4333
  %v4335 = vmul.f32 %v4326, 1.442695
  %v4336 = vpow.pop %v4335
  %v4337 = vmul.f32 %v4327, 1.442695
  %v4338 = vpow.pop %v4337
  %v4339 = vmul.f32 %v4328, 1.442695
  %v4340 = vpow.pop %v4339
  %v4341 = vmul.f32 %v4329, 1.442695
  %v4342 = vpow.pop %v4341
  %v4343 = vmul.f32 %v4330, 1.442695
  %v4344 = vpow.pop %v4343
  %v4345 = vsub.f32 %v4332, 1.0
  %v4346 = vsub.f32 %v4334, 1.0
  %v4347 = vsub.f32 %v4336, 1.0
  %v4348 = vsub.f32 %v4338, 1.0
  %v4349 = vsub.f32 %v4340, 1.0
  %v4350 = vsub.f32 %v4342, 1.0
  %v4351 = vsub.f32 %v4344, 1.0
  %v4352 = vsel %vm4317, %v4310, %v4345
  %v4353 = vsel %vm4318, %v4311, %v4346
  %v4354 = vsel %vm4319, %v4312, %v4347
  %v4355 = vsel %vm4320, %v4313, %v4348
  %v4356 = vsel %vm4321, %v4314, %v4349
  %v4357 = vsel %vm4322, %v4315, %v4350
  %v4358 = vsel %vm4323, %v4316, %v4351
  %v4359 = vpack.c.bf16 %v4352, %v4352
  %v4360 = vpack.c.bf16 %v4353, %v4353
  %v4361 = vpack.c.bf16 %v4354, %v4354
  %v4362 = vpack.c.bf16 %v4355, %v4355
  %v4363 = vpack.c.bf16 %v4356, %v4356
  %v4364 = vpack.c.bf16 %v4357, %v4357
  %v4365 = vpack.c.bf16 %v4358, %v4358
  %v4366 = vld [vmem:[%s5] sm:$0xff]
  %v4367 = vld [vmem:[%s5 + $0x8] sm:$0xff]
  %v4368 = vld [vmem:[%s5 + $0x10] sm:$0xff]
  %v4369 = vld [vmem:[%s5 + $0x18] sm:$0xff]
  %v4370 = vld [vmem:[%s5 + $0x20] sm:$0xff]
  %v4371 = vld [vmem:[%s5 + $0x28] sm:$0xff]
  %v4372 = vld [vmem:[%s5 + $0x30] sm:$0xff]
  %v4373 = vld [vmem:[%s5 + $0x38] sm:$0xff]
  %v4374 = vld [vmem:[%s5 + $0x40] sm:$0xff]
  %v4375 = vld [vmem:[%s5 + $0x48] sm:$0xff]
  %v4376 = vld [vmem:[%s5 + $0x50] sm:$0xff]
  %v4377 = vld [vmem:[%s5 + $0x58] sm:$0xff]
  %v4378 = vld [vmem:[%s5 + $0x60] sm:$0xff]
  %v4379 = vld [vmem:[%s5 + $0x68] sm:$0xff]
  %v4380 = vld [vmem:[%s5 + $0x70] sm:$0xff]
  %v4381 = vld [vmem:[%s5 + $0x78] sm:$0xff]
  %v4382 = vld [vmem:[%s5 + $0x80] sm:$0xff]
  %v4383 = vld [vmem:[%s5 + $0x88] sm:$0xff]
  %v4384 = vld [vmem:[%s5 + $0x90] sm:$0xff]
  %v4385 = vld [vmem:[%s5 + $0x98] sm:$0xff]
  %v4386 = vld [vmem:[%s5 + $0xa0] sm:$0xff]
  %v4387 = vld [vmem:[%s5 + $0xa8] sm:$0xff]
  %v4388 = vld [vmem:[%s5 + $0xb0] sm:$0xff]
  %v4389 = vld [vmem:[%s5 + $0xb8] sm:$0xff]
  %v4390 = vld [vmem:[%s5 + $0xc0] sm:$0xff]
  %v4391 = vld [vmem:[%s5 + $0xc8] sm:$0xff]
  %v4392 = vld [vmem:[%s5 + $0xd0] sm:$0xff]
  %v4393 = vld [vmem:[%s5 + $0xd8] sm:$0xff]
  %v4394 = vld [vmem:[%s5 + $0xe0] sm:$0xff]
  %v4395 = vld [vmem:[%s5 + $0xe8] sm:$0xff]
  %v4396 = vld [vmem:[%s5 + $0xf0] sm:$0xff]
  %v4397 = vld [vmem:[%s5 + $0xf8] sm:$0xff]
  %v4398 = vld [vmem:[%s5 + $0x100] sm:$0xff]
  %v4399 = vld [vmem:[%s5 + $0x108] sm:$0xff]
  %v4400 = vld [vmem:[%s5 + $0x110] sm:$0xff]
  %v4401 = vld [vmem:[%s5 + $0x118] sm:$0xff]
  %v4402 = vld [vmem:[%s5 + $0x120] sm:$0xff]
  %v4403 = vld [vmem:[%s5 + $0x128] sm:$0xff]
  %v4404 = vld [vmem:[%s5 + $0x130] sm:$0xff]
  %v4405 = vld [vmem:[%s5 + $0x138] sm:$0xff]
  %v4406 = vld [vmem:[%s5 + $0x140] sm:$0xff]
  %v4407 = vld [vmem:[%s5 + $0x148] sm:$0xff]
  %v4408 = vld [vmem:[%s5 + $0x150] sm:$0xff]
  %v4409 = vld [vmem:[%s5 + $0x158] sm:$0xff]
  %v4410 = vld [vmem:[%s5 + $0x160] sm:$0xff]
  %v4411 = vld [vmem:[%s5 + $0x168] sm:$0xff]
  %v4412 = vld [vmem:[%s5 + $0x170] sm:$0xff]
  %v4413 = vld [vmem:[%s5 + $0x178] sm:$0xff]
  %v4414 = vld [vmem:[%s5 + $0x180] sm:$0xff]
  %v4415 = vld [vmem:[%s5 + $0x188] sm:$0xff]
  %v4416 = vld [vmem:[%s5 + $0x190] sm:$0xff]
  %v4417 = vld [vmem:[%s5 + $0x198] sm:$0xff]
  %v4418 = vld [vmem:[%s5 + $0x1a0] sm:$0xff]
  %v4419 = vld [vmem:[%s5 + $0x1a8] sm:$0xff]
  %v4420 = vld [vmem:[%s5 + $0x1b0] sm:$0xff]
  %v4421 = vld [vmem:[%s5 + $0x1b8] sm:$0xff]
  %v4422 = vld [vmem:[%s5 + $0x1c0] sm:$0xff]
  %v4423 = vld [vmem:[%s5 + $0x1c8] sm:$0xff]
  %v4424 = vld [vmem:[%s5 + $0x1d0] sm:$0xff]
  %v4425 = vld [vmem:[%s5 + $0x1d8] sm:$0xff]
  %v4426 = vld [vmem:[%s5 + $0x1e0] sm:$0xff]
  %v4427 = vld [vmem:[%s5 + $0x1e8] sm:$0xff]
  %v4428 = vld [vmem:[%s5 + $0x1f0] sm:$0xff]
  %v4429 = vld [vmem:[%s5 + $0x1f8] sm:$0xff]
  %v4430 = vld [vmem:[%s5 + $0x200] sm:$0xff]
  %v4431 = vld [vmem:[%s5 + $0x208] sm:$0xff]
  %v4432 = vld [vmem:[%s5 + $0x210] sm:$0xff]
  %v4433 = vld [vmem:[%s5 + $0x218] sm:$0xff]
  %v4434 = vld [vmem:[%s5 + $0x220] sm:$0xff]
  %v4435 = vld [vmem:[%s5 + $0x228] sm:$0xff]
  %v4436 = vld [vmem:[%s5 + $0x230] sm:$0xff]
  %v4437 = vld [vmem:[%s5 + $0x238] sm:$0xff]
  %v4438 = vld [vmem:[%s5 + $0x240] sm:$0xff]
  %v4439 = vld [vmem:[%s5 + $0x248] sm:$0xff]
  %v4440 = vld [vmem:[%s5 + $0x250] sm:$0xff]
  %v4441 = vld [vmem:[%s5 + $0x258] sm:$0xff]
  %v4442 = vld [vmem:[%s5 + $0x260] sm:$0xff]
  %v4443 = vld [vmem:[%s5 + $0x268] sm:$0xff]
  %v4444 = vld [vmem:[%s5 + $0x270] sm:$0xff]
  %v4445 = vld [vmem:[%s5 + $0x278] sm:$0xff]
  %v4446 = vld [vmem:[%s5 + $0x280] sm:$0xff]
  %v4447 = vld [vmem:[%s5 + $0x288] sm:$0xff]
  %v4448 = vld [vmem:[%s5 + $0x290] sm:$0xff]
  %v4449 = vld [vmem:[%s5 + $0x298] sm:$0xff]
  %v4450 = vld [vmem:[%s5 + $0x2a0] sm:$0xff]
  %v4451 = vld [vmem:[%s5 + $0x2a8] sm:$0xff]
  %v4452 = vld [vmem:[%s5 + $0x2b0] sm:$0xff]
  %v4453 = vld [vmem:[%s5 + $0x2b8] sm:$0xff]
  %v4454 = vld [vmem:[%s5 + $0x2c0] sm:$0xff]
  %v4455 = vld [vmem:[%s5 + $0x2c8] sm:$0xff]
  %v4456 = vld [vmem:[%s5 + $0x2d0] sm:$0xff]
  %v4457 = vld [vmem:[%s5 + $0x2d8] sm:$0xff]
  %v4458 = vld [vmem:[%s5 + $0x2e0] sm:$0xff]
  %v4459 = vld [vmem:[%s5 + $0x2e8] sm:$0xff]
  %v4460 = vld [vmem:[%s5 + $0x2f0] sm:$0xff]
  %v4461 = vld [vmem:[%s5 + $0x2f8] sm:$0xff]
  %v4462 = vld [vmem:[%s5 + $0x300] sm:$0xff]
  %v4463 = vld [vmem:[%s5 + $0x308] sm:$0xff]
  %v4464 = vld [vmem:[%s5 + $0x310] sm:$0xff]
  %v4465 = vld [vmem:[%s5 + $0x318] sm:$0xff]
  %v4466 = vld [vmem:[%s5 + $0x320] sm:$0xff]
  %v4467 = vld [vmem:[%s5 + $0x328] sm:$0xff]
  %v4468 = vld [vmem:[%s5 + $0x330] sm:$0xff]
  %v4469 = vld [vmem:[%s5 + $0x338] sm:$0xff]
  %v4470 = vld [vmem:[%s5 + $0x340] sm:$0xff]
  %v4471 = vld [vmem:[%s5 + $0x348] sm:$0xff]
  %v4472 = vld [vmem:[%s5 + $0x350] sm:$0xff]
  %v4473 = vld [vmem:[%s5 + $0x358] sm:$0xff]
  %v4474 = vld [vmem:[%s5 + $0x360] sm:$0xff]
  %v4475 = vld [vmem:[%s5 + $0x368] sm:$0xff]
  %v4476 = vld [vmem:[%s5 + $0x370] sm:$0xff]
  %v4477 = vld [vmem:[%s5 + $0x378] sm:$0xff]
  %v4478 = vld [vmem:[%s5 + $0x380] sm:$0xff]
  %v4479 = vld [vmem:[%s5 + $0x388] sm:$0xff]
  %v4480 = vld [vmem:[%s5 + $0x390] sm:$0xff]
  %v4481 = vld [vmem:[%s5 + $0x398] sm:$0xff]
  %v4482 = vld [vmem:[%s5 + $0x3a0] sm:$0xff]
  %v4483 = vld [vmem:[%s5 + $0x3a8] sm:$0xff]
  %v4484 = vld [vmem:[%s5 + $0x3b0] sm:$0xff]
  %v4485 = vld [vmem:[%s5 + $0x3b8] sm:$0xff]
  %v4486 = vld [vmem:[%s5 + $0x3c0] sm:$0xff]
  %v4487 = vld [vmem:[%s5 + $0x3c8] sm:$0xff]
  %v4488 = vld [vmem:[%s5 + $0x3d0] sm:$0xff]
  %v4489 = vld [vmem:[%s5 + $0x3d8] sm:$0xff]
  %v4490 = vld [vmem:[%s5 + $0x3e0] sm:$0xff]
  %v4491 = vld [vmem:[%s5 + $0x3e8] sm:$0xff]
  %v4492 = vld [vmem:[%s5 + $0x3f0] sm:$0xff]
  %v4493 = vld [vmem:[%s5 + $0x3f8] sm:$0xff]
  %v4494 = vld [vmem:[%s5 + $0x400] sm:$0xff]
  %v4495 = vld [vmem:[%s5 + $0x408] sm:$0xff]
  %v4496 = vld [vmem:[%s5 + $0x410] sm:$0xff]
  %v4497 = vld [vmem:[%s5 + $0x418] sm:$0xff]
  %v4498 = vld [vmem:[%s5 + $0x420] sm:$0xff]
  %v4499 = vld [vmem:[%s5 + $0x428] sm:$0xff]
  %v4500 = vld [vmem:[%s5 + $0x430] sm:$0xff]
  %v4501 = vld [vmem:[%s5 + $0x438] sm:$0xff]
  %v4502 = vld [vmem:[%s5 + $0x440] sm:$0xff]
  %v4503 = vld [vmem:[%s5 + $0x448] sm:$0xff]
  %v4504 = vld [vmem:[%s5 + $0x450] sm:$0xff]
  %v4505 = vld [vmem:[%s5 + $0x458] sm:$0xff]
  %v4506 = vld [vmem:[%s5 + $0x460] sm:$0xff]
  %v4507 = vld [vmem:[%s5 + $0x468] sm:$0xff]
  %v4508 = vld [vmem:[%s5 + $0x470] sm:$0xff]
  %v4509 = vld [vmem:[%s5 + $0x478] sm:$0xff]
  %v4510 = vld [vmem:[%s5 + $0x480] sm:$0xff]
  %v4511 = vld [vmem:[%s5 + $0x488] sm:$0xff]
  %v4512 = vld [vmem:[%s5 + $0x490] sm:$0xff]
  %v4513 = vld [vmem:[%s5 + $0x498] sm:$0xff]
  %v4514 = vld [vmem:[%s5 + $0x4a0] sm:$0xff]
  %v4515 = vld [vmem:[%s5 + $0x4a8] sm:$0xff]
  %v4516 = vld [vmem:[%s5 + $0x4b0] sm:$0xff]
  %v4517 = vld [vmem:[%s5 + $0x4b8] sm:$0xff]
  %v4518 = vld [vmem:[%s5 + $0x4c0] sm:$0xff]
  %v4519 = vld [vmem:[%s5 + $0x4c8] sm:$0xff]
  %v4520 = vld [vmem:[%s5 + $0x4d0] sm:$0xff]
  %v4521 = vld [vmem:[%s5 + $0x4d8] sm:$0xff]
  %v4522 = vld [vmem:[%s5 + $0x4e0] sm:$0xff]
  %v4523 = vld [vmem:[%s5 + $0x4e8] sm:$0xff]
  %v4524 = vld [vmem:[%s5 + $0x4f0] sm:$0xff]
  %v4525 = vld [vmem:[%s5 + $0x4f8] sm:$0xff]
  %v4526 = vld [vmem:[%s5 + $0x500] sm:$0xff]
  %v4527 = vld [vmem:[%s5 + $0x508] sm:$0xff]
  %v4528 = vld [vmem:[%s5 + $0x510] sm:$0xff]
  %v4529 = vld [vmem:[%s5 + $0x518] sm:$0xff]
  %v4530 = vld [vmem:[%s5 + $0x520] sm:$0xff]
  %v4531 = vld [vmem:[%s5 + $0x528] sm:$0xff]
  %v4532 = vld [vmem:[%s5 + $0x530] sm:$0xff]
  %v4533 = vld [vmem:[%s5 + $0x538] sm:$0xff]
  %v4534 = vld [vmem:[%s5 + $0x540] sm:$0xff]
  %v4535 = vld [vmem:[%s5 + $0x548] sm:$0xff]
  %v4536 = vld [vmem:[%s5 + $0x550] sm:$0xff]
  %v4537 = vld [vmem:[%s5 + $0x558] sm:$0xff]
  %v4538 = vld [vmem:[%s5 + $0x560] sm:$0xff]
  %v4539 = vld [vmem:[%s5 + $0x568] sm:$0xff]
  %v4540 = vld [vmem:[%s5 + $0x570] sm:$0xff]
  %v4541 = vld [vmem:[%s5 + $0x578] sm:$0xff]
  %v4542 = vld [vmem:[%s5 + $0x580] sm:$0xff]
  %v4543 = vld [vmem:[%s5 + $0x588] sm:$0xff]
  %v4544 = vld [vmem:[%s5 + $0x590] sm:$0xff]
  %v4545 = vld [vmem:[%s5 + $0x598] sm:$0xff]
  %v4546 = vld [vmem:[%s5 + $0x5a0] sm:$0xff]
  %v4547 = vld [vmem:[%s5 + $0x5a8] sm:$0xff]
  %v4548 = vld [vmem:[%s5 + $0x5b0] sm:$0xff]
  %v4549 = vld [vmem:[%s5 + $0x5b8] sm:$0xff]
  %v4550 = vld [vmem:[%s5 + $0x5c0] sm:$0xff]
  %v4551 = vld [vmem:[%s5 + $0x5c8] sm:$0xff]
  %v4552 = vld [vmem:[%s5 + $0x5d0] sm:$0xff]
  %v4553 = vld [vmem:[%s5 + $0x5d8] sm:$0xff]
  %v4554 = vld [vmem:[%s5 + $0x5e0] sm:$0xff]
  %v4555 = vld [vmem:[%s5 + $0x5e8] sm:$0xff]
  %v4556 = vld [vmem:[%s5 + $0x5f0] sm:$0xff]
  %v4557 = vld [vmem:[%s5 + $0x5f8] sm:$0xff]
  %v4558 = vld [vmem:[%s5 + $0x600] sm:$0xff]
  %v4559 = vld [vmem:[%s5 + $0x608] sm:$0xff]
  %v4560 = vld [vmem:[%s5 + $0x610] sm:$0xff]
  %v4561 = vld [vmem:[%s5 + $0x618] sm:$0xff]
  %v4562 = vld [vmem:[%s5 + $0x620] sm:$0xff]
  %v4563 = vld [vmem:[%s5 + $0x628] sm:$0xff]
  %v4564 = vld [vmem:[%s5 + $0x630] sm:$0xff]
  %v4565 = vld [vmem:[%s5 + $0x638] sm:$0xff]
  %v4566 = vld [vmem:[%s6] sm:$0xf]
  %v4568 = vlaneseq
  %v4569 = vshrl.u32 %v4568, 7
  %v4570 = vsub.s32 0, %v4569
  %v4571 = vrot.slane %v4566, %v4570
  %v4572 = vlaneseq
  %v4573 = vshrl.u32 %v4572, 7
  %v4574 = vsub.s32 1, %v4573
  %v4575 = vrot.slane %v4566, %v4574
  %v4576 = vlaneseq
  %v4577 = vshrl.u32 %v4576, 7
  %v4578 = vsub.s32 2, %v4577
  %v4579 = vrot.slane %v4566, %v4578
  %v4580 = vlaneseq
  %v4581 = vshrl.u32 %v4580, 7
  %v4582 = vsub.s32 3, %v4581
  %v4583 = vrot.slane %v4566, %v4582
  %v4788 = vunpack.c.l.b16 %v4366
  %v4789 = vunpack.c.h.b16 %v4366
  %v4790 = vunpack.c.l.b16 %v4367
  %v4791 = vunpack.c.h.b16 %v4367
  %v4792 = vunpack.c.l.b16 %v4368
  %v4793 = vunpack.c.h.b16 %v4368
  %v4794 = vunpack.c.l.b16 %v4369
  %v4795 = vunpack.c.h.b16 %v4369
  %v4796 = vunpack.c.l.b16 %v4370
  %v4797 = vunpack.c.h.b16 %v4370
  %v4798 = vunpack.c.l.b16 %v4371
  %v4799 = vunpack.c.h.b16 %v4371
  %v4800 = vunpack.c.l.b16 %v4372
  %v4801 = vunpack.c.h.b16 %v4372
  %v4802 = vunpack.c.l.b16 %v4373
  %v4803 = vunpack.c.h.b16 %v4373
  %v4804 = vunpack.c.l.b16 %v4374
  %v4805 = vunpack.c.h.b16 %v4374
  %v4806 = vunpack.c.l.b16 %v4375
  %v4807 = vunpack.c.h.b16 %v4375
  %v4808 = vunpack.c.l.b16 %v4376
  %v4809 = vunpack.c.h.b16 %v4376
  %v4810 = vunpack.c.l.b16 %v4377
  %v4811 = vunpack.c.h.b16 %v4377
  %v4812 = vunpack.c.l.b16 %v4378
  %v4813 = vunpack.c.h.b16 %v4378
  %v4814 = vunpack.c.l.b16 %v4379
  %v4815 = vunpack.c.h.b16 %v4379
  %v4816 = vunpack.c.l.b16 %v4380
  %v4817 = vunpack.c.h.b16 %v4380
  %v4818 = vunpack.c.l.b16 %v4381
  %v4819 = vunpack.c.h.b16 %v4381
  %v4820 = vunpack.c.l.b16 %v4382
  %v4821 = vunpack.c.h.b16 %v4382
  %v4822 = vunpack.c.l.b16 %v4383
  %v4823 = vunpack.c.h.b16 %v4383
  %v4824 = vunpack.c.l.b16 %v4384
  %v4825 = vunpack.c.h.b16 %v4384
  %v4826 = vunpack.c.l.b16 %v4385
  %v4827 = vunpack.c.h.b16 %v4385
  %v4828 = vunpack.c.l.b16 %v4386
  %v4829 = vunpack.c.h.b16 %v4386
  %v4830 = vunpack.c.l.b16 %v4387
  %v4831 = vunpack.c.h.b16 %v4387
  %v4832 = vunpack.c.l.b16 %v4388
  %v4833 = vunpack.c.h.b16 %v4388
  %v4834 = vunpack.c.l.b16 %v4389
  %v4835 = vunpack.c.h.b16 %v4389
  %v4836 = vunpack.c.l.b16 %v4390
  %v4837 = vunpack.c.h.b16 %v4390
  %v4838 = vunpack.c.l.b16 %v4391
  %v4839 = vunpack.c.h.b16 %v4391
  %v4840 = vunpack.c.l.b16 %v4392
  %v4841 = vunpack.c.h.b16 %v4392
  %v4842 = vunpack.c.l.b16 %v4393
  %v4843 = vunpack.c.h.b16 %v4393
  %v4844 = vunpack.c.l.b16 %v4394
  %v4845 = vunpack.c.h.b16 %v4394
  %v4846 = vunpack.c.l.b16 %v4395
  %v4847 = vunpack.c.h.b16 %v4395
  %v4848 = vunpack.c.l.b16 %v4396
  %v4849 = vunpack.c.h.b16 %v4396
  %v4850 = vunpack.c.l.b16 %v4397
  %v4851 = vunpack.c.h.b16 %v4397
  %v4852 = vunpack.c.l.b16 %v4398
  %v4853 = vunpack.c.h.b16 %v4398
  %v4854 = vunpack.c.l.b16 %v4399
  %v4855 = vunpack.c.h.b16 %v4399
  %v4856 = vunpack.c.l.b16 %v4400
  %v4857 = vunpack.c.h.b16 %v4400
  %v4858 = vunpack.c.l.b16 %v4401
  %v4859 = vunpack.c.h.b16 %v4401
  %v4860 = vunpack.c.l.b16 %v4402
  %v4861 = vunpack.c.h.b16 %v4402
  %v4862 = vunpack.c.l.b16 %v4403
  %v4863 = vunpack.c.h.b16 %v4403
  %v4864 = vunpack.c.l.b16 %v4404
  %v4865 = vunpack.c.h.b16 %v4404
  %v4866 = vunpack.c.l.b16 %v4405
  %v4867 = vunpack.c.h.b16 %v4405
  %v4868 = vunpack.c.l.b16 %v4406
  %v4869 = vunpack.c.h.b16 %v4406
  %v4870 = vunpack.c.l.b16 %v4407
  %v4871 = vunpack.c.h.b16 %v4407
  %v4872 = vunpack.c.l.b16 %v4408
  %v4873 = vunpack.c.h.b16 %v4408
  %v4874 = vunpack.c.l.b16 %v4409
  %v4875 = vunpack.c.h.b16 %v4409
  %v4876 = vunpack.c.l.b16 %v4410
  %v4877 = vunpack.c.h.b16 %v4410
  %v4878 = vunpack.c.l.b16 %v4411
  %v4879 = vunpack.c.h.b16 %v4411
  %v4880 = vunpack.c.l.b16 %v4412
  %v4881 = vunpack.c.h.b16 %v4412
  %v4882 = vunpack.c.l.b16 %v4413
  %v4883 = vunpack.c.h.b16 %v4413
  %v4884 = vunpack.c.l.b16 %v4414
  %v4885 = vunpack.c.h.b16 %v4414
  %v4886 = vunpack.c.l.b16 %v4415
  %v4887 = vunpack.c.h.b16 %v4415
  %v4888 = vunpack.c.l.b16 %v4416
  %v4889 = vunpack.c.h.b16 %v4416
  %v4890 = vunpack.c.l.b16 %v4417
  %v4891 = vunpack.c.h.b16 %v4417
  %v4892 = vunpack.c.l.b16 %v4418
  %v4893 = vunpack.c.h.b16 %v4418
  %v4894 = vunpack.c.l.b16 %v4419
  %v4895 = vunpack.c.h.b16 %v4419
  %v4896 = vunpack.c.l.b16 %v4420
  %v4897 = vunpack.c.h.b16 %v4420
  %v4898 = vunpack.c.l.b16 %v4421
  %v4899 = vunpack.c.h.b16 %v4421
  %v4900 = vunpack.c.l.b16 %v4422
  %v4901 = vunpack.c.h.b16 %v4422
  %v4902 = vunpack.c.l.b16 %v4423
  %v4903 = vunpack.c.h.b16 %v4423
  %v4904 = vunpack.c.l.b16 %v4424
  %v4905 = vunpack.c.h.b16 %v4424
  %v4906 = vunpack.c.l.b16 %v4425
  %v4907 = vunpack.c.h.b16 %v4425
  %v4908 = vunpack.c.l.b16 %v4426
  %v4909 = vunpack.c.h.b16 %v4426
  %v4910 = vunpack.c.l.b16 %v4427
  %v4911 = vunpack.c.h.b16 %v4427
  %v4912 = vunpack.c.l.b16 %v4428
  %v4913 = vunpack.c.h.b16 %v4428
  %v4914 = vunpack.c.l.b16 %v4429
  %v4915 = vunpack.c.h.b16 %v4429
  %v4916 = vunpack.c.l.b16 %v4430
  %v4917 = vunpack.c.h.b16 %v4430
  %v4918 = vunpack.c.l.b16 %v4431
  %v4919 = vunpack.c.h.b16 %v4431
  %v4920 = vunpack.c.l.b16 %v4432
  %v4921 = vunpack.c.h.b16 %v4432
  %v4922 = vunpack.c.l.b16 %v4433
  %v4923 = vunpack.c.h.b16 %v4433
  %v4924 = vunpack.c.l.b16 %v4434
  %v4925 = vunpack.c.h.b16 %v4434
  %v4926 = vunpack.c.l.b16 %v4435
  %v4927 = vunpack.c.h.b16 %v4435
  %v4928 = vunpack.c.l.b16 %v4436
  %v4929 = vunpack.c.h.b16 %v4436
  %v4930 = vunpack.c.l.b16 %v4437
  %v4931 = vunpack.c.h.b16 %v4437
  %v4932 = vunpack.c.l.b16 %v4438
  %v4933 = vunpack.c.h.b16 %v4438
  %v4934 = vunpack.c.l.b16 %v4439
  %v4935 = vunpack.c.h.b16 %v4439
  %v4936 = vunpack.c.l.b16 %v4440
  %v4937 = vunpack.c.h.b16 %v4440
  %v4938 = vunpack.c.l.b16 %v4441
  %v4939 = vunpack.c.h.b16 %v4441
  %v4940 = vunpack.c.l.b16 %v4442
  %v4941 = vunpack.c.h.b16 %v4442
  %v4942 = vunpack.c.l.b16 %v4443
  %v4943 = vunpack.c.h.b16 %v4443
  %v4944 = vunpack.c.l.b16 %v4444
  %v4945 = vunpack.c.h.b16 %v4444
  %v4946 = vunpack.c.l.b16 %v4445
  %v4947 = vunpack.c.h.b16 %v4445
  %v4948 = vunpack.c.l.b16 %v4446
  %v4949 = vunpack.c.h.b16 %v4446
  %v4950 = vunpack.c.l.b16 %v4447
  %v4951 = vunpack.c.h.b16 %v4447
  %v4952 = vunpack.c.l.b16 %v4448
  %v4953 = vunpack.c.h.b16 %v4448
  %v4954 = vunpack.c.l.b16 %v4449
  %v4955 = vunpack.c.h.b16 %v4449
  %v4956 = vunpack.c.l.b16 %v4450
  %v4957 = vunpack.c.h.b16 %v4450
  %v4958 = vunpack.c.l.b16 %v4451
  %v4959 = vunpack.c.h.b16 %v4451
  %v4960 = vunpack.c.l.b16 %v4452
  %v4961 = vunpack.c.h.b16 %v4452
  %v4962 = vunpack.c.l.b16 %v4453
  %v4963 = vunpack.c.h.b16 %v4453
  %v4964 = vunpack.c.l.b16 %v4454
  %v4965 = vunpack.c.h.b16 %v4454
  %v4966 = vunpack.c.l.b16 %v4455
  %v4967 = vunpack.c.h.b16 %v4455
  %v4968 = vunpack.c.l.b16 %v4456
  %v4969 = vunpack.c.h.b16 %v4456
  %v4970 = vunpack.c.l.b16 %v4457
  %v4971 = vunpack.c.h.b16 %v4457
  %v4972 = vunpack.c.l.b16 %v4458
  %v4973 = vunpack.c.h.b16 %v4458
  %v4974 = vunpack.c.l.b16 %v4459
  %v4975 = vunpack.c.h.b16 %v4459
  %v4976 = vunpack.c.l.b16 %v4460
  %v4977 = vunpack.c.h.b16 %v4460
  %v4978 = vunpack.c.l.b16 %v4461
  %v4979 = vunpack.c.h.b16 %v4461
  %v4980 = vunpack.c.l.b16 %v4462
  %v4981 = vunpack.c.h.b16 %v4462
  %v4982 = vunpack.c.l.b16 %v4463
  %v4983 = vunpack.c.h.b16 %v4463
  %v4984 = vunpack.c.l.b16 %v4464
  %v4985 = vunpack.c.h.b16 %v4464
  %v4986 = vunpack.c.l.b16 %v4465
  %v4987 = vunpack.c.h.b16 %v4465
  %v4988 = vunpack.c.l.b16 %v4466
  %v4989 = vunpack.c.h.b16 %v4466
  %v4990 = vunpack.c.l.b16 %v4467
  %v4991 = vunpack.c.h.b16 %v4467
  %v4992 = vunpack.c.l.b16 %v4468
  %v4993 = vunpack.c.h.b16 %v4468
  %v4994 = vunpack.c.l.b16 %v4469
  %v4995 = vunpack.c.h.b16 %v4469
  %v4996 = vunpack.c.l.b16 %v4470
  %v4997 = vunpack.c.h.b16 %v4470
  %v4998 = vunpack.c.l.b16 %v4471
  %v4999 = vunpack.c.h.b16 %v4471
  %v5000 = vunpack.c.l.b16 %v4472
  %v5001 = vunpack.c.h.b16 %v4472
  %v5002 = vunpack.c.l.b16 %v4473
  %v5003 = vunpack.c.h.b16 %v4473
  %v5004 = vunpack.c.l.b16 %v4474
  %v5005 = vunpack.c.h.b16 %v4474
  %v5006 = vunpack.c.l.b16 %v4475
  %v5007 = vunpack.c.h.b16 %v4475
  %v5008 = vunpack.c.l.b16 %v4476
  %v5009 = vunpack.c.h.b16 %v4476
  %v5010 = vunpack.c.l.b16 %v4477
  %v5011 = vunpack.c.h.b16 %v4477
  %v5012 = vunpack.c.l.b16 %v4478
  %v5013 = vunpack.c.h.b16 %v4478
  %v5014 = vunpack.c.l.b16 %v4479
  %v5015 = vunpack.c.h.b16 %v4479
  %v5016 = vunpack.c.l.b16 %v4480
  %v5017 = vunpack.c.h.b16 %v4480
  %v5018 = vunpack.c.l.b16 %v4481
  %v5019 = vunpack.c.h.b16 %v4481
  %v5020 = vunpack.c.l.b16 %v4482
  %v5021 = vunpack.c.h.b16 %v4482
  %v5022 = vunpack.c.l.b16 %v4483
  %v5023 = vunpack.c.h.b16 %v4483
  %v5024 = vunpack.c.l.b16 %v4484
  %v5025 = vunpack.c.h.b16 %v4484
  %v5026 = vunpack.c.l.b16 %v4485
  %v5027 = vunpack.c.h.b16 %v4485
  %v5028 = vunpack.c.l.b16 %v4486
  %v5029 = vunpack.c.h.b16 %v4486
  %v5030 = vunpack.c.l.b16 %v4487
  %v5031 = vunpack.c.h.b16 %v4487
  %v5032 = vunpack.c.l.b16 %v4488
  %v5033 = vunpack.c.h.b16 %v4488
  %v5034 = vunpack.c.l.b16 %v4489
  %v5035 = vunpack.c.h.b16 %v4489
  %v5036 = vunpack.c.l.b16 %v4490
  %v5037 = vunpack.c.h.b16 %v4490
  %v5038 = vunpack.c.l.b16 %v4491
  %v5039 = vunpack.c.h.b16 %v4491
  %v5040 = vunpack.c.l.b16 %v4492
  %v5041 = vunpack.c.h.b16 %v4492
  %v5042 = vunpack.c.l.b16 %v4493
  %v5043 = vunpack.c.h.b16 %v4493
  %v5044 = vunpack.c.l.b16 %v4494
  %v5045 = vunpack.c.h.b16 %v4494
  %v5046 = vunpack.c.l.b16 %v4495
  %v5047 = vunpack.c.h.b16 %v4495
  %v5048 = vunpack.c.l.b16 %v4496
  %v5049 = vunpack.c.h.b16 %v4496
  %v5050 = vunpack.c.l.b16 %v4497
  %v5051 = vunpack.c.h.b16 %v4497
  %v5052 = vunpack.c.l.b16 %v4498
  %v5053 = vunpack.c.h.b16 %v4498
  %v5054 = vunpack.c.l.b16 %v4499
  %v5055 = vunpack.c.h.b16 %v4499
  %v5056 = vunpack.c.l.b16 %v4500
  %v5057 = vunpack.c.h.b16 %v4500
  %v5058 = vunpack.c.l.b16 %v4501
  %v5059 = vunpack.c.h.b16 %v4501
  %v5060 = vunpack.c.l.b16 %v4502
  %v5061 = vunpack.c.h.b16 %v4502
  %v5062 = vunpack.c.l.b16 %v4503
  %v5063 = vunpack.c.h.b16 %v4503
  %v5064 = vunpack.c.l.b16 %v4504
  %v5065 = vunpack.c.h.b16 %v4504
  %v5066 = vunpack.c.l.b16 %v4505
  %v5067 = vunpack.c.h.b16 %v4505
  %v5068 = vunpack.c.l.b16 %v4506
  %v5069 = vunpack.c.h.b16 %v4506
  %v5070 = vunpack.c.l.b16 %v4507
  %v5071 = vunpack.c.h.b16 %v4507
  %v5072 = vunpack.c.l.b16 %v4508
  %v5073 = vunpack.c.h.b16 %v4508
  %v5074 = vunpack.c.l.b16 %v4509
  %v5075 = vunpack.c.h.b16 %v4509
  %v5076 = vunpack.c.l.b16 %v4510
  %v5077 = vunpack.c.h.b16 %v4510
  %v5078 = vunpack.c.l.b16 %v4511
  %v5079 = vunpack.c.h.b16 %v4511
  %v5080 = vunpack.c.l.b16 %v4512
  %v5081 = vunpack.c.h.b16 %v4512
  %v5082 = vunpack.c.l.b16 %v4513
  %v5083 = vunpack.c.h.b16 %v4513
  %v5084 = vunpack.c.l.b16 %v4514
  %v5085 = vunpack.c.h.b16 %v4514
  %v5086 = vunpack.c.l.b16 %v4515
  %v5087 = vunpack.c.h.b16 %v4515
  %v5088 = vunpack.c.l.b16 %v4516
  %v5089 = vunpack.c.h.b16 %v4516
  %v5090 = vunpack.c.l.b16 %v4517
  %v5091 = vunpack.c.h.b16 %v4517
  %v5092 = vunpack.c.l.b16 %v4518
  %v5093 = vunpack.c.h.b16 %v4518
  %v5094 = vunpack.c.l.b16 %v4519
  %v5095 = vunpack.c.h.b16 %v4519
  %v5096 = vunpack.c.l.b16 %v4520
  %v5097 = vunpack.c.h.b16 %v4520
  %v5098 = vunpack.c.l.b16 %v4521
  %v5099 = vunpack.c.h.b16 %v4521
  %v5100 = vunpack.c.l.b16 %v4522
  %v5101 = vunpack.c.h.b16 %v4522
  %v5102 = vunpack.c.l.b16 %v4523
  %v5103 = vunpack.c.h.b16 %v4523
  %v5104 = vunpack.c.l.b16 %v4524
  %v5105 = vunpack.c.h.b16 %v4524
  %v5106 = vunpack.c.l.b16 %v4525
  %v5107 = vunpack.c.h.b16 %v4525
  %v5108 = vunpack.c.l.b16 %v4526
  %v5109 = vunpack.c.h.b16 %v4526
  %v5110 = vunpack.c.l.b16 %v4527
  %v5111 = vunpack.c.h.b16 %v4527
  %v5112 = vunpack.c.l.b16 %v4528
  %v5113 = vunpack.c.h.b16 %v4528
  %v5114 = vunpack.c.l.b16 %v4529
  %v5115 = vunpack.c.h.b16 %v4529
  %v5116 = vunpack.c.l.b16 %v4530
  %v5117 = vunpack.c.h.b16 %v4530
  %v5118 = vunpack.c.l.b16 %v4531
  %v5119 = vunpack.c.h.b16 %v4531
  %v5120 = vunpack.c.l.b16 %v4532
  %v5121 = vunpack.c.h.b16 %v4532
  %v5122 = vunpack.c.l.b16 %v4533
  %v5123 = vunpack.c.h.b16 %v4533
  %v5124 = vunpack.c.l.b16 %v4534
  %v5125 = vunpack.c.h.b16 %v4534
  %v5126 = vunpack.c.l.b16 %v4535
  %v5127 = vunpack.c.h.b16 %v4535
  %v5128 = vunpack.c.l.b16 %v4536
  %v5129 = vunpack.c.h.b16 %v4536
  %v5130 = vunpack.c.l.b16 %v4537
  %v5131 = vunpack.c.h.b16 %v4537
  %v5132 = vunpack.c.l.b16 %v4538
  %v5133 = vunpack.c.h.b16 %v4538
  %v5134 = vunpack.c.l.b16 %v4539
  %v5135 = vunpack.c.h.b16 %v4539
  %v5136 = vunpack.c.l.b16 %v4540
  %v5137 = vunpack.c.h.b16 %v4540
  %v5138 = vunpack.c.l.b16 %v4541
  %v5139 = vunpack.c.h.b16 %v4541
  %v5140 = vunpack.c.l.b16 %v4542
  %v5141 = vunpack.c.h.b16 %v4542
  %v5142 = vunpack.c.l.b16 %v4543
  %v5143 = vunpack.c.h.b16 %v4543
  %v5144 = vunpack.c.l.b16 %v4544
  %v5145 = vunpack.c.h.b16 %v4544
  %v5146 = vunpack.c.l.b16 %v4545
  %v5147 = vunpack.c.h.b16 %v4545
  %v5148 = vunpack.c.l.b16 %v4546
  %v5149 = vunpack.c.h.b16 %v4546
  %v5150 = vunpack.c.l.b16 %v4547
  %v5151 = vunpack.c.h.b16 %v4547
  %v5152 = vunpack.c.l.b16 %v4548
  %v5153 = vunpack.c.h.b16 %v4548
  %v5154 = vunpack.c.l.b16 %v4549
  %v5155 = vunpack.c.h.b16 %v4549
  %v5156 = vunpack.c.l.b16 %v4550
  %v5157 = vunpack.c.h.b16 %v4550
  %v5158 = vunpack.c.l.b16 %v4551
  %v5159 = vunpack.c.h.b16 %v4551
  %v5160 = vunpack.c.l.b16 %v4552
  %v5161 = vunpack.c.h.b16 %v4552
  %v5162 = vunpack.c.l.b16 %v4553
  %v5163 = vunpack.c.h.b16 %v4553
  %v5164 = vunpack.c.l.b16 %v4554
  %v5165 = vunpack.c.h.b16 %v4554
  %v5166 = vunpack.c.l.b16 %v4555
  %v5167 = vunpack.c.h.b16 %v4555
  %v5168 = vunpack.c.l.b16 %v4556
  %v5169 = vunpack.c.h.b16 %v4556
  %v5170 = vunpack.c.l.b16 %v4557
  %v5171 = vunpack.c.h.b16 %v4557
  %v5172 = vunpack.c.l.b16 %v4558
  %v5173 = vunpack.c.h.b16 %v4558
  %v5174 = vunpack.c.l.b16 %v4559
  %v5175 = vunpack.c.h.b16 %v4559
  %v5176 = vunpack.c.l.b16 %v4560
  %v5177 = vunpack.c.h.b16 %v4560
  %v5178 = vunpack.c.l.b16 %v4561
  %v5179 = vunpack.c.h.b16 %v4561
  %v5180 = vunpack.c.l.b16 %v4562
  %v5181 = vunpack.c.h.b16 %v4562
  %v5182 = vunpack.c.l.b16 %v4563
  %v5183 = vunpack.c.h.b16 %v4563
  %v5184 = vunpack.c.l.b16 %v4564
  %v5185 = vunpack.c.h.b16 %v4564
  %v5186 = vunpack.c.l.b16 %v4565
  %v5187 = vunpack.c.h.b16 %v4565
  %v5188 = vpack.c.b16 %v4792, %v4788
  %v5189 = vpack.c.b16 %v4793, %v4789
  %v5190 = vpack.c.b16 %v4794, %v4790
  %v5191 = vpack.c.b16 %v4795, %v4791
  %v5192 = vpack.c.b16 %v4800, %v4796
  %v5193 = vpack.c.b16 %v4801, %v4797
  %v5194 = vpack.c.b16 %v4802, %v4798
  %v5195 = vpack.c.b16 %v4803, %v4799
  %v5196 = vpack.c.b16 %v4808, %v4804
  %v5197 = vpack.c.b16 %v4809, %v4805
  %v5198 = vpack.c.b16 %v4810, %v4806
  %v5199 = vpack.c.b16 %v4811, %v4807
  %v5200 = vpack.c.b16 %v4816, %v4812
  %v5201 = vpack.c.b16 %v4817, %v4813
  %v5202 = vpack.c.b16 %v4818, %v4814
  %v5203 = vpack.c.b16 %v4819, %v4815
  %v5204 = vpack.c.b16 %v4824, %v4820
  %v5205 = vpack.c.b16 %v4825, %v4821
  %v5206 = vpack.c.b16 %v4826, %v4822
  %v5207 = vpack.c.b16 %v4827, %v4823
  %v5208 = vpack.c.b16 %v4832, %v4828
  %v5209 = vpack.c.b16 %v4833, %v4829
  %v5210 = vpack.c.b16 %v4834, %v4830
  %v5211 = vpack.c.b16 %v4835, %v4831
  %v5212 = vpack.c.b16 %v4840, %v4836
  %v5213 = vpack.c.b16 %v4841, %v4837
  %v5214 = vpack.c.b16 %v4842, %v4838
  %v5215 = vpack.c.b16 %v4843, %v4839
  %v5216 = vpack.c.b16 %v4848, %v4844
  %v5217 = vpack.c.b16 %v4849, %v4845
  %v5218 = vpack.c.b16 %v4850, %v4846
  %v5219 = vpack.c.b16 %v4851, %v4847
  %v5220 = vpack.c.b16 %v4856, %v4852
  %v5221 = vpack.c.b16 %v4857, %v4853
  %v5222 = vpack.c.b16 %v4858, %v4854
  %v5223 = vpack.c.b16 %v4859, %v4855
  %v5224 = vpack.c.b16 %v4864, %v4860
  %v5225 = vpack.c.b16 %v4865, %v4861
  %v5226 = vpack.c.b16 %v4866, %v4862
  %v5227 = vpack.c.b16 %v4867, %v4863
  %v5228 = vpack.c.b16 %v4872, %v4868
  %v5229 = vpack.c.b16 %v4873, %v4869
  %v5230 = vpack.c.b16 %v4874, %v4870
  %v5231 = vpack.c.b16 %v4875, %v4871
  %v5232 = vpack.c.b16 %v4880, %v4876
  %v5233 = vpack.c.b16 %v4881, %v4877
  %v5234 = vpack.c.b16 %v4882, %v4878
  %v5235 = vpack.c.b16 %v4883, %v4879
  %v5236 = vpack.c.b16 %v4888, %v4884
  %v5237 = vpack.c.b16 %v4889, %v4885
  %v5238 = vpack.c.b16 %v4890, %v4886
  %v5239 = vpack.c.b16 %v4891, %v4887
  %v5240 = vpack.c.b16 %v4896, %v4892
  %v5241 = vpack.c.b16 %v4897, %v4893
  %v5242 = vpack.c.b16 %v4898, %v4894
  %v5243 = vpack.c.b16 %v4899, %v4895
  %v5244 = vpack.c.b16 %v4904, %v4900
  %v5245 = vpack.c.b16 %v4905, %v4901
  %v5246 = vpack.c.b16 %v4906, %v4902
  %v5247 = vpack.c.b16 %v4907, %v4903
  %v5248 = vpack.c.b16 %v4912, %v4908
  %v5249 = vpack.c.b16 %v4913, %v4909
  %v5250 = vpack.c.b16 %v4914, %v4910
  %v5251 = vpack.c.b16 %v4915, %v4911
  %v5252 = vpack.c.b16 %v4920, %v4916
  %v5253 = vpack.c.b16 %v4921, %v4917
  %v5254 = vpack.c.b16 %v4922, %v4918
  %v5255 = vpack.c.b16 %v4923, %v4919
  %v5256 = vpack.c.b16 %v4928, %v4924
  %v5257 = vpack.c.b16 %v4929, %v4925
  %v5258 = vpack.c.b16 %v4930, %v4926
  %v5259 = vpack.c.b16 %v4931, %v4927
  %v5260 = vpack.c.b16 %v4936, %v4932
  %v5261 = vpack.c.b16 %v4937, %v4933
  %v5262 = vpack.c.b16 %v4938, %v4934
  %v5263 = vpack.c.b16 %v4939, %v4935
  %v5264 = vpack.c.b16 %v4944, %v4940
  %v5265 = vpack.c.b16 %v4945, %v4941
  %v5266 = vpack.c.b16 %v4946, %v4942
  %v5267 = vpack.c.b16 %v4947, %v4943
  %v5268 = vpack.c.b16 %v4952, %v4948
  %v5269 = vpack.c.b16 %v4953, %v4949
  %v5270 = vpack.c.b16 %v4954, %v4950
  %v5271 = vpack.c.b16 %v4955, %v4951
  %v5272 = vpack.c.b16 %v4960, %v4956
  %v5273 = vpack.c.b16 %v4961, %v4957
  %v5274 = vpack.c.b16 %v4962, %v4958
  %v5275 = vpack.c.b16 %v4963, %v4959
  %v5276 = vpack.c.b16 %v4968, %v4964
  %v5277 = vpack.c.b16 %v4969, %v4965
  %v5278 = vpack.c.b16 %v4970, %v4966
  %v5279 = vpack.c.b16 %v4971, %v4967
  %v5280 = vpack.c.b16 %v4976, %v4972
  %v5281 = vpack.c.b16 %v4977, %v4973
  %v5282 = vpack.c.b16 %v4978, %v4974
  %v5283 = vpack.c.b16 %v4979, %v4975
  %v5284 = vpack.c.b16 %v4984, %v4980
  %v5285 = vpack.c.b16 %v4985, %v4981
  %v5286 = vpack.c.b16 %v4986, %v4982
  %v5287 = vpack.c.b16 %v4987, %v4983
  %v5288 = vpack.c.b16 %v4992, %v4988
  %v5289 = vpack.c.b16 %v4993, %v4989
  %v5290 = vpack.c.b16 %v4994, %v4990
  %v5291 = vpack.c.b16 %v4995, %v4991
  %v5292 = vpack.c.b16 %v5000, %v4996
  %v5293 = vpack.c.b16 %v5001, %v4997
  %v5294 = vpack.c.b16 %v5002, %v4998
  %v5295 = vpack.c.b16 %v5003, %v4999
  %v5296 = vpack.c.b16 %v5008, %v5004
  %v5297 = vpack.c.b16 %v5009, %v5005
  %v5298 = vpack.c.b16 %v5010, %v5006
  %v5299 = vpack.c.b16 %v5011, %v5007
  %v5300 = vpack.c.b16 %v5016, %v5012
  %v5301 = vpack.c.b16 %v5017, %v5013
  %v5302 = vpack.c.b16 %v5018, %v5014
  %v5303 = vpack.c.b16 %v5019, %v5015
  %v5304 = vpack.c.b16 %v5024, %v5020
  %v5305 = vpack.c.b16 %v5025, %v5021
  %v5306 = vpack.c.b16 %v5026, %v5022
  %v5307 = vpack.c.b16 %v5027, %v5023
  %v5308 = vpack.c.b16 %v5032, %v5028
  %v5309 = vpack.c.b16 %v5033, %v5029
  %v5310 = vpack.c.b16 %v5034, %v5030
  %v5311 = vpack.c.b16 %v5035, %v5031
  %v5312 = vpack.c.b16 %v5040, %v5036
  %v5313 = vpack.c.b16 %v5041, %v5037
  %v5314 = vpack.c.b16 %v5042, %v5038
  %v5315 = vpack.c.b16 %v5043, %v5039
  %v5316 = vpack.c.b16 %v5048, %v5044
  %v5317 = vpack.c.b16 %v5049, %v5045
  %v5318 = vpack.c.b16 %v5050, %v5046
  %v5319 = vpack.c.b16 %v5051, %v5047
  %v5320 = vpack.c.b16 %v5056, %v5052
  %v5321 = vpack.c.b16 %v5057, %v5053
  %v5322 = vpack.c.b16 %v5058, %v5054
  %v5323 = vpack.c.b16 %v5059, %v5055
  %v5324 = vpack.c.b16 %v5064, %v5060
  %v5325 = vpack.c.b16 %v5065, %v5061
  %v5326 = vpack.c.b16 %v5066, %v5062
  %v5327 = vpack.c.b16 %v5067, %v5063
  %v5328 = vpack.c.b16 %v5072, %v5068
  %v5329 = vpack.c.b16 %v5073, %v5069
  %v5330 = vpack.c.b16 %v5074, %v5070
  %v5331 = vpack.c.b16 %v5075, %v5071
  %v5332 = vpack.c.b16 %v5080, %v5076
  %v5333 = vpack.c.b16 %v5081, %v5077
  %v5334 = vpack.c.b16 %v5082, %v5078
  %v5335 = vpack.c.b16 %v5083, %v5079
  %v5336 = vpack.c.b16 %v5088, %v5084
  %v5337 = vpack.c.b16 %v5089, %v5085
  %v5338 = vpack.c.b16 %v5090, %v5086
  %v5339 = vpack.c.b16 %v5091, %v5087
  %v5340 = vpack.c.b16 %v5096, %v5092
  %v5341 = vpack.c.b16 %v5097, %v5093
  %v5342 = vpack.c.b16 %v5098, %v5094
  %v5343 = vpack.c.b16 %v5099, %v5095
  %v5344 = vpack.c.b16 %v5104, %v5100
  %v5345 = vpack.c.b16 %v5105, %v5101
  %v5346 = vpack.c.b16 %v5106, %v5102
  %v5347 = vpack.c.b16 %v5107, %v5103
  %v5348 = vpack.c.b16 %v5112, %v5108
  %v5349 = vpack.c.b16 %v5113, %v5109
  %v5350 = vpack.c.b16 %v5114, %v5110
  %v5351 = vpack.c.b16 %v5115, %v5111
  %v5352 = vpack.c.b16 %v5120, %v5116
  %v5353 = vpack.c.b16 %v5121, %v5117
  %v5354 = vpack.c.b16 %v5122, %v5118
  %v5355 = vpack.c.b16 %v5123, %v5119
  %v5356 = vpack.c.b16 %v5128, %v5124
  %v5357 = vpack.c.b16 %v5129, %v5125
  %v5358 = vpack.c.b16 %v5130, %v5126
  %v5359 = vpack.c.b16 %v5131, %v5127
  %v5360 = vpack.c.b16 %v5136, %v5132
  %v5361 = vpack.c.b16 %v5137, %v5133
  %v5362 = vpack.c.b16 %v5138, %v5134
  %v5363 = vpack.c.b16 %v5139, %v5135
  %v5364 = vpack.c.b16 %v5144, %v5140
  %v5365 = vpack.c.b16 %v5145, %v5141
  %v5366 = vpack.c.b16 %v5146, %v5142
  %v5367 = vpack.c.b16 %v5147, %v5143
  %v5368 = vpack.c.b16 %v5152, %v5148
  %v5369 = vpack.c.b16 %v5153, %v5149
  %v5370 = vpack.c.b16 %v5154, %v5150
  %v5371 = vpack.c.b16 %v5155, %v5151
  %v5372 = vpack.c.b16 %v5160, %v5156
  %v5373 = vpack.c.b16 %v5161, %v5157
  %v5374 = vpack.c.b16 %v5162, %v5158
  %v5375 = vpack.c.b16 %v5163, %v5159
  %v5376 = vpack.c.b16 %v5168, %v5164
  %v5377 = vpack.c.b16 %v5169, %v5165
  %v5378 = vpack.c.b16 %v5170, %v5166
  %v5379 = vpack.c.b16 %v5171, %v5167
  %v5380 = vpack.c.b16 %v5176, %v5172
  %v5381 = vpack.c.b16 %v5177, %v5173
  %v5382 = vpack.c.b16 %v5178, %v5174
  %v5383 = vpack.c.b16 %v5179, %v5175
  %v5384 = vpack.c.b16 %v5184, %v5180
  %v5385 = vpack.c.b16 %v5185, %v5181
  %v5386 = vpack.c.b16 %v5186, %v5182
  %v5387 = vpack.c.b16 %v5187, %v5183
  %v5589 = vsel %vm3056, %v4365, 0
  %5591 = vmatprep.subr.bf16.mxu0 %v5217
  %5592 = vmatpush1.bf16.msra.mxu0 %v5216
  %5593 = vmatprep.subr.bf16.mxu0 %v5213
  %5594 = vmatpush1.bf16.msra.mxu0 %v5212
  %5595 = vmatprep.subr.bf16.mxu0 %v5209
  %5596 = vmatpush1.bf16.msra.mxu0 %v5208
  %5597 = vmatprep.subr.bf16.mxu0 %v5205
  %5598 = vmatpush1.bf16.msra.mxu0 %v5204
  %5599 = vmatprep.subr.bf16.mxu0 %v5201
  %5600 = vmatpush1.bf16.msra.mxu0 %v5200
  %5601 = vmatprep.subr.bf16.mxu0 %v5197
  %5602 = vmatpush1.bf16.msra.mxu0 %v5196
  %5603 = vmatprep.subr.bf16.mxu0 %v5193
  %5604 = vmatpush1.bf16.msra.mxu0 %v5192
  %5605 = vmatprep.subr.bf16.mxu0 %v5189
  %5606 = vmatpush1.bf16.msra.mxu0 %v5188
  %5607 = vmatprep.subr.bf16.mxu0 %v5249
  %5608 = vmatpush2.bf16.msra.mxu0 %v5248
  %5609 = vmatprep.subr.bf16.mxu0 %v5245
  %5610 = vmatpush2.bf16.msra.mxu0 %v5244
  %5611 = vmatprep.subr.bf16.mxu0 %v5241
  %5612 = vmatpush2.bf16.msra.mxu0 %v5240
  %5613 = vmatprep.subr.bf16.mxu0 %v5237
  %5614 = vmatpush2.bf16.msra.mxu0 %v5236
  %5615 = vmatprep.subr.bf16.mxu0 %v5233
  %5616 = vmatpush2.bf16.msra.mxu0 %v5232
  %5617 = vmatprep.subr.bf16.mxu0 %v5229
  %5618 = vmatpush2.bf16.msra.mxu0 %v5228
  %5619 = vmatprep.subr.bf16.mxu0 %v5225
  %5620 = vmatpush2.bf16.msra.mxu0 %v5224
  %5621 = vmatprep.subr.bf16.mxu0 %v5221
  %5622 = vmatpush2.bf16.msra.mxu0 %v5220
  %5623 = vmatprep.mubr.bf16.mxu0 %v4360
  %5624 = vmatmul.mubr.bf16.gmra.mxu0 %v4359
  %v5625 = vpop.f32.mrf.mxu0
  %v5626 = vadd.f32 %v4571, %v5625
  %v5627 = vpop.f32.mrf.mxu0
  %v5628 = vadd.f32 %v4575, %v5627
  %v5629 = vpop.f32.mrf.mxu0
  %v5630 = vpop.f32.mrf.mxu0
  %5631 = vdwg.mxu0
  %5632 = vmatprep.subr.bf16.mxu0 %v5281
  %5633 = vmatpush1.bf16.msra.mxu0 %v5280
  %5634 = vmatprep.subr.bf16.mxu0 %v5277
  %5635 = vmatpush1.bf16.msra.mxu0 %v5276
  %5636 = vmatprep.subr.bf16.mxu0 %v5273
  %5637 = vmatpush1.bf16.msra.mxu0 %v5272
  %5638 = vmatprep.subr.bf16.mxu0 %v5269
  %5639 = vmatpush1.bf16.msra.mxu0 %v5268
  %5640 = vmatprep.subr.bf16.mxu0 %v5265
  %5641 = vmatpush1.bf16.msra.mxu0 %v5264
  %5642 = vmatprep.subr.bf16.mxu0 %v5261
  %5643 = vmatpush1.bf16.msra.mxu0 %v5260
  %5644 = vmatprep.subr.bf16.mxu0 %v5257
  %5645 = vmatpush1.bf16.msra.mxu0 %v5256
  %5646 = vmatprep.subr.bf16.mxu0 %v5253
  %5647 = vmatpush1.bf16.msra.mxu0 %v5252
  %5648 = vmatprep.subr.bf16.mxu0 %v5313
  %5649 = vmatpush2.bf16.msra.mxu0 %v5312
  %5650 = vmatprep.subr.bf16.mxu0 %v5309
  %5651 = vmatpush2.bf16.msra.mxu0 %v5308
  %5652 = vmatprep.subr.bf16.mxu0 %v5305
  %5653 = vmatpush2.bf16.msra.mxu0 %v5304
  %5654 = vmatprep.subr.bf16.mxu0 %v5301
  %5655 = vmatpush2.bf16.msra.mxu0 %v5300
  %5656 = vmatprep.subr.bf16.mxu0 %v5297
  %5657 = vmatpush2.bf16.msra.mxu0 %v5296
  %5658 = vmatprep.subr.bf16.mxu0 %v5293
  %5659 = vmatpush2.bf16.msra.mxu0 %v5292
  %5660 = vmatprep.subr.bf16.mxu0 %v5289
  %5661 = vmatpush2.bf16.msra.mxu0 %v5288
  %5662 = vmatprep.subr.bf16.mxu0 %v5285
  %5663 = vmatpush2.bf16.msra.mxu0 %v5284
  %5664 = vmatprep.mubr.bf16.mxu0 %v4362
  %5665 = vmatmul.mubr.bf16.gmra.mxu0 %v4361
  %v5666 = vpop.f32.mrf.mxu0
  %v5667 = vadd.f32 %v5626, %v5666
  %v5668 = vpop.f32.mrf.mxu0
  %v5669 = vadd.f32 %v5628, %v5668
  %v5670 = vpop.f32.mrf.mxu0
  %v5671 = vpop.f32.mrf.mxu0
  %5672 = vdwg.mxu0
  %5673 = vmatprep.subr.bf16.mxu0 %v5345
  %5674 = vmatpush1.bf16.msra.mxu0 %v5344
  %5675 = vmatprep.subr.bf16.mxu0 %v5341
  %5676 = vmatpush1.bf16.msra.mxu0 %v5340
  %5677 = vmatprep.subr.bf16.mxu0 %v5337
  %5678 = vmatpush1.bf16.msra.mxu0 %v5336
  %5679 = vmatprep.subr.bf16.mxu0 %v5333
  %5680 = vmatpush1.bf16.msra.mxu0 %v5332
  %5681 = vmatprep.subr.bf16.mxu0 %v5329
  %5682 = vmatpush1.bf16.msra.mxu0 %v5328
  %5683 = vmatprep.subr.bf16.mxu0 %v5325
  %5684 = vmatpush1.bf16.msra.mxu0 %v5324
  %5685 = vmatprep.subr.bf16.mxu0 %v5321
  %5686 = vmatpush1.bf16.msra.mxu0 %v5320
  %5687 = vmatprep.subr.bf16.mxu0 %v5317
  %5688 = vmatpush1.bf16.msra.mxu0 %v5316
  %5689 = vmatprep.subr.bf16.mxu0 %v5377
  %5690 = vmatpush2.bf16.msra.mxu0 %v5376
  %5691 = vmatprep.subr.bf16.mxu0 %v5373
  %5692 = vmatpush2.bf16.msra.mxu0 %v5372
  %5693 = vmatprep.subr.bf16.mxu0 %v5369
  %5694 = vmatpush2.bf16.msra.mxu0 %v5368
  %5695 = vmatprep.subr.bf16.mxu0 %v5365
  %5696 = vmatpush2.bf16.msra.mxu0 %v5364
  %5697 = vmatprep.subr.bf16.mxu0 %v5361
  %5698 = vmatpush2.bf16.msra.mxu0 %v5360
  %5699 = vmatprep.subr.bf16.mxu0 %v5357
  %5700 = vmatpush2.bf16.msra.mxu0 %v5356
  %5701 = vmatprep.subr.bf16.mxu0 %v5353
  %5702 = vmatpush2.bf16.msra.mxu0 %v5352
  %5703 = vmatprep.subr.bf16.mxu0 %v5349
  %5704 = vmatpush2.bf16.msra.mxu0 %v5348
  %5705 = vmatprep.mubr.bf16.mxu0 %v4364
  %5706 = vmatmul.mubr.bf16.gmra.mxu0 %v4363
  %v5707 = vpop.f32.mrf.mxu0
  %v5708 = vadd.f32 %v5667, %v5707
  %v5709 = vpop.f32.mrf.mxu0
  %v5710 = vadd.f32 %v5669, %v5709
  %v5711 = vpop.f32.mrf.mxu0
  %v5712 = vpop.f32.mrf.mxu0
  %5713 = vdwg.mxu0
  %5714 = vmatprep.subr.bf16.mxu0 0
  %5715 = vmatpush1.bf16.msra.mxu0 0
  %5716 = vmatprep.subr.bf16.mxu0 0
  %5717 = vmatpush1.bf16.msra.mxu0 0
  %5718 = vmatprep.subr.bf16.mxu0 0
  %5719 = vmatpush1.bf16.msra.mxu0 0
  %5720 = vmatprep.subr.bf16.mxu0 0
  %5721 = vmatpush1.bf16.msra.mxu0 0
  %5722 = vmatprep.subr.bf16.mxu0 0
  %5723 = vmatpush1.bf16.msra.mxu0 0
  %5724 = vmatprep.subr.bf16.mxu0 0
  %5725 = vmatpush1.bf16.msra.mxu0 0
  %5726 = vmatprep.subr.bf16.mxu0 %v5385
  %5727 = vmatpush1.bf16.msra.mxu0 %v5384
  %5728 = vmatprep.subr.bf16.mxu0 %v5381
  %5729 = vmatpush1.bf16.msra.mxu0 %v5380
  %5730 = vmatprep.subr.bf16.mxu0 0
  %5731 = vmatpush2.bf16.msra.mxu0 0
  %5732 = vmatprep.subr.bf16.mxu0 0
  %5733 = vmatpush2.bf16.msra.mxu0 0
  %5734 = vmatprep.subr.bf16.mxu0 0
  %5735 = vmatpush2.bf16.msra.mxu0 0
  %5736 = vmatprep.subr.bf16.mxu0 0
  %5737 = vmatpush2.bf16.msra.mxu0 0
  %5738 = vmatprep.subr.bf16.mxu0 0
  %5739 = vmatpush2.bf16.msra.mxu0 0
  %5740 = vmatprep.subr.bf16.mxu0 0
  %5741 = vmatpush2.bf16.msra.mxu0 0
  %5742 = vmatprep.subr.bf16.mxu0 0
  %5743 = vmatpush2.bf16.msra.mxu0 0
  %5744 = vmatprep.subr.bf16.mxu0 0
  %5745 = vmatpush2.bf16.msra.mxu0 0
  %5746 = vmatprep.mubr.bf16.mxu0 0
  %5747 = vmatmul.mubr.bf16.gmra.mxu0 %v5589
  %v5748 = vpop.f32.mrf.mxu0
  %v5749 = vadd.f32 %v5708, %v5748
  %v5750 = vpop.f32.mrf.mxu0
  %v5751 = vadd.f32 %v5710, %v5750
  %v5752 = vpop.f32.mrf.mxu0
  %v5753 = vpop.f32.mrf.mxu0
  %5754 = vdwg.mxu0
  %5755 = vmatprep.subr.bf16.mxu0 %v5219
  %5756 = vmatpush1.bf16.msra.mxu0 %v5218
  %5757 = vmatprep.subr.bf16.mxu0 %v5215
  %5758 = vmatpush1.bf16.msra.mxu0 %v5214
  %5759 = vmatprep.subr.bf16.mxu0 %v5211
  %5760 = vmatpush1.bf16.msra.mxu0 %v5210
  %5761 = vmatprep.subr.bf16.mxu0 %v5207
  %5762 = vmatpush1.bf16.msra.mxu0 %v5206
  %5763 = vmatprep.subr.bf16.mxu0 %v5203
  %5764 = vmatpush1.bf16.msra.mxu0 %v5202
  %5765 = vmatprep.subr.bf16.mxu0 %v5199
  %5766 = vmatpush1.bf16.msra.mxu0 %v5198
  %5767 = vmatprep.subr.bf16.mxu0 %v5195
  %5768 = vmatpush1.bf16.msra.mxu0 %v5194
  %5769 = vmatprep.subr.bf16.mxu0 %v5191
  %5770 = vmatpush1.bf16.msra.mxu0 %v5190
  %5771 = vmatprep.subr.bf16.mxu0 %v5251
  %5772 = vmatpush2.bf16.msra.mxu0 %v5250
  %5773 = vmatprep.subr.bf16.mxu0 %v5247
  %5774 = vmatpush2.bf16.msra.mxu0 %v5246
  %5775 = vmatprep.subr.bf16.mxu0 %v5243
  %5776 = vmatpush2.bf16.msra.mxu0 %v5242
  %5777 = vmatprep.subr.bf16.mxu0 %v5239
  %5778 = vmatpush2.bf16.msra.mxu0 %v5238
  %5779 = vmatprep.subr.bf16.mxu0 %v5235
  %5780 = vmatpush2.bf16.msra.mxu0 %v5234
  %5781 = vmatprep.subr.bf16.mxu0 %v5231
  %5782 = vmatpush2.bf16.msra.mxu0 %v5230
  %5783 = vmatprep.subr.bf16.mxu0 %v5227
  %5784 = vmatpush2.bf16.msra.mxu0 %v5226
  %5785 = vmatprep.subr.bf16.mxu0 %v5223
  %5786 = vmatpush2.bf16.msra.mxu0 %v5222
  %5787 = vmatprep.mubr.bf16.mxu0 %v4360
  %5788 = vmatmul.mubr.bf16.gmra.mxu0 %v4359
  %v5789 = vpop.f32.mrf.mxu0
  %v5790 = vadd.f32 %v4579, %v5789
  %v5791 = vpop.f32.mrf.mxu0
  %v5792 = vadd.f32 %v4583, %v5791
  %v5793 = vpop.f32.mrf.mxu0
  %v5794 = vpop.f32.mrf.mxu0
  %5795 = vdwg.mxu0
  %5796 = vmatprep.subr.bf16.mxu0 %v5283
  %5797 = vmatpush1.bf16.msra.mxu0 %v5282
  %5798 = vmatprep.subr.bf16.mxu0 %v5279
  %5799 = vmatpush1.bf16.msra.mxu0 %v5278
  %5800 = vmatprep.subr.bf16.mxu0 %v5275
  %5801 = vmatpush1.bf16.msra.mxu0 %v5274
  %5802 = vmatprep.subr.bf16.mxu0 %v5271
  %5803 = vmatpush1.bf16.msra.mxu0 %v5270
  %5804 = vmatprep.subr.bf16.mxu0 %v5267
  %5805 = vmatpush1.bf16.msra.mxu0 %v5266
  %5806 = vmatprep.subr.bf16.mxu0 %v5263
  %5807 = vmatpush1.bf16.msra.mxu0 %v5262
  %5808 = vmatprep.subr.bf16.mxu0 %v5259
  %5809 = vmatpush1.bf16.msra.mxu0 %v5258
  %5810 = vmatprep.subr.bf16.mxu0 %v5255
  %5811 = vmatpush1.bf16.msra.mxu0 %v5254
  %5812 = vmatprep.subr.bf16.mxu0 %v5315
  %5813 = vmatpush2.bf16.msra.mxu0 %v5314
  %5814 = vmatprep.subr.bf16.mxu0 %v5311
  %5815 = vmatpush2.bf16.msra.mxu0 %v5310
  %5816 = vmatprep.subr.bf16.mxu0 %v5307
  %5817 = vmatpush2.bf16.msra.mxu0 %v5306
  %5818 = vmatprep.subr.bf16.mxu0 %v5303
  %5819 = vmatpush2.bf16.msra.mxu0 %v5302
  %5820 = vmatprep.subr.bf16.mxu0 %v5299
  %5821 = vmatpush2.bf16.msra.mxu0 %v5298
  %5822 = vmatprep.subr.bf16.mxu0 %v5295
  %5823 = vmatpush2.bf16.msra.mxu0 %v5294
  %5824 = vmatprep.subr.bf16.mxu0 %v5291
  %5825 = vmatpush2.bf16.msra.mxu0 %v5290
  %5826 = vmatprep.subr.bf16.mxu0 %v5287
  %5827 = vmatpush2.bf16.msra.mxu0 %v5286
  %5828 = vmatprep.mubr.bf16.mxu0 %v4362
  %5829 = vmatmul.mubr.bf16.gmra.mxu0 %v4361
  %v5830 = vpop.f32.mrf.mxu0
  %v5831 = vadd.f32 %v5790, %v5830
  %v5832 = vpop.f32.mrf.mxu0
  %v5833 = vadd.f32 %v5792, %v5832
  %v5834 = vpop.f32.mrf.mxu0
  %v5835 = vpop.f32.mrf.mxu0
  %5836 = vdwg.mxu0
  %5837 = vmatprep.subr.bf16.mxu0 %v5347
  %5838 = vmatpush1.bf16.msra.mxu0 %v5346
  %5839 = vmatprep.subr.bf16.mxu0 %v5343
  %5840 = vmatpush1.bf16.msra.mxu0 %v5342
  %5841 = vmatprep.subr.bf16.mxu0 %v5339
  %5842 = vmatpush1.bf16.msra.mxu0 %v5338
  %5843 = vmatprep.subr.bf16.mxu0 %v5335
  %5844 = vmatpush1.bf16.msra.mxu0 %v5334
  %5845 = vmatprep.subr.bf16.mxu0 %v5331
  %5846 = vmatpush1.bf16.msra.mxu0 %v5330
  %5847 = vmatprep.subr.bf16.mxu0 %v5327
  %5848 = vmatpush1.bf16.msra.mxu0 %v5326
  %5849 = vmatprep.subr.bf16.mxu0 %v5323
  %5850 = vmatpush1.bf16.msra.mxu0 %v5322
  %5851 = vmatprep.subr.bf16.mxu0 %v5319
  %5852 = vmatpush1.bf16.msra.mxu0 %v5318
  %5853 = vmatprep.subr.bf16.mxu0 %v5379
  %5854 = vmatpush2.bf16.msra.mxu0 %v5378
  %5855 = vmatprep.subr.bf16.mxu0 %v5375
  %5856 = vmatpush2.bf16.msra.mxu0 %v5374
  %5857 = vmatprep.subr.bf16.mxu0 %v5371
  %5858 = vmatpush2.bf16.msra.mxu0 %v5370
  %5859 = vmatprep.subr.bf16.mxu0 %v5367
  %5860 = vmatpush2.bf16.msra.mxu0 %v5366
  %5861 = vmatprep.subr.bf16.mxu0 %v5363
  %5862 = vmatpush2.bf16.msra.mxu0 %v5362
  %5863 = vmatprep.subr.bf16.mxu0 %v5359
  %5864 = vmatpush2.bf16.msra.mxu0 %v5358
  %5865 = vmatprep.subr.bf16.mxu0 %v5355
  %5866 = vmatpush2.bf16.msra.mxu0 %v5354
  %5867 = vmatprep.subr.bf16.mxu0 %v5351
  %5868 = vmatpush2.bf16.msra.mxu0 %v5350
  %5869 = vmatprep.mubr.bf16.mxu0 %v4364
  %5870 = vmatmul.mubr.bf16.gmra.mxu0 %v4363
  %v5871 = vpop.f32.mrf.mxu0
  %v5872 = vadd.f32 %v5831, %v5871
  %v5873 = vpop.f32.mrf.mxu0
  %v5874 = vadd.f32 %v5833, %v5873
  %v5875 = vpop.f32.mrf.mxu0
  %v5876 = vpop.f32.mrf.mxu0
  %5877 = vdwg.mxu0
  %5878 = vmatprep.subr.bf16.mxu0 0
  %5879 = vmatpush1.bf16.msra.mxu0 0
  %5880 = vmatprep.subr.bf16.mxu0 0
  %5881 = vmatpush1.bf16.msra.mxu0 0
  %5882 = vmatprep.subr.bf16.mxu0 0
  %5883 = vmatpush1.bf16.msra.mxu0 0
  %5884 = vmatprep.subr.bf16.mxu0 0
  %5885 = vmatpush1.bf16.msra.mxu0 0
  %5886 = vmatprep.subr.bf16.mxu0 0
  %5887 = vmatpush1.bf16.msra.mxu0 0
  %5888 = vmatprep.subr.bf16.mxu0 0
  %5889 = vmatpush1.bf16.msra.mxu0 0
  %5890 = vmatprep.subr.bf16.mxu0 %v5387
  %5891 = vmatpush1.bf16.msra.mxu0 %v5386
  %5892 = vmatprep.subr.bf16.mxu0 %v5383
  %5893 = vmatpush1.bf16.msra.mxu0 %v5382
  %5894 = vmatprep.subr.bf16.mxu0 0
  %5895 = vmatpush2.bf16.msra.mxu0 0
  %5896 = vmatprep.subr.bf16.mxu0 0
  %5897 = vmatpush2.bf16.msra.mxu0 0
  %5898 = vmatprep.subr.bf16.mxu0 0
  %5899 = vmatpush2.bf16.msra.mxu0 0
  %5900 = vmatprep.subr.bf16.mxu0 0
  %5901 = vmatpush2.bf16.msra.mxu0 0
  %5902 = vmatprep.subr.bf16.mxu0 0
  %5903 = vmatpush2.bf16.msra.mxu0 0
  %5904 = vmatprep.subr.bf16.mxu0 0
  %5905 = vmatpush2.bf16.msra.mxu0 0
  %5906 = vmatprep.subr.bf16.mxu0 0
  %5907 = vmatpush2.bf16.msra.mxu0 0
  %5908 = vmatprep.subr.bf16.mxu0 0
  %5909 = vmatpush2.bf16.msra.mxu0 0
  %5910 = vmatprep.mubr.bf16.mxu0 0
  %5911 = vmatmul.mubr.bf16.gmra.mxu0 %v5589
  %v5912 = vpop.f32.mrf.mxu0
  %v5913 = vadd.f32 %v5872, %v5912
  %v5914 = vpop.f32.mrf.mxu0
  %v5915 = vadd.f32 %v5874, %v5914
  %v5916 = vpop.f32.mrf.mxu0
  %v5917 = vpop.f32.mrf.mxu0
  %5918 = vdwg.mxu0
  %v5920 = vsel %vm810, %v5915, 0
  %5922 = vmatprep.subr.mxu0 0.0
  %5923 = vmatpush1.msra.mxu0 %v775
  %5924 = vmatprep.subr.mxu0 0.0
  %5925 = vmatpush1.msra.mxu0 %v774
  %5926 = vmatprep.subr.mxu0 0.0
  %5927 = vmatpush1.msra.mxu0 %v773
  %5928 = vmatprep.subr.mxu0 0.0
  %5929 = vmatpush1.msra.mxu0 %v772
  %5930 = vmatprep.subr.mxu0 0.0
  %5931 = vmatpush1.msra.mxu0 %v771
  %5932 = vmatprep.subr.mxu0 0.0
  %5933 = vmatpush1.msra.mxu0 %v770
  %5934 = vmatprep.subr.mxu0 0.0
  %5935 = vmatpush1.msra.mxu0 %v769
  %5936 = vmatprep.subr.mxu0 0.0
  %5937 = vmatpush1.msra.mxu0 %v768
  %5938 = vmatprep.subr.mxu0 0.0
  %5939 = vmatpush1.msra.mxu0 %v767
  %5940 = vmatprep.subr.mxu0 0.0
  %5941 = vmatpush1.msra.mxu0 %v766
  %5942 = vmatprep.subr.mxu0 0.0
  %5943 = vmatpush1.msra.mxu0 %v765
  %5944 = vmatprep.subr.mxu0 0.0
  %5945 = vmatpush1.msra.mxu0 %v764
  %5946 = vmatprep.subr.mxu0 0.0
  %5947 = vmatpush1.msra.mxu0 %v763
  %5948 = vmatprep.subr.mxu0 0.0
  %5949 = vmatpush1.msra.mxu0 %v762
  %5950 = vmatprep.subr.mxu0 0.0
  %5951 = vmatpush1.msra.mxu0 %v761
  %5952 = vmatprep.subr.mxu0 0.0
  %5953 = vmatpush1.msra.mxu0 %v760
  %5954 = vmatprep.subr.mxu0 0.0
  %5955 = vmatpush2.msra.mxu0 %v791
  %5956 = vmatprep.subr.mxu0 0.0
  %5957 = vmatpush2.msra.mxu0 %v790
  %5958 = vmatprep.subr.mxu0 0.0
  %5959 = vmatpush2.msra.mxu0 %v789
  %5960 = vmatprep.subr.mxu0 0.0
  %5961 = vmatpush2.msra.mxu0 %v788
  %5962 = vmatprep.subr.mxu0 0.0
  %5963 = vmatpush2.msra.mxu0 %v787
  %5964 = vmatprep.subr.mxu0 0.0
  %5965 = vmatpush2.msra.mxu0 %v786
  %5966 = vmatprep.subr.mxu0 0.0
  %5967 = vmatpush2.msra.mxu0 %v785
  %5968 = vmatprep.subr.mxu0 0.0
  %5969 = vmatpush2.msra.mxu0 %v784
  %5970 = vmatprep.subr.mxu0 0.0
  %5971 = vmatpush2.msra.mxu0 %v783
  %5972 = vmatprep.subr.mxu0 0.0
  %5973 = vmatpush2.msra.mxu0 %v782
  %5974 = vmatprep.subr.mxu0 0.0
  %5975 = vmatpush2.msra.mxu0 %v781
  %5976 = vmatprep.subr.mxu0 0.0
  %5977 = vmatpush2.msra.mxu0 %v780
  %5978 = vmatprep.subr.mxu0 0.0
  %5979 = vmatpush2.msra.mxu0 %v779
  %5980 = vmatprep.subr.mxu0 0.0
  %5981 = vmatpush2.msra.mxu0 %v778
  %5982 = vmatprep.subr.mxu0 0.0
  %5983 = vmatpush2.msra.mxu0 %v777
  %5984 = vmatprep.subr.mxu0 0.0
  %5985 = vmatpush2.msra.mxu0 %v776
  %5986 = vmatprep.mubr.f32.mxu0 %v5751
  %5987 = vmatmul.mubr.f32.gmra.mxu0 %v5749
  %v5988 = vpop.f32.mrf.mxu0
  %v5989 = vadd.f32 0.0, %v5988
  %v5990 = vpop.f32.mrf.mxu0
  %5991 = vdwg.mxu0
  %5992 = vmatprep.subr.mxu0 0.0
  %5993 = vmatpush1.msra.mxu0 %v807
  %5994 = vmatprep.subr.mxu0 0.0
  %5995 = vmatpush1.msra.mxu0 %v806
  %5996 = vmatprep.subr.mxu0 0.0
  %5997 = vmatpush1.msra.mxu0 %v805
  %5998 = vmatprep.subr.mxu0 0.0
  %5999 = vmatpush1.msra.mxu0 %v804
  %6000 = vmatprep.subr.mxu0 0.0
  %6001 = vmatpush1.msra.mxu0 %v803
  %6002 = vmatprep.subr.mxu0 0.0
  %6003 = vmatpush1.msra.mxu0 %v802
  %6004 = vmatprep.subr.mxu0 0.0
  %6005 = vmatpush1.msra.mxu0 %v801
  %6006 = vmatprep.subr.mxu0 0.0
  %6007 = vmatpush1.msra.mxu0 %v800
  %6008 = vmatprep.subr.mxu0 0.0
  %6009 = vmatpush1.msra.mxu0 %v799
  %6010 = vmatprep.subr.mxu0 0.0
  %6011 = vmatpush1.msra.mxu0 %v798
  %6012 = vmatprep.subr.mxu0 0.0
  %6013 = vmatpush1.msra.mxu0 %v797
  %6014 = vmatprep.subr.mxu0 0.0
  %6015 = vmatpush1.msra.mxu0 %v796
  %6016 = vmatprep.subr.mxu0 0.0
  %6017 = vmatpush1.msra.mxu0 %v795
  %6018 = vmatprep.subr.mxu0 0.0
  %6019 = vmatpush1.msra.mxu0 %v794
  %6020 = vmatprep.subr.mxu0 0.0
  %6021 = vmatpush1.msra.mxu0 %v793
  %6022 = vmatprep.subr.mxu0 0.0
  %6023 = vmatpush1.msra.mxu0 %v792
  %6024 = vmatprep.subr.mxu0 0.0
  %6025 = vmatpush2.msra.mxu0 0.0
  %6026 = vmatprep.subr.mxu0 0.0
  %6027 = vmatpush2.msra.mxu0 0.0
  %6028 = vmatprep.subr.mxu0 0.0
  %6029 = vmatpush2.msra.mxu0 0.0
  %6030 = vmatprep.subr.mxu0 0.0
  %6031 = vmatpush2.msra.mxu0 0.0
  %6032 = vmatprep.subr.mxu0 0.0
  %6033 = vmatpush2.msra.mxu0 0.0
  %6034 = vmatprep.subr.mxu0 0.0
  %6035 = vmatpush2.msra.mxu0 0.0
  %6036 = vmatprep.subr.mxu0 0.0
  %6037 = vmatpush2.msra.mxu0 0.0
  %6038 = vmatprep.subr.mxu0 0.0
  %6039 = vmatpush2.msra.mxu0 0.0
  %6040 = vmatprep.subr.mxu0 0.0
  %6041 = vmatpush2.msra.mxu0 0.0
  %6042 = vmatprep.subr.mxu0 0.0
  %6043 = vmatpush2.msra.mxu0 0.0
  %6044 = vmatprep.subr.mxu0 0.0
  %6045 = vmatpush2.msra.mxu0 0.0
  %6046 = vmatprep.subr.mxu0 0.0
  %6047 = vmatpush2.msra.mxu0 0.0
  %6048 = vmatprep.subr.mxu0 0.0
  %6049 = vmatpush2.msra.mxu0 0.0
  %6050 = vmatprep.subr.mxu0 0.0
  %6051 = vmatpush2.msra.mxu0 0.0
  %6052 = vmatprep.subr.mxu0 0.0
  %6053 = vmatpush2.msra.mxu0 %v809
  %6054 = vmatprep.subr.mxu0 0.0
  %6055 = vmatpush2.msra.mxu0 %v808
  %6056 = vmatprep.mubr.f32.mxu0 %v5920
  %6057 = vmatmul.mubr.f32.gmra.mxu0 %v5913
  %v6058 = vpop.f32.mrf.mxu0
  %v6059 = vadd.f32 %v5989, %v6058
  %v6060 = vpop.f32.mrf.mxu0
  %6061 = vdwg.mxu0
  %v6062 = vmul.f32 %v6059, 0.01
  %v6063 = vmul.f32 %v5749, %v5749
  %v6064 = vmul.f32 %v5751, %v5751
  %v6065 = vmul.f32 %v5913, %v5913
  %v6066 = vmul.f32 %v5915, %v5915
  %v6068 = vsel %vm810, %v6066, 0
  %6070 = vmatprep.subr.mxu0 0.0
  %6071 = vmatpush1.msra.mxu0 %v775
  %6072 = vmatprep.subr.mxu0 0.0
  %6073 = vmatpush1.msra.mxu0 %v774
  %6074 = vmatprep.subr.mxu0 0.0
  %6075 = vmatpush1.msra.mxu0 %v773
  %6076 = vmatprep.subr.mxu0 0.0
  %6077 = vmatpush1.msra.mxu0 %v772
  %6078 = vmatprep.subr.mxu0 0.0
  %6079 = vmatpush1.msra.mxu0 %v771
  %6080 = vmatprep.subr.mxu0 0.0
  %6081 = vmatpush1.msra.mxu0 %v770
  %6082 = vmatprep.subr.mxu0 0.0
  %6083 = vmatpush1.msra.mxu0 %v769
  %6084 = vmatprep.subr.mxu0 0.0
  %6085 = vmatpush1.msra.mxu0 %v768
  %6086 = vmatprep.subr.mxu0 0.0
  %6087 = vmatpush1.msra.mxu0 %v767
  %6088 = vmatprep.subr.mxu0 0.0
  %6089 = vmatpush1.msra.mxu0 %v766
  %6090 = vmatprep.subr.mxu0 0.0
  %6091 = vmatpush1.msra.mxu0 %v765
  %6092 = vmatprep.subr.mxu0 0.0
  %6093 = vmatpush1.msra.mxu0 %v764
  %6094 = vmatprep.subr.mxu0 0.0
  %6095 = vmatpush1.msra.mxu0 %v763
  %6096 = vmatprep.subr.mxu0 0.0
  %6097 = vmatpush1.msra.mxu0 %v762
  %6098 = vmatprep.subr.mxu0 0.0
  %6099 = vmatpush1.msra.mxu0 %v761
  %6100 = vmatprep.subr.mxu0 0.0
  %6101 = vmatpush1.msra.mxu0 %v760
  %6102 = vmatprep.subr.mxu0 0.0
  %6103 = vmatpush2.msra.mxu0 %v791
  %6104 = vmatprep.subr.mxu0 0.0
  %6105 = vmatpush2.msra.mxu0 %v790
  %6106 = vmatprep.subr.mxu0 0.0
  %6107 = vmatpush2.msra.mxu0 %v789
  %6108 = vmatprep.subr.mxu0 0.0
  %6109 = vmatpush2.msra.mxu0 %v788
  %6110 = vmatprep.subr.mxu0 0.0
  %6111 = vmatpush2.msra.mxu0 %v787
  %6112 = vmatprep.subr.mxu0 0.0
  %6113 = vmatpush2.msra.mxu0 %v786
  %6114 = vmatprep.subr.mxu0 0.0
  %6115 = vmatpush2.msra.mxu0 %v785
  %6116 = vmatprep.subr.mxu0 0.0
  %6117 = vmatpush2.msra.mxu0 %v784
  %6118 = vmatprep.subr.mxu0 0.0
  %6119 = vmatpush2.msra.mxu0 %v783
  %6120 = vmatprep.subr.mxu0 0.0
  %6121 = vmatpush2.msra.mxu0 %v782
  %6122 = vmatprep.subr.mxu0 0.0
  %6123 = vmatpush2.msra.mxu0 %v781
  %6124 = vmatprep.subr.mxu0 0.0
  %6125 = vmatpush2.msra.mxu0 %v780
  %6126 = vmatprep.subr.mxu0 0.0
  %6127 = vmatpush2.msra.mxu0 %v779
  %6128 = vmatprep.subr.mxu0 0.0
  %6129 = vmatpush2.msra.mxu0 %v778
  %6130 = vmatprep.subr.mxu0 0.0
  %6131 = vmatpush2.msra.mxu0 %v777
  %6132 = vmatprep.subr.mxu0 0.0
  %6133 = vmatpush2.msra.mxu0 %v776
  %6134 = vmatprep.mubr.f32.mxu0 %v6064
  %6135 = vmatmul.mubr.f32.gmra.mxu0 %v6063
  %v6136 = vpop.f32.mrf.mxu0
  %v6137 = vadd.f32 0.0, %v6136
  %v6138 = vpop.f32.mrf.mxu0
  %6139 = vdwg.mxu0
  %6140 = vmatprep.subr.mxu0 0.0
  %6141 = vmatpush1.msra.mxu0 %v807
  %6142 = vmatprep.subr.mxu0 0.0
  %6143 = vmatpush1.msra.mxu0 %v806
  %6144 = vmatprep.subr.mxu0 0.0
  %6145 = vmatpush1.msra.mxu0 %v805
  %6146 = vmatprep.subr.mxu0 0.0
  %6147 = vmatpush1.msra.mxu0 %v804
  %6148 = vmatprep.subr.mxu0 0.0
  %6149 = vmatpush1.msra.mxu0 %v803
  %6150 = vmatprep.subr.mxu0 0.0
  %6151 = vmatpush1.msra.mxu0 %v802
  %6152 = vmatprep.subr.mxu0 0.0
  %6153 = vmatpush1.msra.mxu0 %v801
  %6154 = vmatprep.subr.mxu0 0.0
  %6155 = vmatpush1.msra.mxu0 %v800
  %6156 = vmatprep.subr.mxu0 0.0
  %6157 = vmatpush1.msra.mxu0 %v799
  %6158 = vmatprep.subr.mxu0 0.0
  %6159 = vmatpush1.msra.mxu0 %v798
  %6160 = vmatprep.subr.mxu0 0.0
  %6161 = vmatpush1.msra.mxu0 %v797
  %6162 = vmatprep.subr.mxu0 0.0
  %6163 = vmatpush1.msra.mxu0 %v796
  %6164 = vmatprep.subr.mxu0 0.0
  %6165 = vmatpush1.msra.mxu0 %v795
  %6166 = vmatprep.subr.mxu0 0.0
  %6167 = vmatpush1.msra.mxu0 %v794
  %6168 = vmatprep.subr.mxu0 0.0
  %6169 = vmatpush1.msra.mxu0 %v793
  %6170 = vmatprep.subr.mxu0 0.0
  %6171 = vmatpush1.msra.mxu0 %v792
  %6172 = vmatprep.subr.mxu0 0.0
  %6173 = vmatpush2.msra.mxu0 0.0
  %6174 = vmatprep.subr.mxu0 0.0
  %6175 = vmatpush2.msra.mxu0 0.0
  %6176 = vmatprep.subr.mxu0 0.0
  %6177 = vmatpush2.msra.mxu0 0.0
  %6178 = vmatprep.subr.mxu0 0.0
  %6179 = vmatpush2.msra.mxu0 0.0
  %6180 = vmatprep.subr.mxu0 0.0
  %6181 = vmatpush2.msra.mxu0 0.0
  %6182 = vmatprep.subr.mxu0 0.0
  %6183 = vmatpush2.msra.mxu0 0.0
  %6184 = vmatprep.subr.mxu0 0.0
  %6185 = vmatpush2.msra.mxu0 0.0
  %6186 = vmatprep.subr.mxu0 0.0
  %6187 = vmatpush2.msra.mxu0 0.0
  %6188 = vmatprep.subr.mxu0 0.0
  %6189 = vmatpush2.msra.mxu0 0.0
  %6190 = vmatprep.subr.mxu0 0.0
  %6191 = vmatpush2.msra.mxu0 0.0
  %6192 = vmatprep.subr.mxu0 0.0
  %6193 = vmatpush2.msra.mxu0 0.0
  %6194 = vmatprep.subr.mxu0 0.0
  %6195 = vmatpush2.msra.mxu0 0.0
  %6196 = vmatprep.subr.mxu0 0.0
  %6197 = vmatpush2.msra.mxu0 0.0
  %6198 = vmatprep.subr.mxu0 0.0
  %6199 = vmatpush2.msra.mxu0 0.0
  %6200 = vmatprep.subr.mxu0 0.0
  %6201 = vmatpush2.msra.mxu0 %v809
  %6202 = vmatprep.subr.mxu0 0.0
  %6203 = vmatpush2.msra.mxu0 %v808
  %6204 = vmatprep.mubr.f32.mxu0 %v6068
  %6205 = vmatmul.mubr.f32.gmra.mxu0 %v6065
  %v6206 = vpop.f32.mrf.mxu0
  %v6207 = vadd.f32 %v6137, %v6206
  %v6208 = vpop.f32.mrf.mxu0
  %6209 = vdwg.mxu0
  %v6210 = vmul.f32 %v6207, 0.01
  %v6211 = vmul.f32 %v6062, %v6062
  %v6212 = vsub.f32 %v6210, %v6211
  %v6213 = vadd.f32 %v6212, 1e-05
  %v6214 = vrsqrt.pop %v6213
  %v6216 = vsel %vm1111, %v6062, 0
  %6218 = vmatprep.subr.mxu0 0.0
  %6219 = vmatpush1.msra.mxu0 0.0
  %6220 = vmatprep.subr.mxu0 0.0
  %6221 = vmatpush1.msra.mxu0 0.0
  %6222 = vmatprep.subr.mxu0 0.0
  %6223 = vmatpush1.msra.mxu0 0.0
  %6224 = vmatprep.subr.mxu0 0.0
  %6225 = vmatpush1.msra.mxu0 0.0
  %6226 = vmatprep.subr.mxu0 0.0
  %6227 = vmatpush1.msra.mxu0 0.0
  %6228 = vmatprep.subr.mxu0 0.0
  %6229 = vmatpush1.msra.mxu0 0.0
  %6230 = vmatprep.subr.mxu0 0.0
  %6231 = vmatpush1.msra.mxu0 0.0
  %6232 = vmatprep.subr.mxu0 0.0
  %6233 = vmatpush1.msra.mxu0 0.0
  %6234 = vmatprep.subr.mxu0 0.0
  %6235 = vmatpush1.msra.mxu0 0.0
  %6236 = vmatprep.subr.mxu0 0.0
  %6237 = vmatpush1.msra.mxu0 0.0
  %6238 = vmatprep.subr.mxu0 0.0
  %6239 = vmatpush1.msra.mxu0 0.0
  %6240 = vmatprep.subr.mxu0 0.0
  %6241 = vmatpush1.msra.mxu0 0.0
  %6242 = vmatprep.subr.mxu0 0.0
  %6243 = vmatpush1.msra.mxu0 0.0
  %6244 = vmatprep.subr.mxu0 0.0
  %6245 = vmatpush1.msra.mxu0 0.0
  %6246 = vmatprep.subr.mxu0 0.0
  %6247 = vmatpush1.msra.mxu0 0.0
  %6248 = vmatprep.subr.mxu0 %v1108
  %6249 = vmatpush1.msra.mxu0 %v1107
  %6250 = vmatprep.subr.mxu0 0.0
  %6251 = vmatpush2.msra.mxu0 0.0
  %6252 = vmatprep.subr.mxu0 0.0
  %6253 = vmatpush2.msra.mxu0 0.0
  %6254 = vmatprep.subr.mxu0 0.0
  %6255 = vmatpush2.msra.mxu0 0.0
  %6256 = vmatprep.subr.mxu0 0.0
  %6257 = vmatpush2.msra.mxu0 0.0
  %6258 = vmatprep.subr.mxu0 0.0
  %6259 = vmatpush2.msra.mxu0 0.0
  %6260 = vmatprep.subr.mxu0 0.0
  %6261 = vmatpush2.msra.mxu0 0.0
  %6262 = vmatprep.subr.mxu0 0.0
  %6263 = vmatpush2.msra.mxu0 0.0
  %6264 = vmatprep.subr.mxu0 0.0
  %6265 = vmatpush2.msra.mxu0 0.0
  %6266 = vmatprep.subr.mxu0 0.0
  %6267 = vmatpush2.msra.mxu0 0.0
  %6268 = vmatprep.subr.mxu0 0.0
  %6269 = vmatpush2.msra.mxu0 0.0
  %6270 = vmatprep.subr.mxu0 0.0
  %6271 = vmatpush2.msra.mxu0 0.0
  %6272 = vmatprep.subr.mxu0 0.0
  %6273 = vmatpush2.msra.mxu0 0.0
  %6274 = vmatprep.subr.mxu0 0.0
  %6275 = vmatpush2.msra.mxu0 0.0
  %6276 = vmatprep.subr.mxu0 0.0
  %6277 = vmatpush2.msra.mxu0 0.0
  %6278 = vmatprep.subr.mxu0 0.0
  %6279 = vmatpush2.msra.mxu0 0.0
  %6280 = vmatprep.subr.mxu0 0.0
  %6281 = vmatpush2.msra.mxu0 0.0
  %6282 = vmatprep.mubr.f32.mxu0 0.0
  %6283 = vmatmul.mubr.f32.gmra.mxu0 %v6216
  %v6284 = vpop.f32.mrf.mxu0
  %v6285 = vadd.f32 0.0, %v6284
  %v6286 = vpop.f32.mrf.mxu0
  %v6287 = vadd.f32 0.0, %v6286
  %6288 = vdwg.mxu0
  %6289 = vmatprep.subr.mxu0 0.0
  %6290 = vmatpush1.msra.mxu0 0.0
  %6291 = vmatprep.subr.mxu0 0.0
  %6292 = vmatpush1.msra.mxu0 0.0
  %6293 = vmatprep.subr.mxu0 0.0
  %6294 = vmatpush1.msra.mxu0 0.0
  %6295 = vmatprep.subr.mxu0 0.0
  %6296 = vmatpush1.msra.mxu0 0.0
  %6297 = vmatprep.subr.mxu0 0.0
  %6298 = vmatpush1.msra.mxu0 0.0
  %6299 = vmatprep.subr.mxu0 0.0
  %6300 = vmatpush1.msra.mxu0 0.0
  %6301 = vmatprep.subr.mxu0 0.0
  %6302 = vmatpush1.msra.mxu0 0.0
  %6303 = vmatprep.subr.mxu0 0.0
  %6304 = vmatpush1.msra.mxu0 0.0
  %6305 = vmatprep.subr.mxu0 0.0
  %6306 = vmatpush1.msra.mxu0 0.0
  %6307 = vmatprep.subr.mxu0 0.0
  %6308 = vmatpush1.msra.mxu0 0.0
  %6309 = vmatprep.subr.mxu0 0.0
  %6310 = vmatpush1.msra.mxu0 0.0
  %6311 = vmatprep.subr.mxu0 0.0
  %6312 = vmatpush1.msra.mxu0 0.0
  %6313 = vmatprep.subr.mxu0 0.0
  %6314 = vmatpush1.msra.mxu0 0.0
  %6315 = vmatprep.subr.mxu0 0.0
  %6316 = vmatpush1.msra.mxu0 0.0
  %6317 = vmatprep.subr.mxu0 0.0
  %6318 = vmatpush1.msra.mxu0 0.0
  %6319 = vmatprep.subr.mxu0 %v1110
  %6320 = vmatpush1.msra.mxu0 %v1109
  %6321 = vmatprep.subr.mxu0 0.0
  %6322 = vmatpush2.msra.mxu0 0.0
  %6323 = vmatprep.subr.mxu0 0.0
  %6324 = vmatpush2.msra.mxu0 0.0
  %6325 = vmatprep.subr.mxu0 0.0
  %6326 = vmatpush2.msra.mxu0 0.0
  %6327 = vmatprep.subr.mxu0 0.0
  %6328 = vmatpush2.msra.mxu0 0.0
  %6329 = vmatprep.subr.mxu0 0.0
  %6330 = vmatpush2.msra.mxu0 0.0
  %6331 = vmatprep.subr.mxu0 0.0
  %6332 = vmatpush2.msra.mxu0 0.0
  %6333 = vmatprep.subr.mxu0 0.0
  %6334 = vmatpush2.msra.mxu0 0.0
  %6335 = vmatprep.subr.mxu0 0.0
  %6336 = vmatpush2.msra.mxu0 0.0
  %6337 = vmatprep.subr.mxu0 0.0
  %6338 = vmatpush2.msra.mxu0 0.0
  %6339 = vmatprep.subr.mxu0 0.0
  %6340 = vmatpush2.msra.mxu0 0.0
  %6341 = vmatprep.subr.mxu0 0.0
  %6342 = vmatpush2.msra.mxu0 0.0
  %6343 = vmatprep.subr.mxu0 0.0
  %6344 = vmatpush2.msra.mxu0 0.0
  %6345 = vmatprep.subr.mxu0 0.0
  %6346 = vmatpush2.msra.mxu0 0.0
  %6347 = vmatprep.subr.mxu0 0.0
  %6348 = vmatpush2.msra.mxu0 0.0
  %6349 = vmatprep.subr.mxu0 0.0
  %6350 = vmatpush2.msra.mxu0 0.0
  %6351 = vmatprep.subr.mxu0 0.0
  %6352 = vmatpush2.msra.mxu0 0.0
  %6353 = vmatprep.mubr.f32.mxu0 0.0
  %6354 = vmatmul.mubr.f32.gmra.mxu0 %v6216
  %v6355 = vpop.f32.mrf.mxu0
  %v6356 = vadd.f32 0.0, %v6355
  %v6357 = vpop.f32.mrf.mxu0
  %v6358 = vadd.f32 0.0, %v6357
  %6359 = vdwg.mxu0
  %v6361 = vsel %vm1111, %v6214, 0
  %6363 = vmatprep.subr.mxu0 0.0
  %6364 = vmatpush1.msra.mxu0 0.0
  %6365 = vmatprep.subr.mxu0 0.0
  %6366 = vmatpush1.msra.mxu0 0.0
  %6367 = vmatprep.subr.mxu0 0.0
  %6368 = vmatpush1.msra.mxu0 0.0
  %6369 = vmatprep.subr.mxu0 0.0
  %6370 = vmatpush1.msra.mxu0 0.0
  %6371 = vmatprep.subr.mxu0 0.0
  %6372 = vmatpush1.msra.mxu0 0.0
  %6373 = vmatprep.subr.mxu0 0.0
  %6374 = vmatpush1.msra.mxu0 0.0
  %6375 = vmatprep.subr.mxu0 0.0
  %6376 = vmatpush1.msra.mxu0 0.0
  %6377 = vmatprep.subr.mxu0 0.0
  %6378 = vmatpush1.msra.mxu0 0.0
  %6379 = vmatprep.subr.mxu0 0.0
  %6380 = vmatpush1.msra.mxu0 0.0
  %6381 = vmatprep.subr.mxu0 0.0
  %6382 = vmatpush1.msra.mxu0 0.0
  %6383 = vmatprep.subr.mxu0 0.0
  %6384 = vmatpush1.msra.mxu0 0.0
  %6385 = vmatprep.subr.mxu0 0.0
  %6386 = vmatpush1.msra.mxu0 0.0
  %6387 = vmatprep.subr.mxu0 0.0
  %6388 = vmatpush1.msra.mxu0 0.0
  %6389 = vmatprep.subr.mxu0 0.0
  %6390 = vmatpush1.msra.mxu0 0.0
  %6391 = vmatprep.subr.mxu0 0.0
  %6392 = vmatpush1.msra.mxu0 0.0
  %6393 = vmatprep.subr.mxu0 %v1108
  %6394 = vmatpush1.msra.mxu0 %v1107
  %6395 = vmatprep.subr.mxu0 0.0
  %6396 = vmatpush2.msra.mxu0 0.0
  %6397 = vmatprep.subr.mxu0 0.0
  %6398 = vmatpush2.msra.mxu0 0.0
  %6399 = vmatprep.subr.mxu0 0.0
  %6400 = vmatpush2.msra.mxu0 0.0
  %6401 = vmatprep.subr.mxu0 0.0
  %6402 = vmatpush2.msra.mxu0 0.0
  %6403 = vmatprep.subr.mxu0 0.0
  %6404 = vmatpush2.msra.mxu0 0.0
  %6405 = vmatprep.subr.mxu0 0.0
  %6406 = vmatpush2.msra.mxu0 0.0
  %6407 = vmatprep.subr.mxu0 0.0
  %6408 = vmatpush2.msra.mxu0 0.0
  %6409 = vmatprep.subr.mxu0 0.0
  %6410 = vmatpush2.msra.mxu0 0.0
  %6411 = vmatprep.subr.mxu0 0.0
  %6412 = vmatpush2.msra.mxu0 0.0
  %6413 = vmatprep.subr.mxu0 0.0
  %6414 = vmatpush2.msra.mxu0 0.0
  %6415 = vmatprep.subr.mxu0 0.0
  %6416 = vmatpush2.msra.mxu0 0.0
  %6417 = vmatprep.subr.mxu0 0.0
  %6418 = vmatpush2.msra.mxu0 0.0
  %6419 = vmatprep.subr.mxu0 0.0
  %6420 = vmatpush2.msra.mxu0 0.0
  %6421 = vmatprep.subr.mxu0 0.0
  %6422 = vmatpush2.msra.mxu0 0.0
  %6423 = vmatprep.subr.mxu0 0.0
  %6424 = vmatpush2.msra.mxu0 0.0
  %6425 = vmatprep.subr.mxu0 0.0
  %6426 = vmatpush2.msra.mxu0 0.0
  %6427 = vmatprep.mubr.f32.mxu0 0.0
  %6428 = vmatmul.mubr.f32.gmra.mxu0 %v6361
  %v6429 = vpop.f32.mrf.mxu0
  %v6430 = vadd.f32 0.0, %v6429
  %v6431 = vpop.f32.mrf.mxu0
  %v6432 = vadd.f32 0.0, %v6431
  %6433 = vdwg.mxu0
  %6434 = vmatprep.subr.mxu0 0.0
  %6435 = vmatpush1.msra.mxu0 0.0
  %6436 = vmatprep.subr.mxu0 0.0
  %6437 = vmatpush1.msra.mxu0 0.0
  %6438 = vmatprep.subr.mxu0 0.0
  %6439 = vmatpush1.msra.mxu0 0.0
  %6440 = vmatprep.subr.mxu0 0.0
  %6441 = vmatpush1.msra.mxu0 0.0
  %6442 = vmatprep.subr.mxu0 0.0
  %6443 = vmatpush1.msra.mxu0 0.0
  %6444 = vmatprep.subr.mxu0 0.0
  %6445 = vmatpush1.msra.mxu0 0.0
  %6446 = vmatprep.subr.mxu0 0.0
  %6447 = vmatpush1.msra.mxu0 0.0
  %6448 = vmatprep.subr.mxu0 0.0
  %6449 = vmatpush1.msra.mxu0 0.0
  %6450 = vmatprep.subr.mxu0 0.0
  %6451 = vmatpush1.msra.mxu0 0.0
  %6452 = vmatprep.subr.mxu0 0.0
  %6453 = vmatpush1.msra.mxu0 0.0
  %6454 = vmatprep.subr.mxu0 0.0
  %6455 = vmatpush1.msra.mxu0 0.0
  %6456 = vmatprep.subr.mxu0 0.0
  %6457 = vmatpush1.msra.mxu0 0.0
  %6458 = vmatprep.subr.mxu0 0.0
  %6459 = vmatpush1.msra.mxu0 0.0
  %6460 = vmatprep.subr.mxu0 0.0
  %6461 = vmatpush1.msra.mxu0 0.0
  %6462 = vmatprep.subr.mxu0 0.0
  %6463 = vmatpush1.msra.mxu0 0.0
  %6464 = vmatprep.subr.mxu0 %v1110
  %6465 = vmatpush1.msra.mxu0 %v1109
  %6466 = vmatprep.subr.mxu0 0.0
  %6467 = vmatpush2.msra.mxu0 0.0
  %6468 = vmatprep.subr.mxu0 0.0
  %6469 = vmatpush2.msra.mxu0 0.0
  %6470 = vmatprep.subr.mxu0 0.0
  %6471 = vmatpush2.msra.mxu0 0.0
  %6472 = vmatprep.subr.mxu0 0.0
  %6473 = vmatpush2.msra.mxu0 0.0
  %6474 = vmatprep.subr.mxu0 0.0
  %6475 = vmatpush2.msra.mxu0 0.0
  %6476 = vmatprep.subr.mxu0 0.0
  %6477 = vmatpush2.msra.mxu0 0.0
  %6478 = vmatprep.subr.mxu0 0.0
  %6479 = vmatpush2.msra.mxu0 0.0
  %6480 = vmatprep.subr.mxu0 0.0
  %6481 = vmatpush2.msra.mxu0 0.0
  %6482 = vmatprep.subr.mxu0 0.0
  %6483 = vmatpush2.msra.mxu0 0.0
  %6484 = vmatprep.subr.mxu0 0.0
  %6485 = vmatpush2.msra.mxu0 0.0
  %6486 = vmatprep.subr.mxu0 0.0
  %6487 = vmatpush2.msra.mxu0 0.0
  %6488 = vmatprep.subr.mxu0 0.0
  %6489 = vmatpush2.msra.mxu0 0.0
  %6490 = vmatprep.subr.mxu0 0.0
  %6491 = vmatpush2.msra.mxu0 0.0
  %6492 = vmatprep.subr.mxu0 0.0
  %6493 = vmatpush2.msra.mxu0 0.0
  %6494 = vmatprep.subr.mxu0 0.0
  %6495 = vmatpush2.msra.mxu0 0.0
  %6496 = vmatprep.subr.mxu0 0.0
  %6497 = vmatpush2.msra.mxu0 0.0
  %6498 = vmatprep.mubr.f32.mxu0 0.0
  %6499 = vmatmul.mubr.f32.gmra.mxu0 %v6361
  %v6500 = vpop.f32.mrf.mxu0
  %v6501 = vadd.f32 0.0, %v6500
  %v6502 = vpop.f32.mrf.mxu0
  %v6503 = vadd.f32 0.0, %v6502
  %6504 = vdwg.mxu0
  %v6505 = vsub.f32 %v5749, %v6285
  %v6506 = vsub.f32 %v5751, %v6287
  %v6507 = vsub.f32 %v5913, %v6356
  %v6508 = vsub.f32 %v5915, %v6358
  %v6509 = vmul.f32 %v6505, %v6430
  %v6510 = vmul.f32 %v6506, %v6432
  %v6511 = vmul.f32 %v6507, %v6501
  %v6512 = vmul.f32 %v6508, %v6503
  %v6513 = vld [vmem:[%s17] sm:$0xf]
  %v6515 = vlaneseq
  %v6516 = vshrl.u32 %v6515, 7
  %v6517 = vsub.s32 0, %v6516
  %v6518 = vrot.slane %v6513, %v6517
  %v6519 = vlaneseq
  %v6520 = vshrl.u32 %v6519, 7
  %v6521 = vsub.s32 1, %v6520
  %v6522 = vrot.slane %v6513, %v6521
  %v6523 = vlaneseq
  %v6524 = vshrl.u32 %v6523, 7
  %v6525 = vsub.s32 2, %v6524
  %v6526 = vrot.slane %v6513, %v6525
  %v6527 = vlaneseq
  %v6528 = vshrl.u32 %v6527, 7
  %v6529 = vsub.s32 3, %v6528
  %v6530 = vrot.slane %v6513, %v6529
  %v6535 = vmul.f32 %v6509, %v6518
  %v6536 = vmul.f32 %v6510, %v6522
  %v6537 = vmul.f32 %v6511, %v6526
  %v6538 = vmul.f32 %v6512, %v6530
  %v6539 = vld [vmem:[%s18] sm:$0xf]
  %v6541 = vlaneseq
  %v6542 = vshrl.u32 %v6541, 7
  %v6543 = vsub.s32 0, %v6542
  %v6544 = vrot.slane %v6539, %v6543
  %v6545 = vlaneseq
  %v6546 = vshrl.u32 %v6545, 7
  %v6547 = vsub.s32 1, %v6546
  %v6548 = vrot.slane %v6539, %v6547
  %v6549 = vlaneseq
  %v6550 = vshrl.u32 %v6549, 7
  %v6551 = vsub.s32 2, %v6550
  %v6552 = vrot.slane %v6539, %v6551
  %v6553 = vlaneseq
  %v6554 = vshrl.u32 %v6553, 7
  %v6555 = vsub.s32 3, %v6554
  %v6556 = vrot.slane %v6539, %v6555
  %v6561 = vadd.f32 %v6535, %v6544
  %v6562 = vadd.f32 %v6536, %v6548
  %v6563 = vadd.f32 %v6537, %v6552
  %v6564 = vadd.f32 %v6538, %v6556
  %vm6565 = vcmp.gt.f32.partialorder %v6561, 0.0
  %vm6566 = vcmp.gt.f32.partialorder %v6562, 0.0
  %vm6567 = vcmp.gt.f32.partialorder %v6563, 0.0
  %vm6568 = vcmp.gt.f32.partialorder %v6564, 0.0
  %v6569 = vmin.f32 %v6561, 0.0
  %v6570 = vmin.f32 %v6562, 0.0
  %v6571 = vmin.f32 %v6563, 0.0
  %v6572 = vmin.f32 %v6564, 0.0
  %v6573 = vmul.f32 %v6569, 1.442695
  %v6574 = vpow.pop %v6573
  %v6575 = vmul.f32 %v6570, 1.442695
  %v6576 = vpow.pop %v6575
  %v6577 = vmul.f32 %v6571, 1.442695
  %v6578 = vpow.pop %v6577
  %v6579 = vmul.f32 %v6572, 1.442695
  %v6580 = vpow.pop %v6579
  %v6581 = vsub.f32 %v6574, 1.0
  %v6582 = vsub.f32 %v6576, 1.0
  %v6583 = vsub.f32 %v6578, 1.0
  %v6584 = vsub.f32 %v6580, 1.0
  %v6585 = vsel %vm6565, %v6561, %v6581
  %v6586 = vsel %vm6566, %v6562, %v6582
  %v6587 = vsel %vm6567, %v6563, %v6583
  %v6588 = vsel %vm6568, %v6564, %v6584
  %v6589 = vpack.c.bf16 %v6585, %v6585
  %v6590 = vpack.c.bf16 %v6586, %v6586
  %v6591 = vpack.c.bf16 %v6587, %v6587
  %v6592 = vpack.c.bf16 %v6588, %v6588
  %v6593 = vld [vmem:[%s7] sm:$0xff]
  %v6594 = vld [vmem:[%s7 + $0x8] sm:$0xf]
  %v6595 = vld [vmem:[%s7 + $0xc] sm:$0xff]
  %v6596 = vld [vmem:[%s7 + $0x14] sm:$0xf]
  %v6597 = vld [vmem:[%s7 + $0x18] sm:$0xff]
  %v6598 = vld [vmem:[%s7 + $0x20] sm:$0xf]
  %v6599 = vld [vmem:[%s7 + $0x24] sm:$0xff]
  %v6600 = vld [vmem:[%s7 + $0x2c] sm:$0xf]
  %v6601 = vld [vmem:[%s7 + $0x30] sm:$0xff]
  %v6602 = vld [vmem:[%s7 + $0x38] sm:$0xf]
  %v6603 = vld [vmem:[%s7 + $0x3c] sm:$0xff]
  %v6604 = vld [vmem:[%s7 + $0x44] sm:$0xf]
  %v6605 = vld [vmem:[%s7 + $0x48] sm:$0xff]
  %v6606 = vld [vmem:[%s7 + $0x50] sm:$0xf]
  %v6607 = vld [vmem:[%s7 + $0x54] sm:$0xff]
  %v6608 = vld [vmem:[%s7 + $0x5c] sm:$0xf]
  %v6609 = vld [vmem:[%s7 + $0x60] sm:$0xff]
  %v6610 = vld [vmem:[%s7 + $0x68] sm:$0xf]
  %v6611 = vld [vmem:[%s7 + $0x6c] sm:$0xff]
  %v6612 = vld [vmem:[%s7 + $0x74] sm:$0xf]
  %v6613 = vld [vmem:[%s7 + $0x78] sm:$0xff]
  %v6614 = vld [vmem:[%s7 + $0x80] sm:$0xf]
  %v6615 = vld [vmem:[%s7 + $0x84] sm:$0xff]
  %v6616 = vld [vmem:[%s7 + $0x8c] sm:$0xf]
  %v6617 = vld [vmem:[%s7 + $0x90] sm:$0xff]
  %v6618 = vld [vmem:[%s7 + $0x98] sm:$0xf]
  %v6619 = vld [vmem:[%s7 + $0x9c] sm:$0xff]
  %v6620 = vld [vmem:[%s7 + $0xa4] sm:$0xf]
  %v6621 = vld [vmem:[%s7 + $0xa8] sm:$0xff]
  %v6622 = vld [vmem:[%s7 + $0xb0] sm:$0xf]
  %v6623 = vld [vmem:[%s7 + $0xb4] sm:$0xff]
  %v6624 = vld [vmem:[%s7 + $0xbc] sm:$0xf]
  %v6625 = vld [vmem:[%s7 + $0xc0] sm:$0xff]
  %v6626 = vld [vmem:[%s7 + $0xc8] sm:$0xf]
  %v6627 = vld [vmem:[%s7 + $0xcc] sm:$0xff]
  %v6628 = vld [vmem:[%s7 + $0xd4] sm:$0xf]
  %v6629 = vld [vmem:[%s7 + $0xd8] sm:$0xff]
  %v6630 = vld [vmem:[%s7 + $0xe0] sm:$0xf]
  %v6631 = vld [vmem:[%s7 + $0xe4] sm:$0xff]
  %v6632 = vld [vmem:[%s7 + $0xec] sm:$0xf]
  %v6633 = vld [vmem:[%s7 + $0xf0] sm:$0xff]
  %v6634 = vld [vmem:[%s7 + $0xf8] sm:$0xf]
  %v6635 = vld [vmem:[%s7 + $0xfc] sm:$0xff]
  %v6636 = vld [vmem:[%s7 + $0x104] sm:$0xf]
  %v6637 = vld [vmem:[%s7 + $0x108] sm:$0xff]
  %v6638 = vld [vmem:[%s7 + $0x110] sm:$0xf]
  %v6639 = vld [vmem:[%s7 + $0x114] sm:$0xff]
  %v6640 = vld [vmem:[%s7 + $0x11c] sm:$0xf]
  %v6641 = vld [vmem:[%s7 + $0x120] sm:$0xff]
  %v6642 = vld [vmem:[%s7 + $0x128] sm:$0xf]
  %v6643 = vld [vmem:[%s7 + $0x12c] sm:$0xff]
  %v6644 = vld [vmem:[%s7 + $0x134] sm:$0xf]
  %v6645 = vld [vmem:[%s7 + $0x138] sm:$0xff]
  %v6646 = vld [vmem:[%s7 + $0x140] sm:$0xf]
  %v6647 = vld [vmem:[%s7 + $0x144] sm:$0xff]
  %v6648 = vld [vmem:[%s7 + $0x14c] sm:$0xf]
  %v6649 = vld [vmem:[%s7 + $0x150] sm:$0xff]
  %v6650 = vld [vmem:[%s7 + $0x158] sm:$0xf]
  %v6651 = vld [vmem:[%s7 + $0x15c] sm:$0xff]
  %v6652 = vld [vmem:[%s7 + $0x164] sm:$0xf]
  %v6653 = vld [vmem:[%s7 + $0x168] sm:$0xff]
  %v6654 = vld [vmem:[%s7 + $0x170] sm:$0xf]
  %v6655 = vld [vmem:[%s7 + $0x174] sm:$0xff]
  %v6656 = vld [vmem:[%s7 + $0x17c] sm:$0xf]
  %v6657 = vld [vmem:[%s7 + $0x180] sm:$0xff]
  %v6658 = vld [vmem:[%s7 + $0x188] sm:$0xf]
  %v6659 = vld [vmem:[%s7 + $0x18c] sm:$0xff]
  %v6660 = vld [vmem:[%s7 + $0x194] sm:$0xf]
  %v6661 = vld [vmem:[%s7 + $0x198] sm:$0xff]
  %v6662 = vld [vmem:[%s7 + $0x1a0] sm:$0xf]
  %v6663 = vld [vmem:[%s7 + $0x1a4] sm:$0xff]
  %v6664 = vld [vmem:[%s7 + $0x1ac] sm:$0xf]
  %v6665 = vld [vmem:[%s7 + $0x1b0] sm:$0xff]
  %v6666 = vld [vmem:[%s7 + $0x1b8] sm:$0xf]
  %v6667 = vld [vmem:[%s7 + $0x1bc] sm:$0xff]
  %v6668 = vld [vmem:[%s7 + $0x1c4] sm:$0xf]
  %v6669 = vld [vmem:[%s7 + $0x1c8] sm:$0xff]
  %v6670 = vld [vmem:[%s7 + $0x1d0] sm:$0xf]
  %v6671 = vld [vmem:[%s7 + $0x1d4] sm:$0xff]
  %v6672 = vld [vmem:[%s7 + $0x1dc] sm:$0xf]
  %v6673 = vld [vmem:[%s7 + $0x1e0] sm:$0xff]
  %v6674 = vld [vmem:[%s7 + $0x1e8] sm:$0xf]
  %v6675 = vld [vmem:[%s7 + $0x1ec] sm:$0xff]
  %v6676 = vld [vmem:[%s7 + $0x1f4] sm:$0xf]
  %v6677 = vld [vmem:[%s7 + $0x1f8] sm:$0xff]
  %v6678 = vld [vmem:[%s7 + $0x200] sm:$0xf]
  %v6679 = vld [vmem:[%s7 + $0x204] sm:$0xff]
  %v6680 = vld [vmem:[%s7 + $0x20c] sm:$0xf]
  %v6681 = vld [vmem:[%s7 + $0x210] sm:$0xff]
  %v6682 = vld [vmem:[%s7 + $0x218] sm:$0xf]
  %v6683 = vld [vmem:[%s7 + $0x21c] sm:$0xff]
  %v6684 = vld [vmem:[%s7 + $0x224] sm:$0xf]
  %v6685 = vld [vmem:[%s7 + $0x228] sm:$0xff]
  %v6686 = vld [vmem:[%s7 + $0x230] sm:$0xf]
  %v6687 = vld [vmem:[%s7 + $0x234] sm:$0xff]
  %v6688 = vld [vmem:[%s7 + $0x23c] sm:$0xf]
  %v6689 = vld [vmem:[%s7 + $0x240] sm:$0xff]
  %v6690 = vld [vmem:[%s7 + $0x248] sm:$0xf]
  %v6691 = vld [vmem:[%s7 + $0x24c] sm:$0xff]
  %v6692 = vld [vmem:[%s7 + $0x254] sm:$0xf]
  %v6693 = vld [vmem:[%s8] sm:$0x7]
  %v6695 = vlaneseq
  %v6696 = vshrl.u32 %v6695, 7
  %v6697 = vsub.s32 0, %v6696
  %v6698 = vrot.slane %v6693, %v6697
  %v6699 = vlaneseq
  %v6700 = vshrl.u32 %v6699, 7
  %v6701 = vsub.s32 1, %v6700
  %v6702 = vrot.slane %v6693, %v6701
  %v6703 = vlaneseq
  %v6704 = vshrl.u32 %v6703, 7
  %v6705 = vsub.s32 2, %v6704
  %v6706 = vrot.slane %v6693, %v6705
  %v6810 = vunpack.c.l.b16 %v6593
  %v6811 = vunpack.c.h.b16 %v6593
  %v6812 = vunpack.c.l.b16 %v6594
  %v6813 = vunpack.c.l.b16 %v6595
  %v6814 = vunpack.c.h.b16 %v6595
  %v6815 = vunpack.c.l.b16 %v6596
  %v6816 = vunpack.c.l.b16 %v6597
  %v6817 = vunpack.c.h.b16 %v6597
  %v6818 = vunpack.c.l.b16 %v6598
  %v6819 = vunpack.c.l.b16 %v6599
  %v6820 = vunpack.c.h.b16 %v6599
  %v6821 = vunpack.c.l.b16 %v6600
  %v6822 = vunpack.c.l.b16 %v6601
  %v6823 = vunpack.c.h.b16 %v6601
  %v6824 = vunpack.c.l.b16 %v6602
  %v6825 = vunpack.c.l.b16 %v6603
  %v6826 = vunpack.c.h.b16 %v6603
  %v6827 = vunpack.c.l.b16 %v6604
  %v6828 = vunpack.c.l.b16 %v6605
  %v6829 = vunpack.c.h.b16 %v6605
  %v6830 = vunpack.c.l.b16 %v6606
  %v6831 = vunpack.c.l.b16 %v6607
  %v6832 = vunpack.c.h.b16 %v6607
  %v6833 = vunpack.c.l.b16 %v6608
  %v6834 = vunpack.c.l.b16 %v6609
  %v6835 = vunpack.c.h.b16 %v6609
  %v6836 = vunpack.c.l.b16 %v6610
  %v6837 = vunpack.c.l.b16 %v6611
  %v6838 = vunpack.c.h.b16 %v6611
  %v6839 = vunpack.c.l.b16 %v6612
  %v6840 = vunpack.c.l.b16 %v6613
  %v6841 = vunpack.c.h.b16 %v6613
  %v6842 = vunpack.c.l.b16 %v6614
  %v6843 = vunpack.c.l.b16 %v6615
  %v6844 = vunpack.c.h.b16 %v6615
  %v6845 = vunpack.c.l.b16 %v6616
  %v6846 = vunpack.c.l.b16 %v6617
  %v6847 = vunpack.c.h.b16 %v6617
  %v6848 = vunpack.c.l.b16 %v6618
  %v6849 = vunpack.c.l.b16 %v6619
  %v6850 = vunpack.c.h.b16 %v6619
  %v6851 = vunpack.c.l.b16 %v6620
  %v6852 = vunpack.c.l.b16 %v6621
  %v6853 = vunpack.c.h.b16 %v6621
  %v6854 = vunpack.c.l.b16 %v6622
  %v6855 = vunpack.c.l.b16 %v6623
  %v6856 = vunpack.c.h.b16 %v6623
  %v6857 = vunpack.c.l.b16 %v6624
  %v6858 = vunpack.c.l.b16 %v6625
  %v6859 = vunpack.c.h.b16 %v6625
  %v6860 = vunpack.c.l.b16 %v6626
  %v6861 = vunpack.c.l.b16 %v6627
  %v6862 = vunpack.c.h.b16 %v6627
  %v6863 = vunpack.c.l.b16 %v6628
  %v6864 = vunpack.c.l.b16 %v6629
  %v6865 = vunpack.c.h.b16 %v6629
  %v6866 = vunpack.c.l.b16 %v6630
  %v6867 = vunpack.c.l.b16 %v6631
  %v6868 = vunpack.c.h.b16 %v6631
  %v6869 = vunpack.c.l.b16 %v6632
  %v6870 = vunpack.c.l.b16 %v6633
  %v6871 = vunpack.c.h.b16 %v6633
  %v6872 = vunpack.c.l.b16 %v6634
  %v6873 = vunpack.c.l.b16 %v6635
  %v6874 = vunpack.c.h.b16 %v6635
  %v6875 = vunpack.c.l.b16 %v6636
  %v6876 = vunpack.c.l.b16 %v6637
  %v6877 = vunpack.c.h.b16 %v6637
  %v6878 = vunpack.c.l.b16 %v6638
  %v6879 = vunpack.c.l.b16 %v6639
  %v6880 = vunpack.c.h.b16 %v6639
  %v6881 = vunpack.c.l.b16 %v6640
  %v6882 = vunpack.c.l.b16 %v6641
  %v6883 = vunpack.c.h.b16 %v6641
  %v6884 = vunpack.c.l.b16 %v6642
  %v6885 = vunpack.c.l.b16 %v6643
  %v6886 = vunpack.c.h.b16 %v6643
  %v6887 = vunpack.c.l.b16 %v6644
  %v6888 = vunpack.c.l.b16 %v6645
  %v6889 = vunpack.c.h.b16 %v6645
  %v6890 = vunpack.c.l.b16 %v6646
  %v6891 = vunpack.c.l.b16 %v6647
  %v6892 = vunpack.c.h.b16 %v6647
  %v6893 = vunpack.c.l.b16 %v6648
  %v6894 = vunpack.c.l.b16 %v6649
  %v6895 = vunpack.c.h.b16 %v6649
  %v6896 = vunpack.c.l.b16 %v6650
  %v6897 = vunpack.c.l.b16 %v6651
  %v6898 = vunpack.c.h.b16 %v6651
  %v6899 = vunpack.c.l.b16 %v6652
  %v6900 = vunpack.c.l.b16 %v6653
  %v6901 = vunpack.c.h.b16 %v6653
  %v6902 = vunpack.c.l.b16 %v6654
  %v6903 = vunpack.c.l.b16 %v6655
  %v6904 = vunpack.c.h.b16 %v6655
  %v6905 = vunpack.c.l.b16 %v6656
  %v6906 = vunpack.c.l.b16 %v6657
  %v6907 = vunpack.c.h.b16 %v6657
  %v6908 = vunpack.c.l.b16 %v6658
  %v6909 = vunpack.c.l.b16 %v6659
  %v6910 = vunpack.c.h.b16 %v6659
  %v6911 = vunpack.c.l.b16 %v6660
  %v6912 = vunpack.c.l.b16 %v6661
  %v6913 = vunpack.c.h.b16 %v6661
  %v6914 = vunpack.c.l.b16 %v6662
  %v6915 = vunpack.c.l.b16 %v6663
  %v6916 = vunpack.c.h.b16 %v6663
  %v6917 = vunpack.c.l.b16 %v6664
  %v6918 = vunpack.c.l.b16 %v6665
  %v6919 = vunpack.c.h.b16 %v6665
  %v6920 = vunpack.c.l.b16 %v6666
  %v6921 = vunpack.c.l.b16 %v6667
  %v6922 = vunpack.c.h.b16 %v6667
  %v6923 = vunpack.c.l.b16 %v6668
  %v6924 = vunpack.c.l.b16 %v6669
  %v6925 = vunpack.c.h.b16 %v6669
  %v6926 = vunpack.c.l.b16 %v6670
  %v6927 = vunpack.c.l.b16 %v6671
  %v6928 = vunpack.c.h.b16 %v6671
  %v6929 = vunpack.c.l.b16 %v6672
  %v6930 = vunpack.c.l.b16 %v6673
  %v6931 = vunpack.c.h.b16 %v6673
  %v6932 = vunpack.c.l.b16 %v6674
  %v6933 = vunpack.c.l.b16 %v6675
  %v6934 = vunpack.c.h.b16 %v6675
  %v6935 = vunpack.c.l.b16 %v6676
  %v6936 = vunpack.c.l.b16 %v6677
  %v6937 = vunpack.c.h.b16 %v6677
  %v6938 = vunpack.c.l.b16 %v6678
  %v6939 = vunpack.c.l.b16 %v6679
  %v6940 = vunpack.c.h.b16 %v6679
  %v6941 = vunpack.c.l.b16 %v6680
  %v6942 = vunpack.c.l.b16 %v6681
  %v6943 = vunpack.c.h.b16 %v6681
  %v6944 = vunpack.c.l.b16 %v6682
  %v6945 = vunpack.c.l.b16 %v6683
  %v6946 = vunpack.c.h.b16 %v6683
  %v6947 = vunpack.c.l.b16 %v6684
  %v6948 = vunpack.c.l.b16 %v6685
  %v6949 = vunpack.c.h.b16 %v6685
  %v6950 = vunpack.c.l.b16 %v6686
  %v6951 = vunpack.c.l.b16 %v6687
  %v6952 = vunpack.c.h.b16 %v6687
  %v6953 = vunpack.c.l.b16 %v6688
  %v6954 = vunpack.c.l.b16 %v6689
  %v6955 = vunpack.c.h.b16 %v6689
  %v6956 = vunpack.c.l.b16 %v6690
  %v6957 = vunpack.c.l.b16 %v6691
  %v6958 = vunpack.c.h.b16 %v6691
  %v6959 = vunpack.c.l.b16 %v6692
  %v6960 = vpack.c.b16 %v6813, %v6810
  %v6961 = vpack.c.b16 %v6814, %v6811
  %v6962 = vpack.c.b16 %v6815, %v6812
  %v6963 = vpack.c.b16 %v6819, %v6816
  %v6964 = vpack.c.b16 %v6820, %v6817
  %v6965 = vpack.c.b16 %v6821, %v6818
  %v6966 = vpack.c.b16 %v6825, %v6822
  %v6967 = vpack.c.b16 %v6826, %v6823
  %v6968 = vpack.c.b16 %v6827, %v6824
  %v6969 = vpack.c.b16 %v6831, %v6828
  %v6970 = vpack.c.b16 %v6832, %v6829
  %v6971 = vpack.c.b16 %v6833, %v6830
  %v6972 = vpack.c.b16 %v6837, %v6834
  %v6973 = vpack.c.b16 %v6838, %v6835
  %v6974 = vpack.c.b16 %v6839, %v6836
  %v6975 = vpack.c.b16 %v6843, %v6840
  %v6976 = vpack.c.b16 %v6844, %v6841
  %v6977 = vpack.c.b16 %v6845, %v6842
  %v6978 = vpack.c.b16 %v6849, %v6846
  %v6979 = vpack.c.b16 %v6850, %v6847
  %v6980 = vpack.c.b16 %v6851, %v6848
  %v6981 = vpack.c.b16 %v6855, %v6852
  %v6982 = vpack.c.b16 %v6856, %v6853
  %v6983 = vpack.c.b16 %v6857, %v6854
  %v6984 = vpack.c.b16 %v6861, %v6858
  %v6985 = vpack.c.b16 %v6862, %v6859
  %v6986 = vpack.c.b16 %v6863, %v6860
  %v6987 = vpack.c.b16 %v6867, %v6864
  %v6988 = vpack.c.b16 %v6868, %v6865
  %v6989 = vpack.c.b16 %v6869, %v6866
  %v6990 = vpack.c.b16 %v6873, %v6870
  %v6991 = vpack.c.b16 %v6874, %v6871
  %v6992 = vpack.c.b16 %v6875, %v6872
  %v6993 = vpack.c.b16 %v6879, %v6876
  %v6994 = vpack.c.b16 %v6880, %v6877
  %v6995 = vpack.c.b16 %v6881, %v6878
  %v6996 = vpack.c.b16 %v6885, %v6882
  %v6997 = vpack.c.b16 %v6886, %v6883
  %v6998 = vpack.c.b16 %v6887, %v6884
  %v6999 = vpack.c.b16 %v6891, %v6888
  %v7000 = vpack.c.b16 %v6892, %v6889
  %v7001 = vpack.c.b16 %v6893, %v6890
  %v7002 = vpack.c.b16 %v6897, %v6894
  %v7003 = vpack.c.b16 %v6898, %v6895
  %v7004 = vpack.c.b16 %v6899, %v6896
  %v7005 = vpack.c.b16 %v6903, %v6900
  %v7006 = vpack.c.b16 %v6904, %v6901
  %v7007 = vpack.c.b16 %v6905, %v6902
  %v7008 = vpack.c.b16 %v6909, %v6906
  %v7009 = vpack.c.b16 %v6910, %v6907
  %v7010 = vpack.c.b16 %v6911, %v6908
  %v7011 = vpack.c.b16 %v6915, %v6912
  %v7012 = vpack.c.b16 %v6916, %v6913
  %v7013 = vpack.c.b16 %v6917, %v6914
  %v7014 = vpack.c.b16 %v6921, %v6918
  %v7015 = vpack.c.b16 %v6922, %v6919
  %v7016 = vpack.c.b16 %v6923, %v6920
  %v7017 = vpack.c.b16 %v6927, %v6924
  %v7018 = vpack.c.b16 %v6928, %v6925
  %v7019 = vpack.c.b16 %v6929, %v6926
  %v7020 = vpack.c.b16 %v6933, %v6930
  %v7021 = vpack.c.b16 %v6934, %v6931
  %v7022 = vpack.c.b16 %v6935, %v6932
  %v7023 = vpack.c.b16 %v6939, %v6936
  %v7024 = vpack.c.b16 %v6940, %v6937
  %v7025 = vpack.c.b16 %v6941, %v6938
  %v7026 = vpack.c.b16 %v6945, %v6942
  %v7027 = vpack.c.b16 %v6946, %v6943
  %v7028 = vpack.c.b16 %v6947, %v6944
  %v7029 = vpack.c.b16 %v6951, %v6948
  %v7030 = vpack.c.b16 %v6952, %v6949
  %v7031 = vpack.c.b16 %v6953, %v6950
  %v7032 = vpack.c.b16 %v6957, %v6954
  %v7033 = vpack.c.b16 %v6958, %v6955
  %v7034 = vpack.c.b16 %v6959, %v6956
  %v7111 = vsel %vm810, %v6592, 0
  %7113 = vmatprep.subr.bf16.mxu0 %v6982
  %7114 = vmatpush1.bf16.msra.mxu0 %v6981
  %7115 = vmatprep.subr.bf16.mxu0 %v6979
  %7116 = vmatpush1.bf16.msra.mxu0 %v6978
  %7117 = vmatprep.subr.bf16.mxu0 %v6976
  %7118 = vmatpush1.bf16.msra.mxu0 %v6975
  %7119 = vmatprep.subr.bf16.mxu0 %v6973
  %7120 = vmatpush1.bf16.msra.mxu0 %v6972
  %7121 = vmatprep.subr.bf16.mxu0 %v6970
  %7122 = vmatpush1.bf16.msra.mxu0 %v6969
  %7123 = vmatprep.subr.bf16.mxu0 %v6967
  %7124 = vmatpush1.bf16.msra.mxu0 %v6966
  %7125 = vmatprep.subr.bf16.mxu0 %v6964
  %7126 = vmatpush1.bf16.msra.mxu0 %v6963
  %7127 = vmatprep.subr.bf16.mxu0 %v6961
  %7128 = vmatpush1.bf16.msra.mxu0 %v6960
  %7129 = vmatprep.subr.bf16.mxu0 %v7006
  %7130 = vmatpush2.bf16.msra.mxu0 %v7005
  %7131 = vmatprep.subr.bf16.mxu0 %v7003
  %7132 = vmatpush2.bf16.msra.mxu0 %v7002
  %7133 = vmatprep.subr.bf16.mxu0 %v7000
  %7134 = vmatpush2.bf16.msra.mxu0 %v6999
  %7135 = vmatprep.subr.bf16.mxu0 %v6997
  %7136 = vmatpush2.bf16.msra.mxu0 %v6996
  %7137 = vmatprep.subr.bf16.mxu0 %v6994
  %7138 = vmatpush2.bf16.msra.mxu0 %v6993
  %7139 = vmatprep.subr.bf16.mxu0 %v6991
  %7140 = vmatpush2.bf16.msra.mxu0 %v6990
  %7141 = vmatprep.subr.bf16.mxu0 %v6988
  %7142 = vmatpush2.bf16.msra.mxu0 %v6987
  %7143 = vmatprep.subr.bf16.mxu0 %v6985
  %7144 = vmatpush2.bf16.msra.mxu0 %v6984
  %7145 = vmatprep.mubr.bf16.mxu0 %v6590
  %7146 = vmatmul.mubr.bf16.gmra.mxu0 %v6589
  %v7147 = vpop.f32.mrf.mxu0
  %v7148 = vadd.f32 %v6698, %v7147
  %v7149 = vpop.f32.mrf.mxu0
  %v7150 = vadd.f32 %v6702, %v7149
  %v7151 = vpop.f32.mrf.mxu0
  %v7152 = vpop.f32.mrf.mxu0
  %7153 = vdwg.mxu0
  %7154 = vmatprep.subr.bf16.mxu0 %v7030
  %7155 = vmatpush1.bf16.msra.mxu0 %v7029
  %7156 = vmatprep.subr.bf16.mxu0 %v7027
  %7157 = vmatpush1.bf16.msra.mxu0 %v7026
  %7158 = vmatprep.subr.bf16.mxu0 %v7024
  %7159 = vmatpush1.bf16.msra.mxu0 %v7023
  %7160 = vmatprep.subr.bf16.mxu0 %v7021
  %7161 = vmatpush1.bf16.msra.mxu0 %v7020
  %7162 = vmatprep.subr.bf16.mxu0 %v7018
  %7163 = vmatpush1.bf16.msra.mxu0 %v7017
  %7164 = vmatprep.subr.bf16.mxu0 %v7015
  %7165 = vmatpush1.bf16.msra.mxu0 %v7014
  %7166 = vmatprep.subr.bf16.mxu0 %v7012
  %7167 = vmatpush1.bf16.msra.mxu0 %v7011
  %7168 = vmatprep.subr.bf16.mxu0 %v7009
  %7169 = vmatpush1.bf16.msra.mxu0 %v7008
  %7170 = vmatprep.subr.bf16.mxu0 0
  %7171 = vmatpush2.bf16.msra.mxu0 0
  %7172 = vmatprep.subr.bf16.mxu0 0
  %7173 = vmatpush2.bf16.msra.mxu0 0
  %7174 = vmatprep.subr.bf16.mxu0 0
  %7175 = vmatpush2.bf16.msra.mxu0 0
  %7176 = vmatprep.subr.bf16.mxu0 0
  %7177 = vmatpush2.bf16.msra.mxu0 0
  %7178 = vmatprep.subr.bf16.mxu0 0
  %7179 = vmatpush2.bf16.msra.mxu0 0
  %7180 = vmatprep.subr.bf16.mxu0 0
  %7181 = vmatpush2.bf16.msra.mxu0 0
  %7182 = vmatprep.subr.bf16.mxu0 0
  %7183 = vmatpush2.bf16.msra.mxu0 0
  %7184 = vmatprep.subr.bf16.mxu0 %v7033
  %7185 = vmatpush2.bf16.msra.mxu0 %v7032
  %7186 = vmatprep.mubr.bf16.mxu0 %v7111
  %7187 = vmatmul.mubr.bf16.gmra.mxu0 %v6591
  %v7188 = vpop.f32.mrf.mxu0
  %v7189 = vadd.f32 %v7148, %v7188
  %v7190 = vpop.f32.mrf.mxu0
  %v7191 = vadd.f32 %v7150, %v7190
  %v7192 = vpop.f32.mrf.mxu0
  %v7193 = vpop.f32.mrf.mxu0
  %7194 = vdwg.mxu0
  %7195 = vmatprep.subr.bf16.mxu0 0
  %7196 = vmatpush1.bf16.msra.mxu0 %v6983
  %7197 = vmatprep.subr.bf16.mxu0 0
  %7198 = vmatpush1.bf16.msra.mxu0 %v6980
  %7199 = vmatprep.subr.bf16.mxu0 0
  %7200 = vmatpush1.bf16.msra.mxu0 %v6977
  %7201 = vmatprep.subr.bf16.mxu0 0
  %7202 = vmatpush1.bf16.msra.mxu0 %v6974
  %7203 = vmatprep.subr.bf16.mxu0 0
  %7204 = vmatpush1.bf16.msra.mxu0 %v6971
  %7205 = vmatprep.subr.bf16.mxu0 0
  %7206 = vmatpush1.bf16.msra.mxu0 %v6968
  %7207 = vmatprep.subr.bf16.mxu0 0
  %7208 = vmatpush1.bf16.msra.mxu0 %v6965
  %7209 = vmatprep.subr.bf16.mxu0 0
  %7210 = vmatpush1.bf16.msra.mxu0 %v6962
  %7211 = vmatprep.subr.bf16.mxu0 0
  %7212 = vmatpush2.bf16.msra.mxu0 %v7007
  %7213 = vmatprep.subr.bf16.mxu0 0
  %7214 = vmatpush2.bf16.msra.mxu0 %v7004
  %7215 = vmatprep.subr.bf16.mxu0 0
  %7216 = vmatpush2.bf16.msra.mxu0 %v7001
  %7217 = vmatprep.subr.bf16.mxu0 0
  %7218 = vmatpush2.bf16.msra.mxu0 %v6998
  %7219 = vmatprep.subr.bf16.mxu0 0
  %7220 = vmatpush2.bf16.msra.mxu0 %v6995
  %7221 = vmatprep.subr.bf16.mxu0 0
  %7222 = vmatpush2.bf16.msra.mxu0 %v6992
  %7223 = vmatprep.subr.bf16.mxu0 0
  %7224 = vmatpush2.bf16.msra.mxu0 %v6989
  %7225 = vmatprep.subr.bf16.mxu0 0
  %7226 = vmatpush2.bf16.msra.mxu0 %v6986
  %7227 = vmatprep.mubr.bf16.mxu0 %v6590
  %7228 = vmatmul.mubr.bf16.gmra.mxu0 %v6589
  %v7229 = vpop.f32.mrf.mxu0
  %v7230 = vadd.f32 %v6706, %v7229
  %v7231 = vpop.f32.mrf.mxu0
  %v7232 = vpop.f32.mrf.mxu0
  %v7233 = vpop.f32.mrf.mxu0
  %7234 = vdwg.mxu0
  %7235 = vmatprep.subr.bf16.mxu0 0
  %7236 = vmatpush1.bf16.msra.mxu0 %v7031
  %7237 = vmatprep.subr.bf16.mxu0 0
  %7238 = vmatpush1.bf16.msra.mxu0 %v7028
  %7239 = vmatprep.subr.bf16.mxu0 0
  %7240 = vmatpush1.bf16.msra.mxu0 %v7025
  %7241 = vmatprep.subr.bf16.mxu0 0
  %7242 = vmatpush1.bf16.msra.mxu0 %v7022
  %7243 = vmatprep.subr.bf16.mxu0 0
  %7244 = vmatpush1.bf16.msra.mxu0 %v7019
  %7245 = vmatprep.subr.bf16.mxu0 0
  %7246 = vmatpush1.bf16.msra.mxu0 %v7016
  %7247 = vmatprep.subr.bf16.mxu0 0
  %7248 = vmatpush1.bf16.msra.mxu0 %v7013
  %7249 = vmatprep.subr.bf16.mxu0 0
  %7250 = vmatpush1.bf16.msra.mxu0 %v7010
  %7251 = vmatprep.subr.bf16.mxu0 0
  %7252 = vmatpush2.bf16.msra.mxu0 0
  %7253 = vmatprep.subr.bf16.mxu0 0
  %7254 = vmatpush2.bf16.msra.mxu0 0
  %7255 = vmatprep.subr.bf16.mxu0 0
  %7256 = vmatpush2.bf16.msra.mxu0 0
  %7257 = vmatprep.subr.bf16.mxu0 0
  %7258 = vmatpush2.bf16.msra.mxu0 0
  %7259 = vmatprep.subr.bf16.mxu0 0
  %7260 = vmatpush2.bf16.msra.mxu0 0
  %7261 = vmatprep.subr.bf16.mxu0 0
  %7262 = vmatpush2.bf16.msra.mxu0 0
  %7263 = vmatprep.subr.bf16.mxu0 0
  %7264 = vmatpush2.bf16.msra.mxu0 0
  %7265 = vmatprep.subr.bf16.mxu0 0
  %7266 = vmatpush2.bf16.msra.mxu0 %v7034
  %7267 = vmatprep.mubr.bf16.mxu0 %v7111
  %7268 = vmatmul.mubr.bf16.gmra.mxu0 %v6591
  %v7269 = vpop.f32.mrf.mxu0
  %v7270 = vadd.f32 %v7230, %v7269
  %v7271 = vpop.f32.mrf.mxu0
  %v7272 = vpop.f32.mrf.mxu0
  %v7273 = vpop.f32.mrf.mxu0
  %7274 = vdwg.mxu0
  %vm7275 = vcmp.gt.f32.partialorder %v7189, 0.0
  %vm7276 = vcmp.gt.f32.partialorder %v7191, 0.0
  %vm7277 = vcmp.gt.f32.partialorder %v7270, 0.0
  %v7278 = vmin.f32 %v7189, 0.0
  %v7279 = vmin.f32 %v7191, 0.0
  %v7280 = vmin.f32 %v7270, 0.0
  %v7281 = vmul.f32 %v7278, 1.442695
  %v7282 = vpow.pop %v7281
  %v7283 = vmul.f32 %v7279, 1.442695
  %v7284 = vpow.pop %v7283
  %v7285 = vmul.f32 %v7280, 1.442695
  %v7286 = vpow.pop %v7285
  %v7287 = vsub.f32 %v7282, 1.0
  %v7288 = vsub.f32 %v7284, 1.0
  %v7289 = vsub.f32 %v7286, 1.0
  %v7290 = vsel %vm7275, %v7189, %v7287
  %v7291 = vsel %vm7276, %v7191, %v7288
  %v7292 = vsel %vm7277, %v7270, %v7289
  %v7293 = vpack.c.bf16 %v7290, %v7290
  %v7294 = vpack.c.bf16 %v7291, %v7291
  %v7295 = vpack.c.bf16 %v7292, %v7292
  %v7296 = vld [vmem:[%s19] sm:$0xff]
  %v7297 = vld [vmem:[%s19 + $0x8] sm:$0xff]
  %v7298 = vld [vmem:[%s19 + $0x10] sm:$0xff]
  %v7299 = vld [vmem:[%s19 + $0x18] sm:$0xff]
  %v7300 = vld [vmem:[%s19 + $0x20] sm:$0xff]
  %v7301 = vld [vmem:[%s19 + $0x28] sm:$0xff]
  %v7302 = vld [vmem:[%s19 + $0x30] sm:$0xff]
  %v7303 = vld [vmem:[%s19 + $0x38] sm:$0xff]
  %v7304 = vld [vmem:[%s19 + $0x40] sm:$0xff]
  %v7305 = vld [vmem:[%s19 + $0x48] sm:$0xff]
  %v7306 = vld [vmem:[%s19 + $0x50] sm:$0xff]
  %v7307 = vld [vmem:[%s19 + $0x58] sm:$0xff]
  %v7308 = vld [vmem:[%s19 + $0x60] sm:$0xff]
  %v7309 = vld [vmem:[%s19 + $0x68] sm:$0xff]
  %v7310 = vld [vmem:[%s19 + $0x70] sm:$0xff]
  %v7311 = vld [vmem:[%s19 + $0x78] sm:$0xff]
  %v7312 = vld [vmem:[%s19 + $0x80] sm:$0xff]
  %v7313 = vld [vmem:[%s19 + $0x88] sm:$0xff]
  %v7314 = vld [vmem:[%s19 + $0x90] sm:$0xff]
  %v7315 = vld [vmem:[%s19 + $0x98] sm:$0xff]
  %v7316 = vld [vmem:[%s19 + $0xa0] sm:$0xff]
  %v7317 = vld [vmem:[%s19 + $0xa8] sm:$0xff]
  %v7318 = vld [vmem:[%s19 + $0xb0] sm:$0xff]
  %v7319 = vld [vmem:[%s19 + $0xb8] sm:$0xff]
  %v7320 = vld [vmem:[%s19 + $0xc0] sm:$0xff]
  %v7321 = vld [vmem:[%s19 + $0xc8] sm:$0xff]
  %v7322 = vld [vmem:[%s19 + $0xd0] sm:$0xff]
  %v7323 = vld [vmem:[%s19 + $0xd8] sm:$0xff]
  %v7324 = vld [vmem:[%s19 + $0xe0] sm:$0xff]
  %v7325 = vld [vmem:[%s19 + $0xe8] sm:$0xff]
  %v7326 = vld [vmem:[%s19 + $0xf0] sm:$0xff]
  %v7327 = vld [vmem:[%s19 + $0xf8] sm:$0xff]
  %v7328 = vld [vmem:[%s19 + $0x100] sm:$0xff]
  %v7329 = vld [vmem:[%s19 + $0x108] sm:$0xff]
  %v7330 = vld [vmem:[%s19 + $0x110] sm:$0xff]
  %v7331 = vld [vmem:[%s19 + $0x118] sm:$0xff]
  %v7332 = vld [vmem:[%s19 + $0x120] sm:$0xff]
  %v7333 = vld [vmem:[%s19 + $0x128] sm:$0x33]
  %v7334 = vld [vmem:[%s20] sm:$0x3]
  %v7336 = vlaneseq
  %v7337 = vshrl.u32 %v7336, 7
  %v7338 = vsub.s32 0, %v7337
  %v7339 = vrot.slane %v7334, %v7338
  %v7340 = vlaneseq
  %v7341 = vshrl.u32 %v7340, 7
  %v7342 = vsub.s32 1, %v7341
  %v7343 = vrot.slane %v7334, %v7342
  %v7384 = vunpack.c.l.b16 %v7296
  %v7385 = vunpack.c.h.b16 %v7296
  %v7386 = vunpack.c.l.b16 %v7297
  %v7387 = vunpack.c.h.b16 %v7297
  %v7388 = vunpack.c.l.b16 %v7298
  %v7389 = vunpack.c.h.b16 %v7298
  %v7390 = vunpack.c.l.b16 %v7299
  %v7391 = vunpack.c.h.b16 %v7299
  %v7392 = vunpack.c.l.b16 %v7300
  %v7393 = vunpack.c.h.b16 %v7300
  %v7394 = vunpack.c.l.b16 %v7301
  %v7395 = vunpack.c.h.b16 %v7301
  %v7396 = vunpack.c.l.b16 %v7302
  %v7397 = vunpack.c.h.b16 %v7302
  %v7398 = vunpack.c.l.b16 %v7303
  %v7399 = vunpack.c.h.b16 %v7303
  %v7400 = vunpack.c.l.b16 %v7304
  %v7401 = vunpack.c.h.b16 %v7304
  %v7402 = vunpack.c.l.b16 %v7305
  %v7403 = vunpack.c.h.b16 %v7305
  %v7404 = vunpack.c.l.b16 %v7306
  %v7405 = vunpack.c.h.b16 %v7306
  %v7406 = vunpack.c.l.b16 %v7307
  %v7407 = vunpack.c.h.b16 %v7307
  %v7408 = vunpack.c.l.b16 %v7308
  %v7409 = vunpack.c.h.b16 %v7308
  %v7410 = vunpack.c.l.b16 %v7309
  %v7411 = vunpack.c.h.b16 %v7309
  %v7412 = vunpack.c.l.b16 %v7310
  %v7413 = vunpack.c.h.b16 %v7310
  %v7414 = vunpack.c.l.b16 %v7311
  %v7415 = vunpack.c.h.b16 %v7311
  %v7416 = vunpack.c.l.b16 %v7312
  %v7417 = vunpack.c.h.b16 %v7312
  %v7418 = vunpack.c.l.b16 %v7313
  %v7419 = vunpack.c.h.b16 %v7313
  %v7420 = vunpack.c.l.b16 %v7314
  %v7421 = vunpack.c.h.b16 %v7314
  %v7422 = vunpack.c.l.b16 %v7315
  %v7423 = vunpack.c.h.b16 %v7315
  %v7424 = vunpack.c.l.b16 %v7316
  %v7425 = vunpack.c.h.b16 %v7316
  %v7426 = vunpack.c.l.b16 %v7317
  %v7427 = vunpack.c.h.b16 %v7317
  %v7428 = vunpack.c.l.b16 %v7318
  %v7429 = vunpack.c.h.b16 %v7318
  %v7430 = vunpack.c.l.b16 %v7319
  %v7431 = vunpack.c.h.b16 %v7319
  %v7432 = vunpack.c.l.b16 %v7320
  %v7433 = vunpack.c.h.b16 %v7320
  %v7434 = vunpack.c.l.b16 %v7321
  %v7435 = vunpack.c.h.b16 %v7321
  %v7436 = vunpack.c.l.b16 %v7322
  %v7437 = vunpack.c.h.b16 %v7322
  %v7438 = vunpack.c.l.b16 %v7323
  %v7439 = vunpack.c.h.b16 %v7323
  %v7440 = vunpack.c.l.b16 %v7324
  %v7441 = vunpack.c.h.b16 %v7324
  %v7442 = vunpack.c.l.b16 %v7325
  %v7443 = vunpack.c.h.b16 %v7325
  %v7444 = vunpack.c.l.b16 %v7326
  %v7445 = vunpack.c.h.b16 %v7326
  %v7446 = vunpack.c.l.b16 %v7327
  %v7447 = vunpack.c.h.b16 %v7327
  %v7448 = vunpack.c.l.b16 %v7328
  %v7449 = vunpack.c.h.b16 %v7328
  %v7450 = vunpack.c.l.b16 %v7329
  %v7451 = vunpack.c.h.b16 %v7329
  %v7452 = vunpack.c.l.b16 %v7330
  %v7453 = vunpack.c.h.b16 %v7330
  %v7454 = vunpack.c.l.b16 %v7331
  %v7455 = vunpack.c.h.b16 %v7331
  %v7456 = vunpack.c.l.b16 %v7332
  %v7457 = vunpack.c.h.b16 %v7332
  %v7458 = vunpack.c.l.b16 %v7333
  %v7459 = vunpack.c.h.b16 %v7333
  %v7460 = vpack.c.b16 %v7386, %v7384
  %v7461 = vpack.c.b16 %v7387, %v7385
  %v7462 = vpack.c.b16 %v7390, %v7388
  %v7463 = vpack.c.b16 %v7391, %v7389
  %v7464 = vpack.c.b16 %v7394, %v7392
  %v7465 = vpack.c.b16 %v7395, %v7393
  %v7466 = vpack.c.b16 %v7398, %v7396
  %v7467 = vpack.c.b16 %v7399, %v7397
  %v7468 = vpack.c.b16 %v7402, %v7400
  %v7469 = vpack.c.b16 %v7403, %v7401
  %v7470 = vpack.c.b16 %v7406, %v7404
  %v7471 = vpack.c.b16 %v7407, %v7405
  %v7472 = vpack.c.b16 %v7410, %v7408
  %v7473 = vpack.c.b16 %v7411, %v7409
  %v7474 = vpack.c.b16 %v7414, %v7412
  %v7475 = vpack.c.b16 %v7415, %v7413
  %v7476 = vpack.c.b16 %v7418, %v7416
  %v7477 = vpack.c.b16 %v7419, %v7417
  %v7478 = vpack.c.b16 %v7422, %v7420
  %v7479 = vpack.c.b16 %v7423, %v7421
  %v7480 = vpack.c.b16 %v7426, %v7424
  %v7481 = vpack.c.b16 %v7427, %v7425
  %v7482 = vpack.c.b16 %v7430, %v7428
  %v7483 = vpack.c.b16 %v7431, %v7429
  %v7484 = vpack.c.b16 %v7434, %v7432
  %v7485 = vpack.c.b16 %v7435, %v7433
  %v7486 = vpack.c.b16 %v7438, %v7436
  %v7487 = vpack.c.b16 %v7439, %v7437
  %v7488 = vpack.c.b16 %v7442, %v7440
  %v7489 = vpack.c.b16 %v7443, %v7441
  %v7490 = vpack.c.b16 %v7446, %v7444
  %v7491 = vpack.c.b16 %v7447, %v7445
  %v7492 = vpack.c.b16 %v7450, %v7448
  %v7493 = vpack.c.b16 %v7451, %v7449
  %v7494 = vpack.c.b16 %v7454, %v7452
  %v7495 = vpack.c.b16 %v7455, %v7453
  %v7496 = vpack.c.b16 %v7458, %v7456
  %v7497 = vpack.c.b16 %v7459, %v7457
  %v7535 = vsel %vm579, %v7295, 0
  %v7538 = vsel %vm583, %v7496, 0
  %v7541 = vsel %vm583, %v7497, 0
  %7543 = vmatprep.subr.bf16.mxu0 %v7475
  %7544 = vmatpush1.bf16.msra.mxu0 %v7474
  %7545 = vmatprep.subr.bf16.mxu0 %v7473
  %7546 = vmatpush1.bf16.msra.mxu0 %v7472
  %7547 = vmatprep.subr.bf16.mxu0 %v7471
  %7548 = vmatpush1.bf16.msra.mxu0 %v7470
  %7549 = vmatprep.subr.bf16.mxu0 %v7469
  %7550 = vmatpush1.bf16.msra.mxu0 %v7468
  %7551 = vmatprep.subr.bf16.mxu0 %v7467
  %7552 = vmatpush1.bf16.msra.mxu0 %v7466
  %7553 = vmatprep.subr.bf16.mxu0 %v7465
  %7554 = vmatpush1.bf16.msra.mxu0 %v7464
  %7555 = vmatprep.subr.bf16.mxu0 %v7463
  %7556 = vmatpush1.bf16.msra.mxu0 %v7462
  %7557 = vmatprep.subr.bf16.mxu0 %v7461
  %7558 = vmatpush1.bf16.msra.mxu0 %v7460
  %7559 = vmatprep.subr.bf16.mxu0 %v7491
  %7560 = vmatpush2.bf16.msra.mxu0 %v7490
  %7561 = vmatprep.subr.bf16.mxu0 %v7489
  %7562 = vmatpush2.bf16.msra.mxu0 %v7488
  %7563 = vmatprep.subr.bf16.mxu0 %v7487
  %7564 = vmatpush2.bf16.msra.mxu0 %v7486
  %7565 = vmatprep.subr.bf16.mxu0 %v7485
  %7566 = vmatpush2.bf16.msra.mxu0 %v7484
  %7567 = vmatprep.subr.bf16.mxu0 %v7483
  %7568 = vmatpush2.bf16.msra.mxu0 %v7482
  %7569 = vmatprep.subr.bf16.mxu0 %v7481
  %7570 = vmatpush2.bf16.msra.mxu0 %v7480
  %7571 = vmatprep.subr.bf16.mxu0 %v7479
  %7572 = vmatpush2.bf16.msra.mxu0 %v7478
  %7573 = vmatprep.subr.bf16.mxu0 %v7477
  %7574 = vmatpush2.bf16.msra.mxu0 %v7476
  %7575 = vmatprep.mubr.bf16.mxu0 %v7294
  %7576 = vmatmul.mubr.bf16.gmra.mxu0 %v7293
  %v7577 = vpop.f32.mrf.mxu0
  %v7578 = vadd.f32 %v7339, %v7577
  %v7579 = vpop.f32.mrf.mxu0
  %v7580 = vadd.f32 %v7343, %v7579
  %v7581 = vpop.f32.mrf.mxu0
  %v7582 = vpop.f32.mrf.mxu0
  %7583 = vdwg.mxu0
  %7584 = vmatprep.subr.bf16.mxu0 0
  %7585 = vmatpush1.bf16.msra.mxu0 0
  %7586 = vmatprep.subr.bf16.mxu0 0
  %7587 = vmatpush1.bf16.msra.mxu0 0
  %7588 = vmatprep.subr.bf16.mxu0 0
  %7589 = vmatpush1.bf16.msra.mxu0 0
  %7590 = vmatprep.subr.bf16.mxu0 0
  %7591 = vmatpush1.bf16.msra.mxu0 0
  %7592 = vmatprep.subr.bf16.mxu0 0
  %7593 = vmatpush1.bf16.msra.mxu0 0
  %7594 = vmatprep.subr.bf16.mxu0 %v7541
  %7595 = vmatpush1.bf16.msra.mxu0 %v7538
  %7596 = vmatprep.subr.bf16.mxu0 %v7495
  %7597 = vmatpush1.bf16.msra.mxu0 %v7494
  %7598 = vmatprep.subr.bf16.mxu0 %v7493
  %7599 = vmatpush1.bf16.msra.mxu0 %v7492
  %7600 = vmatprep.subr.bf16.mxu0 0
  %7601 = vmatpush2.bf16.msra.mxu0 0
  %7602 = vmatprep.subr.bf16.mxu0 0
  %7603 = vmatpush2.bf16.msra.mxu0 0
  %7604 = vmatprep.subr.bf16.mxu0 0
  %7605 = vmatpush2.bf16.msra.mxu0 0
  %7606 = vmatprep.subr.bf16.mxu0 0
  %7607 = vmatpush2.bf16.msra.mxu0 0
  %7608 = vmatprep.subr.bf16.mxu0 0
  %7609 = vmatpush2.bf16.msra.mxu0 0
  %7610 = vmatprep.subr.bf16.mxu0 0
  %7611 = vmatpush2.bf16.msra.mxu0 0
  %7612 = vmatprep.subr.bf16.mxu0 0
  %7613 = vmatpush2.bf16.msra.mxu0 0
  %7614 = vmatprep.subr.bf16.mxu0 0
  %7615 = vmatpush2.bf16.msra.mxu0 0
  %7616 = vmatprep.mubr.bf16.mxu0 0
  %7617 = vmatmul.mubr.bf16.gmra.mxu0 %v7535
  %v7618 = vpop.f32.mrf.mxu0
  %v7619 = vadd.f32 %v7578, %v7618
  %v7620 = vpop.f32.mrf.mxu0
  %v7621 = vadd.f32 %v7580, %v7620
  %v7622 = vpop.f32.mrf.mxu0
  %v7623 = vpop.f32.mrf.mxu0
  %7624 = vdwg.mxu0
  %vm7625 = vcmask 1041408
  %v7626 = vsel %vm7625, %v7619, 0.0
  %v7627 = vsel %vm7625, %v7621, 0.0
  %v7628 = vadd.f32 %v7626, %v7627
  %7629 = vadd.xlane.f32.xlu0 %v7628
  %v7630 = vpop.xlane.xlu0 %7629
  %v7631 = vrcp.pop 256.0
  %v7632 = vmul.f32 %v7630, %v7631
  %v7633 = vsub.f32 %v7619, %v7632
  %v7634 = vsub.f32 %v7621, %v7632
  %v7635 = vmul.f32 %v7633, %v7633
  %v7636 = vmul.f32 %v7634, %v7634
  %v7637 = vsel %vm7625, %v7635, 0.0
  %v7638 = vsel %vm7625, %v7636, 0.0
  %v7639 = vadd.f32 %v7637, %v7638
  %7640 = vadd.xlane.f32.xlu0 %v7639
  %v7641 = vpop.xlane.xlu0 %7640
  %v7642 = vmul.f32 %v7641, %v7631
  %v7643 = vadd.f32 %v7642, 1e-05
  %v7644 = vrsqrt.pop %v7643
  %v7645 = vmul.f32 %v7633, %v7644
  %v7646 = vmul.f32 %v7634, %v7644
  %v7647 = vld [vmem:[%s21] sm:$0x3]
  %v7649 = vlaneseq
  %v7650 = vshrl.u32 %v7649, 7
  %v7651 = vsub.s32 0, %v7650
  %v7652 = vrot.slane %v7647, %v7651
  %v7653 = vlaneseq
  %v7654 = vshrl.u32 %v7653, 7
  %v7655 = vsub.s32 1, %v7654
  %v7656 = vrot.slane %v7647, %v7655
  %v7659 = vmul.f32 %v7645, %v7652
  %v7660 = vmul.f32 %v7646, %v7656
  %v7661 = vld [vmem:[%s22] sm:$0x3]
  %v7663 = vlaneseq
  %v7664 = vshrl.u32 %v7663, 7
  %v7665 = vsub.s32 0, %v7664
  %v7666 = vrot.slane %v7661, %v7665
  %v7667 = vlaneseq
  %v7668 = vshrl.u32 %v7667, 7
  %v7669 = vsub.s32 1, %v7668
  %v7670 = vrot.slane %v7661, %v7669
  %v7673 = vadd.f32 %v7659, %v7666
  %v7674 = vadd.f32 %v7660, %v7670
  %vm7675 = vcmp.gt.f32.partialorder %v7673, 0.0
  %vm7676 = vcmp.gt.f32.partialorder %v7674, 0.0
  %v7677 = vmin.f32 %v7673, 0.0
  %v7678 = vmin.f32 %v7674, 0.0
  %v7679 = vmul.f32 %v7677, 1.442695
  %v7680 = vpow.pop %v7679
  %v7681 = vmul.f32 %v7678, 1.442695
  %v7682 = vpow.pop %v7681
  %v7683 = vsub.f32 %v7680, 1.0
  %v7684 = vsub.f32 %v7682, 1.0
  %v7685 = vsel %vm7675, %v7673, %v7683
  %v7686 = vsel %vm7676, %v7674, %v7684
  %v7687 = vpack.c.bf16 %v7685, %v7685
  %v7688 = vpack.c.bf16 %v7686, %v7686
  %v7689 = vld [vmem:[%s23] sm:$0xff]
  %v7690 = vld [vmem:[%s23 + $0x8] sm:$0xf]
  %v7691 = vld [vmem:[%s23 + $0xc] sm:$0xff]
  %v7692 = vld [vmem:[%s23 + $0x14] sm:$0xf]
  %v7693 = vld [vmem:[%s23 + $0x18] sm:$0xff]
  %v7694 = vld [vmem:[%s23 + $0x20] sm:$0xf]
  %v7695 = vld [vmem:[%s23 + $0x24] sm:$0xff]
  %v7696 = vld [vmem:[%s23 + $0x2c] sm:$0xf]
  %v7697 = vld [vmem:[%s23 + $0x30] sm:$0xff]
  %v7698 = vld [vmem:[%s23 + $0x38] sm:$0xf]
  %v7699 = vld [vmem:[%s23 + $0x3c] sm:$0xff]
  %v7700 = vld [vmem:[%s23 + $0x44] sm:$0xf]
  %v7701 = vld [vmem:[%s23 + $0x48] sm:$0xff]
  %v7702 = vld [vmem:[%s23 + $0x50] sm:$0xf]
  %v7703 = vld [vmem:[%s23 + $0x54] sm:$0xff]
  %v7704 = vld [vmem:[%s23 + $0x5c] sm:$0xf]
  %v7705 = vld [vmem:[%s23 + $0x60] sm:$0xff]
  %v7706 = vld [vmem:[%s23 + $0x68] sm:$0xf]
  %v7707 = vld [vmem:[%s23 + $0x6c] sm:$0xff]
  %v7708 = vld [vmem:[%s23 + $0x74] sm:$0xf]
  %v7709 = vld [vmem:[%s23 + $0x78] sm:$0xff]
  %v7710 = vld [vmem:[%s23 + $0x80] sm:$0xf]
  %v7711 = vld [vmem:[%s23 + $0x84] sm:$0xff]
  %v7712 = vld [vmem:[%s23 + $0x8c] sm:$0xf]
  %v7713 = vld [vmem:[%s23 + $0x90] sm:$0xff]
  %v7714 = vld [vmem:[%s23 + $0x98] sm:$0xf]
  %v7715 = vld [vmem:[%s23 + $0x9c] sm:$0xff]
  %v7716 = vld [vmem:[%s23 + $0xa4] sm:$0xf]
  %v7717 = vld [vmem:[%s23 + $0xa8] sm:$0xff]
  %v7718 = vld [vmem:[%s23 + $0xb0] sm:$0xf]
  %v7719 = vld [vmem:[%s23 + $0xb4] sm:$0xff]
  %v7720 = vld [vmem:[%s23 + $0xbc] sm:$0xf]
  %v7721 = vld [vmem:[%s23 + $0xc0] sm:$0xff]
  %v7722 = vld [vmem:[%s23 + $0xc8] sm:$0xf]
  %v7723 = vld [vmem:[%s23 + $0xcc] sm:$0xff]
  %v7724 = vld [vmem:[%s23 + $0xd4] sm:$0xf]
  %v7725 = vld [vmem:[%s23 + $0xd8] sm:$0xff]
  %v7726 = vld [vmem:[%s23 + $0xe0] sm:$0xf]
  %v7727 = vld [vmem:[%s23 + $0xe4] sm:$0xff]
  %v7728 = vld [vmem:[%s23 + $0xec] sm:$0xf]
  %v7729 = vld [vmem:[%s23 + $0xf0] sm:$0xff]
  %v7730 = vld [vmem:[%s23 + $0xf8] sm:$0xf]
  %v7731 = vld [vmem:[%s23 + $0xfc] sm:$0xff]
  %v7732 = vld [vmem:[%s23 + $0x104] sm:$0xf]
  %v7733 = vld [vmem:[%s23 + $0x108] sm:$0xff]
  %v7734 = vld [vmem:[%s23 + $0x110] sm:$0xf]
  %v7735 = vld [vmem:[%s23 + $0x114] sm:$0xff]
  %v7736 = vld [vmem:[%s23 + $0x11c] sm:$0xf]
  %v7737 = vld [vmem:[%s23 + $0x120] sm:$0xff]
  %v7738 = vld [vmem:[%s23 + $0x128] sm:$0xf]
  %v7739 = vld [vmem:[%s23 + $0x12c] sm:$0xff]
  %v7740 = vld [vmem:[%s23 + $0x134] sm:$0xf]
  %v7741 = vld [vmem:[%s23 + $0x138] sm:$0xff]
  %v7742 = vld [vmem:[%s23 + $0x140] sm:$0xf]
  %v7743 = vld [vmem:[%s23 + $0x144] sm:$0xff]
  %v7744 = vld [vmem:[%s23 + $0x14c] sm:$0xf]
  %v7745 = vld [vmem:[%s23 + $0x150] sm:$0xff]
  %v7746 = vld [vmem:[%s23 + $0x158] sm:$0xf]
  %v7747 = vld [vmem:[%s23 + $0x15c] sm:$0xff]
  %v7748 = vld [vmem:[%s23 + $0x164] sm:$0xf]
  %v7749 = vld [vmem:[%s23 + $0x168] sm:$0xff]
  %v7750 = vld [vmem:[%s23 + $0x170] sm:$0xf]
  %v7751 = vld [vmem:[%s23 + $0x174] sm:$0xff]
  %v7752 = vld [vmem:[%s23 + $0x17c] sm:$0xf]
  %v7753 = vld [vmem:[%s24] sm:$0x7]
  %v7755 = vlaneseq
  %v7756 = vshrl.u32 %v7755, 7
  %v7757 = vsub.s32 0, %v7756
  %v7758 = vrot.slane %v7753, %v7757
  %v7759 = vlaneseq
  %v7760 = vshrl.u32 %v7759, 7
  %v7761 = vsub.s32 1, %v7760
  %v7762 = vrot.slane %v7753, %v7761
  %v7763 = vlaneseq
  %v7764 = vshrl.u32 %v7763, 7
  %v7765 = vsub.s32 2, %v7764
  %v7766 = vrot.slane %v7753, %v7765
  %v7834 = vunpack.c.l.b16 %v7689
  %v7835 = vunpack.c.h.b16 %v7689
  %v7836 = vunpack.c.l.b16 %v7690
  %v7837 = vunpack.c.l.b16 %v7691
  %v7838 = vunpack.c.h.b16 %v7691
  %v7839 = vunpack.c.l.b16 %v7692
  %v7840 = vunpack.c.l.b16 %v7693
  %v7841 = vunpack.c.h.b16 %v7693
  %v7842 = vunpack.c.l.b16 %v7694
  %v7843 = vunpack.c.l.b16 %v7695
  %v7844 = vunpack.c.h.b16 %v7695
  %v7845 = vunpack.c.l.b16 %v7696
  %v7846 = vunpack.c.l.b16 %v7697
  %v7847 = vunpack.c.h.b16 %v7697
  %v7848 = vunpack.c.l.b16 %v7698
  %v7849 = vunpack.c.l.b16 %v7699
  %v7850 = vunpack.c.h.b16 %v7699
  %v7851 = vunpack.c.l.b16 %v7700
  %v7852 = vunpack.c.l.b16 %v7701
  %v7853 = vunpack.c.h.b16 %v7701
  %v7854 = vunpack.c.l.b16 %v7702
  %v7855 = vunpack.c.l.b16 %v7703
  %v7856 = vunpack.c.h.b16 %v7703
  %v7857 = vunpack.c.l.b16 %v7704
  %v7858 = vunpack.c.l.b16 %v7705
  %v7859 = vunpack.c.h.b16 %v7705
  %v7860 = vunpack.c.l.b16 %v7706
  %v7861 = vunpack.c.l.b16 %v7707
  %v7862 = vunpack.c.h.b16 %v7707
  %v7863 = vunpack.c.l.b16 %v7708
  %v7864 = vunpack.c.l.b16 %v7709
  %v7865 = vunpack.c.h.b16 %v7709
  %v7866 = vunpack.c.l.b16 %v7710
  %v7867 = vunpack.c.l.b16 %v7711
  %v7868 = vunpack.c.h.b16 %v7711
  %v7869 = vunpack.c.l.b16 %v7712
  %v7870 = vunpack.c.l.b16 %v7713
  %v7871 = vunpack.c.h.b16 %v7713
  %v7872 = vunpack.c.l.b16 %v7714
  %v7873 = vunpack.c.l.b16 %v7715
  %v7874 = vunpack.c.h.b16 %v7715
  %v7875 = vunpack.c.l.b16 %v7716
  %v7876 = vunpack.c.l.b16 %v7717
  %v7877 = vunpack.c.h.b16 %v7717
  %v7878 = vunpack.c.l.b16 %v7718
  %v7879 = vunpack.c.l.b16 %v7719
  %v7880 = vunpack.c.h.b16 %v7719
  %v7881 = vunpack.c.l.b16 %v7720
  %v7882 = vunpack.c.l.b16 %v7721
  %v7883 = vunpack.c.h.b16 %v7721
  %v7884 = vunpack.c.l.b16 %v7722
  %v7885 = vunpack.c.l.b16 %v7723
  %v7886 = vunpack.c.h.b16 %v7723
  %v7887 = vunpack.c.l.b16 %v7724
  %v7888 = vunpack.c.l.b16 %v7725
  %v7889 = vunpack.c.h.b16 %v7725
  %v7890 = vunpack.c.l.b16 %v7726
  %v7891 = vunpack.c.l.b16 %v7727
  %v7892 = vunpack.c.h.b16 %v7727
  %v7893 = vunpack.c.l.b16 %v7728
  %v7894 = vunpack.c.l.b16 %v7729
  %v7895 = vunpack.c.h.b16 %v7729
  %v7896 = vunpack.c.l.b16 %v7730
  %v7897 = vunpack.c.l.b16 %v7731
  %v7898 = vunpack.c.h.b16 %v7731
  %v7899 = vunpack.c.l.b16 %v7732
  %v7900 = vunpack.c.l.b16 %v7733
  %v7901 = vunpack.c.h.b16 %v7733
  %v7902 = vunpack.c.l.b16 %v7734
  %v7903 = vunpack.c.l.b16 %v7735
  %v7904 = vunpack.c.h.b16 %v7735
  %v7905 = vunpack.c.l.b16 %v7736
  %v7906 = vunpack.c.l.b16 %v7737
  %v7907 = vunpack.c.h.b16 %v7737
  %v7908 = vunpack.c.l.b16 %v7738
  %v7909 = vunpack.c.l.b16 %v7739
  %v7910 = vunpack.c.h.b16 %v7739
  %v7911 = vunpack.c.l.b16 %v7740
  %v7912 = vunpack.c.l.b16 %v7741
  %v7913 = vunpack.c.h.b16 %v7741
  %v7914 = vunpack.c.l.b16 %v7742
  %v7915 = vunpack.c.l.b16 %v7743
  %v7916 = vunpack.c.h.b16 %v7743
  %v7917 = vunpack.c.l.b16 %v7744
  %v7918 = vunpack.c.l.b16 %v7745
  %v7919 = vunpack.c.h.b16 %v7745
  %v7920 = vunpack.c.l.b16 %v7746
  %v7921 = vunpack.c.l.b16 %v7747
  %v7922 = vunpack.c.h.b16 %v7747
  %v7923 = vunpack.c.l.b16 %v7748
  %v7924 = vunpack.c.l.b16 %v7749
  %v7925 = vunpack.c.h.b16 %v7749
  %v7926 = vunpack.c.l.b16 %v7750
  %v7927 = vunpack.c.l.b16 %v7751
  %v7928 = vunpack.c.h.b16 %v7751
  %v7929 = vunpack.c.l.b16 %v7752
  %v7930 = vpack.c.b16 %v7837, %v7834
  %v7931 = vpack.c.b16 %v7838, %v7835
  %v7932 = vpack.c.b16 %v7839, %v7836
  %v7933 = vpack.c.b16 %v7843, %v7840
  %v7934 = vpack.c.b16 %v7844, %v7841
  %v7935 = vpack.c.b16 %v7845, %v7842
  %v7936 = vpack.c.b16 %v7849, %v7846
  %v7937 = vpack.c.b16 %v7850, %v7847
  %v7938 = vpack.c.b16 %v7851, %v7848
  %v7939 = vpack.c.b16 %v7855, %v7852
  %v7940 = vpack.c.b16 %v7856, %v7853
  %v7941 = vpack.c.b16 %v7857, %v7854
  %v7942 = vpack.c.b16 %v7861, %v7858
  %v7943 = vpack.c.b16 %v7862, %v7859
  %v7944 = vpack.c.b16 %v7863, %v7860
  %v7945 = vpack.c.b16 %v7867, %v7864
  %v7946 = vpack.c.b16 %v7868, %v7865
  %v7947 = vpack.c.b16 %v7869, %v7866
  %v7948 = vpack.c.b16 %v7873, %v7870
  %v7949 = vpack.c.b16 %v7874, %v7871
  %v7950 = vpack.c.b16 %v7875, %v7872
  %v7951 = vpack.c.b16 %v7879, %v7876
  %v7952 = vpack.c.b16 %v7880, %v7877
  %v7953 = vpack.c.b16 %v7881, %v7878
  %v7954 = vpack.c.b16 %v7885, %v7882
  %v7955 = vpack.c.b16 %v7886, %v7883
  %v7956 = vpack.c.b16 %v7887, %v7884
  %v7957 = vpack.c.b16 %v7891, %v7888
  %v7958 = vpack.c.b16 %v7892, %v7889
  %v7959 = vpack.c.b16 %v7893, %v7890
  %v7960 = vpack.c.b16 %v7897, %v7894
  %v7961 = vpack.c.b16 %v7898, %v7895
  %v7962 = vpack.c.b16 %v7899, %v7896
  %v7963 = vpack.c.b16 %v7903, %v7900
  %v7964 = vpack.c.b16 %v7904, %v7901
  %v7965 = vpack.c.b16 %v7905, %v7902
  %v7966 = vpack.c.b16 %v7909, %v7906
  %v7967 = vpack.c.b16 %v7910, %v7907
  %v7968 = vpack.c.b16 %v7911, %v7908
  %v7969 = vpack.c.b16 %v7915, %v7912
  %v7970 = vpack.c.b16 %v7916, %v7913
  %v7971 = vpack.c.b16 %v7917, %v7914
  %v7972 = vpack.c.b16 %v7921, %v7918
  %v7973 = vpack.c.b16 %v7922, %v7919
  %v7974 = vpack.c.b16 %v7923, %v7920
  %v7975 = vpack.c.b16 %v7927, %v7924
  %v7976 = vpack.c.b16 %v7928, %v7925
  %v7977 = vpack.c.b16 %v7929, %v7926
  %8026 = vmatprep.subr.bf16.mxu0 %v7952
  %8027 = vmatpush1.bf16.msra.mxu0 %v7951
  %8028 = vmatprep.subr.bf16.mxu0 %v7949
  %8029 = vmatpush1.bf16.msra.mxu0 %v7948
  %8030 = vmatprep.subr.bf16.mxu0 %v7946
  %8031 = vmatpush1.bf16.msra.mxu0 %v7945
  %8032 = vmatprep.subr.bf16.mxu0 %v7943
  %8033 = vmatpush1.bf16.msra.mxu0 %v7942
  %8034 = vmatprep.subr.bf16.mxu0 %v7940
  %8035 = vmatpush1.bf16.msra.mxu0 %v7939
  %8036 = vmatprep.subr.bf16.mxu0 %v7937
  %8037 = vmatpush1.bf16.msra.mxu0 %v7936
  %8038 = vmatprep.subr.bf16.mxu0 %v7934
  %8039 = vmatpush1.bf16.msra.mxu0 %v7933
  %8040 = vmatprep.subr.bf16.mxu0 %v7931
  %8041 = vmatpush1.bf16.msra.mxu0 %v7930
  %8042 = vmatprep.subr.bf16.mxu0 %v7976
  %8043 = vmatpush2.bf16.msra.mxu0 %v7975
  %8044 = vmatprep.subr.bf16.mxu0 %v7973
  %8045 = vmatpush2.bf16.msra.mxu0 %v7972
  %8046 = vmatprep.subr.bf16.mxu0 %v7970
  %8047 = vmatpush2.bf16.msra.mxu0 %v7969
  %8048 = vmatprep.subr.bf16.mxu0 %v7967
  %8049 = vmatpush2.bf16.msra.mxu0 %v7966
  %8050 = vmatprep.subr.bf16.mxu0 %v7964
  %8051 = vmatpush2.bf16.msra.mxu0 %v7963
  %8052 = vmatprep.subr.bf16.mxu0 %v7961
  %8053 = vmatpush2.bf16.msra.mxu0 %v7960
  %8054 = vmatprep.subr.bf16.mxu0 %v7958
  %8055 = vmatpush2.bf16.msra.mxu0 %v7957
  %8056 = vmatprep.subr.bf16.mxu0 %v7955
  %8057 = vmatpush2.bf16.msra.mxu0 %v7954
  %8058 = vmatprep.mubr.bf16.mxu0 %v7688
  %8059 = vmatmul.mubr.bf16.gmra.mxu0 %v7687
  %v8060 = vpop.f32.mrf.mxu0
  %v8061 = vadd.f32 %v7758, %v8060
  %v8062 = vpop.f32.mrf.mxu0
  %v8063 = vadd.f32 %v7762, %v8062
  %v8064 = vpop.f32.mrf.mxu0
  %v8065 = vpop.f32.mrf.mxu0
  %8066 = vdwg.mxu0
  %8067 = vmatprep.subr.bf16.mxu0 0
  %8068 = vmatpush1.bf16.msra.mxu0 %v7953
  %8069 = vmatprep.subr.bf16.mxu0 0
  %8070 = vmatpush1.bf16.msra.mxu0 %v7950
  %8071 = vmatprep.subr.bf16.mxu0 0
  %8072 = vmatpush1.bf16.msra.mxu0 %v7947
  %8073 = vmatprep.subr.bf16.mxu0 0
  %8074 = vmatpush1.bf16.msra.mxu0 %v7944
  %8075 = vmatprep.subr.bf16.mxu0 0
  %8076 = vmatpush1.bf16.msra.mxu0 %v7941
  %8077 = vmatprep.subr.bf16.mxu0 0
  %8078 = vmatpush1.bf16.msra.mxu0 %v7938
  %8079 = vmatprep.subr.bf16.mxu0 0
  %8080 = vmatpush1.bf16.msra.mxu0 %v7935
  %8081 = vmatprep.subr.bf16.mxu0 0
  %8082 = vmatpush1.bf16.msra.mxu0 %v7932
  %8083 = vmatprep.subr.bf16.mxu0 0
  %8084 = vmatpush2.bf16.msra.mxu0 %v7977
  %8085 = vmatprep.subr.bf16.mxu0 0
  %8086 = vmatpush2.bf16.msra.mxu0 %v7974
  %8087 = vmatprep.subr.bf16.mxu0 0
  %8088 = vmatpush2.bf16.msra.mxu0 %v7971
  %8089 = vmatprep.subr.bf16.mxu0 0
  %8090 = vmatpush2.bf16.msra.mxu0 %v7968
  %8091 = vmatprep.subr.bf16.mxu0 0
  %8092 = vmatpush2.bf16.msra.mxu0 %v7965
  %8093 = vmatprep.subr.bf16.mxu0 0
  %8094 = vmatpush2.bf16.msra.mxu0 %v7962
  %8095 = vmatprep.subr.bf16.mxu0 0
  %8096 = vmatpush2.bf16.msra.mxu0 %v7959
  %8097 = vmatprep.subr.bf16.mxu0 0
  %8098 = vmatpush2.bf16.msra.mxu0 %v7956
  %8099 = vmatprep.mubr.bf16.mxu0 %v7688
  %8100 = vmatmul.mubr.bf16.gmra.mxu0 %v7687
  %v8101 = vpop.f32.mrf.mxu0
  %v8102 = vadd.f32 %v7766, %v8101
  %v8103 = vpop.f32.mrf.mxu0
  %v8104 = vpop.f32.mrf.mxu0
  %v8105 = vpop.f32.mrf.mxu0
  %8106 = vdwg.mxu0
  %v8110 = vcombine.low %v8061, %v8063
  %v8112 = vunpack.c.l.s4 1983009808
  %v8113 = vunpack.c.0.s8 %v8112
  %v8114 = vlaneseq
  %v8115 = vshrl.u32 %v8114, 7
  %v8116 = vsub.s32 %v8113, %v8115
  %v8117 = vrot.slane %v8110, %v8116
  %v8119 = vunpack.c.l.s4 1983009808
  %v8120 = vunpack.c.0.s8 %v8119
  %v8121 = vlaneseq
  %v8122 = vshrl.u32 %v8121, 7
  %v8123 = vsub.s32 %v8120, %v8122
  %v8124 = vrot.slane %v8102, %v8123
  %v8125 = vcombine.low %v8117, %v8124
  %vm8127 = vcmask 1043458
  %vm8128 = vmor %vm8127, %vm7625
  %vm8129 = vcmask 357380
  %vm8130 = vmor %vm8129, %vm8128
  %8131 = vst.msk [vmem:[%s25] sm:$0x3f] %vm8130, %v8125
  // Predicated region
  $region102: #{small_score_forward.1} parent=0 // pred_check
    _
  $region103: #{small_score_forward.1} parent=0 // pred_check_branch
    %8133 = sbr.rel (0) target = $region105
  $region104: #{small_score_forward.1} parent=0 // pred_region
    _
  $region105: #{small_score_forward.1} parent=0 // pred_fallthru
    _
  // Predicated region
  $region106: #{small_score_forward.1} parent=0 // pred_check
    _
  $region107: #{small_score_forward.1} parent=0 // pred_check_branch
    %8135 = sbr.rel (0) target = $region109
  $region108: #{small_score_forward.1} parent=0 // pred_region
    _
  $region109: #{small_score_forward.1} parent=0 // pred_fallthru
    _

</llo_original>
